<compile_context>
chip_gen: v7x
topology: tpu7x:2x2x1
jax: 0.10.0
libtpu: 0.0.40
codegen_flags: <defaults>
</compile_context>

<pallas_src>
import numpy as np
import jax
import jax.numpy as jnp
from jax.experimental import pallas as pl
from jax.experimental.pallas import tpu as pltpu

D_IN = 768
EMBED = 16
TOWER_OUT = 16
NUM_SIM = 2
NUM_CLASSES = 4

BF16 = jnp.bfloat16


def _relu(x):
    return jnp.maximum(x, 0.0)


def _dot(a, b):
    # bf16 x bf16 MXU matmul with f32 accumulation.
    return jnp.dot(a.astype(BF16), b, preferred_element_type=jnp.float32)


def amodel_kernel(x_ref,            # (2B, 768) bf16  [headline ; body] stacked on batch
                  sim_w_ref,        # (768, 3072) bf16 [s0_ws|s0_wc|s1_ws|s1_wc]
                  sim_b_ref,        # (2, 768) f32
                  t1w_ref,          # (768, 512) bf16 [h1w|b1w]
                  t2w_ref,          # (256, 256) bf16 [h2w|b2w]
                  w34_ref,          # (448, 64) bf16  row-stacked [h3w;b3w;h4w;b4w;fc1w]
                  tb_ref,           # (8, 256) f32 padded tower biases
                  blk1_w12_ref,     # (1536, 256) bf16 (rows 0:768 -> a1, 768:1536 -> a2)
                  blk1_whb_ref,     # (32, 256) bf16  (rows 0:16 -> h, 16:32 -> b)
                  blk2_w_ref,       # (256, 64) bf16
                  fc2_w_ref,        # (16, 4) f32
                  head_b_ref,       # (4, 256) f32 padded head biases
                  out_ref):         # (B, 4) f32
    two_b = x_ref.shape[0]
    B = two_b // 2

    # Read inputs / small packed biases once and reuse.
    x0 = x_ref[...]                 # (2B, 768) bf16
    sim_b = sim_b_ref[...]          # (2, 768)
    tb = tb_ref[...]                # (8, 256)
    head_b = head_b_ref[...]        # (4, 256)

    # --- sim blocks on the batch-stacked activations: one matmul per block ---
    x = x0
    for k in range(NUM_SIM):
        wblk = sim_w_ref[:, k * 2 * D_IN:(k + 1) * 2 * D_IN]      # (768, 1536) bf16
        y = _dot(x, wblk)                                         # (2B, 1536) f32
        ys = y[:, :D_IN]                                          # [a1@Ws ; a2@Ws]
        yc = y[:, D_IN:]                                          # [a1@Wc ; a2@Wc]
        yc_sw = jnp.concatenate([yc[B:], yc[:B]], axis=0)         # swap branch halves
        x = _relu(ys + yc_sw + sim_b[k:k + 1, :])
    a1 = x[:B]
    a2 = x[B:]

    # --- headline / body towers: 768 -> 256 -> 128 -> 64 -> 16 ---
    h = x0[:B]
    bb = x0[B:]
    h = _relu(_dot(h, t1w_ref[:, 0:256]) + tb[0:1, :256])
    bb = _relu(_dot(bb, t1w_ref[:, 256:512]) + tb[4:5, :256])
    h = _relu(_dot(h, t2w_ref[:, 0:128]) + tb[1:2, :128])
    bb = _relu(_dot(bb, t2w_ref[:, 128:256]) + tb[5:6, :128])
    h = _relu(_dot(h, w34_ref[0:128, 0:64]) + tb[2:3, :64])
    bb = _relu(_dot(bb, w34_ref[128:256, 0:64]) + tb[6:7, :64])
    h = _relu(_dot(h, w34_ref[256:320, 0:TOWER_OUT]) + tb[3:4, :TOWER_OUT])
    bb = _relu(_dot(bb, w34_ref[320:384, 0:TOWER_OUT]) + tb[7:8, :TOWER_OUT])

    # --- fusion head: concat replaced by summed partial matmuls ---
    z = (_dot(a1, blk1_w12_ref[0:D_IN, :])
         + _dot(a2, blk1_w12_ref[D_IN:2 * D_IN, :])
         + _dot(h, blk1_whb_ref[0:TOWER_OUT, :])
         + _dot(bb, blk1_whb_ref[TOWER_OUT:2 * TOWER_OUT, :])
         + head_b[0:1, :256])
    e = _relu(z)                                                  # (B, 256)
    e = _relu(_dot(e, blk2_w_ref[...]) + head_b[1:2, :64])        # (B, 64)
    e = jax.nn.sigmoid(_dot(e, w34_ref[384:448, 0:EMBED])
                       + head_b[2:3, :EMBED])                     # (B, 16)
    logits = (jnp.dot(e, fc2_w_ref[...], preferred_element_type=jnp.float32)
              + head_b[3:4, :NUM_CLASSES])                        # (B, 4)

    # stable softmax over axis 1 (f32, exact division so rows sum to 1)
    m = jnp.max(logits, axis=1, keepdims=True)
    p = jnp.exp(logits - m)
    out_ref[...] = p / jnp.sum(p, axis=1, keepdims=True)


def pack_params(params):
    """Pack the natural (PyTorch-shaped) f32 params into few tile-aligned kernel inputs."""
    (s0_ws, s0_wc, s0_b, s1_ws, s1_wc, s1_b,
     h1w, h1b, h2w, h2b, h3w, h3b, h4w, h4b,
     b1w, b1b, b2w, b2b, b3w, b3b, b4w, b4b,
     blk1w, blk1b, blk2w, blk2b,
     fc1w, fc1b, fc2w, fc2b) = params

    sim_w = jnp.concatenate([s0_ws, s0_wc, s1_ws, s1_wc], axis=1).astype(BF16)   # (768, 3072)
    sim_b = jnp.concatenate([s0_b, s1_b], axis=0)                                # (2, 768) f32
    t1w = jnp.concatenate([h1w, b1w], axis=1).astype(BF16)                       # (768, 512)
    t2w = jnp.concatenate([h2w, b2w], axis=1).astype(BF16)                       # (256, 256)

    # row-stacked pack of the small tower tails + fc1 (tile-aligned row offsets).
    w34 = jnp.zeros((448, 64), jnp.float32)
    w34 = w34.at[0:128, 0:64].set(h3w).at[128:256, 0:64].set(b3w)
    w34 = w34.at[256:320, 0:TOWER_OUT].set(h4w).at[320:384, 0:TOWER_OUT].set(b4w)
    w34 = w34.at[384:448, 0:EMBED].set(fc1w)
    w34 = w34.astype(BF16)                                                       # (448, 64)

    tb = jnp.zeros((8, 256), jnp.float32)
    tb = tb.at[0, :256].set(h1b[0]).at[1, :128].set(h2b[0])
    tb = tb.at[2, :64].set(h3b[0]).at[3, :TOWER_OUT].set(h4b[0])
    tb = tb.at[4, :256].set(b1b[0]).at[5, :128].set(b2b[0])
    tb = tb.at[6, :64].set(b3b[0]).at[7, :TOWER_OUT].set(b4b[0])

    head_b = jnp.zeros((4, 256), jnp.float32)
    head_b = head_b.at[0, :256].set(blk1b[0]).at[1, :64].set(blk2b[0])
    head_b = head_b.at[2, :EMBED].set(fc1b[0]).at[3, :NUM_CLASSES].set(fc2b[0])

    return (sim_w, sim_b,
            t1w, t2w, w34,
            tb,
            blk1w[:2 * D_IN].astype(BF16), blk1w[2 * D_IN:].astype(BF16),
            blk2w.astype(BF16), fc2w,
            head_b)


def amodel_forward(headline, body, packed):
    B = headline.shape[0]
    # bf16 input is numerically identical here: matmul operands are bf16 anyway.
    x = jnp.concatenate([headline, body], axis=0).astype(BF16)    # (2B, 768)
    args = (x,) + tuple(packed)
    vmem_spec = pl.BlockSpec(memory_space=pltpu.MemorySpace.VMEM)
    return pl.pallas_call(
        amodel_kernel,
        out_shape=jax.ShapeDtypeStruct((B, NUM_CLASSES), jnp.float32),
        in_specs=[vmem_spec] * len(args),
        out_specs=vmem_spec,
        compiler_params=pltpu.CompilerParams(vmem_limit_bytes=32 << 20),
    )(*args)


def init_params(key):
    """Deterministic synthetic parameters matching the module's natural shapes (f32)."""
    keys = iter(jax.random.split(key, 64))

    def lin(i, o):
        kw = next(keys)
        kb = next(keys)
        w = (jax.random.normal(kw, (i, o), jnp.float32) / np.sqrt(i)).astype(jnp.float32)
        b = (jax.random.normal(kb, (1, o), jnp.float32) * 0.01).astype(jnp.float32)
        return w, b

    params = []
    # sim blocks: Ws (768,768), Wc (768,768), bias (1,768) each
    for _ in range(NUM_SIM):
        ws, _ = lin(D_IN, D_IN)
        wc, _ = lin(D_IN, D_IN)
        b = (jax.random.normal(next(keys), (1, D_IN), jnp.float32) * 0.01).astype(jnp.float32)
        params += [ws, wc, b]
    tower_dims = [(D_IN, 256), (256, 128), (128, 64), (64, TOWER_OUT)]
    for i, o in tower_dims:   # headline tower
        params += list(lin(i, o))
    for i, o in tower_dims:   # body tower
        params += list(lin(i, o))
    params += list(lin(D_IN * 2 + TOWER_OUT * 2, 256))   # block1
    params += list(lin(256, 64))                         # block2
    params += list(lin(64, EMBED))                       # fc1
    params += list(lin(EMBED, NUM_CLASSES))              # fc2
    return params


def reference_forward(headline, body, params):
    """Pure-JAX f32 reference (same math, unpacked weights) for correctness checking."""
    (s0_ws, s0_wc, s0_b, s1_ws, s1_wc, s1_b,
     h1w, h1b, h2w, h2b, h3w, h3b, h4w, h4b,
     b1w, b1b, b2w, b2b, b3w, b3b, b4w, b4b,
     blk1w, blk1b, blk2w, blk2b,
     fc1w, fc1b, fc2w, fc2b) = params
    a1, a2 = headline, body
    for ws, wc, b in ((s0_ws, s0_wc, s0_b), (s1_ws, s1_wc, s1_b)):
        n1 = _relu(a1 @ ws + a2 @ wc + b)
        n2 = _relu(a2 @ ws + a1 @ wc + b)
        a1, a2 = n1, n2
    h = headline
    for w, b in ((h1w, h1b), (h2w, h2b), (h3w, h3b), (h4w, h4b)):
        h = _relu(h @ w + b)
    bb = body
    for w, b in ((b1w, b1b), (b2w, b2b), (b3w, b3b), (b4w, b4b)):
        bb = _relu(bb @ w + b)
    embed = jnp.concatenate((a1, a2, h, bb), axis=1)
    embed = _relu(embed @ blk1w + blk1b)
    embed = _relu(embed @ blk2w + blk2b)
    embed = jax.nn.sigmoid(embed @ fc1w + fc1b)
    return jax.nn.softmax(embed @ fc2w + fc2b, axis=1)


if __name__ == "__main__":
    key = jax.random.PRNGKey(0)
    k_h, k_b, k_p = jax.random.split(key, 3)
    B = 8
    headline = jax.random.normal(k_h, (B, D_IN), jnp.float32)
    body = jax.random.normal(k_b, (B, D_IN), jnp.float32)
    params = init_params(k_p)
    packed = pack_params(params)

    out = amodel_forward(headline, body, packed)
    out = jax.block_until_ready(out)

    ref = jax.block_until_ready(reference_forward(headline, body, params))
    # bf16 weights/matmul operands vs f32 reference -> relaxed tolerance on softmax probs.
    np.testing.assert_allclose(np.asarray(out), np.asarray(ref), rtol=5e-2, atol=5e-2)
    assert out.shape == (B, NUM_CLASSES)
    np.testing.assert_allclose(np.asarray(out).sum(axis=1), np.ones(B), rtol=1e-5, atol=1e-5)

    print("KERNEL_OK")
</pallas_src>

<mosaic_0001>
module attributes {stable_mosaic.version = 11 : i64} {
  func.func @amodel_kernel(%arg0: memref<16x768xbf16, #tpu.memory_space<vmem>>, %arg1: memref<768x3072xbf16, #tpu.memory_space<vmem>>, %arg2: memref<2x768xf32, #tpu.memory_space<vmem>>, %arg3: memref<768x512xbf16, #tpu.memory_space<vmem>>, %arg4: memref<256x256xbf16, #tpu.memory_space<vmem>>, %arg5: memref<448x64xbf16, #tpu.memory_space<vmem>>, %arg6: memref<8x256xf32, #tpu.memory_space<vmem>>, %arg7: memref<1536x256xbf16, #tpu.memory_space<vmem>>, %arg8: memref<32x256xbf16, #tpu.memory_space<vmem>>, %arg9: memref<256x64xbf16, #tpu.memory_space<vmem>>, %arg10: memref<16x4xf32, #tpu.memory_space<vmem>>, %arg11: memref<4x256xf32, #tpu.memory_space<vmem>>, %arg12: memref<8x4xf32, #tpu.memory_space<vmem>>) attributes {dimension_semantics = [], scalar_prefetch = 0 : i64, scratch_operands = 0 : i64, tpu.core_type = #tpu.core_type<tc>} {
    %c0 = arith.constant 0 : index
    %c0_0 = arith.constant 0 : index
    %0 = vector.load %arg0[%c0, %c0_0] : memref<16x768xbf16, #tpu.memory_space<vmem>>, vector<16x768xbf16>
    %c0_1 = arith.constant 0 : index
    %c0_2 = arith.constant 0 : index
    %1 = vector.load %arg2[%c0_1, %c0_2] : memref<2x768xf32, #tpu.memory_space<vmem>>, vector<2x768xf32>
    %c0_3 = arith.constant 0 : index
    %c0_4 = arith.constant 0 : index
    %2 = vector.load %arg6[%c0_3, %c0_4] : memref<8x256xf32, #tpu.memory_space<vmem>>, vector<8x256xf32>
    %c0_5 = arith.constant 0 : index
    %c0_6 = arith.constant 0 : index
    %3 = vector.load %arg11[%c0_5, %c0_6] : memref<4x256xf32, #tpu.memory_space<vmem>>, vector<4x256xf32>
    %c0_7 = arith.constant 0 : index
    %c0_8 = arith.constant 0 : index
    %4 = vector.load %arg1[%c0_7, %c0_8] : memref<768x3072xbf16, #tpu.memory_space<vmem>>, vector<768x1536xbf16>
    %cst = arith.constant dense<0.000000e+00> : vector<16x1536xf32>
    %5 = tpu.matmul %0, %4, %cst {dimension_numbers = #tpu.dot_dimension_numbers<[1], [0], [0], [1], [0, 0, 1, 1], [], []>} : vector<16x768xbf16>, vector<768x1536xbf16>, vector<16x1536xf32> -> vector<16x1536xf32>
    %6 = vector.extract_strided_slice %5 {offsets = [0, 0], sizes = [16, 768], strides = [1, 1]} : vector<16x1536xf32> to vector<16x768xf32>
    %7 = vector.extract_strided_slice %5 {offsets = [0, 768], sizes = [16, 768], strides = [1, 1]} : vector<16x1536xf32> to vector<16x768xf32>
    %8 = vector.extract_strided_slice %7 {offsets = [8, 0], sizes = [8, 768], strides = [1, 1]} : vector<16x768xf32> to vector<8x768xf32>
    %9 = vector.extract_strided_slice %7 {offsets = [0, 0], sizes = [8, 768], strides = [1, 1]} : vector<16x768xf32> to vector<8x768xf32>
    %10 = tpu.concatenate %8, %9 in 0 : vector<8x768xf32>, vector<8x768xf32> -> vector<16x768xf32>
    %11 = arith.addf %6, %10 : vector<16x768xf32>
    %12 = vector.extract_strided_slice %1 {offsets = [0, 0], sizes = [1, 768], strides = [1, 1]} : vector<2x768xf32> to vector<1x768xf32>
    %13 = vector.broadcast %12 : vector<1x768xf32> to vector<16x768xf32>
    %14 = arith.addf %11, %13 : vector<16x768xf32>
    %cst_9 = arith.constant 0.000000e+00 : f32
    %15 = vector.broadcast %cst_9 : f32 to vector<16x768xf32>
    %16 = arith.maximumf %14, %15 : vector<16x768xf32>
    %c0_10 = arith.constant 0 : index
    %c1536 = arith.constant 1536 : index
    %17 = vector.load %arg1[%c0_10, %c1536] : memref<768x3072xbf16, #tpu.memory_space<vmem>>, vector<768x1536xbf16>
    %18 = arith.truncf %16 : vector<16x768xf32> to vector<16x768xbf16>
    %cst_11 = arith.constant dense<0.000000e+00> : vector<16x1536xf32>
    %19 = tpu.matmul %18, %17, %cst_11 {dimension_numbers = #tpu.dot_dimension_numbers<[1], [0], [0], [1], [0, 0, 1, 1], [], []>} : vector<16x768xbf16>, vector<768x1536xbf16>, vector<16x1536xf32> -> vector<16x1536xf32>
    %20 = vector.extract_strided_slice %19 {offsets = [0, 0], sizes = [16, 768], strides = [1, 1]} : vector<16x1536xf32> to vector<16x768xf32>
    %21 = vector.extract_strided_slice %19 {offsets = [0, 768], sizes = [16, 768], strides = [1, 1]} : vector<16x1536xf32> to vector<16x768xf32>
    %22 = vector.extract_strided_slice %21 {offsets = [8, 0], sizes = [8, 768], strides = [1, 1]} : vector<16x768xf32> to vector<8x768xf32>
    %23 = vector.extract_strided_slice %21 {offsets = [0, 0], sizes = [8, 768], strides = [1, 1]} : vector<16x768xf32> to vector<8x768xf32>
    %24 = tpu.concatenate %22, %23 in 0 : vector<8x768xf32>, vector<8x768xf32> -> vector<16x768xf32>
    %25 = arith.addf %20, %24 : vector<16x768xf32>
    %26 = vector.extract_strided_slice %1 {offsets = [1, 0], sizes = [1, 768], strides = [1, 1]} : vector<2x768xf32> to vector<1x768xf32>
    %27 = vector.broadcast %26 : vector<1x768xf32> to vector<16x768xf32>
    %28 = arith.addf %25, %27 : vector<16x768xf32>
    %cst_12 = arith.constant 0.000000e+00 : f32
    %29 = vector.broadcast %cst_12 : f32 to vector<16x768xf32>
    %30 = arith.maximumf %28, %29 : vector<16x768xf32>
    %31 = vector.extract_strided_slice %30 {offsets = [0, 0], sizes = [8, 768], strides = [1, 1]} : vector<16x768xf32> to vector<8x768xf32>
    %32 = vector.extract_strided_slice %30 {offsets = [8, 0], sizes = [8, 768], strides = [1, 1]} : vector<16x768xf32> to vector<8x768xf32>
    %33 = vector.extract_strided_slice %0 {offsets = [0, 0], sizes = [8, 768], strides = [1, 1]} : vector<16x768xbf16> to vector<8x768xbf16>
    %34 = vector.extract_strided_slice %0 {offsets = [8, 0], sizes = [8, 768], strides = [1, 1]} : vector<16x768xbf16> to vector<8x768xbf16>
    %c0_13 = arith.constant 0 : index
    %c0_14 = arith.constant 0 : index
    %35 = vector.load %arg3[%c0_13, %c0_14] : memref<768x512xbf16, #tpu.memory_space<vmem>>, vector<768x256xbf16>
    %cst_15 = arith.constant dense<0.000000e+00> : vector<8x256xf32>
    %36 = tpu.matmul %33, %35, %cst_15 {dimension_numbers = #tpu.dot_dimension_numbers<[1], [0], [0], [1], [0, 0, 1, 1], [], []>} : vector<8x768xbf16>, vector<768x256xbf16>, vector<8x256xf32> -> vector<8x256xf32>
    %37 = vector.extract_strided_slice %2 {offsets = [0, 0], sizes = [1, 256], strides = [1, 1]} : vector<8x256xf32> to vector<1x256xf32>
    %38 = vector.broadcast %37 : vector<1x256xf32> to vector<8x256xf32>
    %39 = arith.addf %36, %38 : vector<8x256xf32>
    %cst_16 = arith.constant 0.000000e+00 : f32
    %40 = vector.broadcast %cst_16 : f32 to vector<8x256xf32>
    %41 = arith.maximumf %39, %40 : vector<8x256xf32>
    %c0_17 = arith.constant 0 : index
    %c256 = arith.constant 256 : index
    %42 = vector.load %arg3[%c0_17, %c256] : memref<768x512xbf16, #tpu.memory_space<vmem>>, vector<768x256xbf16>
    %cst_18 = arith.constant dense<0.000000e+00> : vector<8x256xf32>
    %43 = tpu.matmul %34, %42, %cst_18 {dimension_numbers = #tpu.dot_dimension_numbers<[1], [0], [0], [1], [0, 0, 1, 1], [], []>} : vector<8x768xbf16>, vector<768x256xbf16>, vector<8x256xf32> -> vector<8x256xf32>
    %44 = vector.extract_strided_slice %2 {offsets = [4, 0], sizes = [1, 256], strides = [1, 1]} : vector<8x256xf32> to vector<1x256xf32>
    %45 = vector.broadcast %44 : vector<1x256xf32> to vector<8x256xf32>
    %46 = arith.addf %43, %45 : vector<8x256xf32>
    %cst_19 = arith.constant 0.000000e+00 : f32
    %47 = vector.broadcast %cst_19 : f32 to vector<8x256xf32>
    %48 = arith.maximumf %46, %47 : vector<8x256xf32>
    %c0_20 = arith.constant 0 : index
    %c0_21 = arith.constant 0 : index
    %49 = vector.load %arg4[%c0_20, %c0_21] : memref<256x256xbf16, #tpu.memory_space<vmem>>, vector<256x128xbf16>
    %50 = arith.truncf %41 : vector<8x256xf32> to vector<8x256xbf16>
    %cst_22 = arith.constant dense<0.000000e+00> : vector<8x128xf32>
    %51 = tpu.matmul %50, %49, %cst_22 {dimension_numbers = #tpu.dot_dimension_numbers<[1], [0], [0], [1], [0, 0, 1, 1], [], []>} : vector<8x256xbf16>, vector<256x128xbf16>, vector<8x128xf32> -> vector<8x128xf32>
    %52 = vector.extract_strided_slice %2 {offsets = [1, 0], sizes = [1, 128], strides = [1, 1]} : vector<8x256xf32> to vector<1x128xf32>
    %53 = vector.broadcast %52 : vector<1x128xf32> to vector<8x128xf32>
    %54 = arith.addf %51, %53 : vector<8x128xf32>
    %cst_23 = arith.constant 0.000000e+00 : f32
    %55 = vector.broadcast %cst_23 : f32 to vector<8x128xf32>
    %56 = arith.maximumf %54, %55 : vector<8x128xf32>
    %c0_24 = arith.constant 0 : index
    %c128 = arith.constant 128 : index
    %57 = vector.load %arg4[%c0_24, %c128] : memref<256x256xbf16, #tpu.memory_space<vmem>>, vector<256x128xbf16>
    %58 = arith.truncf %48 : vector<8x256xf32> to vector<8x256xbf16>
    %cst_25 = arith.constant dense<0.000000e+00> : vector<8x128xf32>
    %59 = tpu.matmul %58, %57, %cst_25 {dimension_numbers = #tpu.dot_dimension_numbers<[1], [0], [0], [1], [0, 0, 1, 1], [], []>} : vector<8x256xbf16>, vector<256x128xbf16>, vector<8x128xf32> -> vector<8x128xf32>
    %60 = vector.extract_strided_slice %2 {offsets = [5, 0], sizes = [1, 128], strides = [1, 1]} : vector<8x256xf32> to vector<1x128xf32>
    %61 = vector.broadcast %60 : vector<1x128xf32> to vector<8x128xf32>
    %62 = arith.addf %59, %61 : vector<8x128xf32>
    %cst_26 = arith.constant 0.000000e+00 : f32
    %63 = vector.broadcast %cst_26 : f32 to vector<8x128xf32>
    %64 = arith.maximumf %62, %63 : vector<8x128xf32>
    %c0_27 = arith.constant 0 : index
    %c0_28 = arith.constant 0 : index
    %65 = vector.load %arg5[%c0_27, %c0_28] : memref<448x64xbf16, #tpu.memory_space<vmem>>, vector<128x64xbf16>
    %66 = arith.truncf %56 : vector<8x128xf32> to vector<8x128xbf16>
    %cst_29 = arith.constant dense<0.000000e+00> : vector<8x64xf32>
    %67 = tpu.matmul %66, %65, %cst_29 {dimension_numbers = #tpu.dot_dimension_numbers<[1], [0], [0], [1], [0, 0, 1, 1], [], []>} : vector<8x128xbf16>, vector<128x64xbf16>, vector<8x64xf32> -> vector<8x64xf32>
    %68 = vector.extract_strided_slice %2 {offsets = [2, 0], sizes = [1, 64], strides = [1, 1]} : vector<8x256xf32> to vector<1x64xf32>
    %69 = vector.broadcast %68 : vector<1x64xf32> to vector<8x64xf32>
    %70 = arith.addf %67, %69 : vector<8x64xf32>
    %cst_30 = arith.constant 0.000000e+00 : f32
    %71 = vector.broadcast %cst_30 : f32 to vector<8x64xf32>
    %72 = arith.maximumf %70, %71 : vector<8x64xf32>
    %c128_31 = arith.constant 128 : index
    %c0_32 = arith.constant 0 : index
    %73 = vector.load %arg5[%c128_31, %c0_32] : memref<448x64xbf16, #tpu.memory_space<vmem>>, vector<128x64xbf16>
    %74 = arith.truncf %64 : vector<8x128xf32> to vector<8x128xbf16>
    %cst_33 = arith.constant dense<0.000000e+00> : vector<8x64xf32>
    %75 = tpu.matmul %74, %73, %cst_33 {dimension_numbers = #tpu.dot_dimension_numbers<[1], [0], [0], [1], [0, 0, 1, 1], [], []>} : vector<8x128xbf16>, vector<128x64xbf16>, vector<8x64xf32> -> vector<8x64xf32>
    %76 = vector.extract_strided_slice %2 {offsets = [6, 0], sizes = [1, 64], strides = [1, 1]} : vector<8x256xf32> to vector<1x64xf32>
    %77 = vector.broadcast %76 : vector<1x64xf32> to vector<8x64xf32>
    %78 = arith.addf %75, %77 : vector<8x64xf32>
    %cst_34 = arith.constant 0.000000e+00 : f32
    %79 = vector.broadcast %cst_34 : f32 to vector<8x64xf32>
    %80 = arith.maximumf %78, %79 : vector<8x64xf32>
    %c256_35 = arith.constant 256 : index
    %c0_36 = arith.constant 0 : index
    %81 = vector.load %arg5[%c256_35, %c0_36] : memref<448x64xbf16, #tpu.memory_space<vmem>>, vector<64x16xbf16>
    %82 = arith.truncf %72 : vector<8x64xf32> to vector<8x64xbf16>
    %cst_37 = arith.constant dense<0.000000e+00> : vector<8x16xf32>
    %83 = tpu.matmul %82, %81, %cst_37 {dimension_numbers = #tpu.dot_dimension_numbers<[1], [0], [0], [1], [0, 0, 1, 1], [], []>} : vector<8x64xbf16>, vector<64x16xbf16>, vector<8x16xf32> -> vector<8x16xf32>
    %84 = vector.extract_strided_slice %2 {offsets = [3, 0], sizes = [1, 16], strides = [1, 1]} : vector<8x256xf32> to vector<1x16xf32>
    %85 = vector.broadcast %84 : vector<1x16xf32> to vector<8x16xf32>
    %86 = arith.addf %83, %85 : vector<8x16xf32>
    %cst_38 = arith.constant 0.000000e+00 : f32
    %87 = vector.broadcast %cst_38 : f32 to vector<8x16xf32>
    %88 = arith.maximumf %86, %87 : vector<8x16xf32>
    %c320 = arith.constant 320 : index
    %c0_39 = arith.constant 0 : index
    %89 = vector.load %arg5[%c320, %c0_39] : memref<448x64xbf16, #tpu.memory_space<vmem>>, vector<64x16xbf16>
    %90 = arith.truncf %80 : vector<8x64xf32> to vector<8x64xbf16>
    %cst_40 = arith.constant dense<0.000000e+00> : vector<8x16xf32>
    %91 = tpu.matmul %90, %89, %cst_40 {dimension_numbers = #tpu.dot_dimension_numbers<[1], [0], [0], [1], [0, 0, 1, 1], [], []>} : vector<8x64xbf16>, vector<64x16xbf16>, vector<8x16xf32> -> vector<8x16xf32>
    %92 = vector.extract_strided_slice %2 {offsets = [7, 0], sizes = [1, 16], strides = [1, 1]} : vector<8x256xf32> to vector<1x16xf32>
    %93 = vector.broadcast %92 : vector<1x16xf32> to vector<8x16xf32>
    %94 = arith.addf %91, %93 : vector<8x16xf32>
    %cst_41 = arith.constant 0.000000e+00 : f32
    %95 = vector.broadcast %cst_41 : f32 to vector<8x16xf32>
    %96 = arith.maximumf %94, %95 : vector<8x16xf32>
    %c0_42 = arith.constant 0 : index
    %c0_43 = arith.constant 0 : index
    %97 = vector.load %arg7[%c0_42, %c0_43] : memref<1536x256xbf16, #tpu.memory_space<vmem>>, vector<768x256xbf16>
    %98 = arith.truncf %31 : vector<8x768xf32> to vector<8x768xbf16>
    %cst_44 = arith.constant dense<0.000000e+00> : vector<8x256xf32>
    %99 = tpu.matmul %98, %97, %cst_44 {dimension_numbers = #tpu.dot_dimension_numbers<[1], [0], [0], [1], [0, 0, 1, 1], [], []>} : vector<8x768xbf16>, vector<768x256xbf16>, vector<8x256xf32> -> vector<8x256xf32>
    %c768 = arith.constant 768 : index
    %c0_45 = arith.constant 0 : index
    %100 = vector.load %arg7[%c768, %c0_45] : memref<1536x256xbf16, #tpu.memory_space<vmem>>, vector<768x256xbf16>
    %101 = arith.truncf %32 : vector<8x768xf32> to vector<8x768xbf16>
    %cst_46 = arith.constant dense<0.000000e+00> : vector<8x256xf32>
    %102 = tpu.matmul %101, %100, %cst_46 {dimension_numbers = #tpu.dot_dimension_numbers<[1], [0], [0], [1], [0, 0, 1, 1], [], []>} : vector<8x768xbf16>, vector<768x256xbf16>, vector<8x256xf32> -> vector<8x256xf32>
    %103 = arith.addf %99, %102 : vector<8x256xf32>
    %c0_47 = arith.constant 0 : index
    %c0_48 = arith.constant 0 : index
    %104 = vector.load %arg8[%c0_47, %c0_48] : memref<32x256xbf16, #tpu.memory_space<vmem>>, vector<16x256xbf16>
    %105 = arith.truncf %88 : vector<8x16xf32> to vector<8x16xbf16>
    %cst_49 = arith.constant dense<0.000000e+00> : vector<8x256xf32>
    %106 = tpu.matmul %105, %104, %cst_49 {dimension_numbers = #tpu.dot_dimension_numbers<[1], [0], [0], [1], [0, 0, 1, 1], [], []>} : vector<8x16xbf16>, vector<16x256xbf16>, vector<8x256xf32> -> vector<8x256xf32>
    %107 = arith.addf %103, %106 : vector<8x256xf32>
    %c16 = arith.constant 16 : index
    %c0_50 = arith.constant 0 : index
    %108 = vector.load %arg8[%c16, %c0_50] : memref<32x256xbf16, #tpu.memory_space<vmem>>, vector<16x256xbf16>
    %109 = arith.truncf %96 : vector<8x16xf32> to vector<8x16xbf16>
    %cst_51 = arith.constant dense<0.000000e+00> : vector<8x256xf32>
    %110 = tpu.matmul %109, %108, %cst_51 {dimension_numbers = #tpu.dot_dimension_numbers<[1], [0], [0], [1], [0, 0, 1, 1], [], []>} : vector<8x16xbf16>, vector<16x256xbf16>, vector<8x256xf32> -> vector<8x256xf32>
    %111 = arith.addf %107, %110 : vector<8x256xf32>
    %112 = vector.extract_strided_slice %3 {offsets = [0, 0], sizes = [1, 256], strides = [1, 1]} : vector<4x256xf32> to vector<1x256xf32>
    %113 = vector.broadcast %112 : vector<1x256xf32> to vector<8x256xf32>
    %114 = arith.addf %111, %113 : vector<8x256xf32>
    %cst_52 = arith.constant 0.000000e+00 : f32
    %115 = vector.broadcast %cst_52 : f32 to vector<8x256xf32>
    %116 = arith.maximumf %114, %115 : vector<8x256xf32>
    %c0_53 = arith.constant 0 : index
    %c0_54 = arith.constant 0 : index
    %117 = vector.load %arg9[%c0_53, %c0_54] : memref<256x64xbf16, #tpu.memory_space<vmem>>, vector<256x64xbf16>
    %118 = arith.truncf %116 : vector<8x256xf32> to vector<8x256xbf16>
    %cst_55 = arith.constant dense<0.000000e+00> : vector<8x64xf32>
    %119 = tpu.matmul %118, %117, %cst_55 {dimension_numbers = #tpu.dot_dimension_numbers<[1], [0], [0], [1], [0, 0, 1, 1], [], []>} : vector<8x256xbf16>, vector<256x64xbf16>, vector<8x64xf32> -> vector<8x64xf32>
    %120 = vector.extract_strided_slice %3 {offsets = [1, 0], sizes = [1, 64], strides = [1, 1]} : vector<4x256xf32> to vector<1x64xf32>
    %121 = vector.broadcast %120 : vector<1x64xf32> to vector<8x64xf32>
    %122 = arith.addf %119, %121 : vector<8x64xf32>
    %cst_56 = arith.constant 0.000000e+00 : f32
    %123 = vector.broadcast %cst_56 : f32 to vector<8x64xf32>
    %124 = arith.maximumf %122, %123 : vector<8x64xf32>
    %c384 = arith.constant 384 : index
    %c0_57 = arith.constant 0 : index
    %125 = vector.load %arg5[%c384, %c0_57] : memref<448x64xbf16, #tpu.memory_space<vmem>>, vector<64x16xbf16>
    %126 = arith.truncf %124 : vector<8x64xf32> to vector<8x64xbf16>
    %cst_58 = arith.constant dense<0.000000e+00> : vector<8x16xf32>
    %127 = tpu.matmul %126, %125, %cst_58 {dimension_numbers = #tpu.dot_dimension_numbers<[1], [0], [0], [1], [0, 0, 1, 1], [], []>} : vector<8x64xbf16>, vector<64x16xbf16>, vector<8x16xf32> -> vector<8x16xf32>
    %128 = vector.extract_strided_slice %3 {offsets = [2, 0], sizes = [1, 16], strides = [1, 1]} : vector<4x256xf32> to vector<1x16xf32>
    %129 = vector.broadcast %128 : vector<1x16xf32> to vector<8x16xf32>
    %130 = arith.addf %127, %129 : vector<8x16xf32>
    %131 = arith.negf %130 : vector<8x16xf32>
    %132 = math.exp %131 : vector<8x16xf32>
    %cst_59 = arith.constant 1.000000e+00 : f32
    %133 = vector.broadcast %cst_59 : f32 to vector<8x16xf32>
    %134 = arith.addf %133, %132 : vector<8x16xf32>
    %135 = arith.divf %133, %134 : vector<8x16xf32>
    %c0_60 = arith.constant 0 : index
    %c0_61 = arith.constant 0 : index
    %136 = vector.load %arg10[%c0_60, %c0_61] : memref<16x4xf32, #tpu.memory_space<vmem>>, vector<16x4xf32>
    %cst_62 = arith.constant dense<0.000000e+00> : vector<8x4xf32>
    %137 = tpu.matmul %135, %136, %cst_62 {dimension_numbers = #tpu.dot_dimension_numbers<[1], [0], [0], [1], [0, 0, 1, 1], [], []>} : vector<8x16xf32>, vector<16x4xf32>, vector<8x4xf32> -> vector<8x4xf32>
    %138 = vector.extract_strided_slice %3 {offsets = [3, 0], sizes = [1, 4], strides = [1, 1]} : vector<4x256xf32> to vector<1x4xf32>
    %139 = vector.broadcast %138 : vector<1x4xf32> to vector<8x4xf32>
    %140 = arith.addf %137, %139 : vector<8x4xf32>
    %cst_63 = arith.constant dense<0xFF800000> : vector<8xf32>
    %141 = vector.multi_reduction <maximumf>, %140, %cst_63 [1] : vector<8x4xf32> to vector<8xf32>
    %142 = vector.shape_cast %141 : vector<8xf32> to vector<8x1xf32>
    %143 = vector.broadcast %142 : vector<8x1xf32> to vector<8x4xf32>
    %144 = arith.subf %140, %143 : vector<8x4xf32>
    %145 = math.exp %144 : vector<8x4xf32>
    %cst_64 = arith.constant dense<0.000000e+00> : vector<8xf32>
    %146 = vector.multi_reduction <add>, %145, %cst_64 [1] : vector<8x4xf32> to vector<8xf32>
    %147 = vector.shape_cast %146 : vector<8xf32> to vector<8x1xf32>
    %148 = vector.broadcast %147 : vector<8x1xf32> to vector<8x4xf32>
    %149 = arith.divf %145, %148 : vector<8x4xf32>
    %c0_65 = arith.constant 0 : index
    %c0_66 = arith.constant 0 : index
    %150 = vector.load %arg12[%c0_65, %c0_66] : memref<8x4xf32, #tpu.memory_space<vmem>>, vector<8x4xf32>
    tpu.vector_store %arg12[%c0_65, %c0_66], %149 {strides = array<i32>} : memref<8x4xf32, #tpu.memory_space<vmem>>, vector<8x4xf32>,
    return
  }
}

</mosaic_0001>

<llo_original>
// kernel: tpu_custom_call.1
$region0: #{tpu_custom_call.1}
  #allocation0 [shape = 'u32[]', space=smem, size = 0x4, offset = 0x4, fixed_abs, tag = 'smem constant byte address 0x4 - core index']
  #allocation1 [shape = 'u32[144,128]{1,0:T(1,128)}', space=vmem, size = 0x12000, scoped, tag = 'internal scratch']
  %s0 = inlined_call_operand.hbm [shape: bf16[16,768], index: 0, kind: input, shape index: {}]
  %s1 = inlined_call_operand.hbm [shape: bf16[768,3072], index: 1, kind: input, shape index: {}]
  %s2 = inlined_call_operand.hbm [shape: f32[2,768], index: 2, kind: input, shape index: {}]
  %s3 = inlined_call_operand.hbm [shape: bf16[768,512], index: 3, kind: input, shape index: {}]
  %s4 = inlined_call_operand.hbm [shape: bf16[256,256], index: 4, kind: input, shape index: {}]
  %s5 = inlined_call_operand.vmem [shape: bf16[448,64], index: 5, kind: input, shape index: {}]
  %s6 = inlined_call_operand.hbm [shape: f32[8,256], index: 6, kind: input, shape index: {}]
  %s7 = inlined_call_operand.hbm [shape: bf16[1536,256], index: 7, kind: input, shape index: {}]
  %s8 = inlined_call_operand.hbm [shape: bf16[32,256], index: 8, kind: input, shape index: {}]
  %s9 = inlined_call_operand.vmem [shape: bf16[256,64], index: 9, kind: input, shape index: {}]
  %s10 = inlined_call_operand.vmem [shape: f32[16,4], index: 10, kind: input, shape index: {}]
  %s11 = inlined_call_operand.hbm [shape: f32[4,256], index: 11, kind: input, shape index: {}]
  %s12 = inlined_call_operand.vmem [shape: f32[8,4], index: 12, kind: output, shape index: {}]
  %s13 = sld [smem:[#allocation0]]
  $region94: #{tpu_custom_call.1} parent=0
    _
  %s15 = ssub.s32 1, %s13
  %s16 = scalar_select 0, %s15, %s13
  $region1: #{tpu_custom_call.1} parent=0
    #allocation2 [shape = 'u8[24576]{0}', space=vmem, size = 0x6000, scoped, tag = 'input window, operand 0, single buffered']
    #allocation3 [shape = 's32[1]{0}', space=sflag, size = 0x4, scoped, tag = 'scoped memory for tpu_custom_call.1']
    #allocation4 [shape = 'u8[4718592]{0}', space=vmem, size = 0x480000, scoped, tag = 'input window, operand 1, single buffered']
    #allocation5 [shape = 's32[1]{0}', space=sflag, size = 0x4, scoped, tag = 'scoped memory for tpu_custom_call.1']
    #allocation6 [shape = 'u8[6144]{0}', space=vmem, size = 0x1800, scoped, tag = 'input window, operand 2, single buffered']
    #allocation7 [shape = 'u8[786432]{0}', space=vmem, size = 0xc0000, scoped, tag = 'input window, operand 3, single buffered']
    #allocation8 [shape = 's32[1]{0}', space=sflag, size = 0x4, scoped, tag = 'scoped memory for tpu_custom_call.1']
    #allocation9 [shape = 'u8[131072]{0}', space=vmem, size = 0x20000, scoped, tag = 'input window, operand 4, single buffered']
    #allocation10 [shape = 'u8[8192]{0}', space=vmem, size = 0x2000, scoped, tag = 'input window, operand 6, single buffered']
    #allocation11 [shape = 's32[1]{0}', space=sflag, size = 0x4, scoped, tag = 'scoped memory for tpu_custom_call.1']
    #allocation12 [shape = 'u8[786432]{0}', space=vmem, size = 0xc0000, scoped, tag = 'input window, operand 7, single buffered']
    #allocation13 [shape = 'u8[16384]{0}', space=vmem, size = 0x4000, scoped, tag = 'input window, operand 8, single buffered']
    #allocation14 [shape = 's32[1]{0}', space=sflag, size = 0x4, scoped, tag = 'scoped memory for tpu_custom_call.1']
    #allocation15 [shape = 'u8[4096]{0}', space=vmem, size = 0x1000, scoped, tag = 'input window, operand 11, single buffered']
    %17 = vsyncpa [#allocation3], 0
    %18 = vsyncpa [#allocation5], 0
    %19 = vsyncpa [#allocation8], 0
    %20 = vsyncpa [#allocation11], 0
    %21 = vsyncpa [#allocation14], 0
    // Predicated region
    $region2: #{tpu_custom_call.1} parent=1 // pred_check
      _
    $region3: #{tpu_custom_call.1} parent=1 // pred_check_branch
      %23 = sbr.rel (0) target = $region5
    $region4: #{tpu_custom_call.1} parent=1 // pred_region
      %s25 = ssub.s32 768, 768
      %26 = vsyncadd [#allocation3], %s25
      %s27 = sshll.u32 [#allocation2], 4
      %s28 = int_to_ptr.vmem [resolvable:$true] %s27
      %33 = dma.hbm_to_vmem [thread:$0]  %s0, 768, %s28, [#allocation3], 384, 384, 24
    $region5: #{tpu_custom_call.1} parent=1 // pred_fallthru
      _
    // Predicated region
    $region6: #{tpu_custom_call.1} parent=1 // pred_check
      _
    $region7: #{tpu_custom_call.1} parent=1 // pred_check_branch
      %35 = sbr.rel (0) target = $region9
    $region8: #{tpu_custom_call.1} parent=1 // pred_region
      %s37 = ssub.s32 147456, 147456
      %38 = vsyncadd [#allocation5], %s37
      %s39 = sshll.u32 [#allocation4], 4
      %s40 = int_to_ptr.vmem [resolvable:$true] %s39
      %45 = dma.hbm_to_vmem [thread:$0]  %s1, 147456, %s40, [#allocation5], 1536, 1536, 96
    $region9: #{tpu_custom_call.1} parent=1 // pred_fallthru
      _
    // Predicated region
    $region10: #{tpu_custom_call.1} parent=1 // pred_check
      _
    $region11: #{tpu_custom_call.1} parent=1 // pred_check_branch
      %47 = sbr.rel (0) target = $region13
    $region12: #{tpu_custom_call.1} parent=1 // pred_region
      %s49 = ssub.s32 192, 192
      %50 = vsyncadd [#allocation5], %s49
      %s52 = sshll.u32 [#allocation6], 4
      %s53 = int_to_ptr.vmem [resolvable:$true] %s52
      %55 = dma.hbm_to_vmem [thread:$0]  %s2, 192, %s53, [#allocation5]
    $region13: #{tpu_custom_call.1} parent=1 // pred_fallthru
      _
    // Predicated region
    $region14: #{tpu_custom_call.1} parent=1 // pred_check
      _
    $region15: #{tpu_custom_call.1} parent=1 // pred_check_branch
      %57 = sbr.rel (0) target = $region17
    $region16: #{tpu_custom_call.1} parent=1 // pred_region
      %s59 = ssub.s32 24576, 24576
      %60 = vsyncadd [#allocation8], %s59
      %s61 = sshll.u32 [#allocation7], 4
      %s62 = int_to_ptr.vmem [resolvable:$true] %s61
      %67 = dma.hbm_to_vmem [thread:$0]  %s3, 24576, %s62, [#allocation8], 256, 256, 16
    $region17: #{tpu_custom_call.1} parent=1 // pred_fallthru
      _
    // Predicated region
    $region18: #{tpu_custom_call.1} parent=1 // pred_check
      _
    $region19: #{tpu_custom_call.1} parent=1 // pred_check_branch
      %69 = sbr.rel (0) target = $region21
    $region20: #{tpu_custom_call.1} parent=1 // pred_region
      %s71 = ssub.s32 4096, 4096
      %72 = vsyncadd [#allocation8], %s71
      %s73 = sshll.u32 [#allocation9], 4
      %s74 = int_to_ptr.vmem [resolvable:$true] %s73
      %79 = dma.hbm_to_vmem [thread:$0]  %s4, 4096, %s74, [#allocation8], 128, 128, 8
    $region21: #{tpu_custom_call.1} parent=1 // pred_fallthru
      _
    // Predicated region
    $region22: #{tpu_custom_call.1} parent=1 // pred_check
      _
    $region23: #{tpu_custom_call.1} parent=1 // pred_check_branch
      %81 = sbr.rel (0) target = $region25
    $region24: #{tpu_custom_call.1} parent=1 // pred_region
      _
    $region25: #{tpu_custom_call.1} parent=1 // pred_fallthru
      _
    // Predicated region
    $region26: #{tpu_custom_call.1} parent=1 // pred_check
      _
    $region27: #{tpu_custom_call.1} parent=1 // pred_check_branch
      %83 = sbr.rel (0) target = $region29
    $region28: #{tpu_custom_call.1} parent=1 // pred_region
      %s85 = ssub.s32 256, 256
      %86 = vsyncadd [#allocation11], %s85
      %s88 = sshll.u32 [#allocation10], 4
      %s89 = int_to_ptr.vmem [resolvable:$true] %s88
      %91 = dma.hbm_to_vmem [thread:$0]  %s6, 256, %s89, [#allocation11]
    $region29: #{tpu_custom_call.1} parent=1 // pred_fallthru
      _
    // Predicated region
    $region30: #{tpu_custom_call.1} parent=1 // pred_check
      _
    $region31: #{tpu_custom_call.1} parent=1 // pred_check_branch
      %93 = sbr.rel (0) target = $region33
    $region32: #{tpu_custom_call.1} parent=1 // pred_region
      %s95 = ssub.s32 24576, 24576
      %96 = vsyncadd [#allocation11], %s95
      %s97 = sshll.u32 [#allocation12], 4
      %s98 = int_to_ptr.vmem [resolvable:$true] %s97
      %103 = dma.hbm_to_vmem [thread:$0]  %s7, 24576, %s98, [#allocation11], 128, 128, 8
    $region33: #{tpu_custom_call.1} parent=1 // pred_fallthru
      _
    // Predicated region
    $region34: #{tpu_custom_call.1} parent=1 // pred_check
      _
    $region35: #{tpu_custom_call.1} parent=1 // pred_check_branch
      %105 = sbr.rel (0) target = $region37
    $region36: #{tpu_custom_call.1} parent=1 // pred_region
      %s107 = ssub.s32 512, 512
      %108 = vsyncadd [#allocation14], %s107
      %s109 = sshll.u32 [#allocation13], 4
      %s110 = int_to_ptr.vmem [resolvable:$true] %s109
      %115 = dma.hbm_to_vmem [thread:$0]  %s8, 512, %s110, [#allocation14], 128, 128, 8
    $region37: #{tpu_custom_call.1} parent=1 // pred_fallthru
      _
    // Predicated region
    $region38: #{tpu_custom_call.1} parent=1 // pred_check
      _
    $region39: #{tpu_custom_call.1} parent=1 // pred_check_branch
      %117 = sbr.rel (0) target = $region41
    $region40: #{tpu_custom_call.1} parent=1 // pred_region
      _
    $region41: #{tpu_custom_call.1} parent=1 // pred_fallthru
      _
    // Predicated region
    $region42: #{tpu_custom_call.1} parent=1 // pred_check
      _
    $region43: #{tpu_custom_call.1} parent=1 // pred_check_branch
      %119 = sbr.rel (0) target = $region45
    $region44: #{tpu_custom_call.1} parent=1 // pred_region
      _
    $region45: #{tpu_custom_call.1} parent=1 // pred_fallthru
      _
    // Predicated region
    $region46: #{tpu_custom_call.1} parent=1 // pred_check
      _
    $region47: #{tpu_custom_call.1} parent=1 // pred_check_branch
      %121 = sbr.rel (0) target = $region49
    $region48: #{tpu_custom_call.1} parent=1 // pred_region
      %s123 = ssub.s32 128, 128
      %124 = vsyncadd [#allocation14], %s123
      %s126 = sshll.u32 [#allocation15], 4
      %s127 = int_to_ptr.vmem [resolvable:$true] %s126
      %129 = dma.hbm_to_vmem [thread:$0]  %s11, 128, %s127, [#allocation14]
    $region49: #{tpu_custom_call.1} parent=1 // pred_fallthru
      _
    // Predicated region
    $region50: #{tpu_custom_call.1} parent=1 // pred_check
      _
    $region51: #{tpu_custom_call.1} parent=1 // pred_check_branch
      %131 = sbr.rel (0) target = $region53
    $region52: #{tpu_custom_call.1} parent=1 // pred_region
      %132 = dma.done [#allocation3], 768
    $region53: #{tpu_custom_call.1} parent=1 // pred_fallthru
      _
    // Predicated region
    $region54: #{tpu_custom_call.1} parent=1 // pred_check
      _
    $region55: #{tpu_custom_call.1} parent=1 // pred_check_branch
      %134 = sbr.rel (0) target = $region57
    $region56: #{tpu_custom_call.1} parent=1 // pred_region
      %135 = dma.done [#allocation5], 147456
    $region57: #{tpu_custom_call.1} parent=1 // pred_fallthru
      _
    // Predicated region
    $region58: #{tpu_custom_call.1} parent=1 // pred_check
      _
    $region59: #{tpu_custom_call.1} parent=1 // pred_check_branch
      %137 = sbr.rel (0) target = $region61
    $region60: #{tpu_custom_call.1} parent=1 // pred_region
      %138 = dma.done [#allocation5], 192
    $region61: #{tpu_custom_call.1} parent=1 // pred_fallthru
      _
    // Predicated region
    $region62: #{tpu_custom_call.1} parent=1 // pred_check
      _
    $region63: #{tpu_custom_call.1} parent=1 // pred_check_branch
      %140 = sbr.rel (0) target = $region65
    $region64: #{tpu_custom_call.1} parent=1 // pred_region
      %141 = dma.done [#allocation8], 24576
    $region65: #{tpu_custom_call.1} parent=1 // pred_fallthru
      _
    // Predicated region
    $region66: #{tpu_custom_call.1} parent=1 // pred_check
      _
    $region67: #{tpu_custom_call.1} parent=1 // pred_check_branch
      %143 = sbr.rel (0) target = $region69
    $region68: #{tpu_custom_call.1} parent=1 // pred_region
      %144 = dma.done [#allocation8], 4096
    $region69: #{tpu_custom_call.1} parent=1 // pred_fallthru
      _
    // Predicated region
    $region70: #{tpu_custom_call.1} parent=1 // pred_check
      _
    $region71: #{tpu_custom_call.1} parent=1 // pred_check_branch
      %146 = sbr.rel (0) target = $region73
    $region72: #{tpu_custom_call.1} parent=1 // pred_region
      %147 = dma.done [#allocation11], 256
    $region73: #{tpu_custom_call.1} parent=1 // pred_fallthru
      _
    // Predicated region
    $region74: #{tpu_custom_call.1} parent=1 // pred_check
      _
    $region75: #{tpu_custom_call.1} parent=1 // pred_check_branch
      %149 = sbr.rel (0) target = $region77
    $region76: #{tpu_custom_call.1} parent=1 // pred_region
      %150 = dma.done [#allocation11], 24576
    $region77: #{tpu_custom_call.1} parent=1 // pred_fallthru
      _
    // Predicated region
    $region78: #{tpu_custom_call.1} parent=1 // pred_check
      _
    $region79: #{tpu_custom_call.1} parent=1 // pred_check_branch
      %152 = sbr.rel (0) target = $region81
    $region80: #{tpu_custom_call.1} parent=1 // pred_region
      %153 = dma.done [#allocation14], 512
    $region81: #{tpu_custom_call.1} parent=1 // pred_fallthru
      _
    // Predicated region
    $region82: #{tpu_custom_call.1} parent=1 // pred_check
      _
    $region83: #{tpu_custom_call.1} parent=1 // pred_check_branch
      %155 = sbr.rel (0) target = $region85
    $region84: #{tpu_custom_call.1} parent=1 // pred_region
      %156 = dma.done [#allocation14], 128
    $region85: #{tpu_custom_call.1} parent=1 // pred_fallthru
      _
    %v158 = vld [vmem:[#allocation2] sm:$0xff]
    %v159 = vld [vmem:[#allocation2 + $0x8] sm:$0xff]
    %v160 = vld [vmem:[#allocation2 + $0x10] sm:$0xff]
    %v161 = vld [vmem:[#allocation2 + $0x18] sm:$0xff]
    %v162 = vld [vmem:[#allocation2 + $0x20] sm:$0xff]
    %v163 = vld [vmem:[#allocation2 + $0x28] sm:$0xff]
    %v164 = vld [vmem:[#allocation6] sm:$0xff]
    %v165 = vld [vmem:[#allocation6 + $0x8] sm:$0xf]
    %v166 = vld [vmem:[#allocation10] sm:$0xff]
    %v167 = vld [vmem:[#allocation10 + $0x8] sm:$0xff]
    %v168 = vld [vmem:[#allocation15] sm:$0xff]
    %v169 = vld [vmem:[#allocation4] sm:$0xff]
    %v170 = vld [vmem:[#allocation4 + $0x8] sm:$0xff]
    %v171 = vld [vmem:[#allocation4 + $0x10] sm:$0xff]
    %v172 = vld [vmem:[#allocation4 + $0x18] sm:$0xff]
    %v173 = vld [vmem:[#allocation4 + $0x20] sm:$0xff]
    %v174 = vld [vmem:[#allocation4 + $0x28] sm:$0xff]
    %v175 = vld [vmem:[#allocation4 + $0x60] sm:$0xff]
    %v176 = vld [vmem:[#allocation4 + $0x68] sm:$0xff]
    %v177 = vld [vmem:[#allocation4 + $0x70] sm:$0xff]
    %v178 = vld [vmem:[#allocation4 + $0x78] sm:$0xff]
    %v179 = vld [vmem:[#allocation4 + $0x80] sm:$0xff]
    %v180 = vld [vmem:[#allocation4 + $0x88] sm:$0xff]
    %v181 = vld [vmem:[#allocation4 + $0xc0] sm:$0xff]
    %v182 = vld [vmem:[#allocation4 + $0xc8] sm:$0xff]
    %v183 = vld [vmem:[#allocation4 + $0xd0] sm:$0xff]
    %v184 = vld [vmem:[#allocation4 + $0xd8] sm:$0xff]
    %v185 = vld [vmem:[#allocation4 + $0xe0] sm:$0xff]
    %v186 = vld [vmem:[#allocation4 + $0xe8] sm:$0xff]
    %v187 = vld [vmem:[#allocation4 + $0x120] sm:$0xff]
    %v188 = vld [vmem:[#allocation4 + $0x128] sm:$0xff]
    %v189 = vld [vmem:[#allocation4 + $0x130] sm:$0xff]
    %v190 = vld [vmem:[#allocation4 + $0x138] sm:$0xff]
    %v191 = vld [vmem:[#allocation4 + $0x140] sm:$0xff]
    %v192 = vld [vmem:[#allocation4 + $0x148] sm:$0xff]
    %v193 = vld [vmem:[#allocation4 + $0x180] sm:$0xff]
    %v194 = vld [vmem:[#allocation4 + $0x188] sm:$0xff]
    %v195 = vld [vmem:[#allocation4 + $0x190] sm:$0xff]
    %v196 = vld [vmem:[#allocation4 + $0x198] sm:$0xff]
    %v197 = vld [vmem:[#allocation4 + $0x1a0] sm:$0xff]
    %v198 = vld [vmem:[#allocation4 + $0x1a8] sm:$0xff]
    %v199 = vld [vmem:[#allocation4 + $0x1e0] sm:$0xff]
    %v200 = vld [vmem:[#allocation4 + $0x1e8] sm:$0xff]
    %v201 = vld [vmem:[#allocation4 + $0x1f0] sm:$0xff]
    %v202 = vld [vmem:[#allocation4 + $0x1f8] sm:$0xff]
    %v203 = vld [vmem:[#allocation4 + $0x200] sm:$0xff]
    %v204 = vld [vmem:[#allocation4 + $0x208] sm:$0xff]
    %v205 = vld [vmem:[#allocation4 + $0x240] sm:$0xff]
    %v206 = vld [vmem:[#allocation4 + $0x248] sm:$0xff]
    %v207 = vld [vmem:[#allocation4 + $0x250] sm:$0xff]
    %v208 = vld [vmem:[#allocation4 + $0x258] sm:$0xff]
    %v209 = vld [vmem:[#allocation4 + $0x260] sm:$0xff]
    %v210 = vld [vmem:[#allocation4 + $0x268] sm:$0xff]
    %v211 = vld [vmem:[#allocation4 + $0x2a0] sm:$0xff]
    %v212 = vld [vmem:[#allocation4 + $0x2a8] sm:$0xff]
    %v213 = vld [vmem:[#allocation4 + $0x2b0] sm:$0xff]
    %v214 = vld [vmem:[#allocation4 + $0x2b8] sm:$0xff]
    %v215 = vld [vmem:[#allocation4 + $0x2c0] sm:$0xff]
    %v216 = vld [vmem:[#allocation4 + $0x2c8] sm:$0xff]
    %v217 = vld [vmem:[#allocation4 + $0x300] sm:$0xff]
    %v218 = vld [vmem:[#allocation4 + $0x308] sm:$0xff]
    %v219 = vld [vmem:[#allocation4 + $0x310] sm:$0xff]
    %v220 = vld [vmem:[#allocation4 + $0x318] sm:$0xff]
    %v221 = vld [vmem:[#allocation4 + $0x320] sm:$0xff]
    %v222 = vld [vmem:[#allocation4 + $0x328] sm:$0xff]
    %v223 = vld [vmem:[#allocation4 + $0x360] sm:$0xff]
    %v224 = vld [vmem:[#allocation4 + $0x368] sm:$0xff]
    %v225 = vld [vmem:[#allocation4 + $0x370] sm:$0xff]
    %v226 = vld [vmem:[#allocation4 + $0x378] sm:$0xff]
    %v227 = vld [vmem:[#allocation4 + $0x380] sm:$0xff]
    %v228 = vld [vmem:[#allocation4 + $0x388] sm:$0xff]
    %v229 = vld [vmem:[#allocation4 + $0x3c0] sm:$0xff]
    %v230 = vld [vmem:[#allocation4 + $0x3c8] sm:$0xff]
    %v231 = vld [vmem:[#allocation4 + $0x3d0] sm:$0xff]
    %v232 = vld [vmem:[#allocation4 + $0x3d8] sm:$0xff]
    %v233 = vld [vmem:[#allocation4 + $0x3e0] sm:$0xff]
    %v234 = vld [vmem:[#allocation4 + $0x3e8] sm:$0xff]
    %v235 = vld [vmem:[#allocation4 + $0x420] sm:$0xff]
    %v236 = vld [vmem:[#allocation4 + $0x428] sm:$0xff]
    %v237 = vld [vmem:[#allocation4 + $0x430] sm:$0xff]
    %v238 = vld [vmem:[#allocation4 + $0x438] sm:$0xff]
    %v239 = vld [vmem:[#allocation4 + $0x440] sm:$0xff]
    %v240 = vld [vmem:[#allocation4 + $0x448] sm:$0xff]
    %v241 = vld [vmem:[#allocation4 + $0x480] sm:$0xff]
    %v242 = vld [vmem:[#allocation4 + $0x488] sm:$0xff]
    %v243 = vld [vmem:[#allocation4 + $0x490] sm:$0xff]
    %v244 = vld [vmem:[#allocation4 + $0x498] sm:$0xff]
    %v245 = vld [vmem:[#allocation4 + $0x4a0] sm:$0xff]
    %v246 = vld [vmem:[#allocation4 + $0x4a8] sm:$0xff]
    %v247 = vld [vmem:[#allocation4 + $0x4e0] sm:$0xff]
    %v248 = vld [vmem:[#allocation4 + $0x4e8] sm:$0xff]
    %v249 = vld [vmem:[#allocation4 + $0x4f0] sm:$0xff]
    %v250 = vld [vmem:[#allocation4 + $0x4f8] sm:$0xff]
    %v251 = vld [vmem:[#allocation4 + $0x500] sm:$0xff]
    %v252 = vld [vmem:[#allocation4 + $0x508] sm:$0xff]
    %v253 = vld [vmem:[#allocation4 + $0x540] sm:$0xff]
    %v254 = vld [vmem:[#allocation4 + $0x548] sm:$0xff]
    %v255 = vld [vmem:[#allocation4 + $0x550] sm:$0xff]
    %v256 = vld [vmem:[#allocation4 + $0x558] sm:$0xff]
    %v257 = vld [vmem:[#allocation4 + $0x560] sm:$0xff]
    %v258 = vld [vmem:[#allocation4 + $0x568] sm:$0xff]
    %v259 = vld [vmem:[#allocation4 + $0x5a0] sm:$0xff]
    %v260 = vld [vmem:[#allocation4 + $0x5a8] sm:$0xff]
    %v261 = vld [vmem:[#allocation4 + $0x5b0] sm:$0xff]
    %v262 = vld [vmem:[#allocation4 + $0x5b8] sm:$0xff]
    %v263 = vld [vmem:[#allocation4 + $0x5c0] sm:$0xff]
    %v264 = vld [vmem:[#allocation4 + $0x5c8] sm:$0xff]
    %v265 = vld [vmem:[#allocation4 + $0x600] sm:$0xff]
    %v266 = vld [vmem:[#allocation4 + $0x608] sm:$0xff]
    %v267 = vld [vmem:[#allocation4 + $0x610] sm:$0xff]
    %v268 = vld [vmem:[#allocation4 + $0x618] sm:$0xff]
    %v269 = vld [vmem:[#allocation4 + $0x620] sm:$0xff]
    %v270 = vld [vmem:[#allocation4 + $0x628] sm:$0xff]
    %v271 = vld [vmem:[#allocation4 + $0x660] sm:$0xff]
    %v272 = vld [vmem:[#allocation4 + $0x668] sm:$0xff]
    %v273 = vld [vmem:[#allocation4 + $0x670] sm:$0xff]
    %v274 = vld [vmem:[#allocation4 + $0x678] sm:$0xff]
    %v275 = vld [vmem:[#allocation4 + $0x680] sm:$0xff]
    %v276 = vld [vmem:[#allocation4 + $0x688] sm:$0xff]
    %v277 = vld [vmem:[#allocation4 + $0x6c0] sm:$0xff]
    %v278 = vld [vmem:[#allocation4 + $0x6c8] sm:$0xff]
    %v279 = vld [vmem:[#allocation4 + $0x6d0] sm:$0xff]
    %v280 = vld [vmem:[#allocation4 + $0x6d8] sm:$0xff]
    %v281 = vld [vmem:[#allocation4 + $0x6e0] sm:$0xff]
    %v282 = vld [vmem:[#allocation4 + $0x6e8] sm:$0xff]
    %v283 = vld [vmem:[#allocation4 + $0x720] sm:$0xff]
    %v284 = vld [vmem:[#allocation4 + $0x728] sm:$0xff]
    %v285 = vld [vmem:[#allocation4 + $0x730] sm:$0xff]
    %v286 = vld [vmem:[#allocation4 + $0x738] sm:$0xff]
    %v287 = vld [vmem:[#allocation4 + $0x740] sm:$0xff]
    %v288 = vld [vmem:[#allocation4 + $0x748] sm:$0xff]
    %v289 = vld [vmem:[#allocation4 + $0x780] sm:$0xff]
    %v290 = vld [vmem:[#allocation4 + $0x788] sm:$0xff]
    %v291 = vld [vmem:[#allocation4 + $0x790] sm:$0xff]
    %v292 = vld [vmem:[#allocation4 + $0x798] sm:$0xff]
    %v293 = vld [vmem:[#allocation4 + $0x7a0] sm:$0xff]
    %v294 = vld [vmem:[#allocation4 + $0x7a8] sm:$0xff]
    %v295 = vld [vmem:[#allocation4 + $0x7e0] sm:$0xff]
    %v296 = vld [vmem:[#allocation4 + $0x7e8] sm:$0xff]
    %v297 = vld [vmem:[#allocation4 + $0x7f0] sm:$0xff]
    %v298 = vld [vmem:[#allocation4 + $0x7f8] sm:$0xff]
    %v299 = vld [vmem:[#allocation4 + $0x800] sm:$0xff]
    %v300 = vld [vmem:[#allocation4 + $0x808] sm:$0xff]
    %v301 = vld [vmem:[#allocation4 + $0x840] sm:$0xff]
    %v302 = vld [vmem:[#allocation4 + $0x848] sm:$0xff]
    %v303 = vld [vmem:[#allocation4 + $0x850] sm:$0xff]
    %v304 = vld [vmem:[#allocation4 + $0x858] sm:$0xff]
    %v305 = vld [vmem:[#allocation4 + $0x860] sm:$0xff]
    %v306 = vld [vmem:[#allocation4 + $0x868] sm:$0xff]
    %v307 = vld [vmem:[#allocation4 + $0x8a0] sm:$0xff]
    %v308 = vld [vmem:[#allocation4 + $0x8a8] sm:$0xff]
    %v309 = vld [vmem:[#allocation4 + $0x8b0] sm:$0xff]
    %v310 = vld [vmem:[#allocation4 + $0x8b8] sm:$0xff]
    %v311 = vld [vmem:[#allocation4 + $0x8c0] sm:$0xff]
    %v312 = vld [vmem:[#allocation4 + $0x8c8] sm:$0xff]
    %v313 = vld [vmem:[#allocation4 + $0x900] sm:$0xff]
    %v314 = vld [vmem:[#allocation4 + $0x908] sm:$0xff]
    %v315 = vld [vmem:[#allocation4 + $0x910] sm:$0xff]
    %v316 = vld [vmem:[#allocation4 + $0x918] sm:$0xff]
    %v317 = vld [vmem:[#allocation4 + $0x920] sm:$0xff]
    %v318 = vld [vmem:[#allocation4 + $0x928] sm:$0xff]
    %v319 = vld [vmem:[#allocation4 + $0x960] sm:$0xff]
    %v320 = vld [vmem:[#allocation4 + $0x968] sm:$0xff]
    %v321 = vld [vmem:[#allocation4 + $0x970] sm:$0xff]
    %v322 = vld [vmem:[#allocation4 + $0x978] sm:$0xff]
    %v323 = vld [vmem:[#allocation4 + $0x980] sm:$0xff]
    %v324 = vld [vmem:[#allocation4 + $0x988] sm:$0xff]
    %v325 = vld [vmem:[#allocation4 + $0x9c0] sm:$0xff]
    %v326 = vld [vmem:[#allocation4 + $0x9c8] sm:$0xff]
    %v327 = vld [vmem:[#allocation4 + $0x9d0] sm:$0xff]
    %v328 = vld [vmem:[#allocation4 + $0x9d8] sm:$0xff]
    %v329 = vld [vmem:[#allocation4 + $0x9e0] sm:$0xff]
    %v330 = vld [vmem:[#allocation4 + $0x9e8] sm:$0xff]
    %v331 = vld [vmem:[#allocation4 + $0xa20] sm:$0xff]
    %v332 = vld [vmem:[#allocation4 + $0xa28] sm:$0xff]
    %v333 = vld [vmem:[#allocation4 + $0xa30] sm:$0xff]
    %v334 = vld [vmem:[#allocation4 + $0xa38] sm:$0xff]
    %v335 = vld [vmem:[#allocation4 + $0xa40] sm:$0xff]
    %v336 = vld [vmem:[#allocation4 + $0xa48] sm:$0xff]
    %v337 = vld [vmem:[#allocation4 + $0xa80] sm:$0xff]
    %v338 = vld [vmem:[#allocation4 + $0xa88] sm:$0xff]
    %v339 = vld [vmem:[#allocation4 + $0xa90] sm:$0xff]
    %v340 = vld [vmem:[#allocation4 + $0xa98] sm:$0xff]
    %v341 = vld [vmem:[#allocation4 + $0xaa0] sm:$0xff]
    %v342 = vld [vmem:[#allocation4 + $0xaa8] sm:$0xff]
    %v343 = vld [vmem:[#allocation4 + $0xae0] sm:$0xff]
    %v344 = vld [vmem:[#allocation4 + $0xae8] sm:$0xff]
    %v345 = vld [vmem:[#allocation4 + $0xaf0] sm:$0xff]
    %v346 = vld [vmem:[#allocation4 + $0xaf8] sm:$0xff]
    %v347 = vld [vmem:[#allocation4 + $0xb00] sm:$0xff]
    %v348 = vld [vmem:[#allocation4 + $0xb08] sm:$0xff]
    %v349 = vld [vmem:[#allocation4 + $0xb40] sm:$0xff]
    %v350 = vld [vmem:[#allocation4 + $0xb48] sm:$0xff]
    %v351 = vld [vmem:[#allocation4 + $0xb50] sm:$0xff]
    %v352 = vld [vmem:[#allocation4 + $0xb58] sm:$0xff]
    %v353 = vld [vmem:[#allocation4 + $0xb60] sm:$0xff]
    %v354 = vld [vmem:[#allocation4 + $0xb68] sm:$0xff]
    %v355 = vld [vmem:[#allocation4 + $0xba0] sm:$0xff]
    %v356 = vld [vmem:[#allocation4 + $0xba8] sm:$0xff]
    %v357 = vld [vmem:[#allocation4 + $0xbb0] sm:$0xff]
    %v358 = vld [vmem:[#allocation4 + $0xbb8] sm:$0xff]
    %v359 = vld [vmem:[#allocation4 + $0xbc0] sm:$0xff]
    %v360 = vld [vmem:[#allocation4 + $0xbc8] sm:$0xff]
    %v361 = vld [vmem:[#allocation4 + $0xc00] sm:$0xff]
    %v362 = vld [vmem:[#allocation4 + $0xc08] sm:$0xff]
    %v363 = vld [vmem:[#allocation4 + $0xc10] sm:$0xff]
    %v364 = vld [vmem:[#allocation4 + $0xc18] sm:$0xff]
    %v365 = vld [vmem:[#allocation4 + $0xc20] sm:$0xff]
    %v366 = vld [vmem:[#allocation4 + $0xc28] sm:$0xff]
    %v367 = vld [vmem:[#allocation4 + $0xc60] sm:$0xff]
    %v368 = vld [vmem:[#allocation4 + $0xc68] sm:$0xff]
    %v369 = vld [vmem:[#allocation4 + $0xc70] sm:$0xff]
    %v370 = vld [vmem:[#allocation4 + $0xc78] sm:$0xff]
    %v371 = vld [vmem:[#allocation4 + $0xc80] sm:$0xff]
    %v372 = vld [vmem:[#allocation4 + $0xc88] sm:$0xff]
    %v373 = vld [vmem:[#allocation4 + $0xcc0] sm:$0xff]
    %v374 = vld [vmem:[#allocation4 + $0xcc8] sm:$0xff]
    %v375 = vld [vmem:[#allocation4 + $0xcd0] sm:$0xff]
    %v376 = vld [vmem:[#allocation4 + $0xcd8] sm:$0xff]
    %v377 = vld [vmem:[#allocation4 + $0xce0] sm:$0xff]
    %v378 = vld [vmem:[#allocation4 + $0xce8] sm:$0xff]
    %v379 = vld [vmem:[#allocation4 + $0xd20] sm:$0xff]
    %v380 = vld [vmem:[#allocation4 + $0xd28] sm:$0xff]
    %v381 = vld [vmem:[#allocation4 + $0xd30] sm:$0xff]
    %v382 = vld [vmem:[#allocation4 + $0xd38] sm:$0xff]
    %v383 = vld [vmem:[#allocation4 + $0xd40] sm:$0xff]
    %v384 = vld [vmem:[#allocation4 + $0xd48] sm:$0xff]
    %v385 = vld [vmem:[#allocation4 + $0xd80] sm:$0xff]
    %v386 = vld [vmem:[#allocation4 + $0xd88] sm:$0xff]
    %v387 = vld [vmem:[#allocation4 + $0xd90] sm:$0xff]
    %v388 = vld [vmem:[#allocation4 + $0xd98] sm:$0xff]
    %v389 = vld [vmem:[#allocation4 + $0xda0] sm:$0xff]
    %v390 = vld [vmem:[#allocation4 + $0xda8] sm:$0xff]
    %v391 = vld [vmem:[#allocation4 + $0xde0] sm:$0xff]
    %v392 = vld [vmem:[#allocation4 + $0xde8] sm:$0xff]
    %v393 = vld [vmem:[#allocation4 + $0xdf0] sm:$0xff]
    %v394 = vld [vmem:[#allocation4 + $0xdf8] sm:$0xff]
    %v395 = vld [vmem:[#allocation4 + $0xe00] sm:$0xff]
    %v396 = vld [vmem:[#allocation4 + $0xe08] sm:$0xff]
    %v397 = vld [vmem:[#allocation4 + $0xe40] sm:$0xff]
    %v398 = vld [vmem:[#allocation4 + $0xe48] sm:$0xff]
    %v399 = vld [vmem:[#allocation4 + $0xe50] sm:$0xff]
    %v400 = vld [vmem:[#allocation4 + $0xe58] sm:$0xff]
    %v401 = vld [vmem:[#allocation4 + $0xe60] sm:$0xff]
    %v402 = vld [vmem:[#allocation4 + $0xe68] sm:$0xff]
    %v403 = vld [vmem:[#allocation4 + $0xea0] sm:$0xff]
    %v404 = vld [vmem:[#allocation4 + $0xea8] sm:$0xff]
    %v405 = vld [vmem:[#allocation4 + $0xeb0] sm:$0xff]
    %v406 = vld [vmem:[#allocation4 + $0xeb8] sm:$0xff]
    %v407 = vld [vmem:[#allocation4 + $0xec0] sm:$0xff]
    %v408 = vld [vmem:[#allocation4 + $0xec8] sm:$0xff]
    %v409 = vld [vmem:[#allocation4 + $0xf00] sm:$0xff]
    %v410 = vld [vmem:[#allocation4 + $0xf08] sm:$0xff]
    %v411 = vld [vmem:[#allocation4 + $0xf10] sm:$0xff]
    %v412 = vld [vmem:[#allocation4 + $0xf18] sm:$0xff]
    %v413 = vld [vmem:[#allocation4 + $0xf20] sm:$0xff]
    %v414 = vld [vmem:[#allocation4 + $0xf28] sm:$0xff]
    %v415 = vld [vmem:[#allocation4 + $0xf60] sm:$0xff]
    %v416 = vld [vmem:[#allocation4 + $0xf68] sm:$0xff]
    %v417 = vld [vmem:[#allocation4 + $0xf70] sm:$0xff]
    %v418 = vld [vmem:[#allocation4 + $0xf78] sm:$0xff]
    %v419 = vld [vmem:[#allocation4 + $0xf80] sm:$0xff]
    %v420 = vld [vmem:[#allocation4 + $0xf88] sm:$0xff]
    %v421 = vld [vmem:[#allocation4 + $0xfc0] sm:$0xff]
    %v422 = vld [vmem:[#allocation4 + $0xfc8] sm:$0xff]
    %v423 = vld [vmem:[#allocation4 + $0xfd0] sm:$0xff]
    %v424 = vld [vmem:[#allocation4 + $0xfd8] sm:$0xff]
    %v425 = vld [vmem:[#allocation4 + $0xfe0] sm:$0xff]
    %v426 = vld [vmem:[#allocation4 + $0xfe8] sm:$0xff]
    %v427 = vld [vmem:[#allocation4 + $0x1020] sm:$0xff]
    %v428 = vld [vmem:[#allocation4 + $0x1028] sm:$0xff]
    %v429 = vld [vmem:[#allocation4 + $0x1030] sm:$0xff]
    %v430 = vld [vmem:[#allocation4 + $0x1038] sm:$0xff]
    %v431 = vld [vmem:[#allocation4 + $0x1040] sm:$0xff]
    %v432 = vld [vmem:[#allocation4 + $0x1048] sm:$0xff]
    %v433 = vld [vmem:[#allocation4 + $0x1080] sm:$0xff]
    %v434 = vld [vmem:[#allocation4 + $0x1088] sm:$0xff]
    %v435 = vld [vmem:[#allocation4 + $0x1090] sm:$0xff]
    %v436 = vld [vmem:[#allocation4 + $0x1098] sm:$0xff]
    %v437 = vld [vmem:[#allocation4 + $0x10a0] sm:$0xff]
    %v438 = vld [vmem:[#allocation4 + $0x10a8] sm:$0xff]
    %v439 = vld [vmem:[#allocation4 + $0x10e0] sm:$0xff]
    %v440 = vld [vmem:[#allocation4 + $0x10e8] sm:$0xff]
    %v441 = vld [vmem:[#allocation4 + $0x10f0] sm:$0xff]
    %v442 = vld [vmem:[#allocation4 + $0x10f8] sm:$0xff]
    %v443 = vld [vmem:[#allocation4 + $0x1100] sm:$0xff]
    %v444 = vld [vmem:[#allocation4 + $0x1108] sm:$0xff]
    %v445 = vld [vmem:[#allocation4 + $0x1140] sm:$0xff]
    %v446 = vld [vmem:[#allocation4 + $0x1148] sm:$0xff]
    %v447 = vld [vmem:[#allocation4 + $0x1150] sm:$0xff]
    %v448 = vld [vmem:[#allocation4 + $0x1158] sm:$0xff]
    %v449 = vld [vmem:[#allocation4 + $0x1160] sm:$0xff]
    %v450 = vld [vmem:[#allocation4 + $0x1168] sm:$0xff]
    %v451 = vld [vmem:[#allocation4 + $0x11a0] sm:$0xff]
    %v452 = vld [vmem:[#allocation4 + $0x11a8] sm:$0xff]
    %v453 = vld [vmem:[#allocation4 + $0x11b0] sm:$0xff]
    %v454 = vld [vmem:[#allocation4 + $0x11b8] sm:$0xff]
    %v455 = vld [vmem:[#allocation4 + $0x11c0] sm:$0xff]
    %v456 = vld [vmem:[#allocation4 + $0x11c8] sm:$0xff]
    %v457 = vld [vmem:[#allocation4 + $0x1200] sm:$0xff]
    %v458 = vld [vmem:[#allocation4 + $0x1208] sm:$0xff]
    %v459 = vld [vmem:[#allocation4 + $0x1210] sm:$0xff]
    %v460 = vld [vmem:[#allocation4 + $0x1218] sm:$0xff]
    %v461 = vld [vmem:[#allocation4 + $0x1220] sm:$0xff]
    %v462 = vld [vmem:[#allocation4 + $0x1228] sm:$0xff]
    %v463 = vld [vmem:[#allocation4 + $0x1260] sm:$0xff]
    %v464 = vld [vmem:[#allocation4 + $0x1268] sm:$0xff]
    %v465 = vld [vmem:[#allocation4 + $0x1270] sm:$0xff]
    %v466 = vld [vmem:[#allocation4 + $0x1278] sm:$0xff]
    %v467 = vld [vmem:[#allocation4 + $0x1280] sm:$0xff]
    %v468 = vld [vmem:[#allocation4 + $0x1288] sm:$0xff]
    %v469 = vld [vmem:[#allocation4 + $0x12c0] sm:$0xff]
    %v470 = vld [vmem:[#allocation4 + $0x12c8] sm:$0xff]
    %v471 = vld [vmem:[#allocation4 + $0x12d0] sm:$0xff]
    %v472 = vld [vmem:[#allocation4 + $0x12d8] sm:$0xff]
    %v473 = vld [vmem:[#allocation4 + $0x12e0] sm:$0xff]
    %v474 = vld [vmem:[#allocation4 + $0x12e8] sm:$0xff]
    %v475 = vld [vmem:[#allocation4 + $0x1320] sm:$0xff]
    %v476 = vld [vmem:[#allocation4 + $0x1328] sm:$0xff]
    %v477 = vld [vmem:[#allocation4 + $0x1330] sm:$0xff]
    %v478 = vld [vmem:[#allocation4 + $0x1338] sm:$0xff]
    %v479 = vld [vmem:[#allocation4 + $0x1340] sm:$0xff]
    %v480 = vld [vmem:[#allocation4 + $0x1348] sm:$0xff]
    %v481 = vld [vmem:[#allocation4 + $0x1380] sm:$0xff]
    %v482 = vld [vmem:[#allocation4 + $0x1388] sm:$0xff]
    %v483 = vld [vmem:[#allocation4 + $0x1390] sm:$0xff]
    %v484 = vld [vmem:[#allocation4 + $0x1398] sm:$0xff]
    %v485 = vld [vmem:[#allocation4 + $0x13a0] sm:$0xff]
    %v486 = vld [vmem:[#allocation4 + $0x13a8] sm:$0xff]
    %v487 = vld [vmem:[#allocation4 + $0x13e0] sm:$0xff]
    %v488 = vld [vmem:[#allocation4 + $0x13e8] sm:$0xff]
    %v489 = vld [vmem:[#allocation4 + $0x13f0] sm:$0xff]
    %v490 = vld [vmem:[#allocation4 + $0x13f8] sm:$0xff]
    %v491 = vld [vmem:[#allocation4 + $0x1400] sm:$0xff]
    %v492 = vld [vmem:[#allocation4 + $0x1408] sm:$0xff]
    %v493 = vld [vmem:[#allocation4 + $0x1440] sm:$0xff]
    %v494 = vld [vmem:[#allocation4 + $0x1448] sm:$0xff]
    %v495 = vld [vmem:[#allocation4 + $0x1450] sm:$0xff]
    %v496 = vld [vmem:[#allocation4 + $0x1458] sm:$0xff]
    %v497 = vld [vmem:[#allocation4 + $0x1460] sm:$0xff]
    %v498 = vld [vmem:[#allocation4 + $0x1468] sm:$0xff]
    %v499 = vld [vmem:[#allocation4 + $0x14a0] sm:$0xff]
    %v500 = vld [vmem:[#allocation4 + $0x14a8] sm:$0xff]
    %v501 = vld [vmem:[#allocation4 + $0x14b0] sm:$0xff]
    %v502 = vld [vmem:[#allocation4 + $0x14b8] sm:$0xff]
    %v503 = vld [vmem:[#allocation4 + $0x14c0] sm:$0xff]
    %v504 = vld [vmem:[#allocation4 + $0x14c8] sm:$0xff]
    %v505 = vld [vmem:[#allocation4 + $0x1500] sm:$0xff]
    %v506 = vld [vmem:[#allocation4 + $0x1508] sm:$0xff]
    %v507 = vld [vmem:[#allocation4 + $0x1510] sm:$0xff]
    %v508 = vld [vmem:[#allocation4 + $0x1518] sm:$0xff]
    %v509 = vld [vmem:[#allocation4 + $0x1520] sm:$0xff]
    %v510 = vld [vmem:[#allocation4 + $0x1528] sm:$0xff]
    %v511 = vld [vmem:[#allocation4 + $0x1560] sm:$0xff]
    %v512 = vld [vmem:[#allocation4 + $0x1568] sm:$0xff]
    %v513 = vld [vmem:[#allocation4 + $0x1570] sm:$0xff]
    %v514 = vld [vmem:[#allocation4 + $0x1578] sm:$0xff]
    %v515 = vld [vmem:[#allocation4 + $0x1580] sm:$0xff]
    %v516 = vld [vmem:[#allocation4 + $0x1588] sm:$0xff]
    %v517 = vld [vmem:[#allocation4 + $0x15c0] sm:$0xff]
    %v518 = vld [vmem:[#allocation4 + $0x15c8] sm:$0xff]
    %v519 = vld [vmem:[#allocation4 + $0x15d0] sm:$0xff]
    %v520 = vld [vmem:[#allocation4 + $0x15d8] sm:$0xff]
    %v521 = vld [vmem:[#allocation4 + $0x15e0] sm:$0xff]
    %v522 = vld [vmem:[#allocation4 + $0x15e8] sm:$0xff]
    %v523 = vld [vmem:[#allocation4 + $0x1620] sm:$0xff]
    %v524 = vld [vmem:[#allocation4 + $0x1628] sm:$0xff]
    %v525 = vld [vmem:[#allocation4 + $0x1630] sm:$0xff]
    %v526 = vld [vmem:[#allocation4 + $0x1638] sm:$0xff]
    %v527 = vld [vmem:[#allocation4 + $0x1640] sm:$0xff]
    %v528 = vld [vmem:[#allocation4 + $0x1648] sm:$0xff]
    %v529 = vld [vmem:[#allocation4 + $0x1680] sm:$0xff]
    %v530 = vld [vmem:[#allocation4 + $0x1688] sm:$0xff]
    %v531 = vld [vmem:[#allocation4 + $0x1690] sm:$0xff]
    %v532 = vld [vmem:[#allocation4 + $0x1698] sm:$0xff]
    %v533 = vld [vmem:[#allocation4 + $0x16a0] sm:$0xff]
    %v534 = vld [vmem:[#allocation4 + $0x16a8] sm:$0xff]
    %v535 = vld [vmem:[#allocation4 + $0x16e0] sm:$0xff]
    %v536 = vld [vmem:[#allocation4 + $0x16e8] sm:$0xff]
    %v537 = vld [vmem:[#allocation4 + $0x16f0] sm:$0xff]
    %v538 = vld [vmem:[#allocation4 + $0x16f8] sm:$0xff]
    %v539 = vld [vmem:[#allocation4 + $0x1700] sm:$0xff]
    %v540 = vld [vmem:[#allocation4 + $0x1708] sm:$0xff]
    %v541 = vld [vmem:[#allocation4 + $0x1740] sm:$0xff]
    %v542 = vld [vmem:[#allocation4 + $0x1748] sm:$0xff]
    %v543 = vld [vmem:[#allocation4 + $0x1750] sm:$0xff]
    %v544 = vld [vmem:[#allocation4 + $0x1758] sm:$0xff]
    %v545 = vld [vmem:[#allocation4 + $0x1760] sm:$0xff]
    %v546 = vld [vmem:[#allocation4 + $0x1768] sm:$0xff]
    %v547 = vld [vmem:[#allocation4 + $0x17a0] sm:$0xff]
    %v548 = vld [vmem:[#allocation4 + $0x17a8] sm:$0xff]
    %v549 = vld [vmem:[#allocation4 + $0x17b0] sm:$0xff]
    %v550 = vld [vmem:[#allocation4 + $0x17b8] sm:$0xff]
    %v551 = vld [vmem:[#allocation4 + $0x17c0] sm:$0xff]
    %v552 = vld [vmem:[#allocation4 + $0x17c8] sm:$0xff]
    %v553 = vld [vmem:[#allocation4 + $0x1800] sm:$0xff]
    %v554 = vld [vmem:[#allocation4 + $0x1808] sm:$0xff]
    %v555 = vld [vmem:[#allocation4 + $0x1810] sm:$0xff]
    %v556 = vld [vmem:[#allocation4 + $0x1818] sm:$0xff]
    %v557 = vld [vmem:[#allocation4 + $0x1820] sm:$0xff]
    %v558 = vld [vmem:[#allocation4 + $0x1828] sm:$0xff]
    %v559 = vld [vmem:[#allocation4 + $0x1860] sm:$0xff]
    %v560 = vld [vmem:[#allocation4 + $0x1868] sm:$0xff]
    %v561 = vld [vmem:[#allocation4 + $0x1870] sm:$0xff]
    %v562 = vld [vmem:[#allocation4 + $0x1878] sm:$0xff]
    %v563 = vld [vmem:[#allocation4 + $0x1880] sm:$0xff]
    %v564 = vld [vmem:[#allocation4 + $0x1888] sm:$0xff]
    %v565 = vld [vmem:[#allocation4 + $0x18c0] sm:$0xff]
    %v566 = vld [vmem:[#allocation4 + $0x18c8] sm:$0xff]
    %v567 = vld [vmem:[#allocation4 + $0x18d0] sm:$0xff]
    %v568 = vld [vmem:[#allocation4 + $0x18d8] sm:$0xff]
    %v569 = vld [vmem:[#allocation4 + $0x18e0] sm:$0xff]
    %v570 = vld [vmem:[#allocation4 + $0x18e8] sm:$0xff]
    %v571 = vld [vmem:[#allocation4 + $0x1920] sm:$0xff]
    %v572 = vld [vmem:[#allocation4 + $0x1928] sm:$0xff]
    %v573 = vld [vmem:[#allocation4 + $0x1930] sm:$0xff]
    %v574 = vld [vmem:[#allocation4 + $0x1938] sm:$0xff]
    %v575 = vld [vmem:[#allocation4 + $0x1940] sm:$0xff]
    %v576 = vld [vmem:[#allocation4 + $0x1948] sm:$0xff]
    %v577 = vld [vmem:[#allocation4 + $0x1980] sm:$0xff]
    %v578 = vld [vmem:[#allocation4 + $0x1988] sm:$0xff]
    %v579 = vld [vmem:[#allocation4 + $0x1990] sm:$0xff]
    %v580 = vld [vmem:[#allocation4 + $0x1998] sm:$0xff]
    %v581 = vld [vmem:[#allocation4 + $0x19a0] sm:$0xff]
    %v582 = vld [vmem:[#allocation4 + $0x19a8] sm:$0xff]
    %v583 = vld [vmem:[#allocation4 + $0x19e0] sm:$0xff]
    %v584 = vld [vmem:[#allocation4 + $0x19e8] sm:$0xff]
    %v585 = vld [vmem:[#allocation4 + $0x19f0] sm:$0xff]
    %v586 = vld [vmem:[#allocation4 + $0x19f8] sm:$0xff]
    %v587 = vld [vmem:[#allocation4 + $0x1a00] sm:$0xff]
    %v588 = vld [vmem:[#allocation4 + $0x1a08] sm:$0xff]
    %v589 = vld [vmem:[#allocation4 + $0x1a40] sm:$0xff]
    %v590 = vld [vmem:[#allocation4 + $0x1a48] sm:$0xff]
    %v591 = vld [vmem:[#allocation4 + $0x1a50] sm:$0xff]
    %v592 = vld [vmem:[#allocation4 + $0x1a58] sm:$0xff]
    %v593 = vld [vmem:[#allocation4 + $0x1a60] sm:$0xff]
    %v594 = vld [vmem:[#allocation4 + $0x1a68] sm:$0xff]
    %v595 = vld [vmem:[#allocation4 + $0x1aa0] sm:$0xff]
    %v596 = vld [vmem:[#allocation4 + $0x1aa8] sm:$0xff]
    %v597 = vld [vmem:[#allocation4 + $0x1ab0] sm:$0xff]
    %v598 = vld [vmem:[#allocation4 + $0x1ab8] sm:$0xff]
    %v599 = vld [vmem:[#allocation4 + $0x1ac0] sm:$0xff]
    %v600 = vld [vmem:[#allocation4 + $0x1ac8] sm:$0xff]
    %v601 = vld [vmem:[#allocation4 + $0x1b00] sm:$0xff]
    %v602 = vld [vmem:[#allocation4 + $0x1b08] sm:$0xff]
    %v603 = vld [vmem:[#allocation4 + $0x1b10] sm:$0xff]
    %v604 = vld [vmem:[#allocation4 + $0x1b18] sm:$0xff]
    %v605 = vld [vmem:[#allocation4 + $0x1b20] sm:$0xff]
    %v606 = vld [vmem:[#allocation4 + $0x1b28] sm:$0xff]
    %v607 = vld [vmem:[#allocation4 + $0x1b60] sm:$0xff]
    %v608 = vld [vmem:[#allocation4 + $0x1b68] sm:$0xff]
    %v609 = vld [vmem:[#allocation4 + $0x1b70] sm:$0xff]
    %v610 = vld [vmem:[#allocation4 + $0x1b78] sm:$0xff]
    %v611 = vld [vmem:[#allocation4 + $0x1b80] sm:$0xff]
    %v612 = vld [vmem:[#allocation4 + $0x1b88] sm:$0xff]
    %v613 = vld [vmem:[#allocation4 + $0x1bc0] sm:$0xff]
    %v614 = vld [vmem:[#allocation4 + $0x1bc8] sm:$0xff]
    %v615 = vld [vmem:[#allocation4 + $0x1bd0] sm:$0xff]
    %v616 = vld [vmem:[#allocation4 + $0x1bd8] sm:$0xff]
    %v617 = vld [vmem:[#allocation4 + $0x1be0] sm:$0xff]
    %v618 = vld [vmem:[#allocation4 + $0x1be8] sm:$0xff]
    %v619 = vld [vmem:[#allocation4 + $0x1c20] sm:$0xff]
    %v620 = vld [vmem:[#allocation4 + $0x1c28] sm:$0xff]
    %v621 = vld [vmem:[#allocation4 + $0x1c30] sm:$0xff]
    %v622 = vld [vmem:[#allocation4 + $0x1c38] sm:$0xff]
    %v623 = vld [vmem:[#allocation4 + $0x1c40] sm:$0xff]
    %v624 = vld [vmem:[#allocation4 + $0x1c48] sm:$0xff]
    %v625 = vld [vmem:[#allocation4 + $0x1c80] sm:$0xff]
    %v626 = vld [vmem:[#allocation4 + $0x1c88] sm:$0xff]
    %v627 = vld [vmem:[#allocation4 + $0x1c90] sm:$0xff]
    %v628 = vld [vmem:[#allocation4 + $0x1c98] sm:$0xff]
    %v629 = vld [vmem:[#allocation4 + $0x1ca0] sm:$0xff]
    %v630 = vld [vmem:[#allocation4 + $0x1ca8] sm:$0xff]
    %v631 = vld [vmem:[#allocation4 + $0x1ce0] sm:$0xff]
    %v632 = vld [vmem:[#allocation4 + $0x1ce8] sm:$0xff]
    %v633 = vld [vmem:[#allocation4 + $0x1cf0] sm:$0xff]
    %v634 = vld [vmem:[#allocation4 + $0x1cf8] sm:$0xff]
    %v635 = vld [vmem:[#allocation4 + $0x1d00] sm:$0xff]
    %v636 = vld [vmem:[#allocation4 + $0x1d08] sm:$0xff]
    %v637 = vld [vmem:[#allocation4 + $0x1d40] sm:$0xff]
    %v638 = vld [vmem:[#allocation4 + $0x1d48] sm:$0xff]
    %v639 = vld [vmem:[#allocation4 + $0x1d50] sm:$0xff]
    %v640 = vld [vmem:[#allocation4 + $0x1d58] sm:$0xff]
    %v641 = vld [vmem:[#allocation4 + $0x1d60] sm:$0xff]
    %v642 = vld [vmem:[#allocation4 + $0x1d68] sm:$0xff]
    %v643 = vld [vmem:[#allocation4 + $0x1da0] sm:$0xff]
    %v644 = vld [vmem:[#allocation4 + $0x1da8] sm:$0xff]
    %v645 = vld [vmem:[#allocation4 + $0x1db0] sm:$0xff]
    %v646 = vld [vmem:[#allocation4 + $0x1db8] sm:$0xff]
    %v647 = vld [vmem:[#allocation4 + $0x1dc0] sm:$0xff]
    %v648 = vld [vmem:[#allocation4 + $0x1dc8] sm:$0xff]
    %v649 = vld [vmem:[#allocation4 + $0x1e00] sm:$0xff]
    %v650 = vld [vmem:[#allocation4 + $0x1e08] sm:$0xff]
    %v651 = vld [vmem:[#allocation4 + $0x1e10] sm:$0xff]
    %v652 = vld [vmem:[#allocation4 + $0x1e18] sm:$0xff]
    %v653 = vld [vmem:[#allocation4 + $0x1e20] sm:$0xff]
    %v654 = vld [vmem:[#allocation4 + $0x1e28] sm:$0xff]
    %v655 = vld [vmem:[#allocation4 + $0x1e60] sm:$0xff]
    %v656 = vld [vmem:[#allocation4 + $0x1e68] sm:$0xff]
    %v657 = vld [vmem:[#allocation4 + $0x1e70] sm:$0xff]
    %v658 = vld [vmem:[#allocation4 + $0x1e78] sm:$0xff]
    %v659 = vld [vmem:[#allocation4 + $0x1e80] sm:$0xff]
    %v660 = vld [vmem:[#allocation4 + $0x1e88] sm:$0xff]
    %v661 = vld [vmem:[#allocation4 + $0x1ec0] sm:$0xff]
    %v662 = vld [vmem:[#allocation4 + $0x1ec8] sm:$0xff]
    %v663 = vld [vmem:[#allocation4 + $0x1ed0] sm:$0xff]
    %v664 = vld [vmem:[#allocation4 + $0x1ed8] sm:$0xff]
    %v665 = vld [vmem:[#allocation4 + $0x1ee0] sm:$0xff]
    %v666 = vld [vmem:[#allocation4 + $0x1ee8] sm:$0xff]
    %v667 = vld [vmem:[#allocation4 + $0x1f20] sm:$0xff]
    %v668 = vld [vmem:[#allocation4 + $0x1f28] sm:$0xff]
    %v669 = vld [vmem:[#allocation4 + $0x1f30] sm:$0xff]
    %v670 = vld [vmem:[#allocation4 + $0x1f38] sm:$0xff]
    %v671 = vld [vmem:[#allocation4 + $0x1f40] sm:$0xff]
    %v672 = vld [vmem:[#allocation4 + $0x1f48] sm:$0xff]
    %v673 = vld [vmem:[#allocation4 + $0x1f80] sm:$0xff]
    %v674 = vld [vmem:[#allocation4 + $0x1f88] sm:$0xff]
    %v675 = vld [vmem:[#allocation4 + $0x1f90] sm:$0xff]
    %v676 = vld [vmem:[#allocation4 + $0x1f98] sm:$0xff]
    %v677 = vld [vmem:[#allocation4 + $0x1fa0] sm:$0xff]
    %v678 = vld [vmem:[#allocation4 + $0x1fa8] sm:$0xff]
    %v679 = vld [vmem:[#allocation4 + $0x1fe0] sm:$0xff]
    %v680 = vld [vmem:[#allocation4 + $0x1fe8] sm:$0xff]
    %v681 = vld [vmem:[#allocation4 + $0x1ff0] sm:$0xff]
    %v682 = vld [vmem:[#allocation4 + $0x1ff8] sm:$0xff]
    %v683 = vld [vmem:[#allocation4 + $0x2000] sm:$0xff]
    %v684 = vld [vmem:[#allocation4 + $0x2008] sm:$0xff]
    %v685 = vld [vmem:[#allocation4 + $0x2040] sm:$0xff]
    %v686 = vld [vmem:[#allocation4 + $0x2048] sm:$0xff]
    %v687 = vld [vmem:[#allocation4 + $0x2050] sm:$0xff]
    %v688 = vld [vmem:[#allocation4 + $0x2058] sm:$0xff]
    %v689 = vld [vmem:[#allocation4 + $0x2060] sm:$0xff]
    %v690 = vld [vmem:[#allocation4 + $0x2068] sm:$0xff]
    %v691 = vld [vmem:[#allocation4 + $0x20a0] sm:$0xff]
    %v692 = vld [vmem:[#allocation4 + $0x20a8] sm:$0xff]
    %v693 = vld [vmem:[#allocation4 + $0x20b0] sm:$0xff]
    %v694 = vld [vmem:[#allocation4 + $0x20b8] sm:$0xff]
    %v695 = vld [vmem:[#allocation4 + $0x20c0] sm:$0xff]
    %v696 = vld [vmem:[#allocation4 + $0x20c8] sm:$0xff]
    %v697 = vld [vmem:[#allocation4 + $0x2100] sm:$0xff]
    %v698 = vld [vmem:[#allocation4 + $0x2108] sm:$0xff]
    %v699 = vld [vmem:[#allocation4 + $0x2110] sm:$0xff]
    %v700 = vld [vmem:[#allocation4 + $0x2118] sm:$0xff]
    %v701 = vld [vmem:[#allocation4 + $0x2120] sm:$0xff]
    %v702 = vld [vmem:[#allocation4 + $0x2128] sm:$0xff]
    %v703 = vld [vmem:[#allocation4 + $0x2160] sm:$0xff]
    %v704 = vld [vmem:[#allocation4 + $0x2168] sm:$0xff]
    %v705 = vld [vmem:[#allocation4 + $0x2170] sm:$0xff]
    %v706 = vld [vmem:[#allocation4 + $0x2178] sm:$0xff]
    %v707 = vld [vmem:[#allocation4 + $0x2180] sm:$0xff]
    %v708 = vld [vmem:[#allocation4 + $0x2188] sm:$0xff]
    %v709 = vld [vmem:[#allocation4 + $0x21c0] sm:$0xff]
    %v710 = vld [vmem:[#allocation4 + $0x21c8] sm:$0xff]
    %v711 = vld [vmem:[#allocation4 + $0x21d0] sm:$0xff]
    %v712 = vld [vmem:[#allocation4 + $0x21d8] sm:$0xff]
    %v713 = vld [vmem:[#allocation4 + $0x21e0] sm:$0xff]
    %v714 = vld [vmem:[#allocation4 + $0x21e8] sm:$0xff]
    %v715 = vld [vmem:[#allocation4 + $0x2220] sm:$0xff]
    %v716 = vld [vmem:[#allocation4 + $0x2228] sm:$0xff]
    %v717 = vld [vmem:[#allocation4 + $0x2230] sm:$0xff]
    %v718 = vld [vmem:[#allocation4 + $0x2238] sm:$0xff]
    %v719 = vld [vmem:[#allocation4 + $0x2240] sm:$0xff]
    %v720 = vld [vmem:[#allocation4 + $0x2248] sm:$0xff]
    %v721 = vld [vmem:[#allocation4 + $0x2280] sm:$0xff]
    %v722 = vld [vmem:[#allocation4 + $0x2288] sm:$0xff]
    %v723 = vld [vmem:[#allocation4 + $0x2290] sm:$0xff]
    %v724 = vld [vmem:[#allocation4 + $0x2298] sm:$0xff]
    %v725 = vld [vmem:[#allocation4 + $0x22a0] sm:$0xff]
    %v726 = vld [vmem:[#allocation4 + $0x22a8] sm:$0xff]
    %v727 = vld [vmem:[#allocation4 + $0x22e0] sm:$0xff]
    %v728 = vld [vmem:[#allocation4 + $0x22e8] sm:$0xff]
    %v729 = vld [vmem:[#allocation4 + $0x22f0] sm:$0xff]
    %v730 = vld [vmem:[#allocation4 + $0x22f8] sm:$0xff]
    %v731 = vld [vmem:[#allocation4 + $0x2300] sm:$0xff]
    %v732 = vld [vmem:[#allocation4 + $0x2308] sm:$0xff]
    %v733 = vld [vmem:[#allocation4 + $0x2340] sm:$0xff]
    %v734 = vld [vmem:[#allocation4 + $0x2348] sm:$0xff]
    %v735 = vld [vmem:[#allocation4 + $0x2350] sm:$0xff]
    %v736 = vld [vmem:[#allocation4 + $0x2358] sm:$0xff]
    %v737 = vld [vmem:[#allocation4 + $0x2360] sm:$0xff]
    %v738 = vld [vmem:[#allocation4 + $0x2368] sm:$0xff]
    %v739 = vld [vmem:[#allocation4 + $0x23a0] sm:$0xff]
    %v740 = vld [vmem:[#allocation4 + $0x23a8] sm:$0xff]
    %v741 = vld [vmem:[#allocation4 + $0x23b0] sm:$0xff]
    %v742 = vld [vmem:[#allocation4 + $0x23b8] sm:$0xff]
    %v743 = vld [vmem:[#allocation4 + $0x23c0] sm:$0xff]
    %v744 = vld [vmem:[#allocation4 + $0x23c8] sm:$0xff]
    %v751 = vunpack.c.l.b16 %v158
    %v752 = vunpack.c.h.b16 %v158
    %v753 = vunpack.c.l.b16 %v159
    %v754 = vunpack.c.h.b16 %v159
    %v755 = vunpack.c.l.b16 %v160
    %v756 = vunpack.c.h.b16 %v160
    %v757 = vunpack.c.l.b16 %v161
    %v758 = vunpack.c.h.b16 %v161
    %v759 = vunpack.c.l.b16 %v162
    %v760 = vunpack.c.h.b16 %v162
    %v761 = vunpack.c.l.b16 %v163
    %v762 = vunpack.c.h.b16 %v163
    %v763 = vpack.c.b16 %v757, %v751
    %v764 = vpack.c.b16 %v758, %v752
    %v765 = vpack.c.b16 %v759, %v753
    %v766 = vpack.c.b16 %v760, %v754
    %v767 = vpack.c.b16 %v761, %v755
    %v768 = vpack.c.b16 %v762, %v756
    %v1351 = vunpack.c.l.b16 %v169
    %v1352 = vunpack.c.h.b16 %v169
    %v1353 = vunpack.c.l.b16 %v170
    %v1354 = vunpack.c.h.b16 %v170
    %v1355 = vunpack.c.l.b16 %v171
    %v1356 = vunpack.c.h.b16 %v171
    %v1357 = vunpack.c.l.b16 %v172
    %v1358 = vunpack.c.h.b16 %v172
    %v1359 = vunpack.c.l.b16 %v173
    %v1360 = vunpack.c.h.b16 %v173
    %v1361 = vunpack.c.l.b16 %v174
    %v1362 = vunpack.c.h.b16 %v174
    %v1363 = vunpack.c.l.b16 %v175
    %v1364 = vunpack.c.h.b16 %v175
    %v1365 = vunpack.c.l.b16 %v176
    %v1366 = vunpack.c.h.b16 %v176
    %v1367 = vunpack.c.l.b16 %v177
    %v1368 = vunpack.c.h.b16 %v177
    %v1369 = vunpack.c.l.b16 %v178
    %v1370 = vunpack.c.h.b16 %v178
    %v1371 = vunpack.c.l.b16 %v179
    %v1372 = vunpack.c.h.b16 %v179
    %v1373 = vunpack.c.l.b16 %v180
    %v1374 = vunpack.c.h.b16 %v180
    %v1375 = vunpack.c.l.b16 %v181
    %v1376 = vunpack.c.h.b16 %v181
    %v1377 = vunpack.c.l.b16 %v182
    %v1378 = vunpack.c.h.b16 %v182
    %v1379 = vunpack.c.l.b16 %v183
    %v1380 = vunpack.c.h.b16 %v183
    %v1381 = vunpack.c.l.b16 %v184
    %v1382 = vunpack.c.h.b16 %v184
    %v1383 = vunpack.c.l.b16 %v185
    %v1384 = vunpack.c.h.b16 %v185
    %v1385 = vunpack.c.l.b16 %v186
    %v1386 = vunpack.c.h.b16 %v186
    %v1387 = vunpack.c.l.b16 %v187
    %v1388 = vunpack.c.h.b16 %v187
    %v1389 = vunpack.c.l.b16 %v188
    %v1390 = vunpack.c.h.b16 %v188
    %v1391 = vunpack.c.l.b16 %v189
    %v1392 = vunpack.c.h.b16 %v189
    %v1393 = vunpack.c.l.b16 %v190
    %v1394 = vunpack.c.h.b16 %v190
    %v1395 = vunpack.c.l.b16 %v191
    %v1396 = vunpack.c.h.b16 %v191
    %v1397 = vunpack.c.l.b16 %v192
    %v1398 = vunpack.c.h.b16 %v192
    %v1399 = vunpack.c.l.b16 %v193
    %v1400 = vunpack.c.h.b16 %v193
    %v1401 = vunpack.c.l.b16 %v194
    %v1402 = vunpack.c.h.b16 %v194
    %v1403 = vunpack.c.l.b16 %v195
    %v1404 = vunpack.c.h.b16 %v195
    %v1405 = vunpack.c.l.b16 %v196
    %v1406 = vunpack.c.h.b16 %v196
    %v1407 = vunpack.c.l.b16 %v197
    %v1408 = vunpack.c.h.b16 %v197
    %v1409 = vunpack.c.l.b16 %v198
    %v1410 = vunpack.c.h.b16 %v198
    %v1411 = vunpack.c.l.b16 %v199
    %v1412 = vunpack.c.h.b16 %v199
    %v1413 = vunpack.c.l.b16 %v200
    %v1414 = vunpack.c.h.b16 %v200
    %v1415 = vunpack.c.l.b16 %v201
    %v1416 = vunpack.c.h.b16 %v201
    %v1417 = vunpack.c.l.b16 %v202
    %v1418 = vunpack.c.h.b16 %v202
    %v1419 = vunpack.c.l.b16 %v203
    %v1420 = vunpack.c.h.b16 %v203
    %v1421 = vunpack.c.l.b16 %v204
    %v1422 = vunpack.c.h.b16 %v204
    %v1423 = vunpack.c.l.b16 %v205
    %v1424 = vunpack.c.h.b16 %v205
    %v1425 = vunpack.c.l.b16 %v206
    %v1426 = vunpack.c.h.b16 %v206
    %v1427 = vunpack.c.l.b16 %v207
    %v1428 = vunpack.c.h.b16 %v207
    %v1429 = vunpack.c.l.b16 %v208
    %v1430 = vunpack.c.h.b16 %v208
    %v1431 = vunpack.c.l.b16 %v209
    %v1432 = vunpack.c.h.b16 %v209
    %v1433 = vunpack.c.l.b16 %v210
    %v1434 = vunpack.c.h.b16 %v210
    %v1435 = vunpack.c.l.b16 %v211
    %v1436 = vunpack.c.h.b16 %v211
    %v1437 = vunpack.c.l.b16 %v212
    %v1438 = vunpack.c.h.b16 %v212
    %v1439 = vunpack.c.l.b16 %v213
    %v1440 = vunpack.c.h.b16 %v213
    %v1441 = vunpack.c.l.b16 %v214
    %v1442 = vunpack.c.h.b16 %v214
    %v1443 = vunpack.c.l.b16 %v215
    %v1444 = vunpack.c.h.b16 %v215
    %v1445 = vunpack.c.l.b16 %v216
    %v1446 = vunpack.c.h.b16 %v216
    %v1447 = vunpack.c.l.b16 %v217
    %v1448 = vunpack.c.h.b16 %v217
    %v1449 = vunpack.c.l.b16 %v218
    %v1450 = vunpack.c.h.b16 %v218
    %v1451 = vunpack.c.l.b16 %v219
    %v1452 = vunpack.c.h.b16 %v219
    %v1453 = vunpack.c.l.b16 %v220
    %v1454 = vunpack.c.h.b16 %v220
    %v1455 = vunpack.c.l.b16 %v221
    %v1456 = vunpack.c.h.b16 %v221
    %v1457 = vunpack.c.l.b16 %v222
    %v1458 = vunpack.c.h.b16 %v222
    %v1459 = vunpack.c.l.b16 %v223
    %v1460 = vunpack.c.h.b16 %v223
    %v1461 = vunpack.c.l.b16 %v224
    %v1462 = vunpack.c.h.b16 %v224
    %v1463 = vunpack.c.l.b16 %v225
    %v1464 = vunpack.c.h.b16 %v225
    %v1465 = vunpack.c.l.b16 %v226
    %v1466 = vunpack.c.h.b16 %v226
    %v1467 = vunpack.c.l.b16 %v227
    %v1468 = vunpack.c.h.b16 %v227
    %v1469 = vunpack.c.l.b16 %v228
    %v1470 = vunpack.c.h.b16 %v228
    %v1471 = vunpack.c.l.b16 %v229
    %v1472 = vunpack.c.h.b16 %v229
    %v1473 = vunpack.c.l.b16 %v230
    %v1474 = vunpack.c.h.b16 %v230
    %v1475 = vunpack.c.l.b16 %v231
    %v1476 = vunpack.c.h.b16 %v231
    %v1477 = vunpack.c.l.b16 %v232
    %v1478 = vunpack.c.h.b16 %v232
    %v1479 = vunpack.c.l.b16 %v233
    %v1480 = vunpack.c.h.b16 %v233
    %v1481 = vunpack.c.l.b16 %v234
    %v1482 = vunpack.c.h.b16 %v234
    %v1483 = vunpack.c.l.b16 %v235
    %v1484 = vunpack.c.h.b16 %v235
    %v1485 = vunpack.c.l.b16 %v236
    %v1486 = vunpack.c.h.b16 %v236
    %v1487 = vunpack.c.l.b16 %v237
    %v1488 = vunpack.c.h.b16 %v237
    %v1489 = vunpack.c.l.b16 %v238
    %v1490 = vunpack.c.h.b16 %v238
    %v1491 = vunpack.c.l.b16 %v239
    %v1492 = vunpack.c.h.b16 %v239
    %v1493 = vunpack.c.l.b16 %v240
    %v1494 = vunpack.c.h.b16 %v240
    %v1495 = vunpack.c.l.b16 %v241
    %v1496 = vunpack.c.h.b16 %v241
    %v1497 = vunpack.c.l.b16 %v242
    %v1498 = vunpack.c.h.b16 %v242
    %v1499 = vunpack.c.l.b16 %v243
    %v1500 = vunpack.c.h.b16 %v243
    %v1501 = vunpack.c.l.b16 %v244
    %v1502 = vunpack.c.h.b16 %v244
    %v1503 = vunpack.c.l.b16 %v245
    %v1504 = vunpack.c.h.b16 %v245
    %v1505 = vunpack.c.l.b16 %v246
    %v1506 = vunpack.c.h.b16 %v246
    %v1507 = vunpack.c.l.b16 %v247
    %v1508 = vunpack.c.h.b16 %v247
    %v1509 = vunpack.c.l.b16 %v248
    %v1510 = vunpack.c.h.b16 %v248
    %v1511 = vunpack.c.l.b16 %v249
    %v1512 = vunpack.c.h.b16 %v249
    %v1513 = vunpack.c.l.b16 %v250
    %v1514 = vunpack.c.h.b16 %v250
    %v1515 = vunpack.c.l.b16 %v251
    %v1516 = vunpack.c.h.b16 %v251
    %v1517 = vunpack.c.l.b16 %v252
    %v1518 = vunpack.c.h.b16 %v252
    %v1519 = vunpack.c.l.b16 %v253
    %v1520 = vunpack.c.h.b16 %v253
    %v1521 = vunpack.c.l.b16 %v254
    %v1522 = vunpack.c.h.b16 %v254
    %v1523 = vunpack.c.l.b16 %v255
    %v1524 = vunpack.c.h.b16 %v255
    %v1525 = vunpack.c.l.b16 %v256
    %v1526 = vunpack.c.h.b16 %v256
    %v1527 = vunpack.c.l.b16 %v257
    %v1528 = vunpack.c.h.b16 %v257
    %v1529 = vunpack.c.l.b16 %v258
    %v1530 = vunpack.c.h.b16 %v258
    %v1531 = vunpack.c.l.b16 %v259
    %v1532 = vunpack.c.h.b16 %v259
    %v1533 = vunpack.c.l.b16 %v260
    %v1534 = vunpack.c.h.b16 %v260
    %v1535 = vunpack.c.l.b16 %v261
    %v1536 = vunpack.c.h.b16 %v261
    %v1537 = vunpack.c.l.b16 %v262
    %v1538 = vunpack.c.h.b16 %v262
    %v1539 = vunpack.c.l.b16 %v263
    %v1540 = vunpack.c.h.b16 %v263
    %v1541 = vunpack.c.l.b16 %v264
    %v1542 = vunpack.c.h.b16 %v264
    %v1543 = vunpack.c.l.b16 %v265
    %v1544 = vunpack.c.h.b16 %v265
    %v1545 = vunpack.c.l.b16 %v266
    %v1546 = vunpack.c.h.b16 %v266
    %v1547 = vunpack.c.l.b16 %v267
    %v1548 = vunpack.c.h.b16 %v267
    %v1549 = vunpack.c.l.b16 %v268
    %v1550 = vunpack.c.h.b16 %v268
    %v1551 = vunpack.c.l.b16 %v269
    %v1552 = vunpack.c.h.b16 %v269
    %v1553 = vunpack.c.l.b16 %v270
    %v1554 = vunpack.c.h.b16 %v270
    %v1555 = vunpack.c.l.b16 %v271
    %v1556 = vunpack.c.h.b16 %v271
    %v1557 = vunpack.c.l.b16 %v272
    %v1558 = vunpack.c.h.b16 %v272
    %v1559 = vunpack.c.l.b16 %v273
    %v1560 = vunpack.c.h.b16 %v273
    %v1561 = vunpack.c.l.b16 %v274
    %v1562 = vunpack.c.h.b16 %v274
    %v1563 = vunpack.c.l.b16 %v275
    %v1564 = vunpack.c.h.b16 %v275
    %v1565 = vunpack.c.l.b16 %v276
    %v1566 = vunpack.c.h.b16 %v276
    %v1567 = vunpack.c.l.b16 %v277
    %v1568 = vunpack.c.h.b16 %v277
    %v1569 = vunpack.c.l.b16 %v278
    %v1570 = vunpack.c.h.b16 %v278
    %v1571 = vunpack.c.l.b16 %v279
    %v1572 = vunpack.c.h.b16 %v279
    %v1573 = vunpack.c.l.b16 %v280
    %v1574 = vunpack.c.h.b16 %v280
    %v1575 = vunpack.c.l.b16 %v281
    %v1576 = vunpack.c.h.b16 %v281
    %v1577 = vunpack.c.l.b16 %v282
    %v1578 = vunpack.c.h.b16 %v282
    %v1579 = vunpack.c.l.b16 %v283
    %v1580 = vunpack.c.h.b16 %v283
    %v1581 = vunpack.c.l.b16 %v284
    %v1582 = vunpack.c.h.b16 %v284
    %v1583 = vunpack.c.l.b16 %v285
    %v1584 = vunpack.c.h.b16 %v285
    %v1585 = vunpack.c.l.b16 %v286
    %v1586 = vunpack.c.h.b16 %v286
    %v1587 = vunpack.c.l.b16 %v287
    %v1588 = vunpack.c.h.b16 %v287
    %v1589 = vunpack.c.l.b16 %v288
    %v1590 = vunpack.c.h.b16 %v288
    %v1591 = vunpack.c.l.b16 %v289
    %v1592 = vunpack.c.h.b16 %v289
    %v1593 = vunpack.c.l.b16 %v290
    %v1594 = vunpack.c.h.b16 %v290
    %v1595 = vunpack.c.l.b16 %v291
    %v1596 = vunpack.c.h.b16 %v291
    %v1597 = vunpack.c.l.b16 %v292
    %v1598 = vunpack.c.h.b16 %v292
    %v1599 = vunpack.c.l.b16 %v293
    %v1600 = vunpack.c.h.b16 %v293
    %v1601 = vunpack.c.l.b16 %v294
    %v1602 = vunpack.c.h.b16 %v294
    %v1603 = vunpack.c.l.b16 %v295
    %v1604 = vunpack.c.h.b16 %v295
    %v1605 = vunpack.c.l.b16 %v296
    %v1606 = vunpack.c.h.b16 %v296
    %v1607 = vunpack.c.l.b16 %v297
    %v1608 = vunpack.c.h.b16 %v297
    %v1609 = vunpack.c.l.b16 %v298
    %v1610 = vunpack.c.h.b16 %v298
    %v1611 = vunpack.c.l.b16 %v299
    %v1612 = vunpack.c.h.b16 %v299
    %v1613 = vunpack.c.l.b16 %v300
    %v1614 = vunpack.c.h.b16 %v300
    %v1615 = vunpack.c.l.b16 %v301
    %v1616 = vunpack.c.h.b16 %v301
    %v1617 = vunpack.c.l.b16 %v302
    %v1618 = vunpack.c.h.b16 %v302
    %v1619 = vunpack.c.l.b16 %v303
    %v1620 = vunpack.c.h.b16 %v303
    %v1621 = vunpack.c.l.b16 %v304
    %v1622 = vunpack.c.h.b16 %v304
    %v1623 = vunpack.c.l.b16 %v305
    %v1624 = vunpack.c.h.b16 %v305
    %v1625 = vunpack.c.l.b16 %v306
    %v1626 = vunpack.c.h.b16 %v306
    %v1627 = vunpack.c.l.b16 %v307
    %v1628 = vunpack.c.h.b16 %v307
    %v1629 = vunpack.c.l.b16 %v308
    %v1630 = vunpack.c.h.b16 %v308
    %v1631 = vunpack.c.l.b16 %v309
    %v1632 = vunpack.c.h.b16 %v309
    %v1633 = vunpack.c.l.b16 %v310
    %v1634 = vunpack.c.h.b16 %v310
    %v1635 = vunpack.c.l.b16 %v311
    %v1636 = vunpack.c.h.b16 %v311
    %v1637 = vunpack.c.l.b16 %v312
    %v1638 = vunpack.c.h.b16 %v312
    %v1639 = vunpack.c.l.b16 %v313
    %v1640 = vunpack.c.h.b16 %v313
    %v1641 = vunpack.c.l.b16 %v314
    %v1642 = vunpack.c.h.b16 %v314
    %v1643 = vunpack.c.l.b16 %v315
    %v1644 = vunpack.c.h.b16 %v315
    %v1645 = vunpack.c.l.b16 %v316
    %v1646 = vunpack.c.h.b16 %v316
    %v1647 = vunpack.c.l.b16 %v317
    %v1648 = vunpack.c.h.b16 %v317
    %v1649 = vunpack.c.l.b16 %v318
    %v1650 = vunpack.c.h.b16 %v318
    %v1651 = vunpack.c.l.b16 %v319
    %v1652 = vunpack.c.h.b16 %v319
    %v1653 = vunpack.c.l.b16 %v320
    %v1654 = vunpack.c.h.b16 %v320
    %v1655 = vunpack.c.l.b16 %v321
    %v1656 = vunpack.c.h.b16 %v321
    %v1657 = vunpack.c.l.b16 %v322
    %v1658 = vunpack.c.h.b16 %v322
    %v1659 = vunpack.c.l.b16 %v323
    %v1660 = vunpack.c.h.b16 %v323
    %v1661 = vunpack.c.l.b16 %v324
    %v1662 = vunpack.c.h.b16 %v324
    %v1663 = vunpack.c.l.b16 %v325
    %v1664 = vunpack.c.h.b16 %v325
    %v1665 = vunpack.c.l.b16 %v326
    %v1666 = vunpack.c.h.b16 %v326
    %v1667 = vunpack.c.l.b16 %v327
    %v1668 = vunpack.c.h.b16 %v327
    %v1669 = vunpack.c.l.b16 %v328
    %v1670 = vunpack.c.h.b16 %v328
    %v1671 = vunpack.c.l.b16 %v329
    %v1672 = vunpack.c.h.b16 %v329
    %v1673 = vunpack.c.l.b16 %v330
    %v1674 = vunpack.c.h.b16 %v330
    %v1675 = vunpack.c.l.b16 %v331
    %v1676 = vunpack.c.h.b16 %v331
    %v1677 = vunpack.c.l.b16 %v332
    %v1678 = vunpack.c.h.b16 %v332
    %v1679 = vunpack.c.l.b16 %v333
    %v1680 = vunpack.c.h.b16 %v333
    %v1681 = vunpack.c.l.b16 %v334
    %v1682 = vunpack.c.h.b16 %v334
    %v1683 = vunpack.c.l.b16 %v335
    %v1684 = vunpack.c.h.b16 %v335
    %v1685 = vunpack.c.l.b16 %v336
    %v1686 = vunpack.c.h.b16 %v336
    %v1687 = vunpack.c.l.b16 %v337
    %v1688 = vunpack.c.h.b16 %v337
    %v1689 = vunpack.c.l.b16 %v338
    %v1690 = vunpack.c.h.b16 %v338
    %v1691 = vunpack.c.l.b16 %v339
    %v1692 = vunpack.c.h.b16 %v339
    %v1693 = vunpack.c.l.b16 %v340
    %v1694 = vunpack.c.h.b16 %v340
    %v1695 = vunpack.c.l.b16 %v341
    %v1696 = vunpack.c.h.b16 %v341
    %v1697 = vunpack.c.l.b16 %v342
    %v1698 = vunpack.c.h.b16 %v342
    %v1699 = vunpack.c.l.b16 %v343
    %v1700 = vunpack.c.h.b16 %v343
    %v1701 = vunpack.c.l.b16 %v344
    %v1702 = vunpack.c.h.b16 %v344
    %v1703 = vunpack.c.l.b16 %v345
    %v1704 = vunpack.c.h.b16 %v345
    %v1705 = vunpack.c.l.b16 %v346
    %v1706 = vunpack.c.h.b16 %v346
    %v1707 = vunpack.c.l.b16 %v347
    %v1708 = vunpack.c.h.b16 %v347
    %v1709 = vunpack.c.l.b16 %v348
    %v1710 = vunpack.c.h.b16 %v348
    %v1711 = vunpack.c.l.b16 %v349
    %v1712 = vunpack.c.h.b16 %v349
    %v1713 = vunpack.c.l.b16 %v350
    %v1714 = vunpack.c.h.b16 %v350
    %v1715 = vunpack.c.l.b16 %v351
    %v1716 = vunpack.c.h.b16 %v351
    %v1717 = vunpack.c.l.b16 %v352
    %v1718 = vunpack.c.h.b16 %v352
    %v1719 = vunpack.c.l.b16 %v353
    %v1720 = vunpack.c.h.b16 %v353
    %v1721 = vunpack.c.l.b16 %v354
    %v1722 = vunpack.c.h.b16 %v354
    %v1723 = vunpack.c.l.b16 %v355
    %v1724 = vunpack.c.h.b16 %v355
    %v1725 = vunpack.c.l.b16 %v356
    %v1726 = vunpack.c.h.b16 %v356
    %v1727 = vunpack.c.l.b16 %v357
    %v1728 = vunpack.c.h.b16 %v357
    %v1729 = vunpack.c.l.b16 %v358
    %v1730 = vunpack.c.h.b16 %v358
    %v1731 = vunpack.c.l.b16 %v359
    %v1732 = vunpack.c.h.b16 %v359
    %v1733 = vunpack.c.l.b16 %v360
    %v1734 = vunpack.c.h.b16 %v360
    %v1735 = vunpack.c.l.b16 %v361
    %v1736 = vunpack.c.h.b16 %v361
    %v1737 = vunpack.c.l.b16 %v362
    %v1738 = vunpack.c.h.b16 %v362
    %v1739 = vunpack.c.l.b16 %v363
    %v1740 = vunpack.c.h.b16 %v363
    %v1741 = vunpack.c.l.b16 %v364
    %v1742 = vunpack.c.h.b16 %v364
    %v1743 = vunpack.c.l.b16 %v365
    %v1744 = vunpack.c.h.b16 %v365
    %v1745 = vunpack.c.l.b16 %v366
    %v1746 = vunpack.c.h.b16 %v366
    %v1747 = vunpack.c.l.b16 %v367
    %v1748 = vunpack.c.h.b16 %v367
    %v1749 = vunpack.c.l.b16 %v368
    %v1750 = vunpack.c.h.b16 %v368
    %v1751 = vunpack.c.l.b16 %v369
    %v1752 = vunpack.c.h.b16 %v369
    %v1753 = vunpack.c.l.b16 %v370
    %v1754 = vunpack.c.h.b16 %v370
    %v1755 = vunpack.c.l.b16 %v371
    %v1756 = vunpack.c.h.b16 %v371
    %v1757 = vunpack.c.l.b16 %v372
    %v1758 = vunpack.c.h.b16 %v372
    %v1759 = vunpack.c.l.b16 %v373
    %v1760 = vunpack.c.h.b16 %v373
    %v1761 = vunpack.c.l.b16 %v374
    %v1762 = vunpack.c.h.b16 %v374
    %v1763 = vunpack.c.l.b16 %v375
    %v1764 = vunpack.c.h.b16 %v375
    %v1765 = vunpack.c.l.b16 %v376
    %v1766 = vunpack.c.h.b16 %v376
    %v1767 = vunpack.c.l.b16 %v377
    %v1768 = vunpack.c.h.b16 %v377
    %v1769 = vunpack.c.l.b16 %v378
    %v1770 = vunpack.c.h.b16 %v378
    %v1771 = vunpack.c.l.b16 %v379
    %v1772 = vunpack.c.h.b16 %v379
    %v1773 = vunpack.c.l.b16 %v380
    %v1774 = vunpack.c.h.b16 %v380
    %v1775 = vunpack.c.l.b16 %v381
    %v1776 = vunpack.c.h.b16 %v381
    %v1777 = vunpack.c.l.b16 %v382
    %v1778 = vunpack.c.h.b16 %v382
    %v1779 = vunpack.c.l.b16 %v383
    %v1780 = vunpack.c.h.b16 %v383
    %v1781 = vunpack.c.l.b16 %v384
    %v1782 = vunpack.c.h.b16 %v384
    %v1783 = vunpack.c.l.b16 %v385
    %v1784 = vunpack.c.h.b16 %v385
    %v1785 = vunpack.c.l.b16 %v386
    %v1786 = vunpack.c.h.b16 %v386
    %v1787 = vunpack.c.l.b16 %v387
    %v1788 = vunpack.c.h.b16 %v387
    %v1789 = vunpack.c.l.b16 %v388
    %v1790 = vunpack.c.h.b16 %v388
    %v1791 = vunpack.c.l.b16 %v389
    %v1792 = vunpack.c.h.b16 %v389
    %v1793 = vunpack.c.l.b16 %v390
    %v1794 = vunpack.c.h.b16 %v390
    %v1795 = vunpack.c.l.b16 %v391
    %v1796 = vunpack.c.h.b16 %v391
    %v1797 = vunpack.c.l.b16 %v392
    %v1798 = vunpack.c.h.b16 %v392
    %v1799 = vunpack.c.l.b16 %v393
    %v1800 = vunpack.c.h.b16 %v393
    %v1801 = vunpack.c.l.b16 %v394
    %v1802 = vunpack.c.h.b16 %v394
    %v1803 = vunpack.c.l.b16 %v395
    %v1804 = vunpack.c.h.b16 %v395
    %v1805 = vunpack.c.l.b16 %v396
    %v1806 = vunpack.c.h.b16 %v396
    %v1807 = vunpack.c.l.b16 %v397
    %v1808 = vunpack.c.h.b16 %v397
    %v1809 = vunpack.c.l.b16 %v398
    %v1810 = vunpack.c.h.b16 %v398
    %v1811 = vunpack.c.l.b16 %v399
    %v1812 = vunpack.c.h.b16 %v399
    %v1813 = vunpack.c.l.b16 %v400
    %v1814 = vunpack.c.h.b16 %v400
    %v1815 = vunpack.c.l.b16 %v401
    %v1816 = vunpack.c.h.b16 %v401
    %v1817 = vunpack.c.l.b16 %v402
    %v1818 = vunpack.c.h.b16 %v402
    %v1819 = vunpack.c.l.b16 %v403
    %v1820 = vunpack.c.h.b16 %v403
    %v1821 = vunpack.c.l.b16 %v404
    %v1822 = vunpack.c.h.b16 %v404
    %v1823 = vunpack.c.l.b16 %v405
    %v1824 = vunpack.c.h.b16 %v405
    %v1825 = vunpack.c.l.b16 %v406
    %v1826 = vunpack.c.h.b16 %v406
    %v1827 = vunpack.c.l.b16 %v407
    %v1828 = vunpack.c.h.b16 %v407
    %v1829 = vunpack.c.l.b16 %v408
    %v1830 = vunpack.c.h.b16 %v408
    %v1831 = vunpack.c.l.b16 %v409
    %v1832 = vunpack.c.h.b16 %v409
    %v1833 = vunpack.c.l.b16 %v410
    %v1834 = vunpack.c.h.b16 %v410
    %v1835 = vunpack.c.l.b16 %v411
    %v1836 = vunpack.c.h.b16 %v411
    %v1837 = vunpack.c.l.b16 %v412
    %v1838 = vunpack.c.h.b16 %v412
    %v1839 = vunpack.c.l.b16 %v413
    %v1840 = vunpack.c.h.b16 %v413
    %v1841 = vunpack.c.l.b16 %v414
    %v1842 = vunpack.c.h.b16 %v414
    %v1843 = vunpack.c.l.b16 %v415
    %v1844 = vunpack.c.h.b16 %v415
    %v1845 = vunpack.c.l.b16 %v416
    %v1846 = vunpack.c.h.b16 %v416
    %v1847 = vunpack.c.l.b16 %v417
    %v1848 = vunpack.c.h.b16 %v417
    %v1849 = vunpack.c.l.b16 %v418
    %v1850 = vunpack.c.h.b16 %v418
    %v1851 = vunpack.c.l.b16 %v419
    %v1852 = vunpack.c.h.b16 %v419
    %v1853 = vunpack.c.l.b16 %v420
    %v1854 = vunpack.c.h.b16 %v420
    %v1855 = vunpack.c.l.b16 %v421
    %v1856 = vunpack.c.h.b16 %v421
    %v1857 = vunpack.c.l.b16 %v422
    %v1858 = vunpack.c.h.b16 %v422
    %v1859 = vunpack.c.l.b16 %v423
    %v1860 = vunpack.c.h.b16 %v423
    %v1861 = vunpack.c.l.b16 %v424
    %v1862 = vunpack.c.h.b16 %v424
    %v1863 = vunpack.c.l.b16 %v425
    %v1864 = vunpack.c.h.b16 %v425
    %v1865 = vunpack.c.l.b16 %v426
    %v1866 = vunpack.c.h.b16 %v426
    %v1867 = vunpack.c.l.b16 %v427
    %v1868 = vunpack.c.h.b16 %v427
    %v1869 = vunpack.c.l.b16 %v428
    %v1870 = vunpack.c.h.b16 %v428
    %v1871 = vunpack.c.l.b16 %v429
    %v1872 = vunpack.c.h.b16 %v429
    %v1873 = vunpack.c.l.b16 %v430
    %v1874 = vunpack.c.h.b16 %v430
    %v1875 = vunpack.c.l.b16 %v431
    %v1876 = vunpack.c.h.b16 %v431
    %v1877 = vunpack.c.l.b16 %v432
    %v1878 = vunpack.c.h.b16 %v432
    %v1879 = vunpack.c.l.b16 %v433
    %v1880 = vunpack.c.h.b16 %v433
    %v1881 = vunpack.c.l.b16 %v434
    %v1882 = vunpack.c.h.b16 %v434
    %v1883 = vunpack.c.l.b16 %v435
    %v1884 = vunpack.c.h.b16 %v435
    %v1885 = vunpack.c.l.b16 %v436
    %v1886 = vunpack.c.h.b16 %v436
    %v1887 = vunpack.c.l.b16 %v437
    %v1888 = vunpack.c.h.b16 %v437
    %v1889 = vunpack.c.l.b16 %v438
    %v1890 = vunpack.c.h.b16 %v438
    %v1891 = vunpack.c.l.b16 %v439
    %v1892 = vunpack.c.h.b16 %v439
    %v1893 = vunpack.c.l.b16 %v440
    %v1894 = vunpack.c.h.b16 %v440
    %v1895 = vunpack.c.l.b16 %v441
    %v1896 = vunpack.c.h.b16 %v441
    %v1897 = vunpack.c.l.b16 %v442
    %v1898 = vunpack.c.h.b16 %v442
    %v1899 = vunpack.c.l.b16 %v443
    %v1900 = vunpack.c.h.b16 %v443
    %v1901 = vunpack.c.l.b16 %v444
    %v1902 = vunpack.c.h.b16 %v444
    %v1903 = vunpack.c.l.b16 %v445
    %v1904 = vunpack.c.h.b16 %v445
    %v1905 = vunpack.c.l.b16 %v446
    %v1906 = vunpack.c.h.b16 %v446
    %v1907 = vunpack.c.l.b16 %v447
    %v1908 = vunpack.c.h.b16 %v447
    %v1909 = vunpack.c.l.b16 %v448
    %v1910 = vunpack.c.h.b16 %v448
    %v1911 = vunpack.c.l.b16 %v449
    %v1912 = vunpack.c.h.b16 %v449
    %v1913 = vunpack.c.l.b16 %v450
    %v1914 = vunpack.c.h.b16 %v450
    %v1915 = vunpack.c.l.b16 %v451
    %v1916 = vunpack.c.h.b16 %v451
    %v1917 = vunpack.c.l.b16 %v452
    %v1918 = vunpack.c.h.b16 %v452
    %v1919 = vunpack.c.l.b16 %v453
    %v1920 = vunpack.c.h.b16 %v453
    %v1921 = vunpack.c.l.b16 %v454
    %v1922 = vunpack.c.h.b16 %v454
    %v1923 = vunpack.c.l.b16 %v455
    %v1924 = vunpack.c.h.b16 %v455
    %v1925 = vunpack.c.l.b16 %v456
    %v1926 = vunpack.c.h.b16 %v456
    %v1927 = vunpack.c.l.b16 %v457
    %v1928 = vunpack.c.h.b16 %v457
    %v1929 = vunpack.c.l.b16 %v458
    %v1930 = vunpack.c.h.b16 %v458
    %v1931 = vunpack.c.l.b16 %v459
    %v1932 = vunpack.c.h.b16 %v459
    %v1933 = vunpack.c.l.b16 %v460
    %v1934 = vunpack.c.h.b16 %v460
    %v1935 = vunpack.c.l.b16 %v461
    %v1936 = vunpack.c.h.b16 %v461
    %v1937 = vunpack.c.l.b16 %v462
    %v1938 = vunpack.c.h.b16 %v462
    %v1939 = vunpack.c.l.b16 %v463
    %v1940 = vunpack.c.h.b16 %v463
    %v1941 = vunpack.c.l.b16 %v464
    %v1942 = vunpack.c.h.b16 %v464
    %v1943 = vunpack.c.l.b16 %v465
    %v1944 = vunpack.c.h.b16 %v465
    %v1945 = vunpack.c.l.b16 %v466
    %v1946 = vunpack.c.h.b16 %v466
    %v1947 = vunpack.c.l.b16 %v467
    %v1948 = vunpack.c.h.b16 %v467
    %v1949 = vunpack.c.l.b16 %v468
    %v1950 = vunpack.c.h.b16 %v468
    %v1951 = vunpack.c.l.b16 %v469
    %v1952 = vunpack.c.h.b16 %v469
    %v1953 = vunpack.c.l.b16 %v470
    %v1954 = vunpack.c.h.b16 %v470
    %v1955 = vunpack.c.l.b16 %v471
    %v1956 = vunpack.c.h.b16 %v471
    %v1957 = vunpack.c.l.b16 %v472
    %v1958 = vunpack.c.h.b16 %v472
    %v1959 = vunpack.c.l.b16 %v473
    %v1960 = vunpack.c.h.b16 %v473
    %v1961 = vunpack.c.l.b16 %v474
    %v1962 = vunpack.c.h.b16 %v474
    %v1963 = vunpack.c.l.b16 %v475
    %v1964 = vunpack.c.h.b16 %v475
    %v1965 = vunpack.c.l.b16 %v476
    %v1966 = vunpack.c.h.b16 %v476
    %v1967 = vunpack.c.l.b16 %v477
    %v1968 = vunpack.c.h.b16 %v477
    %v1969 = vunpack.c.l.b16 %v478
    %v1970 = vunpack.c.h.b16 %v478
    %v1971 = vunpack.c.l.b16 %v479
    %v1972 = vunpack.c.h.b16 %v479
    %v1973 = vunpack.c.l.b16 %v480
    %v1974 = vunpack.c.h.b16 %v480
    %v1975 = vunpack.c.l.b16 %v481
    %v1976 = vunpack.c.h.b16 %v481
    %v1977 = vunpack.c.l.b16 %v482
    %v1978 = vunpack.c.h.b16 %v482
    %v1979 = vunpack.c.l.b16 %v483
    %v1980 = vunpack.c.h.b16 %v483
    %v1981 = vunpack.c.l.b16 %v484
    %v1982 = vunpack.c.h.b16 %v484
    %v1983 = vunpack.c.l.b16 %v485
    %v1984 = vunpack.c.h.b16 %v485
    %v1985 = vunpack.c.l.b16 %v486
    %v1986 = vunpack.c.h.b16 %v486
    %v1987 = vunpack.c.l.b16 %v487
    %v1988 = vunpack.c.h.b16 %v487
    %v1989 = vunpack.c.l.b16 %v488
    %v1990 = vunpack.c.h.b16 %v488
    %v1991 = vunpack.c.l.b16 %v489
    %v1992 = vunpack.c.h.b16 %v489
    %v1993 = vunpack.c.l.b16 %v490
    %v1994 = vunpack.c.h.b16 %v490
    %v1995 = vunpack.c.l.b16 %v491
    %v1996 = vunpack.c.h.b16 %v491
    %v1997 = vunpack.c.l.b16 %v492
    %v1998 = vunpack.c.h.b16 %v492
    %v1999 = vunpack.c.l.b16 %v493
    %v2000 = vunpack.c.h.b16 %v493
    %v2001 = vunpack.c.l.b16 %v494
    %v2002 = vunpack.c.h.b16 %v494
    %v2003 = vunpack.c.l.b16 %v495
    %v2004 = vunpack.c.h.b16 %v495
    %v2005 = vunpack.c.l.b16 %v496
    %v2006 = vunpack.c.h.b16 %v496
    %v2007 = vunpack.c.l.b16 %v497
    %v2008 = vunpack.c.h.b16 %v497
    %v2009 = vunpack.c.l.b16 %v498
    %v2010 = vunpack.c.h.b16 %v498
    %v2011 = vunpack.c.l.b16 %v499
    %v2012 = vunpack.c.h.b16 %v499
    %v2013 = vunpack.c.l.b16 %v500
    %v2014 = vunpack.c.h.b16 %v500
    %v2015 = vunpack.c.l.b16 %v501
    %v2016 = vunpack.c.h.b16 %v501
    %v2017 = vunpack.c.l.b16 %v502
    %v2018 = vunpack.c.h.b16 %v502
    %v2019 = vunpack.c.l.b16 %v503
    %v2020 = vunpack.c.h.b16 %v503
    %v2021 = vunpack.c.l.b16 %v504
    %v2022 = vunpack.c.h.b16 %v504
    %v2023 = vunpack.c.l.b16 %v505
    %v2024 = vunpack.c.h.b16 %v505
    %v2025 = vunpack.c.l.b16 %v506
    %v2026 = vunpack.c.h.b16 %v506
    %v2027 = vunpack.c.l.b16 %v507
    %v2028 = vunpack.c.h.b16 %v507
    %v2029 = vunpack.c.l.b16 %v508
    %v2030 = vunpack.c.h.b16 %v508
    %v2031 = vunpack.c.l.b16 %v509
    %v2032 = vunpack.c.h.b16 %v509
    %v2033 = vunpack.c.l.b16 %v510
    %v2034 = vunpack.c.h.b16 %v510
    %v2035 = vunpack.c.l.b16 %v511
    %v2036 = vunpack.c.h.b16 %v511
    %v2037 = vunpack.c.l.b16 %v512
    %v2038 = vunpack.c.h.b16 %v512
    %v2039 = vunpack.c.l.b16 %v513
    %v2040 = vunpack.c.h.b16 %v513
    %v2041 = vunpack.c.l.b16 %v514
    %v2042 = vunpack.c.h.b16 %v514
    %v2043 = vunpack.c.l.b16 %v515
    %v2044 = vunpack.c.h.b16 %v515
    %v2045 = vunpack.c.l.b16 %v516
    %v2046 = vunpack.c.h.b16 %v516
    %v2047 = vunpack.c.l.b16 %v517
    %v2048 = vunpack.c.h.b16 %v517
    %v2049 = vunpack.c.l.b16 %v518
    %v2050 = vunpack.c.h.b16 %v518
    %v2051 = vunpack.c.l.b16 %v519
    %v2052 = vunpack.c.h.b16 %v519
    %v2053 = vunpack.c.l.b16 %v520
    %v2054 = vunpack.c.h.b16 %v520
    %v2055 = vunpack.c.l.b16 %v521
    %v2056 = vunpack.c.h.b16 %v521
    %v2057 = vunpack.c.l.b16 %v522
    %v2058 = vunpack.c.h.b16 %v522
    %v2059 = vunpack.c.l.b16 %v523
    %v2060 = vunpack.c.h.b16 %v523
    %v2061 = vunpack.c.l.b16 %v524
    %v2062 = vunpack.c.h.b16 %v524
    %v2063 = vunpack.c.l.b16 %v525
    %v2064 = vunpack.c.h.b16 %v525
    %v2065 = vunpack.c.l.b16 %v526
    %v2066 = vunpack.c.h.b16 %v526
    %v2067 = vunpack.c.l.b16 %v527
    %v2068 = vunpack.c.h.b16 %v527
    %v2069 = vunpack.c.l.b16 %v528
    %v2070 = vunpack.c.h.b16 %v528
    %v2071 = vunpack.c.l.b16 %v529
    %v2072 = vunpack.c.h.b16 %v529
    %v2073 = vunpack.c.l.b16 %v530
    %v2074 = vunpack.c.h.b16 %v530
    %v2075 = vunpack.c.l.b16 %v531
    %v2076 = vunpack.c.h.b16 %v531
    %v2077 = vunpack.c.l.b16 %v532
    %v2078 = vunpack.c.h.b16 %v532
    %v2079 = vunpack.c.l.b16 %v533
    %v2080 = vunpack.c.h.b16 %v533
    %v2081 = vunpack.c.l.b16 %v534
    %v2082 = vunpack.c.h.b16 %v534
    %v2083 = vunpack.c.l.b16 %v535
    %v2084 = vunpack.c.h.b16 %v535
    %v2085 = vunpack.c.l.b16 %v536
    %v2086 = vunpack.c.h.b16 %v536
    %v2087 = vunpack.c.l.b16 %v537
    %v2088 = vunpack.c.h.b16 %v537
    %v2089 = vunpack.c.l.b16 %v538
    %v2090 = vunpack.c.h.b16 %v538
    %v2091 = vunpack.c.l.b16 %v539
    %v2092 = vunpack.c.h.b16 %v539
    %v2093 = vunpack.c.l.b16 %v540
    %v2094 = vunpack.c.h.b16 %v540
    %v2095 = vunpack.c.l.b16 %v541
    %v2096 = vunpack.c.h.b16 %v541
    %v2097 = vunpack.c.l.b16 %v542
    %v2098 = vunpack.c.h.b16 %v542
    %v2099 = vunpack.c.l.b16 %v543
    %v2100 = vunpack.c.h.b16 %v543
    %v2101 = vunpack.c.l.b16 %v544
    %v2102 = vunpack.c.h.b16 %v544
    %v2103 = vunpack.c.l.b16 %v545
    %v2104 = vunpack.c.h.b16 %v545
    %v2105 = vunpack.c.l.b16 %v546
    %v2106 = vunpack.c.h.b16 %v546
    %v2107 = vunpack.c.l.b16 %v547
    %v2108 = vunpack.c.h.b16 %v547
    %v2109 = vunpack.c.l.b16 %v548
    %v2110 = vunpack.c.h.b16 %v548
    %v2111 = vunpack.c.l.b16 %v549
    %v2112 = vunpack.c.h.b16 %v549
    %v2113 = vunpack.c.l.b16 %v550
    %v2114 = vunpack.c.h.b16 %v550
    %v2115 = vunpack.c.l.b16 %v551
    %v2116 = vunpack.c.h.b16 %v551
    %v2117 = vunpack.c.l.b16 %v552
    %v2118 = vunpack.c.h.b16 %v552
    %v2119 = vunpack.c.l.b16 %v553
    %v2120 = vunpack.c.h.b16 %v553
    %v2121 = vunpack.c.l.b16 %v554
    %v2122 = vunpack.c.h.b16 %v554
    %v2123 = vunpack.c.l.b16 %v555
    %v2124 = vunpack.c.h.b16 %v555
    %v2125 = vunpack.c.l.b16 %v556
    %v2126 = vunpack.c.h.b16 %v556
    %v2127 = vunpack.c.l.b16 %v557
    %v2128 = vunpack.c.h.b16 %v557
    %v2129 = vunpack.c.l.b16 %v558
    %v2130 = vunpack.c.h.b16 %v558
    %v2131 = vunpack.c.l.b16 %v559
    %v2132 = vunpack.c.h.b16 %v559
    %v2133 = vunpack.c.l.b16 %v560
    %v2134 = vunpack.c.h.b16 %v560
    %v2135 = vunpack.c.l.b16 %v561
    %v2136 = vunpack.c.h.b16 %v561
    %v2137 = vunpack.c.l.b16 %v562
    %v2138 = vunpack.c.h.b16 %v562
    %v2139 = vunpack.c.l.b16 %v563
    %v2140 = vunpack.c.h.b16 %v563
    %v2141 = vunpack.c.l.b16 %v564
    %v2142 = vunpack.c.h.b16 %v564
    %v2143 = vunpack.c.l.b16 %v565
    %v2144 = vunpack.c.h.b16 %v565
    %v2145 = vunpack.c.l.b16 %v566
    %v2146 = vunpack.c.h.b16 %v566
    %v2147 = vunpack.c.l.b16 %v567
    %v2148 = vunpack.c.h.b16 %v567
    %v2149 = vunpack.c.l.b16 %v568
    %v2150 = vunpack.c.h.b16 %v568
    %v2151 = vunpack.c.l.b16 %v569
    %v2152 = vunpack.c.h.b16 %v569
    %v2153 = vunpack.c.l.b16 %v570
    %v2154 = vunpack.c.h.b16 %v570
    %v2155 = vunpack.c.l.b16 %v571
    %v2156 = vunpack.c.h.b16 %v571
    %v2157 = vunpack.c.l.b16 %v572
    %v2158 = vunpack.c.h.b16 %v572
    %v2159 = vunpack.c.l.b16 %v573
    %v2160 = vunpack.c.h.b16 %v573
    %v2161 = vunpack.c.l.b16 %v574
    %v2162 = vunpack.c.h.b16 %v574
    %v2163 = vunpack.c.l.b16 %v575
    %v2164 = vunpack.c.h.b16 %v575
    %v2165 = vunpack.c.l.b16 %v576
    %v2166 = vunpack.c.h.b16 %v576
    %v2167 = vunpack.c.l.b16 %v577
    %v2168 = vunpack.c.h.b16 %v577
    %v2169 = vunpack.c.l.b16 %v578
    %v2170 = vunpack.c.h.b16 %v578
    %v2171 = vunpack.c.l.b16 %v579
    %v2172 = vunpack.c.h.b16 %v579
    %v2173 = vunpack.c.l.b16 %v580
    %v2174 = vunpack.c.h.b16 %v580
    %v2175 = vunpack.c.l.b16 %v581
    %v2176 = vunpack.c.h.b16 %v581
    %v2177 = vunpack.c.l.b16 %v582
    %v2178 = vunpack.c.h.b16 %v582
    %v2179 = vunpack.c.l.b16 %v583
    %v2180 = vunpack.c.h.b16 %v583
    %v2181 = vunpack.c.l.b16 %v584
    %v2182 = vunpack.c.h.b16 %v584
    %v2183 = vunpack.c.l.b16 %v585
    %v2184 = vunpack.c.h.b16 %v585
    %v2185 = vunpack.c.l.b16 %v586
    %v2186 = vunpack.c.h.b16 %v586
    %v2187 = vunpack.c.l.b16 %v587
    %v2188 = vunpack.c.h.b16 %v587
    %v2189 = vunpack.c.l.b16 %v588
    %v2190 = vunpack.c.h.b16 %v588
    %v2191 = vunpack.c.l.b16 %v589
    %v2192 = vunpack.c.h.b16 %v589
    %v2193 = vunpack.c.l.b16 %v590
    %v2194 = vunpack.c.h.b16 %v590
    %v2195 = vunpack.c.l.b16 %v591
    %v2196 = vunpack.c.h.b16 %v591
    %v2197 = vunpack.c.l.b16 %v592
    %v2198 = vunpack.c.h.b16 %v592
    %v2199 = vunpack.c.l.b16 %v593
    %v2200 = vunpack.c.h.b16 %v593
    %v2201 = vunpack.c.l.b16 %v594
    %v2202 = vunpack.c.h.b16 %v594
    %v2203 = vunpack.c.l.b16 %v595
    %v2204 = vunpack.c.h.b16 %v595
    %v2205 = vunpack.c.l.b16 %v596
    %v2206 = vunpack.c.h.b16 %v596
    %v2207 = vunpack.c.l.b16 %v597
    %v2208 = vunpack.c.h.b16 %v597
    %v2209 = vunpack.c.l.b16 %v598
    %v2210 = vunpack.c.h.b16 %v598
    %v2211 = vunpack.c.l.b16 %v599
    %v2212 = vunpack.c.h.b16 %v599
    %v2213 = vunpack.c.l.b16 %v600
    %v2214 = vunpack.c.h.b16 %v600
    %v2215 = vunpack.c.l.b16 %v601
    %v2216 = vunpack.c.h.b16 %v601
    %v2217 = vunpack.c.l.b16 %v602
    %v2218 = vunpack.c.h.b16 %v602
    %v2219 = vunpack.c.l.b16 %v603
    %v2220 = vunpack.c.h.b16 %v603
    %v2221 = vunpack.c.l.b16 %v604
    %v2222 = vunpack.c.h.b16 %v604
    %v2223 = vunpack.c.l.b16 %v605
    %v2224 = vunpack.c.h.b16 %v605
    %v2225 = vunpack.c.l.b16 %v606
    %v2226 = vunpack.c.h.b16 %v606
    %v2227 = vunpack.c.l.b16 %v607
    %v2228 = vunpack.c.h.b16 %v607
    %v2229 = vunpack.c.l.b16 %v608
    %v2230 = vunpack.c.h.b16 %v608
    %v2231 = vunpack.c.l.b16 %v609
    %v2232 = vunpack.c.h.b16 %v609
    %v2233 = vunpack.c.l.b16 %v610
    %v2234 = vunpack.c.h.b16 %v610
    %v2235 = vunpack.c.l.b16 %v611
    %v2236 = vunpack.c.h.b16 %v611
    %v2237 = vunpack.c.l.b16 %v612
    %v2238 = vunpack.c.h.b16 %v612
    %v2239 = vunpack.c.l.b16 %v613
    %v2240 = vunpack.c.h.b16 %v613
    %v2241 = vunpack.c.l.b16 %v614
    %v2242 = vunpack.c.h.b16 %v614
    %v2243 = vunpack.c.l.b16 %v615
    %v2244 = vunpack.c.h.b16 %v615
    %v2245 = vunpack.c.l.b16 %v616
    %v2246 = vunpack.c.h.b16 %v616
    %v2247 = vunpack.c.l.b16 %v617
    %v2248 = vunpack.c.h.b16 %v617
    %v2249 = vunpack.c.l.b16 %v618
    %v2250 = vunpack.c.h.b16 %v618
    %v2251 = vunpack.c.l.b16 %v619
    %v2252 = vunpack.c.h.b16 %v619
    %v2253 = vunpack.c.l.b16 %v620
    %v2254 = vunpack.c.h.b16 %v620
    %v2255 = vunpack.c.l.b16 %v621
    %v2256 = vunpack.c.h.b16 %v621
    %v2257 = vunpack.c.l.b16 %v622
    %v2258 = vunpack.c.h.b16 %v622
    %v2259 = vunpack.c.l.b16 %v623
    %v2260 = vunpack.c.h.b16 %v623
    %v2261 = vunpack.c.l.b16 %v624
    %v2262 = vunpack.c.h.b16 %v624
    %v2263 = vunpack.c.l.b16 %v625
    %v2264 = vunpack.c.h.b16 %v625
    %v2265 = vunpack.c.l.b16 %v626
    %v2266 = vunpack.c.h.b16 %v626
    %v2267 = vunpack.c.l.b16 %v627
    %v2268 = vunpack.c.h.b16 %v627
    %v2269 = vunpack.c.l.b16 %v628
    %v2270 = vunpack.c.h.b16 %v628
    %v2271 = vunpack.c.l.b16 %v629
    %v2272 = vunpack.c.h.b16 %v629
    %v2273 = vunpack.c.l.b16 %v630
    %v2274 = vunpack.c.h.b16 %v630
    %v2275 = vunpack.c.l.b16 %v631
    %v2276 = vunpack.c.h.b16 %v631
    %v2277 = vunpack.c.l.b16 %v632
    %v2278 = vunpack.c.h.b16 %v632
    %v2279 = vunpack.c.l.b16 %v633
    %v2280 = vunpack.c.h.b16 %v633
    %v2281 = vunpack.c.l.b16 %v634
    %v2282 = vunpack.c.h.b16 %v634
    %v2283 = vunpack.c.l.b16 %v635
    %v2284 = vunpack.c.h.b16 %v635
    %v2285 = vunpack.c.l.b16 %v636
    %v2286 = vunpack.c.h.b16 %v636
    %v2287 = vunpack.c.l.b16 %v637
    %v2288 = vunpack.c.h.b16 %v637
    %v2289 = vunpack.c.l.b16 %v638
    %v2290 = vunpack.c.h.b16 %v638
    %v2291 = vunpack.c.l.b16 %v639
    %v2292 = vunpack.c.h.b16 %v639
    %v2293 = vunpack.c.l.b16 %v640
    %v2294 = vunpack.c.h.b16 %v640
    %v2295 = vunpack.c.l.b16 %v641
    %v2296 = vunpack.c.h.b16 %v641
    %v2297 = vunpack.c.l.b16 %v642
    %v2298 = vunpack.c.h.b16 %v642
    %v2299 = vunpack.c.l.b16 %v643
    %v2300 = vunpack.c.h.b16 %v643
    %v2301 = vunpack.c.l.b16 %v644
    %v2302 = vunpack.c.h.b16 %v644
    %v2303 = vunpack.c.l.b16 %v645
    %v2304 = vunpack.c.h.b16 %v645
    %v2305 = vunpack.c.l.b16 %v646
    %v2306 = vunpack.c.h.b16 %v646
    %v2307 = vunpack.c.l.b16 %v647
    %v2308 = vunpack.c.h.b16 %v647
    %v2309 = vunpack.c.l.b16 %v648
    %v2310 = vunpack.c.h.b16 %v648
    %v2311 = vunpack.c.l.b16 %v649
    %v2312 = vunpack.c.h.b16 %v649
    %v2313 = vunpack.c.l.b16 %v650
    %v2314 = vunpack.c.h.b16 %v650
    %v2315 = vunpack.c.l.b16 %v651
    %v2316 = vunpack.c.h.b16 %v651
    %v2317 = vunpack.c.l.b16 %v652
    %v2318 = vunpack.c.h.b16 %v652
    %v2319 = vunpack.c.l.b16 %v653
    %v2320 = vunpack.c.h.b16 %v653
    %v2321 = vunpack.c.l.b16 %v654
    %v2322 = vunpack.c.h.b16 %v654
    %v2323 = vunpack.c.l.b16 %v655
    %v2324 = vunpack.c.h.b16 %v655
    %v2325 = vunpack.c.l.b16 %v656
    %v2326 = vunpack.c.h.b16 %v656
    %v2327 = vunpack.c.l.b16 %v657
    %v2328 = vunpack.c.h.b16 %v657
    %v2329 = vunpack.c.l.b16 %v658
    %v2330 = vunpack.c.h.b16 %v658
    %v2331 = vunpack.c.l.b16 %v659
    %v2332 = vunpack.c.h.b16 %v659
    %v2333 = vunpack.c.l.b16 %v660
    %v2334 = vunpack.c.h.b16 %v660
    %v2335 = vunpack.c.l.b16 %v661
    %v2336 = vunpack.c.h.b16 %v661
    %v2337 = vunpack.c.l.b16 %v662
    %v2338 = vunpack.c.h.b16 %v662
    %v2339 = vunpack.c.l.b16 %v663
    %v2340 = vunpack.c.h.b16 %v663
    %v2341 = vunpack.c.l.b16 %v664
    %v2342 = vunpack.c.h.b16 %v664
    %v2343 = vunpack.c.l.b16 %v665
    %v2344 = vunpack.c.h.b16 %v665
    %v2345 = vunpack.c.l.b16 %v666
    %v2346 = vunpack.c.h.b16 %v666
    %v2347 = vunpack.c.l.b16 %v667
    %v2348 = vunpack.c.h.b16 %v667
    %v2349 = vunpack.c.l.b16 %v668
    %v2350 = vunpack.c.h.b16 %v668
    %v2351 = vunpack.c.l.b16 %v669
    %v2352 = vunpack.c.h.b16 %v669
    %v2353 = vunpack.c.l.b16 %v670
    %v2354 = vunpack.c.h.b16 %v670
    %v2355 = vunpack.c.l.b16 %v671
    %v2356 = vunpack.c.h.b16 %v671
    %v2357 = vunpack.c.l.b16 %v672
    %v2358 = vunpack.c.h.b16 %v672
    %v2359 = vunpack.c.l.b16 %v673
    %v2360 = vunpack.c.h.b16 %v673
    %v2361 = vunpack.c.l.b16 %v674
    %v2362 = vunpack.c.h.b16 %v674
    %v2363 = vunpack.c.l.b16 %v675
    %v2364 = vunpack.c.h.b16 %v675
    %v2365 = vunpack.c.l.b16 %v676
    %v2366 = vunpack.c.h.b16 %v676
    %v2367 = vunpack.c.l.b16 %v677
    %v2368 = vunpack.c.h.b16 %v677
    %v2369 = vunpack.c.l.b16 %v678
    %v2370 = vunpack.c.h.b16 %v678
    %v2371 = vunpack.c.l.b16 %v679
    %v2372 = vunpack.c.h.b16 %v679
    %v2373 = vunpack.c.l.b16 %v680
    %v2374 = vunpack.c.h.b16 %v680
    %v2375 = vunpack.c.l.b16 %v681
    %v2376 = vunpack.c.h.b16 %v681
    %v2377 = vunpack.c.l.b16 %v682
    %v2378 = vunpack.c.h.b16 %v682
    %v2379 = vunpack.c.l.b16 %v683
    %v2380 = vunpack.c.h.b16 %v683
    %v2381 = vunpack.c.l.b16 %v684
    %v2382 = vunpack.c.h.b16 %v684
    %v2383 = vunpack.c.l.b16 %v685
    %v2384 = vunpack.c.h.b16 %v685
    %v2385 = vunpack.c.l.b16 %v686
    %v2386 = vunpack.c.h.b16 %v686
    %v2387 = vunpack.c.l.b16 %v687
    %v2388 = vunpack.c.h.b16 %v687
    %v2389 = vunpack.c.l.b16 %v688
    %v2390 = vunpack.c.h.b16 %v688
    %v2391 = vunpack.c.l.b16 %v689
    %v2392 = vunpack.c.h.b16 %v689
    %v2393 = vunpack.c.l.b16 %v690
    %v2394 = vunpack.c.h.b16 %v690
    %v2395 = vunpack.c.l.b16 %v691
    %v2396 = vunpack.c.h.b16 %v691
    %v2397 = vunpack.c.l.b16 %v692
    %v2398 = vunpack.c.h.b16 %v692
    %v2399 = vunpack.c.l.b16 %v693
    %v2400 = vunpack.c.h.b16 %v693
    %v2401 = vunpack.c.l.b16 %v694
    %v2402 = vunpack.c.h.b16 %v694
    %v2403 = vunpack.c.l.b16 %v695
    %v2404 = vunpack.c.h.b16 %v695
    %v2405 = vunpack.c.l.b16 %v696
    %v2406 = vunpack.c.h.b16 %v696
    %v2407 = vunpack.c.l.b16 %v697
    %v2408 = vunpack.c.h.b16 %v697
    %v2409 = vunpack.c.l.b16 %v698
    %v2410 = vunpack.c.h.b16 %v698
    %v2411 = vunpack.c.l.b16 %v699
    %v2412 = vunpack.c.h.b16 %v699
    %v2413 = vunpack.c.l.b16 %v700
    %v2414 = vunpack.c.h.b16 %v700
    %v2415 = vunpack.c.l.b16 %v701
    %v2416 = vunpack.c.h.b16 %v701
    %v2417 = vunpack.c.l.b16 %v702
    %v2418 = vunpack.c.h.b16 %v702
    %v2419 = vunpack.c.l.b16 %v703
    %v2420 = vunpack.c.h.b16 %v703
    %v2421 = vunpack.c.l.b16 %v704
    %v2422 = vunpack.c.h.b16 %v704
    %v2423 = vunpack.c.l.b16 %v705
    %v2424 = vunpack.c.h.b16 %v705
    %v2425 = vunpack.c.l.b16 %v706
    %v2426 = vunpack.c.h.b16 %v706
    %v2427 = vunpack.c.l.b16 %v707
    %v2428 = vunpack.c.h.b16 %v707
    %v2429 = vunpack.c.l.b16 %v708
    %v2430 = vunpack.c.h.b16 %v708
    %v2431 = vunpack.c.l.b16 %v709
    %v2432 = vunpack.c.h.b16 %v709
    %v2433 = vunpack.c.l.b16 %v710
    %v2434 = vunpack.c.h.b16 %v710
    %v2435 = vunpack.c.l.b16 %v711
    %v2436 = vunpack.c.h.b16 %v711
    %v2437 = vunpack.c.l.b16 %v712
    %v2438 = vunpack.c.h.b16 %v712
    %v2439 = vunpack.c.l.b16 %v713
    %v2440 = vunpack.c.h.b16 %v713
    %v2441 = vunpack.c.l.b16 %v714
    %v2442 = vunpack.c.h.b16 %v714
    %v2443 = vunpack.c.l.b16 %v715
    %v2444 = vunpack.c.h.b16 %v715
    %v2445 = vunpack.c.l.b16 %v716
    %v2446 = vunpack.c.h.b16 %v716
    %v2447 = vunpack.c.l.b16 %v717
    %v2448 = vunpack.c.h.b16 %v717
    %v2449 = vunpack.c.l.b16 %v718
    %v2450 = vunpack.c.h.b16 %v718
    %v2451 = vunpack.c.l.b16 %v719
    %v2452 = vunpack.c.h.b16 %v719
    %v2453 = vunpack.c.l.b16 %v720
    %v2454 = vunpack.c.h.b16 %v720
    %v2455 = vunpack.c.l.b16 %v721
    %v2456 = vunpack.c.h.b16 %v721
    %v2457 = vunpack.c.l.b16 %v722
    %v2458 = vunpack.c.h.b16 %v722
    %v2459 = vunpack.c.l.b16 %v723
    %v2460 = vunpack.c.h.b16 %v723
    %v2461 = vunpack.c.l.b16 %v724
    %v2462 = vunpack.c.h.b16 %v724
    %v2463 = vunpack.c.l.b16 %v725
    %v2464 = vunpack.c.h.b16 %v725
    %v2465 = vunpack.c.l.b16 %v726
    %v2466 = vunpack.c.h.b16 %v726
    %v2467 = vunpack.c.l.b16 %v727
    %v2468 = vunpack.c.h.b16 %v727
    %v2469 = vunpack.c.l.b16 %v728
    %v2470 = vunpack.c.h.b16 %v728
    %v2471 = vunpack.c.l.b16 %v729
    %v2472 = vunpack.c.h.b16 %v729
    %v2473 = vunpack.c.l.b16 %v730
    %v2474 = vunpack.c.h.b16 %v730
    %v2475 = vunpack.c.l.b16 %v731
    %v2476 = vunpack.c.h.b16 %v731
    %v2477 = vunpack.c.l.b16 %v732
    %v2478 = vunpack.c.h.b16 %v732
    %v2479 = vunpack.c.l.b16 %v733
    %v2480 = vunpack.c.h.b16 %v733
    %v2481 = vunpack.c.l.b16 %v734
    %v2482 = vunpack.c.h.b16 %v734
    %v2483 = vunpack.c.l.b16 %v735
    %v2484 = vunpack.c.h.b16 %v735
    %v2485 = vunpack.c.l.b16 %v736
    %v2486 = vunpack.c.h.b16 %v736
    %v2487 = vunpack.c.l.b16 %v737
    %v2488 = vunpack.c.h.b16 %v737
    %v2489 = vunpack.c.l.b16 %v738
    %v2490 = vunpack.c.h.b16 %v738
    %v2491 = vunpack.c.l.b16 %v739
    %v2492 = vunpack.c.h.b16 %v739
    %v2493 = vunpack.c.l.b16 %v740
    %v2494 = vunpack.c.h.b16 %v740
    %v2495 = vunpack.c.l.b16 %v741
    %v2496 = vunpack.c.h.b16 %v741
    %v2497 = vunpack.c.l.b16 %v742
    %v2498 = vunpack.c.h.b16 %v742
    %v2499 = vunpack.c.l.b16 %v743
    %v2500 = vunpack.c.h.b16 %v743
    %v2501 = vunpack.c.l.b16 %v744
    %v2502 = vunpack.c.h.b16 %v744
    %v2503 = vpack.c.b16 %v1363, %v1351
    %v2504 = vpack.c.b16 %v1364, %v1352
    %v2505 = vpack.c.b16 %v1365, %v1353
    %v2506 = vpack.c.b16 %v1366, %v1354
    %v2507 = vpack.c.b16 %v1367, %v1355
    %v2508 = vpack.c.b16 %v1368, %v1356
    %v2509 = vpack.c.b16 %v1369, %v1357
    %v2510 = vpack.c.b16 %v1370, %v1358
    %v2511 = vpack.c.b16 %v1371, %v1359
    %v2512 = vpack.c.b16 %v1372, %v1360
    %v2513 = vpack.c.b16 %v1373, %v1361
    %v2514 = vpack.c.b16 %v1374, %v1362
    %v2515 = vpack.c.b16 %v1387, %v1375
    %v2516 = vpack.c.b16 %v1388, %v1376
    %v2517 = vpack.c.b16 %v1389, %v1377
    %v2518 = vpack.c.b16 %v1390, %v1378
    %v2519 = vpack.c.b16 %v1391, %v1379
    %v2520 = vpack.c.b16 %v1392, %v1380
    %v2521 = vpack.c.b16 %v1393, %v1381
    %v2522 = vpack.c.b16 %v1394, %v1382
    %v2523 = vpack.c.b16 %v1395, %v1383
    %v2524 = vpack.c.b16 %v1396, %v1384
    %v2525 = vpack.c.b16 %v1397, %v1385
    %v2526 = vpack.c.b16 %v1398, %v1386
    %v2527 = vpack.c.b16 %v1411, %v1399
    %v2528 = vpack.c.b16 %v1412, %v1400
    %v2529 = vpack.c.b16 %v1413, %v1401
    %v2530 = vpack.c.b16 %v1414, %v1402
    %v2531 = vpack.c.b16 %v1415, %v1403
    %v2532 = vpack.c.b16 %v1416, %v1404
    %v2533 = vpack.c.b16 %v1417, %v1405
    %v2534 = vpack.c.b16 %v1418, %v1406
    %v2535 = vpack.c.b16 %v1419, %v1407
    %v2536 = vpack.c.b16 %v1420, %v1408
    %v2537 = vpack.c.b16 %v1421, %v1409
    %v2538 = vpack.c.b16 %v1422, %v1410
    %v2539 = vpack.c.b16 %v1435, %v1423
    %v2540 = vpack.c.b16 %v1436, %v1424
    %v2541 = vpack.c.b16 %v1437, %v1425
    %v2542 = vpack.c.b16 %v1438, %v1426
    %v2543 = vpack.c.b16 %v1439, %v1427
    %v2544 = vpack.c.b16 %v1440, %v1428
    %v2545 = vpack.c.b16 %v1441, %v1429
    %v2546 = vpack.c.b16 %v1442, %v1430
    %v2547 = vpack.c.b16 %v1443, %v1431
    %v2548 = vpack.c.b16 %v1444, %v1432
    %v2549 = vpack.c.b16 %v1445, %v1433
    %v2550 = vpack.c.b16 %v1446, %v1434
    %v2551 = vpack.c.b16 %v1459, %v1447
    %v2552 = vpack.c.b16 %v1460, %v1448
    %v2553 = vpack.c.b16 %v1461, %v1449
    %v2554 = vpack.c.b16 %v1462, %v1450
    %v2555 = vpack.c.b16 %v1463, %v1451
    %v2556 = vpack.c.b16 %v1464, %v1452
    %v2557 = vpack.c.b16 %v1465, %v1453
    %v2558 = vpack.c.b16 %v1466, %v1454
    %v2559 = vpack.c.b16 %v1467, %v1455
    %v2560 = vpack.c.b16 %v1468, %v1456
    %v2561 = vpack.c.b16 %v1469, %v1457
    %v2562 = vpack.c.b16 %v1470, %v1458
    %v2563 = vpack.c.b16 %v1483, %v1471
    %v2564 = vpack.c.b16 %v1484, %v1472
    %v2565 = vpack.c.b16 %v1485, %v1473
    %v2566 = vpack.c.b16 %v1486, %v1474
    %v2567 = vpack.c.b16 %v1487, %v1475
    %v2568 = vpack.c.b16 %v1488, %v1476
    %v2569 = vpack.c.b16 %v1489, %v1477
    %v2570 = vpack.c.b16 %v1490, %v1478
    %v2571 = vpack.c.b16 %v1491, %v1479
    %v2572 = vpack.c.b16 %v1492, %v1480
    %v2573 = vpack.c.b16 %v1493, %v1481
    %v2574 = vpack.c.b16 %v1494, %v1482
    %v2575 = vpack.c.b16 %v1507, %v1495
    %v2576 = vpack.c.b16 %v1508, %v1496
    %v2577 = vpack.c.b16 %v1509, %v1497
    %v2578 = vpack.c.b16 %v1510, %v1498
    %v2579 = vpack.c.b16 %v1511, %v1499
    %v2580 = vpack.c.b16 %v1512, %v1500
    %v2581 = vpack.c.b16 %v1513, %v1501
    %v2582 = vpack.c.b16 %v1514, %v1502
    %v2583 = vpack.c.b16 %v1515, %v1503
    %v2584 = vpack.c.b16 %v1516, %v1504
    %v2585 = vpack.c.b16 %v1517, %v1505
    %v2586 = vpack.c.b16 %v1518, %v1506
    %v2587 = vpack.c.b16 %v1531, %v1519
    %v2588 = vpack.c.b16 %v1532, %v1520
    %v2589 = vpack.c.b16 %v1533, %v1521
    %v2590 = vpack.c.b16 %v1534, %v1522
    %v2591 = vpack.c.b16 %v1535, %v1523
    %v2592 = vpack.c.b16 %v1536, %v1524
    %v2593 = vpack.c.b16 %v1537, %v1525
    %v2594 = vpack.c.b16 %v1538, %v1526
    %v2595 = vpack.c.b16 %v1539, %v1527
    %v2596 = vpack.c.b16 %v1540, %v1528
    %v2597 = vpack.c.b16 %v1541, %v1529
    %v2598 = vpack.c.b16 %v1542, %v1530
    %v2599 = vpack.c.b16 %v1555, %v1543
    %v2600 = vpack.c.b16 %v1556, %v1544
    %v2601 = vpack.c.b16 %v1557, %v1545
    %v2602 = vpack.c.b16 %v1558, %v1546
    %v2603 = vpack.c.b16 %v1559, %v1547
    %v2604 = vpack.c.b16 %v1560, %v1548
    %v2605 = vpack.c.b16 %v1561, %v1549
    %v2606 = vpack.c.b16 %v1562, %v1550
    %v2607 = vpack.c.b16 %v1563, %v1551
    %v2608 = vpack.c.b16 %v1564, %v1552
    %v2609 = vpack.c.b16 %v1565, %v1553
    %v2610 = vpack.c.b16 %v1566, %v1554
    %v2611 = vpack.c.b16 %v1579, %v1567
    %v2612 = vpack.c.b16 %v1580, %v1568
    %v2613 = vpack.c.b16 %v1581, %v1569
    %v2614 = vpack.c.b16 %v1582, %v1570
    %v2615 = vpack.c.b16 %v1583, %v1571
    %v2616 = vpack.c.b16 %v1584, %v1572
    %v2617 = vpack.c.b16 %v1585, %v1573
    %v2618 = vpack.c.b16 %v1586, %v1574
    %v2619 = vpack.c.b16 %v1587, %v1575
    %v2620 = vpack.c.b16 %v1588, %v1576
    %v2621 = vpack.c.b16 %v1589, %v1577
    %v2622 = vpack.c.b16 %v1590, %v1578
    %v2623 = vpack.c.b16 %v1603, %v1591
    %v2624 = vpack.c.b16 %v1604, %v1592
    %v2625 = vpack.c.b16 %v1605, %v1593
    %v2626 = vpack.c.b16 %v1606, %v1594
    %v2627 = vpack.c.b16 %v1607, %v1595
    %v2628 = vpack.c.b16 %v1608, %v1596
    %v2629 = vpack.c.b16 %v1609, %v1597
    %v2630 = vpack.c.b16 %v1610, %v1598
    %v2631 = vpack.c.b16 %v1611, %v1599
    %v2632 = vpack.c.b16 %v1612, %v1600
    %v2633 = vpack.c.b16 %v1613, %v1601
    %v2634 = vpack.c.b16 %v1614, %v1602
    %v2635 = vpack.c.b16 %v1627, %v1615
    %v2636 = vpack.c.b16 %v1628, %v1616
    %v2637 = vpack.c.b16 %v1629, %v1617
    %v2638 = vpack.c.b16 %v1630, %v1618
    %v2639 = vpack.c.b16 %v1631, %v1619
    %v2640 = vpack.c.b16 %v1632, %v1620
    %v2641 = vpack.c.b16 %v1633, %v1621
    %v2642 = vpack.c.b16 %v1634, %v1622
    %v2643 = vpack.c.b16 %v1635, %v1623
    %v2644 = vpack.c.b16 %v1636, %v1624
    %v2645 = vpack.c.b16 %v1637, %v1625
    %v2646 = vpack.c.b16 %v1638, %v1626
    %v2647 = vpack.c.b16 %v1651, %v1639
    %v2648 = vpack.c.b16 %v1652, %v1640
    %v2649 = vpack.c.b16 %v1653, %v1641
    %v2650 = vpack.c.b16 %v1654, %v1642
    %v2651 = vpack.c.b16 %v1655, %v1643
    %v2652 = vpack.c.b16 %v1656, %v1644
    %v2653 = vpack.c.b16 %v1657, %v1645
    %v2654 = vpack.c.b16 %v1658, %v1646
    %v2655 = vpack.c.b16 %v1659, %v1647
    %v2656 = vpack.c.b16 %v1660, %v1648
    %v2657 = vpack.c.b16 %v1661, %v1649
    %v2658 = vpack.c.b16 %v1662, %v1650
    %v2659 = vpack.c.b16 %v1675, %v1663
    %v2660 = vpack.c.b16 %v1676, %v1664
    %v2661 = vpack.c.b16 %v1677, %v1665
    %v2662 = vpack.c.b16 %v1678, %v1666
    %v2663 = vpack.c.b16 %v1679, %v1667
    %v2664 = vpack.c.b16 %v1680, %v1668
    %v2665 = vpack.c.b16 %v1681, %v1669
    %v2666 = vpack.c.b16 %v1682, %v1670
    %v2667 = vpack.c.b16 %v1683, %v1671
    %v2668 = vpack.c.b16 %v1684, %v1672
    %v2669 = vpack.c.b16 %v1685, %v1673
    %v2670 = vpack.c.b16 %v1686, %v1674
    %v2671 = vpack.c.b16 %v1699, %v1687
    %v2672 = vpack.c.b16 %v1700, %v1688
    %v2673 = vpack.c.b16 %v1701, %v1689
    %v2674 = vpack.c.b16 %v1702, %v1690
    %v2675 = vpack.c.b16 %v1703, %v1691
    %v2676 = vpack.c.b16 %v1704, %v1692
    %v2677 = vpack.c.b16 %v1705, %v1693
    %v2678 = vpack.c.b16 %v1706, %v1694
    %v2679 = vpack.c.b16 %v1707, %v1695
    %v2680 = vpack.c.b16 %v1708, %v1696
    %v2681 = vpack.c.b16 %v1709, %v1697
    %v2682 = vpack.c.b16 %v1710, %v1698
    %v2683 = vpack.c.b16 %v1723, %v1711
    %v2684 = vpack.c.b16 %v1724, %v1712
    %v2685 = vpack.c.b16 %v1725, %v1713
    %v2686 = vpack.c.b16 %v1726, %v1714
    %v2687 = vpack.c.b16 %v1727, %v1715
    %v2688 = vpack.c.b16 %v1728, %v1716
    %v2689 = vpack.c.b16 %v1729, %v1717
    %v2690 = vpack.c.b16 %v1730, %v1718
    %v2691 = vpack.c.b16 %v1731, %v1719
    %v2692 = vpack.c.b16 %v1732, %v1720
    %v2693 = vpack.c.b16 %v1733, %v1721
    %v2694 = vpack.c.b16 %v1734, %v1722
    %v2695 = vpack.c.b16 %v1747, %v1735
    %v2696 = vpack.c.b16 %v1748, %v1736
    %v2697 = vpack.c.b16 %v1749, %v1737
    %v2698 = vpack.c.b16 %v1750, %v1738
    %v2699 = vpack.c.b16 %v1751, %v1739
    %v2700 = vpack.c.b16 %v1752, %v1740
    %v2701 = vpack.c.b16 %v1753, %v1741
    %v2702 = vpack.c.b16 %v1754, %v1742
    %v2703 = vpack.c.b16 %v1755, %v1743
    %v2704 = vpack.c.b16 %v1756, %v1744
    %v2705 = vpack.c.b16 %v1757, %v1745
    %v2706 = vpack.c.b16 %v1758, %v1746
    %v2707 = vpack.c.b16 %v1771, %v1759
    %v2708 = vpack.c.b16 %v1772, %v1760
    %v2709 = vpack.c.b16 %v1773, %v1761
    %v2710 = vpack.c.b16 %v1774, %v1762
    %v2711 = vpack.c.b16 %v1775, %v1763
    %v2712 = vpack.c.b16 %v1776, %v1764
    %v2713 = vpack.c.b16 %v1777, %v1765
    %v2714 = vpack.c.b16 %v1778, %v1766
    %v2715 = vpack.c.b16 %v1779, %v1767
    %v2716 = vpack.c.b16 %v1780, %v1768
    %v2717 = vpack.c.b16 %v1781, %v1769
    %v2718 = vpack.c.b16 %v1782, %v1770
    %v2719 = vpack.c.b16 %v1795, %v1783
    %v2720 = vpack.c.b16 %v1796, %v1784
    %v2721 = vpack.c.b16 %v1797, %v1785
    %v2722 = vpack.c.b16 %v1798, %v1786
    %v2723 = vpack.c.b16 %v1799, %v1787
    %v2724 = vpack.c.b16 %v1800, %v1788
    %v2725 = vpack.c.b16 %v1801, %v1789
    %v2726 = vpack.c.b16 %v1802, %v1790
    %v2727 = vpack.c.b16 %v1803, %v1791
    %v2728 = vpack.c.b16 %v1804, %v1792
    %v2729 = vpack.c.b16 %v1805, %v1793
    %v2730 = vpack.c.b16 %v1806, %v1794
    %v2731 = vpack.c.b16 %v1819, %v1807
    %v2732 = vpack.c.b16 %v1820, %v1808
    %v2733 = vpack.c.b16 %v1821, %v1809
    %v2734 = vpack.c.b16 %v1822, %v1810
    %v2735 = vpack.c.b16 %v1823, %v1811
    %v2736 = vpack.c.b16 %v1824, %v1812
    %v2737 = vpack.c.b16 %v1825, %v1813
    %v2738 = vpack.c.b16 %v1826, %v1814
    %v2739 = vpack.c.b16 %v1827, %v1815
    %v2740 = vpack.c.b16 %v1828, %v1816
    %v2741 = vpack.c.b16 %v1829, %v1817
    %v2742 = vpack.c.b16 %v1830, %v1818
    %v2743 = vpack.c.b16 %v1843, %v1831
    %v2744 = vpack.c.b16 %v1844, %v1832
    %v2745 = vpack.c.b16 %v1845, %v1833
    %v2746 = vpack.c.b16 %v1846, %v1834
    %v2747 = vpack.c.b16 %v1847, %v1835
    %v2748 = vpack.c.b16 %v1848, %v1836
    %v2749 = vpack.c.b16 %v1849, %v1837
    %v2750 = vpack.c.b16 %v1850, %v1838
    %v2751 = vpack.c.b16 %v1851, %v1839
    %v2752 = vpack.c.b16 %v1852, %v1840
    %v2753 = vpack.c.b16 %v1853, %v1841
    %v2754 = vpack.c.b16 %v1854, %v1842
    %v2755 = vpack.c.b16 %v1867, %v1855
    %v2756 = vpack.c.b16 %v1868, %v1856
    %v2757 = vpack.c.b16 %v1869, %v1857
    %v2758 = vpack.c.b16 %v1870, %v1858
    %v2759 = vpack.c.b16 %v1871, %v1859
    %v2760 = vpack.c.b16 %v1872, %v1860
    %v2761 = vpack.c.b16 %v1873, %v1861
    %v2762 = vpack.c.b16 %v1874, %v1862
    %v2763 = vpack.c.b16 %v1875, %v1863
    %v2764 = vpack.c.b16 %v1876, %v1864
    %v2765 = vpack.c.b16 %v1877, %v1865
    %v2766 = vpack.c.b16 %v1878, %v1866
    %v2767 = vpack.c.b16 %v1891, %v1879
    %v2768 = vpack.c.b16 %v1892, %v1880
    %v2769 = vpack.c.b16 %v1893, %v1881
    %v2770 = vpack.c.b16 %v1894, %v1882
    %v2771 = vpack.c.b16 %v1895, %v1883
    %v2772 = vpack.c.b16 %v1896, %v1884
    %v2773 = vpack.c.b16 %v1897, %v1885
    %v2774 = vpack.c.b16 %v1898, %v1886
    %v2775 = vpack.c.b16 %v1899, %v1887
    %v2776 = vpack.c.b16 %v1900, %v1888
    %v2777 = vpack.c.b16 %v1901, %v1889
    %v2778 = vpack.c.b16 %v1902, %v1890
    %v2779 = vpack.c.b16 %v1915, %v1903
    %v2780 = vpack.c.b16 %v1916, %v1904
    %v2781 = vpack.c.b16 %v1917, %v1905
    %v2782 = vpack.c.b16 %v1918, %v1906
    %v2783 = vpack.c.b16 %v1919, %v1907
    %v2784 = vpack.c.b16 %v1920, %v1908
    %v2785 = vpack.c.b16 %v1921, %v1909
    %v2786 = vpack.c.b16 %v1922, %v1910
    %v2787 = vpack.c.b16 %v1923, %v1911
    %v2788 = vpack.c.b16 %v1924, %v1912
    %v2789 = vpack.c.b16 %v1925, %v1913
    %v2790 = vpack.c.b16 %v1926, %v1914
    %v2791 = vpack.c.b16 %v1939, %v1927
    %v2792 = vpack.c.b16 %v1940, %v1928
    %v2793 = vpack.c.b16 %v1941, %v1929
    %v2794 = vpack.c.b16 %v1942, %v1930
    %v2795 = vpack.c.b16 %v1943, %v1931
    %v2796 = vpack.c.b16 %v1944, %v1932
    %v2797 = vpack.c.b16 %v1945, %v1933
    %v2798 = vpack.c.b16 %v1946, %v1934
    %v2799 = vpack.c.b16 %v1947, %v1935
    %v2800 = vpack.c.b16 %v1948, %v1936
    %v2801 = vpack.c.b16 %v1949, %v1937
    %v2802 = vpack.c.b16 %v1950, %v1938
    %v2803 = vpack.c.b16 %v1963, %v1951
    %v2804 = vpack.c.b16 %v1964, %v1952
    %v2805 = vpack.c.b16 %v1965, %v1953
    %v2806 = vpack.c.b16 %v1966, %v1954
    %v2807 = vpack.c.b16 %v1967, %v1955
    %v2808 = vpack.c.b16 %v1968, %v1956
    %v2809 = vpack.c.b16 %v1969, %v1957
    %v2810 = vpack.c.b16 %v1970, %v1958
    %v2811 = vpack.c.b16 %v1971, %v1959
    %v2812 = vpack.c.b16 %v1972, %v1960
    %v2813 = vpack.c.b16 %v1973, %v1961
    %v2814 = vpack.c.b16 %v1974, %v1962
    %v2815 = vpack.c.b16 %v1987, %v1975
    %v2816 = vpack.c.b16 %v1988, %v1976
    %v2817 = vpack.c.b16 %v1989, %v1977
    %v2818 = vpack.c.b16 %v1990, %v1978
    %v2819 = vpack.c.b16 %v1991, %v1979
    %v2820 = vpack.c.b16 %v1992, %v1980
    %v2821 = vpack.c.b16 %v1993, %v1981
    %v2822 = vpack.c.b16 %v1994, %v1982
    %v2823 = vpack.c.b16 %v1995, %v1983
    %v2824 = vpack.c.b16 %v1996, %v1984
    %v2825 = vpack.c.b16 %v1997, %v1985
    %v2826 = vpack.c.b16 %v1998, %v1986
    %v2827 = vpack.c.b16 %v2011, %v1999
    %v2828 = vpack.c.b16 %v2012, %v2000
    %v2829 = vpack.c.b16 %v2013, %v2001
    %v2830 = vpack.c.b16 %v2014, %v2002
    %v2831 = vpack.c.b16 %v2015, %v2003
    %v2832 = vpack.c.b16 %v2016, %v2004
    %v2833 = vpack.c.b16 %v2017, %v2005
    %v2834 = vpack.c.b16 %v2018, %v2006
    %v2835 = vpack.c.b16 %v2019, %v2007
    %v2836 = vpack.c.b16 %v2020, %v2008
    %v2837 = vpack.c.b16 %v2021, %v2009
    %v2838 = vpack.c.b16 %v2022, %v2010
    %v2839 = vpack.c.b16 %v2035, %v2023
    %v2840 = vpack.c.b16 %v2036, %v2024
    %v2841 = vpack.c.b16 %v2037, %v2025
    %v2842 = vpack.c.b16 %v2038, %v2026
    %v2843 = vpack.c.b16 %v2039, %v2027
    %v2844 = vpack.c.b16 %v2040, %v2028
    %v2845 = vpack.c.b16 %v2041, %v2029
    %v2846 = vpack.c.b16 %v2042, %v2030
    %v2847 = vpack.c.b16 %v2043, %v2031
    %v2848 = vpack.c.b16 %v2044, %v2032
    %v2849 = vpack.c.b16 %v2045, %v2033
    %v2850 = vpack.c.b16 %v2046, %v2034
    %v2851 = vpack.c.b16 %v2059, %v2047
    %v2852 = vpack.c.b16 %v2060, %v2048
    %v2853 = vpack.c.b16 %v2061, %v2049
    %v2854 = vpack.c.b16 %v2062, %v2050
    %v2855 = vpack.c.b16 %v2063, %v2051
    %v2856 = vpack.c.b16 %v2064, %v2052
    %v2857 = vpack.c.b16 %v2065, %v2053
    %v2858 = vpack.c.b16 %v2066, %v2054
    %v2859 = vpack.c.b16 %v2067, %v2055
    %v2860 = vpack.c.b16 %v2068, %v2056
    %v2861 = vpack.c.b16 %v2069, %v2057
    %v2862 = vpack.c.b16 %v2070, %v2058
    %v2863 = vpack.c.b16 %v2083, %v2071
    %v2864 = vpack.c.b16 %v2084, %v2072
    %v2865 = vpack.c.b16 %v2085, %v2073
    %v2866 = vpack.c.b16 %v2086, %v2074
    %v2867 = vpack.c.b16 %v2087, %v2075
    %v2868 = vpack.c.b16 %v2088, %v2076
    %v2869 = vpack.c.b16 %v2089, %v2077
    %v2870 = vpack.c.b16 %v2090, %v2078
    %v2871 = vpack.c.b16 %v2091, %v2079
    %v2872 = vpack.c.b16 %v2092, %v2080
    %v2873 = vpack.c.b16 %v2093, %v2081
    %v2874 = vpack.c.b16 %v2094, %v2082
    %v2875 = vpack.c.b16 %v2107, %v2095
    %v2876 = vpack.c.b16 %v2108, %v2096
    %v2877 = vpack.c.b16 %v2109, %v2097
    %v2878 = vpack.c.b16 %v2110, %v2098
    %v2879 = vpack.c.b16 %v2111, %v2099
    %v2880 = vpack.c.b16 %v2112, %v2100
    %v2881 = vpack.c.b16 %v2113, %v2101
    %v2882 = vpack.c.b16 %v2114, %v2102
    %v2883 = vpack.c.b16 %v2115, %v2103
    %v2884 = vpack.c.b16 %v2116, %v2104
    %v2885 = vpack.c.b16 %v2117, %v2105
    %v2886 = vpack.c.b16 %v2118, %v2106
    %v2887 = vpack.c.b16 %v2131, %v2119
    %v2888 = vpack.c.b16 %v2132, %v2120
    %v2889 = vpack.c.b16 %v2133, %v2121
    %v2890 = vpack.c.b16 %v2134, %v2122
    %v2891 = vpack.c.b16 %v2135, %v2123
    %v2892 = vpack.c.b16 %v2136, %v2124
    %v2893 = vpack.c.b16 %v2137, %v2125
    %v2894 = vpack.c.b16 %v2138, %v2126
    %v2895 = vpack.c.b16 %v2139, %v2127
    %v2896 = vpack.c.b16 %v2140, %v2128
    %v2897 = vpack.c.b16 %v2141, %v2129
    %v2898 = vpack.c.b16 %v2142, %v2130
    %v2899 = vpack.c.b16 %v2155, %v2143
    %v2900 = vpack.c.b16 %v2156, %v2144
    %v2901 = vpack.c.b16 %v2157, %v2145
    %v2902 = vpack.c.b16 %v2158, %v2146
    %v2903 = vpack.c.b16 %v2159, %v2147
    %v2904 = vpack.c.b16 %v2160, %v2148
    %v2905 = vpack.c.b16 %v2161, %v2149
    %v2906 = vpack.c.b16 %v2162, %v2150
    %v2907 = vpack.c.b16 %v2163, %v2151
    %v2908 = vpack.c.b16 %v2164, %v2152
    %v2909 = vpack.c.b16 %v2165, %v2153
    %v2910 = vpack.c.b16 %v2166, %v2154
    %v2911 = vpack.c.b16 %v2179, %v2167
    %v2912 = vpack.c.b16 %v2180, %v2168
    %v2913 = vpack.c.b16 %v2181, %v2169
    %v2914 = vpack.c.b16 %v2182, %v2170
    %v2915 = vpack.c.b16 %v2183, %v2171
    %v2916 = vpack.c.b16 %v2184, %v2172
    %v2917 = vpack.c.b16 %v2185, %v2173
    %v2918 = vpack.c.b16 %v2186, %v2174
    %v2919 = vpack.c.b16 %v2187, %v2175
    %v2920 = vpack.c.b16 %v2188, %v2176
    %v2921 = vpack.c.b16 %v2189, %v2177
    %v2922 = vpack.c.b16 %v2190, %v2178
    %v2923 = vpack.c.b16 %v2203, %v2191
    %v2924 = vpack.c.b16 %v2204, %v2192
    %v2925 = vpack.c.b16 %v2205, %v2193
    %v2926 = vpack.c.b16 %v2206, %v2194
    %v2927 = vpack.c.b16 %v2207, %v2195
    %v2928 = vpack.c.b16 %v2208, %v2196
    %v2929 = vpack.c.b16 %v2209, %v2197
    %v2930 = vpack.c.b16 %v2210, %v2198
    %v2931 = vpack.c.b16 %v2211, %v2199
    %v2932 = vpack.c.b16 %v2212, %v2200
    %v2933 = vpack.c.b16 %v2213, %v2201
    %v2934 = vpack.c.b16 %v2214, %v2202
    %v2935 = vpack.c.b16 %v2227, %v2215
    %v2936 = vpack.c.b16 %v2228, %v2216
    %v2937 = vpack.c.b16 %v2229, %v2217
    %v2938 = vpack.c.b16 %v2230, %v2218
    %v2939 = vpack.c.b16 %v2231, %v2219
    %v2940 = vpack.c.b16 %v2232, %v2220
    %v2941 = vpack.c.b16 %v2233, %v2221
    %v2942 = vpack.c.b16 %v2234, %v2222
    %v2943 = vpack.c.b16 %v2235, %v2223
    %v2944 = vpack.c.b16 %v2236, %v2224
    %v2945 = vpack.c.b16 %v2237, %v2225
    %v2946 = vpack.c.b16 %v2238, %v2226
    %v2947 = vpack.c.b16 %v2251, %v2239
    %v2948 = vpack.c.b16 %v2252, %v2240
    %v2949 = vpack.c.b16 %v2253, %v2241
    %v2950 = vpack.c.b16 %v2254, %v2242
    %v2951 = vpack.c.b16 %v2255, %v2243
    %v2952 = vpack.c.b16 %v2256, %v2244
    %v2953 = vpack.c.b16 %v2257, %v2245
    %v2954 = vpack.c.b16 %v2258, %v2246
    %v2955 = vpack.c.b16 %v2259, %v2247
    %v2956 = vpack.c.b16 %v2260, %v2248
    %v2957 = vpack.c.b16 %v2261, %v2249
    %v2958 = vpack.c.b16 %v2262, %v2250
    %v2959 = vpack.c.b16 %v2275, %v2263
    %v2960 = vpack.c.b16 %v2276, %v2264
    %v2961 = vpack.c.b16 %v2277, %v2265
    %v2962 = vpack.c.b16 %v2278, %v2266
    %v2963 = vpack.c.b16 %v2279, %v2267
    %v2964 = vpack.c.b16 %v2280, %v2268
    %v2965 = vpack.c.b16 %v2281, %v2269
    %v2966 = vpack.c.b16 %v2282, %v2270
    %v2967 = vpack.c.b16 %v2283, %v2271
    %v2968 = vpack.c.b16 %v2284, %v2272
    %v2969 = vpack.c.b16 %v2285, %v2273
    %v2970 = vpack.c.b16 %v2286, %v2274
    %v2971 = vpack.c.b16 %v2299, %v2287
    %v2972 = vpack.c.b16 %v2300, %v2288
    %v2973 = vpack.c.b16 %v2301, %v2289
    %v2974 = vpack.c.b16 %v2302, %v2290
    %v2975 = vpack.c.b16 %v2303, %v2291
    %v2976 = vpack.c.b16 %v2304, %v2292
    %v2977 = vpack.c.b16 %v2305, %v2293
    %v2978 = vpack.c.b16 %v2306, %v2294
    %v2979 = vpack.c.b16 %v2307, %v2295
    %v2980 = vpack.c.b16 %v2308, %v2296
    %v2981 = vpack.c.b16 %v2309, %v2297
    %v2982 = vpack.c.b16 %v2310, %v2298
    %v2983 = vpack.c.b16 %v2323, %v2311
    %v2984 = vpack.c.b16 %v2324, %v2312
    %v2985 = vpack.c.b16 %v2325, %v2313
    %v2986 = vpack.c.b16 %v2326, %v2314
    %v2987 = vpack.c.b16 %v2327, %v2315
    %v2988 = vpack.c.b16 %v2328, %v2316
    %v2989 = vpack.c.b16 %v2329, %v2317
    %v2990 = vpack.c.b16 %v2330, %v2318
    %v2991 = vpack.c.b16 %v2331, %v2319
    %v2992 = vpack.c.b16 %v2332, %v2320
    %v2993 = vpack.c.b16 %v2333, %v2321
    %v2994 = vpack.c.b16 %v2334, %v2322
    %v2995 = vpack.c.b16 %v2347, %v2335
    %v2996 = vpack.c.b16 %v2348, %v2336
    %v2997 = vpack.c.b16 %v2349, %v2337
    %v2998 = vpack.c.b16 %v2350, %v2338
    %v2999 = vpack.c.b16 %v2351, %v2339
    %v3000 = vpack.c.b16 %v2352, %v2340
    %v3001 = vpack.c.b16 %v2353, %v2341
    %v3002 = vpack.c.b16 %v2354, %v2342
    %v3003 = vpack.c.b16 %v2355, %v2343
    %v3004 = vpack.c.b16 %v2356, %v2344
    %v3005 = vpack.c.b16 %v2357, %v2345
    %v3006 = vpack.c.b16 %v2358, %v2346
    %v3007 = vpack.c.b16 %v2371, %v2359
    %v3008 = vpack.c.b16 %v2372, %v2360
    %v3009 = vpack.c.b16 %v2373, %v2361
    %v3010 = vpack.c.b16 %v2374, %v2362
    %v3011 = vpack.c.b16 %v2375, %v2363
    %v3012 = vpack.c.b16 %v2376, %v2364
    %v3013 = vpack.c.b16 %v2377, %v2365
    %v3014 = vpack.c.b16 %v2378, %v2366
    %v3015 = vpack.c.b16 %v2379, %v2367
    %v3016 = vpack.c.b16 %v2380, %v2368
    %v3017 = vpack.c.b16 %v2381, %v2369
    %v3018 = vpack.c.b16 %v2382, %v2370
    %v3019 = vpack.c.b16 %v2395, %v2383
    %v3020 = vpack.c.b16 %v2396, %v2384
    %v3021 = vpack.c.b16 %v2397, %v2385
    %v3022 = vpack.c.b16 %v2398, %v2386
    %v3023 = vpack.c.b16 %v2399, %v2387
    %v3024 = vpack.c.b16 %v2400, %v2388
    %v3025 = vpack.c.b16 %v2401, %v2389
    %v3026 = vpack.c.b16 %v2402, %v2390
    %v3027 = vpack.c.b16 %v2403, %v2391
    %v3028 = vpack.c.b16 %v2404, %v2392
    %v3029 = vpack.c.b16 %v2405, %v2393
    %v3030 = vpack.c.b16 %v2406, %v2394
    %v3031 = vpack.c.b16 %v2419, %v2407
    %v3032 = vpack.c.b16 %v2420, %v2408
    %v3033 = vpack.c.b16 %v2421, %v2409
    %v3034 = vpack.c.b16 %v2422, %v2410
    %v3035 = vpack.c.b16 %v2423, %v2411
    %v3036 = vpack.c.b16 %v2424, %v2412
    %v3037 = vpack.c.b16 %v2425, %v2413
    %v3038 = vpack.c.b16 %v2426, %v2414
    %v3039 = vpack.c.b16 %v2427, %v2415
    %v3040 = vpack.c.b16 %v2428, %v2416
    %v3041 = vpack.c.b16 %v2429, %v2417
    %v3042 = vpack.c.b16 %v2430, %v2418
    %v3043 = vpack.c.b16 %v2443, %v2431
    %v3044 = vpack.c.b16 %v2444, %v2432
    %v3045 = vpack.c.b16 %v2445, %v2433
    %v3046 = vpack.c.b16 %v2446, %v2434
    %v3047 = vpack.c.b16 %v2447, %v2435
    %v3048 = vpack.c.b16 %v2448, %v2436
    %v3049 = vpack.c.b16 %v2449, %v2437
    %v3050 = vpack.c.b16 %v2450, %v2438
    %v3051 = vpack.c.b16 %v2451, %v2439
    %v3052 = vpack.c.b16 %v2452, %v2440
    %v3053 = vpack.c.b16 %v2453, %v2441
    %v3054 = vpack.c.b16 %v2454, %v2442
    %v3055 = vpack.c.b16 %v2467, %v2455
    %v3056 = vpack.c.b16 %v2468, %v2456
    %v3057 = vpack.c.b16 %v2469, %v2457
    %v3058 = vpack.c.b16 %v2470, %v2458
    %v3059 = vpack.c.b16 %v2471, %v2459
    %v3060 = vpack.c.b16 %v2472, %v2460
    %v3061 = vpack.c.b16 %v2473, %v2461
    %v3062 = vpack.c.b16 %v2474, %v2462
    %v3063 = vpack.c.b16 %v2475, %v2463
    %v3064 = vpack.c.b16 %v2476, %v2464
    %v3065 = vpack.c.b16 %v2477, %v2465
    %v3066 = vpack.c.b16 %v2478, %v2466
    %v3067 = vpack.c.b16 %v2491, %v2479
    %v3068 = vpack.c.b16 %v2492, %v2480
    %v3069 = vpack.c.b16 %v2493, %v2481
    %v3070 = vpack.c.b16 %v2494, %v2482
    %v3071 = vpack.c.b16 %v2495, %v2483
    %v3072 = vpack.c.b16 %v2496, %v2484
    %v3073 = vpack.c.b16 %v2497, %v2485
    %v3074 = vpack.c.b16 %v2498, %v2486
    %v3075 = vpack.c.b16 %v2499, %v2487
    %v3076 = vpack.c.b16 %v2500, %v2488
    %v3077 = vpack.c.b16 %v2501, %v2489
    %v3078 = vpack.c.b16 %v2502, %v2490
    %3655 = vmatprep.subr.bf16.mxu0 %v2504
    %3656 = vmatpush1.bf16.msra.mxu0 %v2503
    %3657 = vmatprep.subr.bf16.mxu0 %v2516
    %3658 = vmatpush1.bf16.msra.mxu0 %v2515
    %3659 = vmatprep.subr.bf16.mxu0 %v2528
    %3660 = vmatpush1.bf16.msra.mxu0 %v2527
    %3661 = vmatprep.subr.bf16.mxu0 %v2540
    %3662 = vmatpush1.bf16.msra.mxu0 %v2539
    %3663 = vmatprep.subr.bf16.mxu0 %v2552
    %3664 = vmatpush1.bf16.msra.mxu0 %v2551
    %3665 = vmatprep.subr.bf16.mxu0 %v2564
    %3666 = vmatpush1.bf16.msra.mxu0 %v2563
    %3667 = vmatprep.subr.bf16.mxu0 %v2576
    %3668 = vmatpush1.bf16.msra.mxu0 %v2575
    %3669 = vmatprep.subr.bf16.mxu0 %v2588
    %3670 = vmatpush1.bf16.msra.mxu0 %v2587
    %3671 = vmatprep.subr.bf16.mxu0 %v2600
    %3672 = vmatpush1.bf16.msra.mxu0 %v2599
    %3673 = vmatprep.subr.bf16.mxu0 %v2612
    %3674 = vmatpush1.bf16.msra.mxu0 %v2611
    %3675 = vmatprep.subr.bf16.mxu0 %v2624
    %3676 = vmatpush1.bf16.msra.mxu0 %v2623
    %3677 = vmatprep.subr.bf16.mxu0 %v2636
    %3678 = vmatpush1.bf16.msra.mxu0 %v2635
    %3679 = vmatprep.subr.bf16.mxu0 %v2648
    %3680 = vmatpush1.bf16.msra.mxu0 %v2647
    %3681 = vmatprep.subr.bf16.mxu0 %v2660
    %3682 = vmatpush1.bf16.msra.mxu0 %v2659
    %3683 = vmatprep.subr.bf16.mxu0 %v2672
    %3684 = vmatpush1.bf16.msra.mxu0 %v2671
    %3685 = vmatprep.subr.bf16.mxu0 %v2684
    %3686 = vmatpush1.bf16.msra.mxu0 %v2683
    %3687 = vmatprep.mubr.bf16.mxu0 %v764
    %3688 = vmatmul.mubr.bf16.gmra.mrb[0].mxu0 %v763
    %v3689 = vpop.f32.mrb[0].mxu0
    %v3690 = vadd.f32 0.0, %v3689
    %v3691 = vpop.f32.mrb[0].mxu0
    %v3692 = vadd.f32 0.0, %v3691
    %v3693 = vpop.f32.mrb[0].mxu0
    %v3694 = vadd.f32 0.0, %v3693
    %v3695 = vpop.f32.mrb[0].mxu0
    %v3696 = vadd.f32 0.0, %v3695
    %3697 = vdwg.mxu0
    %3698 = vmatprep.subr.bf16.mxu0 %v2696
    %3699 = vmatpush1.bf16.msra.mxu0 %v2695
    %3700 = vmatprep.subr.bf16.mxu0 %v2708
    %3701 = vmatpush1.bf16.msra.mxu0 %v2707
    %3702 = vmatprep.subr.bf16.mxu0 %v2720
    %3703 = vmatpush1.bf16.msra.mxu0 %v2719
    %3704 = vmatprep.subr.bf16.mxu0 %v2732
    %3705 = vmatpush1.bf16.msra.mxu0 %v2731
    %3706 = vmatprep.subr.bf16.mxu0 %v2744
    %3707 = vmatpush1.bf16.msra.mxu0 %v2743
    %3708 = vmatprep.subr.bf16.mxu0 %v2756
    %3709 = vmatpush1.bf16.msra.mxu0 %v2755
    %3710 = vmatprep.subr.bf16.mxu0 %v2768
    %3711 = vmatpush1.bf16.msra.mxu0 %v2767
    %3712 = vmatprep.subr.bf16.mxu0 %v2780
    %3713 = vmatpush1.bf16.msra.mxu0 %v2779
    %3714 = vmatprep.subr.bf16.mxu0 %v2792
    %3715 = vmatpush1.bf16.msra.mxu0 %v2791
    %3716 = vmatprep.subr.bf16.mxu0 %v2804
    %3717 = vmatpush1.bf16.msra.mxu0 %v2803
    %3718 = vmatprep.subr.bf16.mxu0 %v2816
    %3719 = vmatpush1.bf16.msra.mxu0 %v2815
    %3720 = vmatprep.subr.bf16.mxu0 %v2828
    %3721 = vmatpush1.bf16.msra.mxu0 %v2827
    %3722 = vmatprep.subr.bf16.mxu0 %v2840
    %3723 = vmatpush1.bf16.msra.mxu0 %v2839
    %3724 = vmatprep.subr.bf16.mxu0 %v2852
    %3725 = vmatpush1.bf16.msra.mxu0 %v2851
    %3726 = vmatprep.subr.bf16.mxu0 %v2864
    %3727 = vmatpush1.bf16.msra.mxu0 %v2863
    %3728 = vmatprep.subr.bf16.mxu0 %v2876
    %3729 = vmatpush1.bf16.msra.mxu0 %v2875
    %3730 = vmatprep.mubr.bf16.mxu0 %v766
    %3731 = vmatmul.mubr.bf16.gmra.mrb[0].mxu0 %v765
    %v3732 = vpop.f32.mrb[0].mxu0
    %v3733 = vadd.f32 %v3690, %v3732
    %v3734 = vpop.f32.mrb[0].mxu0
    %v3735 = vadd.f32 %v3692, %v3734
    %v3736 = vpop.f32.mrb[0].mxu0
    %v3737 = vadd.f32 %v3694, %v3736
    %v3738 = vpop.f32.mrb[0].mxu0
    %v3739 = vadd.f32 %v3696, %v3738
    %3740 = vdwg.mxu0
    %3741 = vmatprep.subr.bf16.mxu0 %v2888
    %3742 = vmatpush1.bf16.msra.mxu0 %v2887
    %3743 = vmatprep.subr.bf16.mxu0 %v2900
    %3744 = vmatpush1.bf16.msra.mxu0 %v2899
    %3745 = vmatprep.subr.bf16.mxu0 %v2912
    %3746 = vmatpush1.bf16.msra.mxu0 %v2911
    %3747 = vmatprep.subr.bf16.mxu0 %v2924
    %3748 = vmatpush1.bf16.msra.mxu0 %v2923
    %3749 = vmatprep.subr.bf16.mxu0 %v2936
    %3750 = vmatpush1.bf16.msra.mxu0 %v2935
    %3751 = vmatprep.subr.bf16.mxu0 %v2948
    %3752 = vmatpush1.bf16.msra.mxu0 %v2947
    %3753 = vmatprep.subr.bf16.mxu0 %v2960
    %3754 = vmatpush1.bf16.msra.mxu0 %v2959
    %3755 = vmatprep.subr.bf16.mxu0 %v2972
    %3756 = vmatpush1.bf16.msra.mxu0 %v2971
    %3757 = vmatprep.subr.bf16.mxu0 %v2984
    %3758 = vmatpush1.bf16.msra.mxu0 %v2983
    %3759 = vmatprep.subr.bf16.mxu0 %v2996
    %3760 = vmatpush1.bf16.msra.mxu0 %v2995
    %3761 = vmatprep.subr.bf16.mxu0 %v3008
    %3762 = vmatpush1.bf16.msra.mxu0 %v3007
    %3763 = vmatprep.subr.bf16.mxu0 %v3020
    %3764 = vmatpush1.bf16.msra.mxu0 %v3019
    %3765 = vmatprep.subr.bf16.mxu0 %v3032
    %3766 = vmatpush1.bf16.msra.mxu0 %v3031
    %3767 = vmatprep.subr.bf16.mxu0 %v3044
    %3768 = vmatpush1.bf16.msra.mxu0 %v3043
    %3769 = vmatprep.subr.bf16.mxu0 %v3056
    %3770 = vmatpush1.bf16.msra.mxu0 %v3055
    %3771 = vmatprep.subr.bf16.mxu0 %v3068
    %3772 = vmatpush1.bf16.msra.mxu0 %v3067
    %3773 = vmatprep.mubr.bf16.mxu0 %v768
    %3774 = vmatmul.mubr.bf16.gmra.mrb[0].mxu0 %v767
    %v3775 = vpop.f32.mrb[0].mxu0
    %v3776 = vadd.f32 %v3733, %v3775
    %v3777 = vpop.f32.mrb[0].mxu0
    %v3778 = vadd.f32 %v3735, %v3777
    %v3779 = vpop.f32.mrb[0].mxu0
    %v3780 = vadd.f32 %v3737, %v3779
    %v3781 = vpop.f32.mrb[0].mxu0
    %v3782 = vadd.f32 %v3739, %v3781
    %3783 = vdwg.mxu0
    %3784 = vmatprep.subr.bf16.mxu0 %v2506
    %3785 = vmatpush1.bf16.msra.mxu0 %v2505
    %3786 = vmatprep.subr.bf16.mxu0 %v2518
    %3787 = vmatpush1.bf16.msra.mxu0 %v2517
    %3788 = vmatprep.subr.bf16.mxu0 %v2530
    %3789 = vmatpush1.bf16.msra.mxu0 %v2529
    %3790 = vmatprep.subr.bf16.mxu0 %v2542
    %3791 = vmatpush1.bf16.msra.mxu0 %v2541
    %3792 = vmatprep.subr.bf16.mxu0 %v2554
    %3793 = vmatpush1.bf16.msra.mxu0 %v2553
    %3794 = vmatprep.subr.bf16.mxu0 %v2566
    %3795 = vmatpush1.bf16.msra.mxu0 %v2565
    %3796 = vmatprep.subr.bf16.mxu0 %v2578
    %3797 = vmatpush1.bf16.msra.mxu0 %v2577
    %3798 = vmatprep.subr.bf16.mxu0 %v2590
    %3799 = vmatpush1.bf16.msra.mxu0 %v2589
    %3800 = vmatprep.subr.bf16.mxu0 %v2602
    %3801 = vmatpush1.bf16.msra.mxu0 %v2601
    %3802 = vmatprep.subr.bf16.mxu0 %v2614
    %3803 = vmatpush1.bf16.msra.mxu0 %v2613
    %3804 = vmatprep.subr.bf16.mxu0 %v2626
    %3805 = vmatpush1.bf16.msra.mxu0 %v2625
    %3806 = vmatprep.subr.bf16.mxu0 %v2638
    %3807 = vmatpush1.bf16.msra.mxu0 %v2637
    %3808 = vmatprep.subr.bf16.mxu0 %v2650
    %3809 = vmatpush1.bf16.msra.mxu0 %v2649
    %3810 = vmatprep.subr.bf16.mxu0 %v2662
    %3811 = vmatpush1.bf16.msra.mxu0 %v2661
    %3812 = vmatprep.subr.bf16.mxu0 %v2674
    %3813 = vmatpush1.bf16.msra.mxu0 %v2673
    %3814 = vmatprep.subr.bf16.mxu0 %v2686
    %3815 = vmatpush1.bf16.msra.mxu0 %v2685
    %3816 = vmatprep.mubr.bf16.mxu0 %v764
    %3817 = vmatmul.mubr.bf16.gmra.mrb[0].mxu0 %v763
    %v3818 = vpop.f32.mrb[0].mxu0
    %v3819 = vadd.f32 0.0, %v3818
    %v3820 = vpop.f32.mrb[0].mxu0
    %v3821 = vadd.f32 0.0, %v3820
    %v3822 = vpop.f32.mrb[0].mxu0
    %v3823 = vadd.f32 0.0, %v3822
    %v3824 = vpop.f32.mrb[0].mxu0
    %v3825 = vadd.f32 0.0, %v3824
    %3826 = vdwg.mxu0
    %3827 = vmatprep.subr.bf16.mxu0 %v2698
    %3828 = vmatpush1.bf16.msra.mxu0 %v2697
    %3829 = vmatprep.subr.bf16.mxu0 %v2710
    %3830 = vmatpush1.bf16.msra.mxu0 %v2709
    %3831 = vmatprep.subr.bf16.mxu0 %v2722
    %3832 = vmatpush1.bf16.msra.mxu0 %v2721
    %3833 = vmatprep.subr.bf16.mxu0 %v2734
    %3834 = vmatpush1.bf16.msra.mxu0 %v2733
    %3835 = vmatprep.subr.bf16.mxu0 %v2746
    %3836 = vmatpush1.bf16.msra.mxu0 %v2745
    %3837 = vmatprep.subr.bf16.mxu0 %v2758
    %3838 = vmatpush1.bf16.msra.mxu0 %v2757
    %3839 = vmatprep.subr.bf16.mxu0 %v2770
    %3840 = vmatpush1.bf16.msra.mxu0 %v2769
    %3841 = vmatprep.subr.bf16.mxu0 %v2782
    %3842 = vmatpush1.bf16.msra.mxu0 %v2781
    %3843 = vmatprep.subr.bf16.mxu0 %v2794
    %3844 = vmatpush1.bf16.msra.mxu0 %v2793
    %3845 = vmatprep.subr.bf16.mxu0 %v2806
    %3846 = vmatpush1.bf16.msra.mxu0 %v2805
    %3847 = vmatprep.subr.bf16.mxu0 %v2818
    %3848 = vmatpush1.bf16.msra.mxu0 %v2817
    %3849 = vmatprep.subr.bf16.mxu0 %v2830
    %3850 = vmatpush1.bf16.msra.mxu0 %v2829
    %3851 = vmatprep.subr.bf16.mxu0 %v2842
    %3852 = vmatpush1.bf16.msra.mxu0 %v2841
    %3853 = vmatprep.subr.bf16.mxu0 %v2854
    %3854 = vmatpush1.bf16.msra.mxu0 %v2853
    %3855 = vmatprep.subr.bf16.mxu0 %v2866
    %3856 = vmatpush1.bf16.msra.mxu0 %v2865
    %3857 = vmatprep.subr.bf16.mxu0 %v2878
    %3858 = vmatpush1.bf16.msra.mxu0 %v2877
    %3859 = vmatprep.mubr.bf16.mxu0 %v766
    %3860 = vmatmul.mubr.bf16.gmra.mrb[0].mxu0 %v765
    %v3861 = vpop.f32.mrb[0].mxu0
    %v3862 = vadd.f32 %v3819, %v3861
    %v3863 = vpop.f32.mrb[0].mxu0
    %v3864 = vadd.f32 %v3821, %v3863
    %v3865 = vpop.f32.mrb[0].mxu0
    %v3866 = vadd.f32 %v3823, %v3865
    %v3867 = vpop.f32.mrb[0].mxu0
    %v3868 = vadd.f32 %v3825, %v3867
    %3869 = vdwg.mxu0
    %3870 = vmatprep.subr.bf16.mxu0 %v2890
    %3871 = vmatpush1.bf16.msra.mxu0 %v2889
    %3872 = vmatprep.subr.bf16.mxu0 %v2902
    %3873 = vmatpush1.bf16.msra.mxu0 %v2901
    %3874 = vmatprep.subr.bf16.mxu0 %v2914
    %3875 = vmatpush1.bf16.msra.mxu0 %v2913
    %3876 = vmatprep.subr.bf16.mxu0 %v2926
    %3877 = vmatpush1.bf16.msra.mxu0 %v2925
    %3878 = vmatprep.subr.bf16.mxu0 %v2938
    %3879 = vmatpush1.bf16.msra.mxu0 %v2937
    %3880 = vmatprep.subr.bf16.mxu0 %v2950
    %3881 = vmatpush1.bf16.msra.mxu0 %v2949
    %3882 = vmatprep.subr.bf16.mxu0 %v2962
    %3883 = vmatpush1.bf16.msra.mxu0 %v2961
    %3884 = vmatprep.subr.bf16.mxu0 %v2974
    %3885 = vmatpush1.bf16.msra.mxu0 %v2973
    %3886 = vmatprep.subr.bf16.mxu0 %v2986
    %3887 = vmatpush1.bf16.msra.mxu0 %v2985
    %3888 = vmatprep.subr.bf16.mxu0 %v2998
    %3889 = vmatpush1.bf16.msra.mxu0 %v2997
    %3890 = vmatprep.subr.bf16.mxu0 %v3010
    %3891 = vmatpush1.bf16.msra.mxu0 %v3009
    %3892 = vmatprep.subr.bf16.mxu0 %v3022
    %3893 = vmatpush1.bf16.msra.mxu0 %v3021
    %3894 = vmatprep.subr.bf16.mxu0 %v3034
    %3895 = vmatpush1.bf16.msra.mxu0 %v3033
    %3896 = vmatprep.subr.bf16.mxu0 %v3046
    %3897 = vmatpush1.bf16.msra.mxu0 %v3045
    %3898 = vmatprep.subr.bf16.mxu0 %v3058
    %3899 = vmatpush1.bf16.msra.mxu0 %v3057
    %3900 = vmatprep.subr.bf16.mxu0 %v3070
    %3901 = vmatpush1.bf16.msra.mxu0 %v3069
    %3902 = vmatprep.mubr.bf16.mxu0 %v768
    %3903 = vmatmul.mubr.bf16.gmra.mrb[0].mxu0 %v767
    %v3904 = vpop.f32.mrb[0].mxu0
    %v3905 = vadd.f32 %v3862, %v3904
    %v3906 = vpop.f32.mrb[0].mxu0
    %v3907 = vadd.f32 %v3864, %v3906
    %v3908 = vpop.f32.mrb[0].mxu0
    %v3909 = vadd.f32 %v3866, %v3908
    %v3910 = vpop.f32.mrb[0].mxu0
    %v3911 = vadd.f32 %v3868, %v3910
    %3912 = vdwg.mxu0
    %3913 = vmatprep.subr.bf16.mxu0 %v2508
    %3914 = vmatpush1.bf16.msra.mxu0 %v2507
    %3915 = vmatprep.subr.bf16.mxu0 %v2520
    %3916 = vmatpush1.bf16.msra.mxu0 %v2519
    %3917 = vmatprep.subr.bf16.mxu0 %v2532
    %3918 = vmatpush1.bf16.msra.mxu0 %v2531
    %3919 = vmatprep.subr.bf16.mxu0 %v2544
    %3920 = vmatpush1.bf16.msra.mxu0 %v2543
    %3921 = vmatprep.subr.bf16.mxu0 %v2556
    %3922 = vmatpush1.bf16.msra.mxu0 %v2555
    %3923 = vmatprep.subr.bf16.mxu0 %v2568
    %3924 = vmatpush1.bf16.msra.mxu0 %v2567
    %3925 = vmatprep.subr.bf16.mxu0 %v2580
    %3926 = vmatpush1.bf16.msra.mxu0 %v2579
    %3927 = vmatprep.subr.bf16.mxu0 %v2592
    %3928 = vmatpush1.bf16.msra.mxu0 %v2591
    %3929 = vmatprep.subr.bf16.mxu0 %v2604
    %3930 = vmatpush1.bf16.msra.mxu0 %v2603
    %3931 = vmatprep.subr.bf16.mxu0 %v2616
    %3932 = vmatpush1.bf16.msra.mxu0 %v2615
    %3933 = vmatprep.subr.bf16.mxu0 %v2628
    %3934 = vmatpush1.bf16.msra.mxu0 %v2627
    %3935 = vmatprep.subr.bf16.mxu0 %v2640
    %3936 = vmatpush1.bf16.msra.mxu0 %v2639
    %3937 = vmatprep.subr.bf16.mxu0 %v2652
    %3938 = vmatpush1.bf16.msra.mxu0 %v2651
    %3939 = vmatprep.subr.bf16.mxu0 %v2664
    %3940 = vmatpush1.bf16.msra.mxu0 %v2663
    %3941 = vmatprep.subr.bf16.mxu0 %v2676
    %3942 = vmatpush1.bf16.msra.mxu0 %v2675
    %3943 = vmatprep.subr.bf16.mxu0 %v2688
    %3944 = vmatpush1.bf16.msra.mxu0 %v2687
    %3945 = vmatprep.mubr.bf16.mxu0 %v764
    %3946 = vmatmul.mubr.bf16.gmra.mrb[0].mxu0 %v763
    %v3947 = vpop.f32.mrb[0].mxu0
    %v3948 = vadd.f32 0.0, %v3947
    %v3949 = vpop.f32.mrb[0].mxu0
    %v3950 = vadd.f32 0.0, %v3949
    %v3951 = vpop.f32.mrb[0].mxu0
    %v3952 = vadd.f32 0.0, %v3951
    %v3953 = vpop.f32.mrb[0].mxu0
    %v3954 = vadd.f32 0.0, %v3953
    %3955 = vdwg.mxu0
    %3956 = vmatprep.subr.bf16.mxu0 %v2700
    %3957 = vmatpush1.bf16.msra.mxu0 %v2699
    %3958 = vmatprep.subr.bf16.mxu0 %v2712
    %3959 = vmatpush1.bf16.msra.mxu0 %v2711
    %3960 = vmatprep.subr.bf16.mxu0 %v2724
    %3961 = vmatpush1.bf16.msra.mxu0 %v2723
    %3962 = vmatprep.subr.bf16.mxu0 %v2736
    %3963 = vmatpush1.bf16.msra.mxu0 %v2735
    %3964 = vmatprep.subr.bf16.mxu0 %v2748
    %3965 = vmatpush1.bf16.msra.mxu0 %v2747
    %3966 = vmatprep.subr.bf16.mxu0 %v2760
    %3967 = vmatpush1.bf16.msra.mxu0 %v2759
    %3968 = vmatprep.subr.bf16.mxu0 %v2772
    %3969 = vmatpush1.bf16.msra.mxu0 %v2771
    %3970 = vmatprep.subr.bf16.mxu0 %v2784
    %3971 = vmatpush1.bf16.msra.mxu0 %v2783
    %3972 = vmatprep.subr.bf16.mxu0 %v2796
    %3973 = vmatpush1.bf16.msra.mxu0 %v2795
    %3974 = vmatprep.subr.bf16.mxu0 %v2808
    %3975 = vmatpush1.bf16.msra.mxu0 %v2807
    %3976 = vmatprep.subr.bf16.mxu0 %v2820
    %3977 = vmatpush1.bf16.msra.mxu0 %v2819
    %3978 = vmatprep.subr.bf16.mxu0 %v2832
    %3979 = vmatpush1.bf16.msra.mxu0 %v2831
    %3980 = vmatprep.subr.bf16.mxu0 %v2844
    %3981 = vmatpush1.bf16.msra.mxu0 %v2843
    %3982 = vmatprep.subr.bf16.mxu0 %v2856
    %3983 = vmatpush1.bf16.msra.mxu0 %v2855
    %3984 = vmatprep.subr.bf16.mxu0 %v2868
    %3985 = vmatpush1.bf16.msra.mxu0 %v2867
    %3986 = vmatprep.subr.bf16.mxu0 %v2880
    %3987 = vmatpush1.bf16.msra.mxu0 %v2879
    %3988 = vmatprep.mubr.bf16.mxu0 %v766
    %3989 = vmatmul.mubr.bf16.gmra.mrb[0].mxu0 %v765
    %v3990 = vpop.f32.mrb[0].mxu0
    %v3991 = vadd.f32 %v3948, %v3990
    %v3992 = vpop.f32.mrb[0].mxu0
    %v3993 = vadd.f32 %v3950, %v3992
    %v3994 = vpop.f32.mrb[0].mxu0
    %v3995 = vadd.f32 %v3952, %v3994
    %v3996 = vpop.f32.mrb[0].mxu0
    %v3997 = vadd.f32 %v3954, %v3996
    %3998 = vdwg.mxu0
    %3999 = vmatprep.subr.bf16.mxu0 %v2892
    %4000 = vmatpush1.bf16.msra.mxu0 %v2891
    %4001 = vmatprep.subr.bf16.mxu0 %v2904
    %4002 = vmatpush1.bf16.msra.mxu0 %v2903
    %4003 = vmatprep.subr.bf16.mxu0 %v2916
    %4004 = vmatpush1.bf16.msra.mxu0 %v2915
    %4005 = vmatprep.subr.bf16.mxu0 %v2928
    %4006 = vmatpush1.bf16.msra.mxu0 %v2927
    %4007 = vmatprep.subr.bf16.mxu0 %v2940
    %4008 = vmatpush1.bf16.msra.mxu0 %v2939
    %4009 = vmatprep.subr.bf16.mxu0 %v2952
    %4010 = vmatpush1.bf16.msra.mxu0 %v2951
    %4011 = vmatprep.subr.bf16.mxu0 %v2964
    %4012 = vmatpush1.bf16.msra.mxu0 %v2963
    %4013 = vmatprep.subr.bf16.mxu0 %v2976
    %4014 = vmatpush1.bf16.msra.mxu0 %v2975
    %4015 = vmatprep.subr.bf16.mxu0 %v2988
    %4016 = vmatpush1.bf16.msra.mxu0 %v2987
    %4017 = vmatprep.subr.bf16.mxu0 %v3000
    %4018 = vmatpush1.bf16.msra.mxu0 %v2999
    %4019 = vmatprep.subr.bf16.mxu0 %v3012
    %4020 = vmatpush1.bf16.msra.mxu0 %v3011
    %4021 = vmatprep.subr.bf16.mxu0 %v3024
    %4022 = vmatpush1.bf16.msra.mxu0 %v3023
    %4023 = vmatprep.subr.bf16.mxu0 %v3036
    %4024 = vmatpush1.bf16.msra.mxu0 %v3035
    %4025 = vmatprep.subr.bf16.mxu0 %v3048
    %4026 = vmatpush1.bf16.msra.mxu0 %v3047
    %4027 = vmatprep.subr.bf16.mxu0 %v3060
    %4028 = vmatpush1.bf16.msra.mxu0 %v3059
    %4029 = vmatprep.subr.bf16.mxu0 %v3072
    %4030 = vmatpush1.bf16.msra.mxu0 %v3071
    %4031 = vmatprep.mubr.bf16.mxu0 %v768
    %4032 = vmatmul.mubr.bf16.gmra.mrb[0].mxu0 %v767
    %v4033 = vpop.f32.mrb[0].mxu0
    %v4034 = vadd.f32 %v3991, %v4033
    %v4035 = vpop.f32.mrb[0].mxu0
    %v4036 = vadd.f32 %v3993, %v4035
    %v4037 = vpop.f32.mrb[0].mxu0
    %v4038 = vadd.f32 %v3995, %v4037
    %v4039 = vpop.f32.mrb[0].mxu0
    %v4040 = vadd.f32 %v3997, %v4039
    %4041 = vdwg.mxu0
    %4042 = vmatprep.subr.bf16.mxu0 %v2510
    %4043 = vmatpush1.bf16.msra.mxu0 %v2509
    %4044 = vmatprep.subr.bf16.mxu0 %v2522
    %4045 = vmatpush1.bf16.msra.mxu0 %v2521
    %4046 = vmatprep.subr.bf16.mxu0 %v2534
    %4047 = vmatpush1.bf16.msra.mxu0 %v2533
    %4048 = vmatprep.subr.bf16.mxu0 %v2546
    %4049 = vmatpush1.bf16.msra.mxu0 %v2545
    %4050 = vmatprep.subr.bf16.mxu0 %v2558
    %4051 = vmatpush1.bf16.msra.mxu0 %v2557
    %4052 = vmatprep.subr.bf16.mxu0 %v2570
    %4053 = vmatpush1.bf16.msra.mxu0 %v2569
    %4054 = vmatprep.subr.bf16.mxu0 %v2582
    %4055 = vmatpush1.bf16.msra.mxu0 %v2581
    %4056 = vmatprep.subr.bf16.mxu0 %v2594
    %4057 = vmatpush1.bf16.msra.mxu0 %v2593
    %4058 = vmatprep.subr.bf16.mxu0 %v2606
    %4059 = vmatpush1.bf16.msra.mxu0 %v2605
    %4060 = vmatprep.subr.bf16.mxu0 %v2618
    %4061 = vmatpush1.bf16.msra.mxu0 %v2617
    %4062 = vmatprep.subr.bf16.mxu0 %v2630
    %4063 = vmatpush1.bf16.msra.mxu0 %v2629
    %4064 = vmatprep.subr.bf16.mxu0 %v2642
    %4065 = vmatpush1.bf16.msra.mxu0 %v2641
    %4066 = vmatprep.subr.bf16.mxu0 %v2654
    %4067 = vmatpush1.bf16.msra.mxu0 %v2653
    %4068 = vmatprep.subr.bf16.mxu0 %v2666
    %4069 = vmatpush1.bf16.msra.mxu0 %v2665
    %4070 = vmatprep.subr.bf16.mxu0 %v2678
    %4071 = vmatpush1.bf16.msra.mxu0 %v2677
    %4072 = vmatprep.subr.bf16.mxu0 %v2690
    %4073 = vmatpush1.bf16.msra.mxu0 %v2689
    %4074 = vmatprep.mubr.bf16.mxu0 %v764
    %4075 = vmatmul.mubr.bf16.gmra.mrb[0].mxu0 %v763
    %v4076 = vpop.f32.mrb[0].mxu0
    %v4077 = vadd.f32 0.0, %v4076
    %v4078 = vpop.f32.mrb[0].mxu0
    %v4079 = vadd.f32 0.0, %v4078
    %v4080 = vpop.f32.mrb[0].mxu0
    %v4081 = vadd.f32 0.0, %v4080
    %v4082 = vpop.f32.mrb[0].mxu0
    %v4083 = vadd.f32 0.0, %v4082
    %4084 = vdwg.mxu0
    %4085 = vmatprep.subr.bf16.mxu0 %v2702
    %4086 = vmatpush1.bf16.msra.mxu0 %v2701
    %4087 = vmatprep.subr.bf16.mxu0 %v2714
    %4088 = vmatpush1.bf16.msra.mxu0 %v2713
    %4089 = vmatprep.subr.bf16.mxu0 %v2726
    %4090 = vmatpush1.bf16.msra.mxu0 %v2725
    %4091 = vmatprep.subr.bf16.mxu0 %v2738
    %4092 = vmatpush1.bf16.msra.mxu0 %v2737
    %4093 = vmatprep.subr.bf16.mxu0 %v2750
    %4094 = vmatpush1.bf16.msra.mxu0 %v2749
    %4095 = vmatprep.subr.bf16.mxu0 %v2762
    %4096 = vmatpush1.bf16.msra.mxu0 %v2761
    %4097 = vmatprep.subr.bf16.mxu0 %v2774
    %4098 = vmatpush1.bf16.msra.mxu0 %v2773
    %4099 = vmatprep.subr.bf16.mxu0 %v2786
    %4100 = vmatpush1.bf16.msra.mxu0 %v2785
    %4101 = vmatprep.subr.bf16.mxu0 %v2798
    %4102 = vmatpush1.bf16.msra.mxu0 %v2797
    %4103 = vmatprep.subr.bf16.mxu0 %v2810
    %4104 = vmatpush1.bf16.msra.mxu0 %v2809
    %4105 = vmatprep.subr.bf16.mxu0 %v2822
    %4106 = vmatpush1.bf16.msra.mxu0 %v2821
    %4107 = vmatprep.subr.bf16.mxu0 %v2834
    %4108 = vmatpush1.bf16.msra.mxu0 %v2833
    %4109 = vmatprep.subr.bf16.mxu0 %v2846
    %4110 = vmatpush1.bf16.msra.mxu0 %v2845
    %4111 = vmatprep.subr.bf16.mxu0 %v2858
    %4112 = vmatpush1.bf16.msra.mxu0 %v2857
    %4113 = vmatprep.subr.bf16.mxu0 %v2870
    %4114 = vmatpush1.bf16.msra.mxu0 %v2869
    %4115 = vmatprep.subr.bf16.mxu0 %v2882
    %4116 = vmatpush1.bf16.msra.mxu0 %v2881
    %4117 = vmatprep.mubr.bf16.mxu0 %v766
    %4118 = vmatmul.mubr.bf16.gmra.mrb[0].mxu0 %v765
    %v4119 = vpop.f32.mrb[0].mxu0
    %v4120 = vadd.f32 %v4077, %v4119
    %v4121 = vpop.f32.mrb[0].mxu0
    %v4122 = vadd.f32 %v4079, %v4121
    %v4123 = vpop.f32.mrb[0].mxu0
    %v4124 = vadd.f32 %v4081, %v4123
    %v4125 = vpop.f32.mrb[0].mxu0
    %v4126 = vadd.f32 %v4083, %v4125
    %4127 = vdwg.mxu0
    %4128 = vmatprep.subr.bf16.mxu0 %v2894
    %4129 = vmatpush1.bf16.msra.mxu0 %v2893
    %4130 = vmatprep.subr.bf16.mxu0 %v2906
    %4131 = vmatpush1.bf16.msra.mxu0 %v2905
    %4132 = vmatprep.subr.bf16.mxu0 %v2918
    %4133 = vmatpush1.bf16.msra.mxu0 %v2917
    %4134 = vmatprep.subr.bf16.mxu0 %v2930
    %4135 = vmatpush1.bf16.msra.mxu0 %v2929
    %4136 = vmatprep.subr.bf16.mxu0 %v2942
    %4137 = vmatpush1.bf16.msra.mxu0 %v2941
    %4138 = vmatprep.subr.bf16.mxu0 %v2954
    %4139 = vmatpush1.bf16.msra.mxu0 %v2953
    %4140 = vmatprep.subr.bf16.mxu0 %v2966
    %4141 = vmatpush1.bf16.msra.mxu0 %v2965
    %4142 = vmatprep.subr.bf16.mxu0 %v2978
    %4143 = vmatpush1.bf16.msra.mxu0 %v2977
    %4144 = vmatprep.subr.bf16.mxu0 %v2990
    %4145 = vmatpush1.bf16.msra.mxu0 %v2989
    %4146 = vmatprep.subr.bf16.mxu0 %v3002
    %4147 = vmatpush1.bf16.msra.mxu0 %v3001
    %4148 = vmatprep.subr.bf16.mxu0 %v3014
    %4149 = vmatpush1.bf16.msra.mxu0 %v3013
    %4150 = vmatprep.subr.bf16.mxu0 %v3026
    %4151 = vmatpush1.bf16.msra.mxu0 %v3025
    %4152 = vmatprep.subr.bf16.mxu0 %v3038
    %4153 = vmatpush1.bf16.msra.mxu0 %v3037
    %4154 = vmatprep.subr.bf16.mxu0 %v3050
    %4155 = vmatpush1.bf16.msra.mxu0 %v3049
    %4156 = vmatprep.subr.bf16.mxu0 %v3062
    %4157 = vmatpush1.bf16.msra.mxu0 %v3061
    %4158 = vmatprep.subr.bf16.mxu0 %v3074
    %4159 = vmatpush1.bf16.msra.mxu0 %v3073
    %4160 = vmatprep.mubr.bf16.mxu0 %v768
    %4161 = vmatmul.mubr.bf16.gmra.mrb[0].mxu0 %v767
    %v4162 = vpop.f32.mrb[0].mxu0
    %v4163 = vadd.f32 %v4120, %v4162
    %v4164 = vpop.f32.mrb[0].mxu0
    %v4165 = vadd.f32 %v4122, %v4164
    %v4166 = vpop.f32.mrb[0].mxu0
    %v4167 = vadd.f32 %v4124, %v4166
    %v4168 = vpop.f32.mrb[0].mxu0
    %v4169 = vadd.f32 %v4126, %v4168
    %4170 = vdwg.mxu0
    %4171 = vmatprep.subr.bf16.mxu0 %v2512
    %4172 = vmatpush1.bf16.msra.mxu0 %v2511
    %4173 = vmatprep.subr.bf16.mxu0 %v2524
    %4174 = vmatpush1.bf16.msra.mxu0 %v2523
    %4175 = vmatprep.subr.bf16.mxu0 %v2536
    %4176 = vmatpush1.bf16.msra.mxu0 %v2535
    %4177 = vmatprep.subr.bf16.mxu0 %v2548
    %4178 = vmatpush1.bf16.msra.mxu0 %v2547
    %4179 = vmatprep.subr.bf16.mxu0 %v2560
    %4180 = vmatpush1.bf16.msra.mxu0 %v2559
    %4181 = vmatprep.subr.bf16.mxu0 %v2572
    %4182 = vmatpush1.bf16.msra.mxu0 %v2571
    %4183 = vmatprep.subr.bf16.mxu0 %v2584
    %4184 = vmatpush1.bf16.msra.mxu0 %v2583
    %4185 = vmatprep.subr.bf16.mxu0 %v2596
    %4186 = vmatpush1.bf16.msra.mxu0 %v2595
    %4187 = vmatprep.subr.bf16.mxu0 %v2608
    %4188 = vmatpush1.bf16.msra.mxu0 %v2607
    %4189 = vmatprep.subr.bf16.mxu0 %v2620
    %4190 = vmatpush1.bf16.msra.mxu0 %v2619
    %4191 = vmatprep.subr.bf16.mxu0 %v2632
    %4192 = vmatpush1.bf16.msra.mxu0 %v2631
    %4193 = vmatprep.subr.bf16.mxu0 %v2644
    %4194 = vmatpush1.bf16.msra.mxu0 %v2643
    %4195 = vmatprep.subr.bf16.mxu0 %v2656
    %4196 = vmatpush1.bf16.msra.mxu0 %v2655
    %4197 = vmatprep.subr.bf16.mxu0 %v2668
    %4198 = vmatpush1.bf16.msra.mxu0 %v2667
    %4199 = vmatprep.subr.bf16.mxu0 %v2680
    %4200 = vmatpush1.bf16.msra.mxu0 %v2679
    %4201 = vmatprep.subr.bf16.mxu0 %v2692
    %4202 = vmatpush1.bf16.msra.mxu0 %v2691
    %4203 = vmatprep.mubr.bf16.mxu0 %v764
    %4204 = vmatmul.mubr.bf16.gmra.mrb[0].mxu0 %v763
    %v4205 = vpop.f32.mrb[0].mxu0
    %v4206 = vadd.f32 0.0, %v4205
    %v4207 = vpop.f32.mrb[0].mxu0
    %v4208 = vadd.f32 0.0, %v4207
    %v4209 = vpop.f32.mrb[0].mxu0
    %v4210 = vadd.f32 0.0, %v4209
    %v4211 = vpop.f32.mrb[0].mxu0
    %v4212 = vadd.f32 0.0, %v4211
    %4213 = vdwg.mxu0
    %4214 = vmatprep.subr.bf16.mxu0 %v2704
    %4215 = vmatpush1.bf16.msra.mxu0 %v2703
    %4216 = vmatprep.subr.bf16.mxu0 %v2716
    %4217 = vmatpush1.bf16.msra.mxu0 %v2715
    %4218 = vmatprep.subr.bf16.mxu0 %v2728
    %4219 = vmatpush1.bf16.msra.mxu0 %v2727
    %4220 = vmatprep.subr.bf16.mxu0 %v2740
    %4221 = vmatpush1.bf16.msra.mxu0 %v2739
    %4222 = vmatprep.subr.bf16.mxu0 %v2752
    %4223 = vmatpush1.bf16.msra.mxu0 %v2751
    %4224 = vmatprep.subr.bf16.mxu0 %v2764
    %4225 = vmatpush1.bf16.msra.mxu0 %v2763
    %4226 = vmatprep.subr.bf16.mxu0 %v2776
    %4227 = vmatpush1.bf16.msra.mxu0 %v2775
    %4228 = vmatprep.subr.bf16.mxu0 %v2788
    %4229 = vmatpush1.bf16.msra.mxu0 %v2787
    %4230 = vmatprep.subr.bf16.mxu0 %v2800
    %4231 = vmatpush1.bf16.msra.mxu0 %v2799
    %4232 = vmatprep.subr.bf16.mxu0 %v2812
    %4233 = vmatpush1.bf16.msra.mxu0 %v2811
    %4234 = vmatprep.subr.bf16.mxu0 %v2824
    %4235 = vmatpush1.bf16.msra.mxu0 %v2823
    %4236 = vmatprep.subr.bf16.mxu0 %v2836
    %4237 = vmatpush1.bf16.msra.mxu0 %v2835
    %4238 = vmatprep.subr.bf16.mxu0 %v2848
    %4239 = vmatpush1.bf16.msra.mxu0 %v2847
    %4240 = vmatprep.subr.bf16.mxu0 %v2860
    %4241 = vmatpush1.bf16.msra.mxu0 %v2859
    %4242 = vmatprep.subr.bf16.mxu0 %v2872
    %4243 = vmatpush1.bf16.msra.mxu0 %v2871
    %4244 = vmatprep.subr.bf16.mxu0 %v2884
    %4245 = vmatpush1.bf16.msra.mxu0 %v2883
    %4246 = vmatprep.mubr.bf16.mxu0 %v766
    %4247 = vmatmul.mubr.bf16.gmra.mrb[0].mxu0 %v765
    %v4248 = vpop.f32.mrb[0].mxu0
    %v4249 = vadd.f32 %v4206, %v4248
    %v4250 = vpop.f32.mrb[0].mxu0
    %v4251 = vadd.f32 %v4208, %v4250
    %v4252 = vpop.f32.mrb[0].mxu0
    %v4253 = vadd.f32 %v4210, %v4252
    %v4254 = vpop.f32.mrb[0].mxu0
    %v4255 = vadd.f32 %v4212, %v4254
    %4256 = vdwg.mxu0
    %4257 = vmatprep.subr.bf16.mxu0 %v2896
    %4258 = vmatpush1.bf16.msra.mxu0 %v2895
    %4259 = vmatprep.subr.bf16.mxu0 %v2908
    %4260 = vmatpush1.bf16.msra.mxu0 %v2907
    %4261 = vmatprep.subr.bf16.mxu0 %v2920
    %4262 = vmatpush1.bf16.msra.mxu0 %v2919
    %4263 = vmatprep.subr.bf16.mxu0 %v2932
    %4264 = vmatpush1.bf16.msra.mxu0 %v2931
    %4265 = vmatprep.subr.bf16.mxu0 %v2944
    %4266 = vmatpush1.bf16.msra.mxu0 %v2943
    %4267 = vmatprep.subr.bf16.mxu0 %v2956
    %4268 = vmatpush1.bf16.msra.mxu0 %v2955
    %4269 = vmatprep.subr.bf16.mxu0 %v2968
    %4270 = vmatpush1.bf16.msra.mxu0 %v2967
    %4271 = vmatprep.subr.bf16.mxu0 %v2980
    %4272 = vmatpush1.bf16.msra.mxu0 %v2979
    %4273 = vmatprep.subr.bf16.mxu0 %v2992
    %4274 = vmatpush1.bf16.msra.mxu0 %v2991
    %4275 = vmatprep.subr.bf16.mxu0 %v3004
    %4276 = vmatpush1.bf16.msra.mxu0 %v3003
    %4277 = vmatprep.subr.bf16.mxu0 %v3016
    %4278 = vmatpush1.bf16.msra.mxu0 %v3015
    %4279 = vmatprep.subr.bf16.mxu0 %v3028
    %4280 = vmatpush1.bf16.msra.mxu0 %v3027
    %4281 = vmatprep.subr.bf16.mxu0 %v3040
    %4282 = vmatpush1.bf16.msra.mxu0 %v3039
    %4283 = vmatprep.subr.bf16.mxu0 %v3052
    %4284 = vmatpush1.bf16.msra.mxu0 %v3051
    %4285 = vmatprep.subr.bf16.mxu0 %v3064
    %4286 = vmatpush1.bf16.msra.mxu0 %v3063
    %4287 = vmatprep.subr.bf16.mxu0 %v3076
    %4288 = vmatpush1.bf16.msra.mxu0 %v3075
    %4289 = vmatprep.mubr.bf16.mxu0 %v768
    %4290 = vmatmul.mubr.bf16.gmra.mrb[0].mxu0 %v767
    %v4291 = vpop.f32.mrb[0].mxu0
    %v4292 = vadd.f32 %v4249, %v4291
    %v4293 = vpop.f32.mrb[0].mxu0
    %v4294 = vadd.f32 %v4251, %v4293
    %v4295 = vpop.f32.mrb[0].mxu0
    %v4296 = vadd.f32 %v4253, %v4295
    %v4297 = vpop.f32.mrb[0].mxu0
    %v4298 = vadd.f32 %v4255, %v4297
    %4299 = vdwg.mxu0
    %4300 = vmatprep.subr.bf16.mxu0 %v2514
    %4301 = vmatpush1.bf16.msra.mxu0 %v2513
    %4302 = vmatprep.subr.bf16.mxu0 %v2526
    %4303 = vmatpush1.bf16.msra.mxu0 %v2525
    %4304 = vmatprep.subr.bf16.mxu0 %v2538
    %4305 = vmatpush1.bf16.msra.mxu0 %v2537
    %4306 = vmatprep.subr.bf16.mxu0 %v2550
    %4307 = vmatpush1.bf16.msra.mxu0 %v2549
    %4308 = vmatprep.subr.bf16.mxu0 %v2562
    %4309 = vmatpush1.bf16.msra.mxu0 %v2561
    %4310 = vmatprep.subr.bf16.mxu0 %v2574
    %4311 = vmatpush1.bf16.msra.mxu0 %v2573
    %4312 = vmatprep.subr.bf16.mxu0 %v2586
    %4313 = vmatpush1.bf16.msra.mxu0 %v2585
    %4314 = vmatprep.subr.bf16.mxu0 %v2598
    %4315 = vmatpush1.bf16.msra.mxu0 %v2597
    %4316 = vmatprep.subr.bf16.mxu0 %v2610
    %4317 = vmatpush1.bf16.msra.mxu0 %v2609
    %4318 = vmatprep.subr.bf16.mxu0 %v2622
    %4319 = vmatpush1.bf16.msra.mxu0 %v2621
    %4320 = vmatprep.subr.bf16.mxu0 %v2634
    %4321 = vmatpush1.bf16.msra.mxu0 %v2633
    %4322 = vmatprep.subr.bf16.mxu0 %v2646
    %4323 = vmatpush1.bf16.msra.mxu0 %v2645
    %4324 = vmatprep.subr.bf16.mxu0 %v2658
    %4325 = vmatpush1.bf16.msra.mxu0 %v2657
    %4326 = vmatprep.subr.bf16.mxu0 %v2670
    %4327 = vmatpush1.bf16.msra.mxu0 %v2669
    %4328 = vmatprep.subr.bf16.mxu0 %v2682
    %4329 = vmatpush1.bf16.msra.mxu0 %v2681
    %4330 = vmatprep.subr.bf16.mxu0 %v2694
    %4331 = vmatpush1.bf16.msra.mxu0 %v2693
    %4332 = vmatprep.mubr.bf16.mxu0 %v764
    %4333 = vmatmul.mubr.bf16.gmra.mrb[0].mxu0 %v763
    %v4334 = vpop.f32.mrb[0].mxu0
    %v4335 = vadd.f32 0.0, %v4334
    %v4336 = vpop.f32.mrb[0].mxu0
    %v4337 = vadd.f32 0.0, %v4336
    %v4338 = vpop.f32.mrb[0].mxu0
    %v4339 = vadd.f32 0.0, %v4338
    %v4340 = vpop.f32.mrb[0].mxu0
    %v4341 = vadd.f32 0.0, %v4340
    %4342 = vdwg.mxu0
    %4343 = vmatprep.subr.bf16.mxu0 %v2706
    %4344 = vmatpush1.bf16.msra.mxu0 %v2705
    %4345 = vmatprep.subr.bf16.mxu0 %v2718
    %4346 = vmatpush1.bf16.msra.mxu0 %v2717
    %4347 = vmatprep.subr.bf16.mxu0 %v2730
    %4348 = vmatpush1.bf16.msra.mxu0 %v2729
    %4349 = vmatprep.subr.bf16.mxu0 %v2742
    %4350 = vmatpush1.bf16.msra.mxu0 %v2741
    %4351 = vmatprep.subr.bf16.mxu0 %v2754
    %4352 = vmatpush1.bf16.msra.mxu0 %v2753
    %4353 = vmatprep.subr.bf16.mxu0 %v2766
    %4354 = vmatpush1.bf16.msra.mxu0 %v2765
    %4355 = vmatprep.subr.bf16.mxu0 %v2778
    %4356 = vmatpush1.bf16.msra.mxu0 %v2777
    %4357 = vmatprep.subr.bf16.mxu0 %v2790
    %4358 = vmatpush1.bf16.msra.mxu0 %v2789
    %4359 = vmatprep.subr.bf16.mxu0 %v2802
    %4360 = vmatpush1.bf16.msra.mxu0 %v2801
    %4361 = vmatprep.subr.bf16.mxu0 %v2814
    %4362 = vmatpush1.bf16.msra.mxu0 %v2813
    %4363 = vmatprep.subr.bf16.mxu0 %v2826
    %4364 = vmatpush1.bf16.msra.mxu0 %v2825
    %4365 = vmatprep.subr.bf16.mxu0 %v2838
    %4366 = vmatpush1.bf16.msra.mxu0 %v2837
    %4367 = vmatprep.subr.bf16.mxu0 %v2850
    %4368 = vmatpush1.bf16.msra.mxu0 %v2849
    %4369 = vmatprep.subr.bf16.mxu0 %v2862
    %4370 = vmatpush1.bf16.msra.mxu0 %v2861
    %4371 = vmatprep.subr.bf16.mxu0 %v2874
    %4372 = vmatpush1.bf16.msra.mxu0 %v2873
    %4373 = vmatprep.subr.bf16.mxu0 %v2886
    %4374 = vmatpush1.bf16.msra.mxu0 %v2885
    %4375 = vmatprep.mubr.bf16.mxu0 %v766
    %4376 = vmatmul.mubr.bf16.gmra.mrb[0].mxu0 %v765
    %v4377 = vpop.f32.mrb[0].mxu0
    %v4378 = vadd.f32 %v4335, %v4377
    %v4379 = vpop.f32.mrb[0].mxu0
    %v4380 = vadd.f32 %v4337, %v4379
    %v4381 = vpop.f32.mrb[0].mxu0
    %v4382 = vadd.f32 %v4339, %v4381
    %v4383 = vpop.f32.mrb[0].mxu0
    %v4384 = vadd.f32 %v4341, %v4383
    %4385 = vdwg.mxu0
    %4386 = vmatprep.subr.bf16.mxu0 %v2898
    %4387 = vmatpush1.bf16.msra.mxu0 %v2897
    %4388 = vmatprep.subr.bf16.mxu0 %v2910
    %4389 = vmatpush1.bf16.msra.mxu0 %v2909
    %4390 = vmatprep.subr.bf16.mxu0 %v2922
    %4391 = vmatpush1.bf16.msra.mxu0 %v2921
    %4392 = vmatprep.subr.bf16.mxu0 %v2934
    %4393 = vmatpush1.bf16.msra.mxu0 %v2933
    %4394 = vmatprep.subr.bf16.mxu0 %v2946
    %4395 = vmatpush1.bf16.msra.mxu0 %v2945
    %4396 = vmatprep.subr.bf16.mxu0 %v2958
    %4397 = vmatpush1.bf16.msra.mxu0 %v2957
    %4398 = vmatprep.subr.bf16.mxu0 %v2970
    %4399 = vmatpush1.bf16.msra.mxu0 %v2969
    %4400 = vmatprep.subr.bf16.mxu0 %v2982
    %4401 = vmatpush1.bf16.msra.mxu0 %v2981
    %4402 = vmatprep.subr.bf16.mxu0 %v2994
    %4403 = vmatpush1.bf16.msra.mxu0 %v2993
    %4404 = vmatprep.subr.bf16.mxu0 %v3006
    %4405 = vmatpush1.bf16.msra.mxu0 %v3005
    %4406 = vmatprep.subr.bf16.mxu0 %v3018
    %4407 = vmatpush1.bf16.msra.mxu0 %v3017
    %4408 = vmatprep.subr.bf16.mxu0 %v3030
    %4409 = vmatpush1.bf16.msra.mxu0 %v3029
    %4410 = vmatprep.subr.bf16.mxu0 %v3042
    %4411 = vmatpush1.bf16.msra.mxu0 %v3041
    %4412 = vmatprep.subr.bf16.mxu0 %v3054
    %4413 = vmatpush1.bf16.msra.mxu0 %v3053
    %4414 = vmatprep.subr.bf16.mxu0 %v3066
    %4415 = vmatpush1.bf16.msra.mxu0 %v3065
    %4416 = vmatprep.subr.bf16.mxu0 %v3078
    %4417 = vmatpush1.bf16.msra.mxu0 %v3077
    %4418 = vmatprep.mubr.bf16.mxu0 %v768
    %4419 = vmatmul.mubr.bf16.gmra.mrb[0].mxu0 %v767
    %v4420 = vpop.f32.mrb[0].mxu0
    %v4421 = vadd.f32 %v4378, %v4420
    %v4422 = vpop.f32.mrb[0].mxu0
    %v4423 = vadd.f32 %v4380, %v4422
    %v4424 = vpop.f32.mrb[0].mxu0
    %v4425 = vadd.f32 %v4382, %v4424
    %v4426 = vpop.f32.mrb[0].mxu0
    %v4427 = vadd.f32 %v4384, %v4426
    %4428 = vdwg.mxu0
    %v4429 = vadd.f32 %v3776, %v4167
    %v4430 = vadd.f32 %v3778, %v4169
    %v4431 = vadd.f32 %v3905, %v4296
    %v4432 = vadd.f32 %v3907, %v4298
    %v4433 = vadd.f32 %v4034, %v4425
    %v4434 = vadd.f32 %v4036, %v4427
    %v4435 = vadd.f32 %v3780, %v4163
    %v4436 = vadd.f32 %v3782, %v4165
    %v4437 = vadd.f32 %v3909, %v4292
    %v4438 = vadd.f32 %v3911, %v4294
    %v4439 = vadd.f32 %v4038, %v4421
    %v4440 = vadd.f32 %v4040, %v4423
    %v4443 = vlaneseq
    %v4444 = vshrl.u32 %v4443, 7
    %v4445 = vsub.s32 0, %v4444
    %v4446 = vrot.slane %v164, %v4445
    %v4447 = vlaneseq
    %v4448 = vshrl.u32 %v4447, 7
    %v4449 = vsub.s32 2, %v4448
    %v4450 = vrot.slane %v164, %v4449
    %v4451 = vlaneseq
    %v4452 = vshrl.u32 %v4451, 7
    %v4453 = vsub.s32 4, %v4452
    %v4454 = vrot.slane %v164, %v4453
    %v4455 = vlaneseq
    %v4456 = vshrl.u32 %v4455, 7
    %v4457 = vsub.s32 6, %v4456
    %v4458 = vrot.slane %v164, %v4457
    %v4459 = vlaneseq
    %v4460 = vshrl.u32 %v4459, 7
    %v4461 = vsub.s32 0, %v4460
    %v4462 = vrot.slane %v165, %v4461
    %v4463 = vlaneseq
    %v4464 = vshrl.u32 %v4463, 7
    %v4465 = vsub.s32 2, %v4464
    %v4466 = vrot.slane %v165, %v4465
    %v4473 = vlaneseq
    %v4474 = vshrl.u32 %v4473, 7
    %v4475 = vsub.s32 0, %v4474
    %v4476 = vrot.slane %v4446, %v4475
    %v4477 = vlaneseq
    %v4478 = vshrl.u32 %v4477, 7
    %v4479 = vsub.s32 0, %v4478
    %v4480 = vrot.slane %v4450, %v4479
    %v4481 = vlaneseq
    %v4482 = vshrl.u32 %v4481, 7
    %v4483 = vsub.s32 0, %v4482
    %v4484 = vrot.slane %v4454, %v4483
    %v4485 = vlaneseq
    %v4486 = vshrl.u32 %v4485, 7
    %v4487 = vsub.s32 0, %v4486
    %v4488 = vrot.slane %v4458, %v4487
    %v4489 = vlaneseq
    %v4490 = vshrl.u32 %v4489, 7
    %v4491 = vsub.s32 0, %v4490
    %v4492 = vrot.slane %v4462, %v4491
    %v4493 = vlaneseq
    %v4494 = vshrl.u32 %v4493, 7
    %v4495 = vsub.s32 0, %v4494
    %v4496 = vrot.slane %v4466, %v4495
    %v4497 = vadd.f32 %v4429, %v4476
    %v4498 = vadd.f32 %v4430, %v4480
    %v4499 = vadd.f32 %v4431, %v4484
    %v4500 = vadd.f32 %v4432, %v4488
    %v4501 = vadd.f32 %v4433, %v4492
    %v4502 = vadd.f32 %v4434, %v4496
    %v4503 = vadd.f32 %v4435, %v4476
    %v4504 = vadd.f32 %v4436, %v4480
    %v4505 = vadd.f32 %v4437, %v4484
    %v4506 = vadd.f32 %v4438, %v4488
    %v4507 = vadd.f32 %v4439, %v4492
    %v4508 = vadd.f32 %v4440, %v4496
    %v4509 = vmax.f32 %v4497, 0.0
    %v4510 = vmax.f32 %v4498, 0.0
    %v4511 = vmax.f32 %v4499, 0.0
    %v4512 = vmax.f32 %v4500, 0.0
    %v4513 = vmax.f32 %v4501, 0.0
    %v4514 = vmax.f32 %v4502, 0.0
    %v4515 = vmax.f32 %v4503, 0.0
    %v4516 = vmax.f32 %v4504, 0.0
    %v4517 = vmax.f32 %v4505, 0.0
    %v4518 = vmax.f32 %v4506, 0.0
    %v4519 = vmax.f32 %v4507, 0.0
    %v4520 = vmax.f32 %v4508, 0.0
    %v4521 = vld [vmem:[#allocation4 + $0x30] sm:$0xff]
    %v4522 = vld [vmem:[#allocation4 + $0x38] sm:$0xff]
    %v4523 = vld [vmem:[#allocation4 + $0x40] sm:$0xff]
    %v4524 = vld [vmem:[#allocation4 + $0x48] sm:$0xff]
    %v4525 = vld [vmem:[#allocation4 + $0x50] sm:$0xff]
    %v4526 = vld [vmem:[#allocation4 + $0x58] sm:$0xff]
    %v4527 = vld [vmem:[#allocation4 + $0x90] sm:$0xff]
    %v4528 = vld [vmem:[#allocation4 + $0x98] sm:$0xff]
    %v4529 = vld [vmem:[#allocation4 + $0xa0] sm:$0xff]
    %v4530 = vld [vmem:[#allocation4 + $0xa8] sm:$0xff]
    %v4531 = vld [vmem:[#allocation4 + $0xb0] sm:$0xff]
    %v4532 = vld [vmem:[#allocation4 + $0xb8] sm:$0xff]
    %v4533 = vld [vmem:[#allocation4 + $0xf0] sm:$0xff]
    %v4534 = vld [vmem:[#allocation4 + $0xf8] sm:$0xff]
    %v4535 = vld [vmem:[#allocation4 + $0x100] sm:$0xff]
    %v4536 = vld [vmem:[#allocation4 + $0x108] sm:$0xff]
    %v4537 = vld [vmem:[#allocation4 + $0x110] sm:$0xff]
    %v4538 = vld [vmem:[#allocation4 + $0x118] sm:$0xff]
    %v4539 = vld [vmem:[#allocation4 + $0x150] sm:$0xff]
    %v4540 = vld [vmem:[#allocation4 + $0x158] sm:$0xff]
    %v4541 = vld [vmem:[#allocation4 + $0x160] sm:$0xff]
    %v4542 = vld [vmem:[#allocation4 + $0x168] sm:$0xff]
    %v4543 = vld [vmem:[#allocation4 + $0x170] sm:$0xff]
    %v4544 = vld [vmem:[#allocation4 + $0x178] sm:$0xff]
    %v4545 = vld [vmem:[#allocation4 + $0x1b0] sm:$0xff]
    %v4546 = vld [vmem:[#allocation4 + $0x1b8] sm:$0xff]
    %v4547 = vld [vmem:[#allocation4 + $0x1c0] sm:$0xff]
    %v4548 = vld [vmem:[#allocation4 + $0x1c8] sm:$0xff]
    %v4549 = vld [vmem:[#allocation4 + $0x1d0] sm:$0xff]
    %v4550 = vld [vmem:[#allocation4 + $0x1d8] sm:$0xff]
    %v4551 = vld [vmem:[#allocation4 + $0x210] sm:$0xff]
    %v4552 = vld [vmem:[#allocation4 + $0x218] sm:$0xff]
    %v4553 = vld [vmem:[#allocation4 + $0x220] sm:$0xff]
    %v4554 = vld [vmem:[#allocation4 + $0x228] sm:$0xff]
    %v4555 = vld [vmem:[#allocation4 + $0x230] sm:$0xff]
    %v4556 = vld [vmem:[#allocation4 + $0x238] sm:$0xff]
    %v4557 = vld [vmem:[#allocation4 + $0x270] sm:$0xff]
    %v4558 = vld [vmem:[#allocation4 + $0x278] sm:$0xff]
    %v4559 = vld [vmem:[#allocation4 + $0x280] sm:$0xff]
    %v4560 = vld [vmem:[#allocation4 + $0x288] sm:$0xff]
    %v4561 = vld [vmem:[#allocation4 + $0x290] sm:$0xff]
    %v4562 = vld [vmem:[#allocation4 + $0x298] sm:$0xff]
    %v4563 = vld [vmem:[#allocation4 + $0x2d0] sm:$0xff]
    %v4564 = vld [vmem:[#allocation4 + $0x2d8] sm:$0xff]
    %v4565 = vld [vmem:[#allocation4 + $0x2e0] sm:$0xff]
    %v4566 = vld [vmem:[#allocation4 + $0x2e8] sm:$0xff]
    %v4567 = vld [vmem:[#allocation4 + $0x2f0] sm:$0xff]
    %v4568 = vld [vmem:[#allocation4 + $0x2f8] sm:$0xff]
    %v4569 = vld [vmem:[#allocation4 + $0x330] sm:$0xff]
    %v4570 = vld [vmem:[#allocation4 + $0x338] sm:$0xff]
    %v4571 = vld [vmem:[#allocation4 + $0x340] sm:$0xff]
    %v4572 = vld [vmem:[#allocation4 + $0x348] sm:$0xff]
    %v4573 = vld [vmem:[#allocation4 + $0x350] sm:$0xff]
    %v4574 = vld [vmem:[#allocation4 + $0x358] sm:$0xff]
    %v4575 = vld [vmem:[#allocation4 + $0x390] sm:$0xff]
    %v4576 = vld [vmem:[#allocation4 + $0x398] sm:$0xff]
    %v4577 = vld [vmem:[#allocation4 + $0x3a0] sm:$0xff]
    %v4578 = vld [vmem:[#allocation4 + $0x3a8] sm:$0xff]
    %v4579 = vld [vmem:[#allocation4 + $0x3b0] sm:$0xff]
    %v4580 = vld [vmem:[#allocation4 + $0x3b8] sm:$0xff]
    %v4581 = vld [vmem:[#allocation4 + $0x3f0] sm:$0xff]
    %v4582 = vld [vmem:[#allocation4 + $0x3f8] sm:$0xff]
    %v4583 = vld [vmem:[#allocation4 + $0x400] sm:$0xff]
    %v4584 = vld [vmem:[#allocation4 + $0x408] sm:$0xff]
    %v4585 = vld [vmem:[#allocation4 + $0x410] sm:$0xff]
    %v4586 = vld [vmem:[#allocation4 + $0x418] sm:$0xff]
    %v4587 = vld [vmem:[#allocation4 + $0x450] sm:$0xff]
    %v4588 = vld [vmem:[#allocation4 + $0x458] sm:$0xff]
    %v4589 = vld [vmem:[#allocation4 + $0x460] sm:$0xff]
    %v4590 = vld [vmem:[#allocation4 + $0x468] sm:$0xff]
    %v4591 = vld [vmem:[#allocation4 + $0x470] sm:$0xff]
    %v4592 = vld [vmem:[#allocation4 + $0x478] sm:$0xff]
    %v4593 = vld [vmem:[#allocation4 + $0x4b0] sm:$0xff]
    %v4594 = vld [vmem:[#allocation4 + $0x4b8] sm:$0xff]
    %v4595 = vld [vmem:[#allocation4 + $0x4c0] sm:$0xff]
    %v4596 = vld [vmem:[#allocation4 + $0x4c8] sm:$0xff]
    %v4597 = vld [vmem:[#allocation4 + $0x4d0] sm:$0xff]
    %v4598 = vld [vmem:[#allocation4 + $0x4d8] sm:$0xff]
    %v4599 = vld [vmem:[#allocation4 + $0x510] sm:$0xff]
    %v4600 = vld [vmem:[#allocation4 + $0x518] sm:$0xff]
    %v4601 = vld [vmem:[#allocation4 + $0x520] sm:$0xff]
    %v4602 = vld [vmem:[#allocation4 + $0x528] sm:$0xff]
    %v4603 = vld [vmem:[#allocation4 + $0x530] sm:$0xff]
    %v4604 = vld [vmem:[#allocation4 + $0x538] sm:$0xff]
    %v4605 = vld [vmem:[#allocation4 + $0x570] sm:$0xff]
    %v4606 = vld [vmem:[#allocation4 + $0x578] sm:$0xff]
    %v4607 = vld [vmem:[#allocation4 + $0x580] sm:$0xff]
    %v4608 = vld [vmem:[#allocation4 + $0x588] sm:$0xff]
    %v4609 = vld [vmem:[#allocation4 + $0x590] sm:$0xff]
    %v4610 = vld [vmem:[#allocation4 + $0x598] sm:$0xff]
    %v4611 = vld [vmem:[#allocation4 + $0x5d0] sm:$0xff]
    %v4612 = vld [vmem:[#allocation4 + $0x5d8] sm:$0xff]
    %v4613 = vld [vmem:[#allocation4 + $0x5e0] sm:$0xff]
    %v4614 = vld [vmem:[#allocation4 + $0x5e8] sm:$0xff]
    %v4615 = vld [vmem:[#allocation4 + $0x5f0] sm:$0xff]
    %v4616 = vld [vmem:[#allocation4 + $0x5f8] sm:$0xff]
    %v4617 = vld [vmem:[#allocation4 + $0x630] sm:$0xff]
    %v4618 = vld [vmem:[#allocation4 + $0x638] sm:$0xff]
    %v4619 = vld [vmem:[#allocation4 + $0x640] sm:$0xff]
    %v4620 = vld [vmem:[#allocation4 + $0x648] sm:$0xff]
    %v4621 = vld [vmem:[#allocation4 + $0x650] sm:$0xff]
    %v4622 = vld [vmem:[#allocation4 + $0x658] sm:$0xff]
    %v4623 = vld [vmem:[#allocation4 + $0x690] sm:$0xff]
    %v4624 = vld [vmem:[#allocation4 + $0x698] sm:$0xff]
    %v4625 = vld [vmem:[#allocation4 + $0x6a0] sm:$0xff]
    %v4626 = vld [vmem:[#allocation4 + $0x6a8] sm:$0xff]
    %v4627 = vld [vmem:[#allocation4 + $0x6b0] sm:$0xff]
    %v4628 = vld [vmem:[#allocation4 + $0x6b8] sm:$0xff]
    %v4629 = vld [vmem:[#allocation4 + $0x6f0] sm:$0xff]
    %v4630 = vld [vmem:[#allocation4 + $0x6f8] sm:$0xff]
    %v4631 = vld [vmem:[#allocation4 + $0x700] sm:$0xff]
    %v4632 = vld [vmem:[#allocation4 + $0x708] sm:$0xff]
    %v4633 = vld [vmem:[#allocation4 + $0x710] sm:$0xff]
    %v4634 = vld [vmem:[#allocation4 + $0x718] sm:$0xff]
    %v4635 = vld [vmem:[#allocation4 + $0x750] sm:$0xff]
    %v4636 = vld [vmem:[#allocation4 + $0x758] sm:$0xff]
    %v4637 = vld [vmem:[#allocation4 + $0x760] sm:$0xff]
    %v4638 = vld [vmem:[#allocation4 + $0x768] sm:$0xff]
    %v4639 = vld [vmem:[#allocation4 + $0x770] sm:$0xff]
    %v4640 = vld [vmem:[#allocation4 + $0x778] sm:$0xff]
    %v4641 = vld [vmem:[#allocation4 + $0x7b0] sm:$0xff]
    %v4642 = vld [vmem:[#allocation4 + $0x7b8] sm:$0xff]
    %v4643 = vld [vmem:[#allocation4 + $0x7c0] sm:$0xff]
    %v4644 = vld [vmem:[#allocation4 + $0x7c8] sm:$0xff]
    %v4645 = vld [vmem:[#allocation4 + $0x7d0] sm:$0xff]
    %v4646 = vld [vmem:[#allocation4 + $0x7d8] sm:$0xff]
    %v4647 = vld [vmem:[#allocation4 + $0x810] sm:$0xff]
    %v4648 = vld [vmem:[#allocation4 + $0x818] sm:$0xff]
    %v4649 = vld [vmem:[#allocation4 + $0x820] sm:$0xff]
    %v4650 = vld [vmem:[#allocation4 + $0x828] sm:$0xff]
    %v4651 = vld [vmem:[#allocation4 + $0x830] sm:$0xff]
    %v4652 = vld [vmem:[#allocation4 + $0x838] sm:$0xff]
    %v4653 = vld [vmem:[#allocation4 + $0x870] sm:$0xff]
    %v4654 = vld [vmem:[#allocation4 + $0x878] sm:$0xff]
    %v4655 = vld [vmem:[#allocation4 + $0x880] sm:$0xff]
    %v4656 = vld [vmem:[#allocation4 + $0x888] sm:$0xff]
    %v4657 = vld [vmem:[#allocation4 + $0x890] sm:$0xff]
    %v4658 = vld [vmem:[#allocation4 + $0x898] sm:$0xff]
    %v4659 = vld [vmem:[#allocation4 + $0x8d0] sm:$0xff]
    %v4660 = vld [vmem:[#allocation4 + $0x8d8] sm:$0xff]
    %v4661 = vld [vmem:[#allocation4 + $0x8e0] sm:$0xff]
    %v4662 = vld [vmem:[#allocation4 + $0x8e8] sm:$0xff]
    %v4663 = vld [vmem:[#allocation4 + $0x8f0] sm:$0xff]
    %v4664 = vld [vmem:[#allocation4 + $0x8f8] sm:$0xff]
    %v4665 = vld [vmem:[#allocation4 + $0x930] sm:$0xff]
    %v4666 = vld [vmem:[#allocation4 + $0x938] sm:$0xff]
    %v4667 = vld [vmem:[#allocation4 + $0x940] sm:$0xff]
    %v4668 = vld [vmem:[#allocation4 + $0x948] sm:$0xff]
    %v4669 = vld [vmem:[#allocation4 + $0x950] sm:$0xff]
    %v4670 = vld [vmem:[#allocation4 + $0x958] sm:$0xff]
    %v4671 = vld [vmem:[#allocation4 + $0x990] sm:$0xff]
    %v4672 = vld [vmem:[#allocation4 + $0x998] sm:$0xff]
    %v4673 = vld [vmem:[#allocation4 + $0x9a0] sm:$0xff]
    %v4674 = vld [vmem:[#allocation4 + $0x9a8] sm:$0xff]
    %v4675 = vld [vmem:[#allocation4 + $0x9b0] sm:$0xff]
    %v4676 = vld [vmem:[#allocation4 + $0x9b8] sm:$0xff]
    %v4677 = vld [vmem:[#allocation4 + $0x9f0] sm:$0xff]
    %v4678 = vld [vmem:[#allocation4 + $0x9f8] sm:$0xff]
    %v4679 = vld [vmem:[#allocation4 + $0xa00] sm:$0xff]
    %v4680 = vld [vmem:[#allocation4 + $0xa08] sm:$0xff]
    %v4681 = vld [vmem:[#allocation4 + $0xa10] sm:$0xff]
    %v4682 = vld [vmem:[#allocation4 + $0xa18] sm:$0xff]
    %v4683 = vld [vmem:[#allocation4 + $0xa50] sm:$0xff]
    %v4684 = vld [vmem:[#allocation4 + $0xa58] sm:$0xff]
    %v4685 = vld [vmem:[#allocation4 + $0xa60] sm:$0xff]
    %v4686 = vld [vmem:[#allocation4 + $0xa68] sm:$0xff]
    %v4687 = vld [vmem:[#allocation4 + $0xa70] sm:$0xff]
    %v4688 = vld [vmem:[#allocation4 + $0xa78] sm:$0xff]
    %v4689 = vld [vmem:[#allocation4 + $0xab0] sm:$0xff]
    %v4690 = vld [vmem:[#allocation4 + $0xab8] sm:$0xff]
    %v4691 = vld [vmem:[#allocation4 + $0xac0] sm:$0xff]
    %v4692 = vld [vmem:[#allocation4 + $0xac8] sm:$0xff]
    %v4693 = vld [vmem:[#allocation4 + $0xad0] sm:$0xff]
    %v4694 = vld [vmem:[#allocation4 + $0xad8] sm:$0xff]
    %v4695 = vld [vmem:[#allocation4 + $0xb10] sm:$0xff]
    %v4696 = vld [vmem:[#allocation4 + $0xb18] sm:$0xff]
    %v4697 = vld [vmem:[#allocation4 + $0xb20] sm:$0xff]
    %v4698 = vld [vmem:[#allocation4 + $0xb28] sm:$0xff]
    %v4699 = vld [vmem:[#allocation4 + $0xb30] sm:$0xff]
    %v4700 = vld [vmem:[#allocation4 + $0xb38] sm:$0xff]
    %v4701 = vld [vmem:[#allocation4 + $0xb70] sm:$0xff]
    %v4702 = vld [vmem:[#allocation4 + $0xb78] sm:$0xff]
    %v4703 = vld [vmem:[#allocation4 + $0xb80] sm:$0xff]
    %v4704 = vld [vmem:[#allocation4 + $0xb88] sm:$0xff]
    %v4705 = vld [vmem:[#allocation4 + $0xb90] sm:$0xff]
    %v4706 = vld [vmem:[#allocation4 + $0xb98] sm:$0xff]
    %v4707 = vld [vmem:[#allocation4 + $0xbd0] sm:$0xff]
    %v4708 = vld [vmem:[#allocation4 + $0xbd8] sm:$0xff]
    %v4709 = vld [vmem:[#allocation4 + $0xbe0] sm:$0xff]
    %v4710 = vld [vmem:[#allocation4 + $0xbe8] sm:$0xff]
    %v4711 = vld [vmem:[#allocation4 + $0xbf0] sm:$0xff]
    %v4712 = vld [vmem:[#allocation4 + $0xbf8] sm:$0xff]
    %v4713 = vld [vmem:[#allocation4 + $0xc30] sm:$0xff]
    %v4714 = vld [vmem:[#allocation4 + $0xc38] sm:$0xff]
    %v4715 = vld [vmem:[#allocation4 + $0xc40] sm:$0xff]
    %v4716 = vld [vmem:[#allocation4 + $0xc48] sm:$0xff]
    %v4717 = vld [vmem:[#allocation4 + $0xc50] sm:$0xff]
    %v4718 = vld [vmem:[#allocation4 + $0xc58] sm:$0xff]
    %v4719 = vld [vmem:[#allocation4 + $0xc90] sm:$0xff]
    %v4720 = vld [vmem:[#allocation4 + $0xc98] sm:$0xff]
    %v4721 = vld [vmem:[#allocation4 + $0xca0] sm:$0xff]
    %v4722 = vld [vmem:[#allocation4 + $0xca8] sm:$0xff]
    %v4723 = vld [vmem:[#allocation4 + $0xcb0] sm:$0xff]
    %v4724 = vld [vmem:[#allocation4 + $0xcb8] sm:$0xff]
    %v4725 = vld [vmem:[#allocation4 + $0xcf0] sm:$0xff]
    %v4726 = vld [vmem:[#allocation4 + $0xcf8] sm:$0xff]
    %v4727 = vld [vmem:[#allocation4 + $0xd00] sm:$0xff]
    %v4728 = vld [vmem:[#allocation4 + $0xd08] sm:$0xff]
    %v4729 = vld [vmem:[#allocation4 + $0xd10] sm:$0xff]
    %v4730 = vld [vmem:[#allocation4 + $0xd18] sm:$0xff]
    %v4731 = vld [vmem:[#allocation4 + $0xd50] sm:$0xff]
    %v4732 = vld [vmem:[#allocation4 + $0xd58] sm:$0xff]
    %v4733 = vld [vmem:[#allocation4 + $0xd60] sm:$0xff]
    %v4734 = vld [vmem:[#allocation4 + $0xd68] sm:$0xff]
    %v4735 = vld [vmem:[#allocation4 + $0xd70] sm:$0xff]
    %v4736 = vld [vmem:[#allocation4 + $0xd78] sm:$0xff]
    %v4737 = vld [vmem:[#allocation4 + $0xdb0] sm:$0xff]
    %v4738 = vld [vmem:[#allocation4 + $0xdb8] sm:$0xff]
    %v4739 = vld [vmem:[#allocation4 + $0xdc0] sm:$0xff]
    %v4740 = vld [vmem:[#allocation4 + $0xdc8] sm:$0xff]
    %v4741 = vld [vmem:[#allocation4 + $0xdd0] sm:$0xff]
    %v4742 = vld [vmem:[#allocation4 + $0xdd8] sm:$0xff]
    %v4743 = vld [vmem:[#allocation4 + $0xe10] sm:$0xff]
    %v4744 = vld [vmem:[#allocation4 + $0xe18] sm:$0xff]
    %v4745 = vld [vmem:[#allocation4 + $0xe20] sm:$0xff]
    %v4746 = vld [vmem:[#allocation4 + $0xe28] sm:$0xff]
    %v4747 = vld [vmem:[#allocation4 + $0xe30] sm:$0xff]
    %v4748 = vld [vmem:[#allocation4 + $0xe38] sm:$0xff]
    %v4749 = vld [vmem:[#allocation4 + $0xe70] sm:$0xff]
    %v4750 = vld [vmem:[#allocation4 + $0xe78] sm:$0xff]
    %v4751 = vld [vmem:[#allocation4 + $0xe80] sm:$0xff]
    %v4752 = vld [vmem:[#allocation4 + $0xe88] sm:$0xff]
    %v4753 = vld [vmem:[#allocation4 + $0xe90] sm:$0xff]
    %v4754 = vld [vmem:[#allocation4 + $0xe98] sm:$0xff]
    %v4755 = vld [vmem:[#allocation4 + $0xed0] sm:$0xff]
    %v4756 = vld [vmem:[#allocation4 + $0xed8] sm:$0xff]
    %v4757 = vld [vmem:[#allocation4 + $0xee0] sm:$0xff]
    %v4758 = vld [vmem:[#allocation4 + $0xee8] sm:$0xff]
    %v4759 = vld [vmem:[#allocation4 + $0xef0] sm:$0xff]
    %v4760 = vld [vmem:[#allocation4 + $0xef8] sm:$0xff]
    %v4761 = vld [vmem:[#allocation4 + $0xf30] sm:$0xff]
    %v4762 = vld [vmem:[#allocation4 + $0xf38] sm:$0xff]
    %v4763 = vld [vmem:[#allocation4 + $0xf40] sm:$0xff]
    %v4764 = vld [vmem:[#allocation4 + $0xf48] sm:$0xff]
    %v4765 = vld [vmem:[#allocation4 + $0xf50] sm:$0xff]
    %v4766 = vld [vmem:[#allocation4 + $0xf58] sm:$0xff]
    %v4767 = vld [vmem:[#allocation4 + $0xf90] sm:$0xff]
    %v4768 = vld [vmem:[#allocation4 + $0xf98] sm:$0xff]
    %v4769 = vld [vmem:[#allocation4 + $0xfa0] sm:$0xff]
    %v4770 = vld [vmem:[#allocation4 + $0xfa8] sm:$0xff]
    %v4771 = vld [vmem:[#allocation4 + $0xfb0] sm:$0xff]
    %v4772 = vld [vmem:[#allocation4 + $0xfb8] sm:$0xff]
    %v4773 = vld [vmem:[#allocation4 + $0xff0] sm:$0xff]
    %v4774 = vld [vmem:[#allocation4 + $0xff8] sm:$0xff]
    %v4775 = vld [vmem:[#allocation4 + $0x1000] sm:$0xff]
    %v4776 = vld [vmem:[#allocation4 + $0x1008] sm:$0xff]
    %v4777 = vld [vmem:[#allocation4 + $0x1010] sm:$0xff]
    %v4778 = vld [vmem:[#allocation4 + $0x1018] sm:$0xff]
    %v4779 = vld [vmem:[#allocation4 + $0x1050] sm:$0xff]
    %v4780 = vld [vmem:[#allocation4 + $0x1058] sm:$0xff]
    %v4781 = vld [vmem:[#allocation4 + $0x1060] sm:$0xff]
    %v4782 = vld [vmem:[#allocation4 + $0x1068] sm:$0xff]
    %v4783 = vld [vmem:[#allocation4 + $0x1070] sm:$0xff]
    %v4784 = vld [vmem:[#allocation4 + $0x1078] sm:$0xff]
    %v4785 = vld [vmem:[#allocation4 + $0x10b0] sm:$0xff]
    %v4786 = vld [vmem:[#allocation4 + $0x10b8] sm:$0xff]
    %v4787 = vld [vmem:[#allocation4 + $0x10c0] sm:$0xff]
    %v4788 = vld [vmem:[#allocation4 + $0x10c8] sm:$0xff]
    %v4789 = vld [vmem:[#allocation4 + $0x10d0] sm:$0xff]
    %v4790 = vld [vmem:[#allocation4 + $0x10d8] sm:$0xff]
    %v4791 = vld [vmem:[#allocation4 + $0x1110] sm:$0xff]
    %v4792 = vld [vmem:[#allocation4 + $0x1118] sm:$0xff]
    %v4793 = vld [vmem:[#allocation4 + $0x1120] sm:$0xff]
    %v4794 = vld [vmem:[#allocation4 + $0x1128] sm:$0xff]
    %v4795 = vld [vmem:[#allocation4 + $0x1130] sm:$0xff]
    %v4796 = vld [vmem:[#allocation4 + $0x1138] sm:$0xff]
    %v4797 = vld [vmem:[#allocation4 + $0x1170] sm:$0xff]
    %v4798 = vld [vmem:[#allocation4 + $0x1178] sm:$0xff]
    %v4799 = vld [vmem:[#allocation4 + $0x1180] sm:$0xff]
    %v4800 = vld [vmem:[#allocation4 + $0x1188] sm:$0xff]
    %v4801 = vld [vmem:[#allocation4 + $0x1190] sm:$0xff]
    %v4802 = vld [vmem:[#allocation4 + $0x1198] sm:$0xff]
    %v4803 = vld [vmem:[#allocation4 + $0x11d0] sm:$0xff]
    %v4804 = vld [vmem:[#allocation4 + $0x11d8] sm:$0xff]
    %v4805 = vld [vmem:[#allocation4 + $0x11e0] sm:$0xff]
    %v4806 = vld [vmem:[#allocation4 + $0x11e8] sm:$0xff]
    %v4807 = vld [vmem:[#allocation4 + $0x11f0] sm:$0xff]
    %v4808 = vld [vmem:[#allocation4 + $0x11f8] sm:$0xff]
    %v4809 = vld [vmem:[#allocation4 + $0x1230] sm:$0xff]
    %v4810 = vld [vmem:[#allocation4 + $0x1238] sm:$0xff]
    %v4811 = vld [vmem:[#allocation4 + $0x1240] sm:$0xff]
    %v4812 = vld [vmem:[#allocation4 + $0x1248] sm:$0xff]
    %v4813 = vld [vmem:[#allocation4 + $0x1250] sm:$0xff]
    %v4814 = vld [vmem:[#allocation4 + $0x1258] sm:$0xff]
    %v4815 = vld [vmem:[#allocation4 + $0x1290] sm:$0xff]
    %v4816 = vld [vmem:[#allocation4 + $0x1298] sm:$0xff]
    %v4817 = vld [vmem:[#allocation4 + $0x12a0] sm:$0xff]
    %v4818 = vld [vmem:[#allocation4 + $0x12a8] sm:$0xff]
    %v4819 = vld [vmem:[#allocation4 + $0x12b0] sm:$0xff]
    %v4820 = vld [vmem:[#allocation4 + $0x12b8] sm:$0xff]
    %v4821 = vld [vmem:[#allocation4 + $0x12f0] sm:$0xff]
    %v4822 = vld [vmem:[#allocation4 + $0x12f8] sm:$0xff]
    %v4823 = vld [vmem:[#allocation4 + $0x1300] sm:$0xff]
    %v4824 = vld [vmem:[#allocation4 + $0x1308] sm:$0xff]
    %v4825 = vld [vmem:[#allocation4 + $0x1310] sm:$0xff]
    %v4826 = vld [vmem:[#allocation4 + $0x1318] sm:$0xff]
    %v4827 = vld [vmem:[#allocation4 + $0x1350] sm:$0xff]
    %v4828 = vld [vmem:[#allocation4 + $0x1358] sm:$0xff]
    %v4829 = vld [vmem:[#allocation4 + $0x1360] sm:$0xff]
    %v4830 = vld [vmem:[#allocation4 + $0x1368] sm:$0xff]
    %v4831 = vld [vmem:[#allocation4 + $0x1370] sm:$0xff]
    %v4832 = vld [vmem:[#allocation4 + $0x1378] sm:$0xff]
    %v4833 = vld [vmem:[#allocation4 + $0x13b0] sm:$0xff]
    %v4834 = vld [vmem:[#allocation4 + $0x13b8] sm:$0xff]
    %v4835 = vld [vmem:[#allocation4 + $0x13c0] sm:$0xff]
    %v4836 = vld [vmem:[#allocation4 + $0x13c8] sm:$0xff]
    %v4837 = vld [vmem:[#allocation4 + $0x13d0] sm:$0xff]
    %v4838 = vld [vmem:[#allocation4 + $0x13d8] sm:$0xff]
    %v4839 = vld [vmem:[#allocation4 + $0x1410] sm:$0xff]
    %v4840 = vld [vmem:[#allocation4 + $0x1418] sm:$0xff]
    %v4841 = vld [vmem:[#allocation4 + $0x1420] sm:$0xff]
    %v4842 = vld [vmem:[#allocation4 + $0x1428] sm:$0xff]
    %v4843 = vld [vmem:[#allocation4 + $0x1430] sm:$0xff]
    %v4844 = vld [vmem:[#allocation4 + $0x1438] sm:$0xff]
    %v4845 = vld [vmem:[#allocation4 + $0x1470] sm:$0xff]
    %v4846 = vld [vmem:[#allocation4 + $0x1478] sm:$0xff]
    %v4847 = vld [vmem:[#allocation4 + $0x1480] sm:$0xff]
    %v4848 = vld [vmem:[#allocation4 + $0x1488] sm:$0xff]
    %v4849 = vld [vmem:[#allocation4 + $0x1490] sm:$0xff]
    %v4850 = vld [vmem:[#allocation4 + $0x1498] sm:$0xff]
    %v4851 = vld [vmem:[#allocation4 + $0x14d0] sm:$0xff]
    %v4852 = vld [vmem:[#allocation4 + $0x14d8] sm:$0xff]
    %v4853 = vld [vmem:[#allocation4 + $0x14e0] sm:$0xff]
    %v4854 = vld [vmem:[#allocation4 + $0x14e8] sm:$0xff]
    %v4855 = vld [vmem:[#allocation4 + $0x14f0] sm:$0xff]
    %v4856 = vld [vmem:[#allocation4 + $0x14f8] sm:$0xff]
    %v4857 = vld [vmem:[#allocation4 + $0x1530] sm:$0xff]
    %v4858 = vld [vmem:[#allocation4 + $0x1538] sm:$0xff]
    %v4859 = vld [vmem:[#allocation4 + $0x1540] sm:$0xff]
    %v4860 = vld [vmem:[#allocation4 + $0x1548] sm:$0xff]
    %v4861 = vld [vmem:[#allocation4 + $0x1550] sm:$0xff]
    %v4862 = vld [vmem:[#allocation4 + $0x1558] sm:$0xff]
    %v4863 = vld [vmem:[#allocation4 + $0x1590] sm:$0xff]
    %v4864 = vld [vmem:[#allocation4 + $0x1598] sm:$0xff]
    %v4865 = vld [vmem:[#allocation4 + $0x15a0] sm:$0xff]
    %v4866 = vld [vmem:[#allocation4 + $0x15a8] sm:$0xff]
    %v4867 = vld [vmem:[#allocation4 + $0x15b0] sm:$0xff]
    %v4868 = vld [vmem:[#allocation4 + $0x15b8] sm:$0xff]
    %v4869 = vld [vmem:[#allocation4 + $0x15f0] sm:$0xff]
    %v4870 = vld [vmem:[#allocation4 + $0x15f8] sm:$0xff]
    %v4871 = vld [vmem:[#allocation4 + $0x1600] sm:$0xff]
    %v4872 = vld [vmem:[#allocation4 + $0x1608] sm:$0xff]
    %v4873 = vld [vmem:[#allocation4 + $0x1610] sm:$0xff]
    %v4874 = vld [vmem:[#allocation4 + $0x1618] sm:$0xff]
    %v4875 = vld [vmem:[#allocation4 + $0x1650] sm:$0xff]
    %v4876 = vld [vmem:[#allocation4 + $0x1658] sm:$0xff]
    %v4877 = vld [vmem:[#allocation4 + $0x1660] sm:$0xff]
    %v4878 = vld [vmem:[#allocation4 + $0x1668] sm:$0xff]
    %v4879 = vld [vmem:[#allocation4 + $0x1670] sm:$0xff]
    %v4880 = vld [vmem:[#allocation4 + $0x1678] sm:$0xff]
    %v4881 = vld [vmem:[#allocation4 + $0x16b0] sm:$0xff]
    %v4882 = vld [vmem:[#allocation4 + $0x16b8] sm:$0xff]
    %v4883 = vld [vmem:[#allocation4 + $0x16c0] sm:$0xff]
    %v4884 = vld [vmem:[#allocation4 + $0x16c8] sm:$0xff]
    %v4885 = vld [vmem:[#allocation4 + $0x16d0] sm:$0xff]
    %v4886 = vld [vmem:[#allocation4 + $0x16d8] sm:$0xff]
    %v4887 = vld [vmem:[#allocation4 + $0x1710] sm:$0xff]
    %v4888 = vld [vmem:[#allocation4 + $0x1718] sm:$0xff]
    %v4889 = vld [vmem:[#allocation4 + $0x1720] sm:$0xff]
    %v4890 = vld [vmem:[#allocation4 + $0x1728] sm:$0xff]
    %v4891 = vld [vmem:[#allocation4 + $0x1730] sm:$0xff]
    %v4892 = vld [vmem:[#allocation4 + $0x1738] sm:$0xff]
    %v4893 = vld [vmem:[#allocation4 + $0x1770] sm:$0xff]
    %v4894 = vld [vmem:[#allocation4 + $0x1778] sm:$0xff]
    %v4895 = vld [vmem:[#allocation4 + $0x1780] sm:$0xff]
    %v4896 = vld [vmem:[#allocation4 + $0x1788] sm:$0xff]
    %v4897 = vld [vmem:[#allocation4 + $0x1790] sm:$0xff]
    %v4898 = vld [vmem:[#allocation4 + $0x1798] sm:$0xff]
    %v4899 = vld [vmem:[#allocation4 + $0x17d0] sm:$0xff]
    %v4900 = vld [vmem:[#allocation4 + $0x17d8] sm:$0xff]
    %v4901 = vld [vmem:[#allocation4 + $0x17e0] sm:$0xff]
    %v4902 = vld [vmem:[#allocation4 + $0x17e8] sm:$0xff]
    %v4903 = vld [vmem:[#allocation4 + $0x17f0] sm:$0xff]
    %v4904 = vld [vmem:[#allocation4 + $0x17f8] sm:$0xff]
    %v4905 = vld [vmem:[#allocation4 + $0x1830] sm:$0xff]
    %v4906 = vld [vmem:[#allocation4 + $0x1838] sm:$0xff]
    %v4907 = vld [vmem:[#allocation4 + $0x1840] sm:$0xff]
    %v4908 = vld [vmem:[#allocation4 + $0x1848] sm:$0xff]
    %v4909 = vld [vmem:[#allocation4 + $0x1850] sm:$0xff]
    %v4910 = vld [vmem:[#allocation4 + $0x1858] sm:$0xff]
    %v4911 = vld [vmem:[#allocation4 + $0x1890] sm:$0xff]
    %v4912 = vld [vmem:[#allocation4 + $0x1898] sm:$0xff]
    %v4913 = vld [vmem:[#allocation4 + $0x18a0] sm:$0xff]
    %v4914 = vld [vmem:[#allocation4 + $0x18a8] sm:$0xff]
    %v4915 = vld [vmem:[#allocation4 + $0x18b0] sm:$0xff]
    %v4916 = vld [vmem:[#allocation4 + $0x18b8] sm:$0xff]
    %v4917 = vld [vmem:[#allocation4 + $0x18f0] sm:$0xff]
    %v4918 = vld [vmem:[#allocation4 + $0x18f8] sm:$0xff]
    %v4919 = vld [vmem:[#allocation4 + $0x1900] sm:$0xff]
    %v4920 = vld [vmem:[#allocation4 + $0x1908] sm:$0xff]
    %v4921 = vld [vmem:[#allocation4 + $0x1910] sm:$0xff]
    %v4922 = vld [vmem:[#allocation4 + $0x1918] sm:$0xff]
    %v4923 = vld [vmem:[#allocation4 + $0x1950] sm:$0xff]
    %v4924 = vld [vmem:[#allocation4 + $0x1958] sm:$0xff]
    %v4925 = vld [vmem:[#allocation4 + $0x1960] sm:$0xff]
    %v4926 = vld [vmem:[#allocation4 + $0x1968] sm:$0xff]
    %v4927 = vld [vmem:[#allocation4 + $0x1970] sm:$0xff]
    %v4928 = vld [vmem:[#allocation4 + $0x1978] sm:$0xff]
    %v4929 = vld [vmem:[#allocation4 + $0x19b0] sm:$0xff]
    %v4930 = vld [vmem:[#allocation4 + $0x19b8] sm:$0xff]
    %v4931 = vld [vmem:[#allocation4 + $0x19c0] sm:$0xff]
    %v4932 = vld [vmem:[#allocation4 + $0x19c8] sm:$0xff]
    %v4933 = vld [vmem:[#allocation4 + $0x19d0] sm:$0xff]
    %v4934 = vld [vmem:[#allocation4 + $0x19d8] sm:$0xff]
    %v4935 = vld [vmem:[#allocation4 + $0x1a10] sm:$0xff]
    %v4936 = vld [vmem:[#allocation4 + $0x1a18] sm:$0xff]
    %v4937 = vld [vmem:[#allocation4 + $0x1a20] sm:$0xff]
    %v4938 = vld [vmem:[#allocation4 + $0x1a28] sm:$0xff]
    %v4939 = vld [vmem:[#allocation4 + $0x1a30] sm:$0xff]
    %v4940 = vld [vmem:[#allocation4 + $0x1a38] sm:$0xff]
    %v4941 = vld [vmem:[#allocation4 + $0x1a70] sm:$0xff]
    %v4942 = vld [vmem:[#allocation4 + $0x1a78] sm:$0xff]
    %v4943 = vld [vmem:[#allocation4 + $0x1a80] sm:$0xff]
    %v4944 = vld [vmem:[#allocation4 + $0x1a88] sm:$0xff]
    %v4945 = vld [vmem:[#allocation4 + $0x1a90] sm:$0xff]
    %v4946 = vld [vmem:[#allocation4 + $0x1a98] sm:$0xff]
    %v4947 = vld [vmem:[#allocation4 + $0x1ad0] sm:$0xff]
    %v4948 = vld [vmem:[#allocation4 + $0x1ad8] sm:$0xff]
    %v4949 = vld [vmem:[#allocation4 + $0x1ae0] sm:$0xff]
    %v4950 = vld [vmem:[#allocation4 + $0x1ae8] sm:$0xff]
    %v4951 = vld [vmem:[#allocation4 + $0x1af0] sm:$0xff]
    %v4952 = vld [vmem:[#allocation4 + $0x1af8] sm:$0xff]
    %v4953 = vld [vmem:[#allocation4 + $0x1b30] sm:$0xff]
    %v4954 = vld [vmem:[#allocation4 + $0x1b38] sm:$0xff]
    %v4955 = vld [vmem:[#allocation4 + $0x1b40] sm:$0xff]
    %v4956 = vld [vmem:[#allocation4 + $0x1b48] sm:$0xff]
    %v4957 = vld [vmem:[#allocation4 + $0x1b50] sm:$0xff]
    %v4958 = vld [vmem:[#allocation4 + $0x1b58] sm:$0xff]
    %v4959 = vld [vmem:[#allocation4 + $0x1b90] sm:$0xff]
    %v4960 = vld [vmem:[#allocation4 + $0x1b98] sm:$0xff]
    %v4961 = vld [vmem:[#allocation4 + $0x1ba0] sm:$0xff]
    %v4962 = vld [vmem:[#allocation4 + $0x1ba8] sm:$0xff]
    %v4963 = vld [vmem:[#allocation4 + $0x1bb0] sm:$0xff]
    %v4964 = vld [vmem:[#allocation4 + $0x1bb8] sm:$0xff]
    %v4965 = vld [vmem:[#allocation4 + $0x1bf0] sm:$0xff]
    %v4966 = vld [vmem:[#allocation4 + $0x1bf8] sm:$0xff]
    %v4967 = vld [vmem:[#allocation4 + $0x1c00] sm:$0xff]
    %v4968 = vld [vmem:[#allocation4 + $0x1c08] sm:$0xff]
    %v4969 = vld [vmem:[#allocation4 + $0x1c10] sm:$0xff]
    %v4970 = vld [vmem:[#allocation4 + $0x1c18] sm:$0xff]
    %v4971 = vld [vmem:[#allocation4 + $0x1c50] sm:$0xff]
    %v4972 = vld [vmem:[#allocation4 + $0x1c58] sm:$0xff]
    %v4973 = vld [vmem:[#allocation4 + $0x1c60] sm:$0xff]
    %v4974 = vld [vmem:[#allocation4 + $0x1c68] sm:$0xff]
    %v4975 = vld [vmem:[#allocation4 + $0x1c70] sm:$0xff]
    %v4976 = vld [vmem:[#allocation4 + $0x1c78] sm:$0xff]
    %v4977 = vld [vmem:[#allocation4 + $0x1cb0] sm:$0xff]
    %v4978 = vld [vmem:[#allocation4 + $0x1cb8] sm:$0xff]
    %v4979 = vld [vmem:[#allocation4 + $0x1cc0] sm:$0xff]
    %v4980 = vld [vmem:[#allocation4 + $0x1cc8] sm:$0xff]
    %v4981 = vld [vmem:[#allocation4 + $0x1cd0] sm:$0xff]
    %v4982 = vld [vmem:[#allocation4 + $0x1cd8] sm:$0xff]
    %v4983 = vld [vmem:[#allocation4 + $0x1d10] sm:$0xff]
    %v4984 = vld [vmem:[#allocation4 + $0x1d18] sm:$0xff]
    %v4985 = vld [vmem:[#allocation4 + $0x1d20] sm:$0xff]
    %v4986 = vld [vmem:[#allocation4 + $0x1d28] sm:$0xff]
    %v4987 = vld [vmem:[#allocation4 + $0x1d30] sm:$0xff]
    %v4988 = vld [vmem:[#allocation4 + $0x1d38] sm:$0xff]
    %v4989 = vld [vmem:[#allocation4 + $0x1d70] sm:$0xff]
    %v4990 = vld [vmem:[#allocation4 + $0x1d78] sm:$0xff]
    %v4991 = vld [vmem:[#allocation4 + $0x1d80] sm:$0xff]
    %v4992 = vld [vmem:[#allocation4 + $0x1d88] sm:$0xff]
    %v4993 = vld [vmem:[#allocation4 + $0x1d90] sm:$0xff]
    %v4994 = vld [vmem:[#allocation4 + $0x1d98] sm:$0xff]
    %v4995 = vld [vmem:[#allocation4 + $0x1dd0] sm:$0xff]
    %v4996 = vld [vmem:[#allocation4 + $0x1dd8] sm:$0xff]
    %v4997 = vld [vmem:[#allocation4 + $0x1de0] sm:$0xff]
    %v4998 = vld [vmem:[#allocation4 + $0x1de8] sm:$0xff]
    %v4999 = vld [vmem:[#allocation4 + $0x1df0] sm:$0xff]
    %v5000 = vld [vmem:[#allocation4 + $0x1df8] sm:$0xff]
    %v5001 = vld [vmem:[#allocation4 + $0x1e30] sm:$0xff]
    %v5002 = vld [vmem:[#allocation4 + $0x1e38] sm:$0xff]
    %v5003 = vld [vmem:[#allocation4 + $0x1e40] sm:$0xff]
    %v5004 = vld [vmem:[#allocation4 + $0x1e48] sm:$0xff]
    %v5005 = vld [vmem:[#allocation4 + $0x1e50] sm:$0xff]
    %v5006 = vld [vmem:[#allocation4 + $0x1e58] sm:$0xff]
    %v5007 = vld [vmem:[#allocation4 + $0x1e90] sm:$0xff]
    %v5008 = vld [vmem:[#allocation4 + $0x1e98] sm:$0xff]
    %v5009 = vld [vmem:[#allocation4 + $0x1ea0] sm:$0xff]
    %v5010 = vld [vmem:[#allocation4 + $0x1ea8] sm:$0xff]
    %v5011 = vld [vmem:[#allocation4 + $0x1eb0] sm:$0xff]
    %v5012 = vld [vmem:[#allocation4 + $0x1eb8] sm:$0xff]
    %v5013 = vld [vmem:[#allocation4 + $0x1ef0] sm:$0xff]
    %v5014 = vld [vmem:[#allocation4 + $0x1ef8] sm:$0xff]
    %v5015 = vld [vmem:[#allocation4 + $0x1f00] sm:$0xff]
    %v5016 = vld [vmem:[#allocation4 + $0x1f08] sm:$0xff]
    %v5017 = vld [vmem:[#allocation4 + $0x1f10] sm:$0xff]
    %v5018 = vld [vmem:[#allocation4 + $0x1f18] sm:$0xff]
    %v5019 = vld [vmem:[#allocation4 + $0x1f50] sm:$0xff]
    %v5020 = vld [vmem:[#allocation4 + $0x1f58] sm:$0xff]
    %v5021 = vld [vmem:[#allocation4 + $0x1f60] sm:$0xff]
    %v5022 = vld [vmem:[#allocation4 + $0x1f68] sm:$0xff]
    %v5023 = vld [vmem:[#allocation4 + $0x1f70] sm:$0xff]
    %v5024 = vld [vmem:[#allocation4 + $0x1f78] sm:$0xff]
    %v5025 = vld [vmem:[#allocation4 + $0x1fb0] sm:$0xff]
    %v5026 = vld [vmem:[#allocation4 + $0x1fb8] sm:$0xff]
    %v5027 = vld [vmem:[#allocation4 + $0x1fc0] sm:$0xff]
    %v5028 = vld [vmem:[#allocation4 + $0x1fc8] sm:$0xff]
    %v5029 = vld [vmem:[#allocation4 + $0x1fd0] sm:$0xff]
    %v5030 = vld [vmem:[#allocation4 + $0x1fd8] sm:$0xff]
    %v5031 = vld [vmem:[#allocation4 + $0x2010] sm:$0xff]
    %v5032 = vld [vmem:[#allocation4 + $0x2018] sm:$0xff]
    %v5033 = vld [vmem:[#allocation4 + $0x2020] sm:$0xff]
    %v5034 = vld [vmem:[#allocation4 + $0x2028] sm:$0xff]
    %v5035 = vld [vmem:[#allocation4 + $0x2030] sm:$0xff]
    %v5036 = vld [vmem:[#allocation4 + $0x2038] sm:$0xff]
    %v5037 = vld [vmem:[#allocation4 + $0x2070] sm:$0xff]
    %v5038 = vld [vmem:[#allocation4 + $0x2078] sm:$0xff]
    %v5039 = vld [vmem:[#allocation4 + $0x2080] sm:$0xff]
    %v5040 = vld [vmem:[#allocation4 + $0x2088] sm:$0xff]
    %v5041 = vld [vmem:[#allocation4 + $0x2090] sm:$0xff]
    %v5042 = vld [vmem:[#allocation4 + $0x2098] sm:$0xff]
    %v5043 = vld [vmem:[#allocation4 + $0x20d0] sm:$0xff]
    %v5044 = vld [vmem:[#allocation4 + $0x20d8] sm:$0xff]
    %v5045 = vld [vmem:[#allocation4 + $0x20e0] sm:$0xff]
    %v5046 = vld [vmem:[#allocation4 + $0x20e8] sm:$0xff]
    %v5047 = vld [vmem:[#allocation4 + $0x20f0] sm:$0xff]
    %v5048 = vld [vmem:[#allocation4 + $0x20f8] sm:$0xff]
    %v5049 = vld [vmem:[#allocation4 + $0x2130] sm:$0xff]
    %v5050 = vld [vmem:[#allocation4 + $0x2138] sm:$0xff]
    %v5051 = vld [vmem:[#allocation4 + $0x2140] sm:$0xff]
    %v5052 = vld [vmem:[#allocation4 + $0x2148] sm:$0xff]
    %v5053 = vld [vmem:[#allocation4 + $0x2150] sm:$0xff]
    %v5054 = vld [vmem:[#allocation4 + $0x2158] sm:$0xff]
    %v5055 = vld [vmem:[#allocation4 + $0x2190] sm:$0xff]
    %v5056 = vld [vmem:[#allocation4 + $0x2198] sm:$0xff]
    %v5057 = vld [vmem:[#allocation4 + $0x21a0] sm:$0xff]
    %v5058 = vld [vmem:[#allocation4 + $0x21a8] sm:$0xff]
    %v5059 = vld [vmem:[#allocation4 + $0x21b0] sm:$0xff]
    %v5060 = vld [vmem:[#allocation4 + $0x21b8] sm:$0xff]
    %v5061 = vld [vmem:[#allocation4 + $0x21f0] sm:$0xff]
    %v5062 = vld [vmem:[#allocation4 + $0x21f8] sm:$0xff]
    %v5063 = vld [vmem:[#allocation4 + $0x2200] sm:$0xff]
    %v5064 = vld [vmem:[#allocation4 + $0x2208] sm:$0xff]
    %v5065 = vld [vmem:[#allocation4 + $0x2210] sm:$0xff]
    %v5066 = vld [vmem:[#allocation4 + $0x2218] sm:$0xff]
    %v5067 = vld [vmem:[#allocation4 + $0x2250] sm:$0xff]
    %v5068 = vld [vmem:[#allocation4 + $0x2258] sm:$0xff]
    %v5069 = vld [vmem:[#allocation4 + $0x2260] sm:$0xff]
    %v5070 = vld [vmem:[#allocation4 + $0x2268] sm:$0xff]
    %v5071 = vld [vmem:[#allocation4 + $0x2270] sm:$0xff]
    %v5072 = vld [vmem:[#allocation4 + $0x2278] sm:$0xff]
    %v5073 = vld [vmem:[#allocation4 + $0x22b0] sm:$0xff]
    %v5074 = vld [vmem:[#allocation4 + $0x22b8] sm:$0xff]
    %v5075 = vld [vmem:[#allocation4 + $0x22c0] sm:$0xff]
    %v5076 = vld [vmem:[#allocation4 + $0x22c8] sm:$0xff]
    %v5077 = vld [vmem:[#allocation4 + $0x22d0] sm:$0xff]
    %v5078 = vld [vmem:[#allocation4 + $0x22d8] sm:$0xff]
    %v5079 = vld [vmem:[#allocation4 + $0x2310] sm:$0xff]
    %v5080 = vld [vmem:[#allocation4 + $0x2318] sm:$0xff]
    %v5081 = vld [vmem:[#allocation4 + $0x2320] sm:$0xff]
    %v5082 = vld [vmem:[#allocation4 + $0x2328] sm:$0xff]
    %v5083 = vld [vmem:[#allocation4 + $0x2330] sm:$0xff]
    %v5084 = vld [vmem:[#allocation4 + $0x2338] sm:$0xff]
    %v5085 = vld [vmem:[#allocation4 + $0x2370] sm:$0xff]
    %v5086 = vld [vmem:[#allocation4 + $0x2378] sm:$0xff]
    %v5087 = vld [vmem:[#allocation4 + $0x2380] sm:$0xff]
    %v5088 = vld [vmem:[#allocation4 + $0x2388] sm:$0xff]
    %v5089 = vld [vmem:[#allocation4 + $0x2390] sm:$0xff]
    %v5090 = vld [vmem:[#allocation4 + $0x2398] sm:$0xff]
    %v5091 = vld [vmem:[#allocation4 + $0x23d0] sm:$0xff]
    %v5092 = vld [vmem:[#allocation4 + $0x23d8] sm:$0xff]
    %v5093 = vld [vmem:[#allocation4 + $0x23e0] sm:$0xff]
    %v5094 = vld [vmem:[#allocation4 + $0x23e8] sm:$0xff]
    %v5095 = vld [vmem:[#allocation4 + $0x23f0] sm:$0xff]
    %v5096 = vld [vmem:[#allocation4 + $0x23f8] sm:$0xff]
    %v5097 = vpack.c.bf16 %v4515, %v4509
    %v5098 = vpack.c.bf16 %v4516, %v4510
    %v5099 = vpack.c.bf16 %v4517, %v4511
    %v5100 = vpack.c.bf16 %v4518, %v4512
    %v5101 = vpack.c.bf16 %v4519, %v4513
    %v5102 = vpack.c.bf16 %v4520, %v4514
    %v5679 = vunpack.c.l.b16 %v4521
    %v5680 = vunpack.c.h.b16 %v4521
    %v5681 = vunpack.c.l.b16 %v4522
    %v5682 = vunpack.c.h.b16 %v4522
    %v5683 = vunpack.c.l.b16 %v4523
    %v5684 = vunpack.c.h.b16 %v4523
    %v5685 = vunpack.c.l.b16 %v4524
    %v5686 = vunpack.c.h.b16 %v4524
    %v5687 = vunpack.c.l.b16 %v4525
    %v5688 = vunpack.c.h.b16 %v4525
    %v5689 = vunpack.c.l.b16 %v4526
    %v5690 = vunpack.c.h.b16 %v4526
    %v5691 = vunpack.c.l.b16 %v4527
    %v5692 = vunpack.c.h.b16 %v4527
    %v5693 = vunpack.c.l.b16 %v4528
    %v5694 = vunpack.c.h.b16 %v4528
    %v5695 = vunpack.c.l.b16 %v4529
    %v5696 = vunpack.c.h.b16 %v4529
    %v5697 = vunpack.c.l.b16 %v4530
    %v5698 = vunpack.c.h.b16 %v4530
    %v5699 = vunpack.c.l.b16 %v4531
    %v5700 = vunpack.c.h.b16 %v4531
    %v5701 = vunpack.c.l.b16 %v4532
    %v5702 = vunpack.c.h.b16 %v4532
    %v5703 = vunpack.c.l.b16 %v4533
    %v5704 = vunpack.c.h.b16 %v4533
    %v5705 = vunpack.c.l.b16 %v4534
    %v5706 = vunpack.c.h.b16 %v4534
    %v5707 = vunpack.c.l.b16 %v4535
    %v5708 = vunpack.c.h.b16 %v4535
    %v5709 = vunpack.c.l.b16 %v4536
    %v5710 = vunpack.c.h.b16 %v4536
    %v5711 = vunpack.c.l.b16 %v4537
    %v5712 = vunpack.c.h.b16 %v4537
    %v5713 = vunpack.c.l.b16 %v4538
    %v5714 = vunpack.c.h.b16 %v4538
    %v5715 = vunpack.c.l.b16 %v4539
    %v5716 = vunpack.c.h.b16 %v4539
    %v5717 = vunpack.c.l.b16 %v4540
    %v5718 = vunpack.c.h.b16 %v4540
    %v5719 = vunpack.c.l.b16 %v4541
    %v5720 = vunpack.c.h.b16 %v4541
    %v5721 = vunpack.c.l.b16 %v4542
    %v5722 = vunpack.c.h.b16 %v4542
    %v5723 = vunpack.c.l.b16 %v4543
    %v5724 = vunpack.c.h.b16 %v4543
    %v5725 = vunpack.c.l.b16 %v4544
    %v5726 = vunpack.c.h.b16 %v4544
    %v5727 = vunpack.c.l.b16 %v4545
    %v5728 = vunpack.c.h.b16 %v4545
    %v5729 = vunpack.c.l.b16 %v4546
    %v5730 = vunpack.c.h.b16 %v4546
    %v5731 = vunpack.c.l.b16 %v4547
    %v5732 = vunpack.c.h.b16 %v4547
    %v5733 = vunpack.c.l.b16 %v4548
    %v5734 = vunpack.c.h.b16 %v4548
    %v5735 = vunpack.c.l.b16 %v4549
    %v5736 = vunpack.c.h.b16 %v4549
    %v5737 = vunpack.c.l.b16 %v4550
    %v5738 = vunpack.c.h.b16 %v4550
    %v5739 = vunpack.c.l.b16 %v4551
    %v5740 = vunpack.c.h.b16 %v4551
    %v5741 = vunpack.c.l.b16 %v4552
    %v5742 = vunpack.c.h.b16 %v4552
    %v5743 = vunpack.c.l.b16 %v4553
    %v5744 = vunpack.c.h.b16 %v4553
    %v5745 = vunpack.c.l.b16 %v4554
    %v5746 = vunpack.c.h.b16 %v4554
    %v5747 = vunpack.c.l.b16 %v4555
    %v5748 = vunpack.c.h.b16 %v4555
    %v5749 = vunpack.c.l.b16 %v4556
    %v5750 = vunpack.c.h.b16 %v4556
    %v5751 = vunpack.c.l.b16 %v4557
    %v5752 = vunpack.c.h.b16 %v4557
    %v5753 = vunpack.c.l.b16 %v4558
    %v5754 = vunpack.c.h.b16 %v4558
    %v5755 = vunpack.c.l.b16 %v4559
    %v5756 = vunpack.c.h.b16 %v4559
    %v5757 = vunpack.c.l.b16 %v4560
    %v5758 = vunpack.c.h.b16 %v4560
    %v5759 = vunpack.c.l.b16 %v4561
    %v5760 = vunpack.c.h.b16 %v4561
    %v5761 = vunpack.c.l.b16 %v4562
    %v5762 = vunpack.c.h.b16 %v4562
    %v5763 = vunpack.c.l.b16 %v4563
    %v5764 = vunpack.c.h.b16 %v4563
    %v5765 = vunpack.c.l.b16 %v4564
    %v5766 = vunpack.c.h.b16 %v4564
    %v5767 = vunpack.c.l.b16 %v4565
    %v5768 = vunpack.c.h.b16 %v4565
    %v5769 = vunpack.c.l.b16 %v4566
    %v5770 = vunpack.c.h.b16 %v4566
    %v5771 = vunpack.c.l.b16 %v4567
    %v5772 = vunpack.c.h.b16 %v4567
    %v5773 = vunpack.c.l.b16 %v4568
    %v5774 = vunpack.c.h.b16 %v4568
    %v5775 = vunpack.c.l.b16 %v4569
    %v5776 = vunpack.c.h.b16 %v4569
    %v5777 = vunpack.c.l.b16 %v4570
    %v5778 = vunpack.c.h.b16 %v4570
    %v5779 = vunpack.c.l.b16 %v4571
    %v5780 = vunpack.c.h.b16 %v4571
    %v5781 = vunpack.c.l.b16 %v4572
    %v5782 = vunpack.c.h.b16 %v4572
    %v5783 = vunpack.c.l.b16 %v4573
    %v5784 = vunpack.c.h.b16 %v4573
    %v5785 = vunpack.c.l.b16 %v4574
    %v5786 = vunpack.c.h.b16 %v4574
    %v5787 = vunpack.c.l.b16 %v4575
    %v5788 = vunpack.c.h.b16 %v4575
    %v5789 = vunpack.c.l.b16 %v4576
    %v5790 = vunpack.c.h.b16 %v4576
    %v5791 = vunpack.c.l.b16 %v4577
    %v5792 = vunpack.c.h.b16 %v4577
    %v5793 = vunpack.c.l.b16 %v4578
    %v5794 = vunpack.c.h.b16 %v4578
    %v5795 = vunpack.c.l.b16 %v4579
    %v5796 = vunpack.c.h.b16 %v4579
    %v5797 = vunpack.c.l.b16 %v4580
    %v5798 = vunpack.c.h.b16 %v4580
    %v5799 = vunpack.c.l.b16 %v4581
    %v5800 = vunpack.c.h.b16 %v4581
    %v5801 = vunpack.c.l.b16 %v4582
    %v5802 = vunpack.c.h.b16 %v4582
    %v5803 = vunpack.c.l.b16 %v4583
    %v5804 = vunpack.c.h.b16 %v4583
    %v5805 = vunpack.c.l.b16 %v4584
    %v5806 = vunpack.c.h.b16 %v4584
    %v5807 = vunpack.c.l.b16 %v4585
    %v5808 = vunpack.c.h.b16 %v4585
    %v5809 = vunpack.c.l.b16 %v4586
    %v5810 = vunpack.c.h.b16 %v4586
    %v5811 = vunpack.c.l.b16 %v4587
    %v5812 = vunpack.c.h.b16 %v4587
    %v5813 = vunpack.c.l.b16 %v4588
    %v5814 = vunpack.c.h.b16 %v4588
    %v5815 = vunpack.c.l.b16 %v4589
    %v5816 = vunpack.c.h.b16 %v4589
    %v5817 = vunpack.c.l.b16 %v4590
    %v5818 = vunpack.c.h.b16 %v4590
    %v5819 = vunpack.c.l.b16 %v4591
    %v5820 = vunpack.c.h.b16 %v4591
    %v5821 = vunpack.c.l.b16 %v4592
    %v5822 = vunpack.c.h.b16 %v4592
    %v5823 = vunpack.c.l.b16 %v4593
    %v5824 = vunpack.c.h.b16 %v4593
    %v5825 = vunpack.c.l.b16 %v4594
    %v5826 = vunpack.c.h.b16 %v4594
    %v5827 = vunpack.c.l.b16 %v4595
    %v5828 = vunpack.c.h.b16 %v4595
    %v5829 = vunpack.c.l.b16 %v4596
    %v5830 = vunpack.c.h.b16 %v4596
    %v5831 = vunpack.c.l.b16 %v4597
    %v5832 = vunpack.c.h.b16 %v4597
    %v5833 = vunpack.c.l.b16 %v4598
    %v5834 = vunpack.c.h.b16 %v4598
    %v5835 = vunpack.c.l.b16 %v4599
    %v5836 = vunpack.c.h.b16 %v4599
    %v5837 = vunpack.c.l.b16 %v4600
    %v5838 = vunpack.c.h.b16 %v4600
    %v5839 = vunpack.c.l.b16 %v4601
    %v5840 = vunpack.c.h.b16 %v4601
    %v5841 = vunpack.c.l.b16 %v4602
    %v5842 = vunpack.c.h.b16 %v4602
    %v5843 = vunpack.c.l.b16 %v4603
    %v5844 = vunpack.c.h.b16 %v4603
    %v5845 = vunpack.c.l.b16 %v4604
    %v5846 = vunpack.c.h.b16 %v4604
    %v5847 = vunpack.c.l.b16 %v4605
    %v5848 = vunpack.c.h.b16 %v4605
    %v5849 = vunpack.c.l.b16 %v4606
    %v5850 = vunpack.c.h.b16 %v4606
    %v5851 = vunpack.c.l.b16 %v4607
    %v5852 = vunpack.c.h.b16 %v4607
    %v5853 = vunpack.c.l.b16 %v4608
    %v5854 = vunpack.c.h.b16 %v4608
    %v5855 = vunpack.c.l.b16 %v4609
    %v5856 = vunpack.c.h.b16 %v4609
    %v5857 = vunpack.c.l.b16 %v4610
    %v5858 = vunpack.c.h.b16 %v4610
    %v5859 = vunpack.c.l.b16 %v4611
    %v5860 = vunpack.c.h.b16 %v4611
    %v5861 = vunpack.c.l.b16 %v4612
    %v5862 = vunpack.c.h.b16 %v4612
    %v5863 = vunpack.c.l.b16 %v4613
    %v5864 = vunpack.c.h.b16 %v4613
    %v5865 = vunpack.c.l.b16 %v4614
    %v5866 = vunpack.c.h.b16 %v4614
    %v5867 = vunpack.c.l.b16 %v4615
    %v5868 = vunpack.c.h.b16 %v4615
    %v5869 = vunpack.c.l.b16 %v4616
    %v5870 = vunpack.c.h.b16 %v4616
    %v5871 = vunpack.c.l.b16 %v4617
    %v5872 = vunpack.c.h.b16 %v4617
    %v5873 = vunpack.c.l.b16 %v4618
    %v5874 = vunpack.c.h.b16 %v4618
    %v5875 = vunpack.c.l.b16 %v4619
    %v5876 = vunpack.c.h.b16 %v4619
    %v5877 = vunpack.c.l.b16 %v4620
    %v5878 = vunpack.c.h.b16 %v4620
    %v5879 = vunpack.c.l.b16 %v4621
    %v5880 = vunpack.c.h.b16 %v4621
    %v5881 = vunpack.c.l.b16 %v4622
    %v5882 = vunpack.c.h.b16 %v4622
    %v5883 = vunpack.c.l.b16 %v4623
    %v5884 = vunpack.c.h.b16 %v4623
    %v5885 = vunpack.c.l.b16 %v4624
    %v5886 = vunpack.c.h.b16 %v4624
    %v5887 = vunpack.c.l.b16 %v4625
    %v5888 = vunpack.c.h.b16 %v4625
    %v5889 = vunpack.c.l.b16 %v4626
    %v5890 = vunpack.c.h.b16 %v4626
    %v5891 = vunpack.c.l.b16 %v4627
    %v5892 = vunpack.c.h.b16 %v4627
    %v5893 = vunpack.c.l.b16 %v4628
    %v5894 = vunpack.c.h.b16 %v4628
    %v5895 = vunpack.c.l.b16 %v4629
    %v5896 = vunpack.c.h.b16 %v4629
    %v5897 = vunpack.c.l.b16 %v4630
    %v5898 = vunpack.c.h.b16 %v4630
    %v5899 = vunpack.c.l.b16 %v4631
    %v5900 = vunpack.c.h.b16 %v4631
    %v5901 = vunpack.c.l.b16 %v4632
    %v5902 = vunpack.c.h.b16 %v4632
    %v5903 = vunpack.c.l.b16 %v4633
    %v5904 = vunpack.c.h.b16 %v4633
    %v5905 = vunpack.c.l.b16 %v4634
    %v5906 = vunpack.c.h.b16 %v4634
    %v5907 = vunpack.c.l.b16 %v4635
    %v5908 = vunpack.c.h.b16 %v4635
    %v5909 = vunpack.c.l.b16 %v4636
    %v5910 = vunpack.c.h.b16 %v4636
    %v5911 = vunpack.c.l.b16 %v4637
    %v5912 = vunpack.c.h.b16 %v4637
    %v5913 = vunpack.c.l.b16 %v4638
    %v5914 = vunpack.c.h.b16 %v4638
    %v5915 = vunpack.c.l.b16 %v4639
    %v5916 = vunpack.c.h.b16 %v4639
    %v5917 = vunpack.c.l.b16 %v4640
    %v5918 = vunpack.c.h.b16 %v4640
    %v5919 = vunpack.c.l.b16 %v4641
    %v5920 = vunpack.c.h.b16 %v4641
    %v5921 = vunpack.c.l.b16 %v4642
    %v5922 = vunpack.c.h.b16 %v4642
    %v5923 = vunpack.c.l.b16 %v4643
    %v5924 = vunpack.c.h.b16 %v4643
    %v5925 = vunpack.c.l.b16 %v4644
    %v5926 = vunpack.c.h.b16 %v4644
    %v5927 = vunpack.c.l.b16 %v4645
    %v5928 = vunpack.c.h.b16 %v4645
    %v5929 = vunpack.c.l.b16 %v4646
    %v5930 = vunpack.c.h.b16 %v4646
    %v5931 = vunpack.c.l.b16 %v4647
    %v5932 = vunpack.c.h.b16 %v4647
    %v5933 = vunpack.c.l.b16 %v4648
    %v5934 = vunpack.c.h.b16 %v4648
    %v5935 = vunpack.c.l.b16 %v4649
    %v5936 = vunpack.c.h.b16 %v4649
    %v5937 = vunpack.c.l.b16 %v4650
    %v5938 = vunpack.c.h.b16 %v4650
    %v5939 = vunpack.c.l.b16 %v4651
    %v5940 = vunpack.c.h.b16 %v4651
    %v5941 = vunpack.c.l.b16 %v4652
    %v5942 = vunpack.c.h.b16 %v4652
    %v5943 = vunpack.c.l.b16 %v4653
    %v5944 = vunpack.c.h.b16 %v4653
    %v5945 = vunpack.c.l.b16 %v4654
    %v5946 = vunpack.c.h.b16 %v4654
    %v5947 = vunpack.c.l.b16 %v4655
    %v5948 = vunpack.c.h.b16 %v4655
    %v5949 = vunpack.c.l.b16 %v4656
    %v5950 = vunpack.c.h.b16 %v4656
    %v5951 = vunpack.c.l.b16 %v4657
    %v5952 = vunpack.c.h.b16 %v4657
    %v5953 = vunpack.c.l.b16 %v4658
    %v5954 = vunpack.c.h.b16 %v4658
    %v5955 = vunpack.c.l.b16 %v4659
    %v5956 = vunpack.c.h.b16 %v4659
    %v5957 = vunpack.c.l.b16 %v4660
    %v5958 = vunpack.c.h.b16 %v4660
    %v5959 = vunpack.c.l.b16 %v4661
    %v5960 = vunpack.c.h.b16 %v4661
    %v5961 = vunpack.c.l.b16 %v4662
    %v5962 = vunpack.c.h.b16 %v4662
    %v5963 = vunpack.c.l.b16 %v4663
    %v5964 = vunpack.c.h.b16 %v4663
    %v5965 = vunpack.c.l.b16 %v4664
    %v5966 = vunpack.c.h.b16 %v4664
    %v5967 = vunpack.c.l.b16 %v4665
    %v5968 = vunpack.c.h.b16 %v4665
    %v5969 = vunpack.c.l.b16 %v4666
    %v5970 = vunpack.c.h.b16 %v4666
    %v5971 = vunpack.c.l.b16 %v4667
    %v5972 = vunpack.c.h.b16 %v4667
    %v5973 = vunpack.c.l.b16 %v4668
    %v5974 = vunpack.c.h.b16 %v4668
    %v5975 = vunpack.c.l.b16 %v4669
    %v5976 = vunpack.c.h.b16 %v4669
    %v5977 = vunpack.c.l.b16 %v4670
    %v5978 = vunpack.c.h.b16 %v4670
    %v5979 = vunpack.c.l.b16 %v4671
    %v5980 = vunpack.c.h.b16 %v4671
    %v5981 = vunpack.c.l.b16 %v4672
    %v5982 = vunpack.c.h.b16 %v4672
    %v5983 = vunpack.c.l.b16 %v4673
    %v5984 = vunpack.c.h.b16 %v4673
    %v5985 = vunpack.c.l.b16 %v4674
    %v5986 = vunpack.c.h.b16 %v4674
    %v5987 = vunpack.c.l.b16 %v4675
    %v5988 = vunpack.c.h.b16 %v4675
    %v5989 = vunpack.c.l.b16 %v4676
    %v5990 = vunpack.c.h.b16 %v4676
    %v5991 = vunpack.c.l.b16 %v4677
    %v5992 = vunpack.c.h.b16 %v4677
    %v5993 = vunpack.c.l.b16 %v4678
    %v5994 = vunpack.c.h.b16 %v4678
    %v5995 = vunpack.c.l.b16 %v4679
    %v5996 = vunpack.c.h.b16 %v4679
    %v5997 = vunpack.c.l.b16 %v4680
    %v5998 = vunpack.c.h.b16 %v4680
    %v5999 = vunpack.c.l.b16 %v4681
    %v6000 = vunpack.c.h.b16 %v4681
    %v6001 = vunpack.c.l.b16 %v4682
    %v6002 = vunpack.c.h.b16 %v4682
    %v6003 = vunpack.c.l.b16 %v4683
    %v6004 = vunpack.c.h.b16 %v4683
    %v6005 = vunpack.c.l.b16 %v4684
    %v6006 = vunpack.c.h.b16 %v4684
    %v6007 = vunpack.c.l.b16 %v4685
    %v6008 = vunpack.c.h.b16 %v4685
    %v6009 = vunpack.c.l.b16 %v4686
    %v6010 = vunpack.c.h.b16 %v4686
    %v6011 = vunpack.c.l.b16 %v4687
    %v6012 = vunpack.c.h.b16 %v4687
    %v6013 = vunpack.c.l.b16 %v4688
    %v6014 = vunpack.c.h.b16 %v4688
    %v6015 = vunpack.c.l.b16 %v4689
    %v6016 = vunpack.c.h.b16 %v4689
    %v6017 = vunpack.c.l.b16 %v4690
    %v6018 = vunpack.c.h.b16 %v4690
    %v6019 = vunpack.c.l.b16 %v4691
    %v6020 = vunpack.c.h.b16 %v4691
    %v6021 = vunpack.c.l.b16 %v4692
    %v6022 = vunpack.c.h.b16 %v4692
    %v6023 = vunpack.c.l.b16 %v4693
    %v6024 = vunpack.c.h.b16 %v4693
    %v6025 = vunpack.c.l.b16 %v4694
    %v6026 = vunpack.c.h.b16 %v4694
    %v6027 = vunpack.c.l.b16 %v4695
    %v6028 = vunpack.c.h.b16 %v4695
    %v6029 = vunpack.c.l.b16 %v4696
    %v6030 = vunpack.c.h.b16 %v4696
    %v6031 = vunpack.c.l.b16 %v4697
    %v6032 = vunpack.c.h.b16 %v4697
    %v6033 = vunpack.c.l.b16 %v4698
    %v6034 = vunpack.c.h.b16 %v4698
    %v6035 = vunpack.c.l.b16 %v4699
    %v6036 = vunpack.c.h.b16 %v4699
    %v6037 = vunpack.c.l.b16 %v4700
    %v6038 = vunpack.c.h.b16 %v4700
    %v6039 = vunpack.c.l.b16 %v4701
    %v6040 = vunpack.c.h.b16 %v4701
    %v6041 = vunpack.c.l.b16 %v4702
    %v6042 = vunpack.c.h.b16 %v4702
    %v6043 = vunpack.c.l.b16 %v4703
    %v6044 = vunpack.c.h.b16 %v4703
    %v6045 = vunpack.c.l.b16 %v4704
    %v6046 = vunpack.c.h.b16 %v4704
    %v6047 = vunpack.c.l.b16 %v4705
    %v6048 = vunpack.c.h.b16 %v4705
    %v6049 = vunpack.c.l.b16 %v4706
    %v6050 = vunpack.c.h.b16 %v4706
    %v6051 = vunpack.c.l.b16 %v4707
    %v6052 = vunpack.c.h.b16 %v4707
    %v6053 = vunpack.c.l.b16 %v4708
    %v6054 = vunpack.c.h.b16 %v4708
    %v6055 = vunpack.c.l.b16 %v4709
    %v6056 = vunpack.c.h.b16 %v4709
    %v6057 = vunpack.c.l.b16 %v4710
    %v6058 = vunpack.c.h.b16 %v4710
    %v6059 = vunpack.c.l.b16 %v4711
    %v6060 = vunpack.c.h.b16 %v4711
    %v6061 = vunpack.c.l.b16 %v4712
    %v6062 = vunpack.c.h.b16 %v4712
    %v6063 = vunpack.c.l.b16 %v4713
    %v6064 = vunpack.c.h.b16 %v4713
    %v6065 = vunpack.c.l.b16 %v4714
    %v6066 = vunpack.c.h.b16 %v4714
    %v6067 = vunpack.c.l.b16 %v4715
    %v6068 = vunpack.c.h.b16 %v4715
    %v6069 = vunpack.c.l.b16 %v4716
    %v6070 = vunpack.c.h.b16 %v4716
    %v6071 = vunpack.c.l.b16 %v4717
    %v6072 = vunpack.c.h.b16 %v4717
    %v6073 = vunpack.c.l.b16 %v4718
    %v6074 = vunpack.c.h.b16 %v4718
    %v6075 = vunpack.c.l.b16 %v4719
    %v6076 = vunpack.c.h.b16 %v4719
    %v6077 = vunpack.c.l.b16 %v4720
    %v6078 = vunpack.c.h.b16 %v4720
    %v6079 = vunpack.c.l.b16 %v4721
    %v6080 = vunpack.c.h.b16 %v4721
    %v6081 = vunpack.c.l.b16 %v4722
    %v6082 = vunpack.c.h.b16 %v4722
    %v6083 = vunpack.c.l.b16 %v4723
    %v6084 = vunpack.c.h.b16 %v4723
    %v6085 = vunpack.c.l.b16 %v4724
    %v6086 = vunpack.c.h.b16 %v4724
    %v6087 = vunpack.c.l.b16 %v4725
    %v6088 = vunpack.c.h.b16 %v4725
    %v6089 = vunpack.c.l.b16 %v4726
    %v6090 = vunpack.c.h.b16 %v4726
    %v6091 = vunpack.c.l.b16 %v4727
    %v6092 = vunpack.c.h.b16 %v4727
    %v6093 = vunpack.c.l.b16 %v4728
    %v6094 = vunpack.c.h.b16 %v4728
    %v6095 = vunpack.c.l.b16 %v4729
    %v6096 = vunpack.c.h.b16 %v4729
    %v6097 = vunpack.c.l.b16 %v4730
    %v6098 = vunpack.c.h.b16 %v4730
    %v6099 = vunpack.c.l.b16 %v4731
    %v6100 = vunpack.c.h.b16 %v4731
    %v6101 = vunpack.c.l.b16 %v4732
    %v6102 = vunpack.c.h.b16 %v4732
    %v6103 = vunpack.c.l.b16 %v4733
    %v6104 = vunpack.c.h.b16 %v4733
    %v6105 = vunpack.c.l.b16 %v4734
    %v6106 = vunpack.c.h.b16 %v4734
    %v6107 = vunpack.c.l.b16 %v4735
    %v6108 = vunpack.c.h.b16 %v4735
    %v6109 = vunpack.c.l.b16 %v4736
    %v6110 = vunpack.c.h.b16 %v4736
    %v6111 = vunpack.c.l.b16 %v4737
    %v6112 = vunpack.c.h.b16 %v4737
    %v6113 = vunpack.c.l.b16 %v4738
    %v6114 = vunpack.c.h.b16 %v4738
    %v6115 = vunpack.c.l.b16 %v4739
    %v6116 = vunpack.c.h.b16 %v4739
    %v6117 = vunpack.c.l.b16 %v4740
    %v6118 = vunpack.c.h.b16 %v4740
    %v6119 = vunpack.c.l.b16 %v4741
    %v6120 = vunpack.c.h.b16 %v4741
    %v6121 = vunpack.c.l.b16 %v4742
    %v6122 = vunpack.c.h.b16 %v4742
    %v6123 = vunpack.c.l.b16 %v4743
    %v6124 = vunpack.c.h.b16 %v4743
    %v6125 = vunpack.c.l.b16 %v4744
    %v6126 = vunpack.c.h.b16 %v4744
    %v6127 = vunpack.c.l.b16 %v4745
    %v6128 = vunpack.c.h.b16 %v4745
    %v6129 = vunpack.c.l.b16 %v4746
    %v6130 = vunpack.c.h.b16 %v4746
    %v6131 = vunpack.c.l.b16 %v4747
    %v6132 = vunpack.c.h.b16 %v4747
    %v6133 = vunpack.c.l.b16 %v4748
    %v6134 = vunpack.c.h.b16 %v4748
    %v6135 = vunpack.c.l.b16 %v4749
    %v6136 = vunpack.c.h.b16 %v4749
    %v6137 = vunpack.c.l.b16 %v4750
    %v6138 = vunpack.c.h.b16 %v4750
    %v6139 = vunpack.c.l.b16 %v4751
    %v6140 = vunpack.c.h.b16 %v4751
    %v6141 = vunpack.c.l.b16 %v4752
    %v6142 = vunpack.c.h.b16 %v4752
    %v6143 = vunpack.c.l.b16 %v4753
    %v6144 = vunpack.c.h.b16 %v4753
    %v6145 = vunpack.c.l.b16 %v4754
    %v6146 = vunpack.c.h.b16 %v4754
    %v6147 = vunpack.c.l.b16 %v4755
    %v6148 = vunpack.c.h.b16 %v4755
    %v6149 = vunpack.c.l.b16 %v4756
    %v6150 = vunpack.c.h.b16 %v4756
    %v6151 = vunpack.c.l.b16 %v4757
    %v6152 = vunpack.c.h.b16 %v4757
    %v6153 = vunpack.c.l.b16 %v4758
    %v6154 = vunpack.c.h.b16 %v4758
    %v6155 = vunpack.c.l.b16 %v4759
    %v6156 = vunpack.c.h.b16 %v4759
    %v6157 = vunpack.c.l.b16 %v4760
    %v6158 = vunpack.c.h.b16 %v4760
    %v6159 = vunpack.c.l.b16 %v4761
    %v6160 = vunpack.c.h.b16 %v4761
    %v6161 = vunpack.c.l.b16 %v4762
    %v6162 = vunpack.c.h.b16 %v4762
    %v6163 = vunpack.c.l.b16 %v4763
    %v6164 = vunpack.c.h.b16 %v4763
    %v6165 = vunpack.c.l.b16 %v4764
    %v6166 = vunpack.c.h.b16 %v4764
    %v6167 = vunpack.c.l.b16 %v4765
    %v6168 = vunpack.c.h.b16 %v4765
    %v6169 = vunpack.c.l.b16 %v4766
    %v6170 = vunpack.c.h.b16 %v4766
    %v6171 = vunpack.c.l.b16 %v4767
    %v6172 = vunpack.c.h.b16 %v4767
    %v6173 = vunpack.c.l.b16 %v4768
    %v6174 = vunpack.c.h.b16 %v4768
    %v6175 = vunpack.c.l.b16 %v4769
    %v6176 = vunpack.c.h.b16 %v4769
    %v6177 = vunpack.c.l.b16 %v4770
    %v6178 = vunpack.c.h.b16 %v4770
    %v6179 = vunpack.c.l.b16 %v4771
    %v6180 = vunpack.c.h.b16 %v4771
    %v6181 = vunpack.c.l.b16 %v4772
    %v6182 = vunpack.c.h.b16 %v4772
    %v6183 = vunpack.c.l.b16 %v4773
    %v6184 = vunpack.c.h.b16 %v4773
    %v6185 = vunpack.c.l.b16 %v4774
    %v6186 = vunpack.c.h.b16 %v4774
    %v6187 = vunpack.c.l.b16 %v4775
    %v6188 = vunpack.c.h.b16 %v4775
    %v6189 = vunpack.c.l.b16 %v4776
    %v6190 = vunpack.c.h.b16 %v4776
    %v6191 = vunpack.c.l.b16 %v4777
    %v6192 = vunpack.c.h.b16 %v4777
    %v6193 = vunpack.c.l.b16 %v4778
    %v6194 = vunpack.c.h.b16 %v4778
    %v6195 = vunpack.c.l.b16 %v4779
    %v6196 = vunpack.c.h.b16 %v4779
    %v6197 = vunpack.c.l.b16 %v4780
    %v6198 = vunpack.c.h.b16 %v4780
    %v6199 = vunpack.c.l.b16 %v4781
    %v6200 = vunpack.c.h.b16 %v4781
    %v6201 = vunpack.c.l.b16 %v4782
    %v6202 = vunpack.c.h.b16 %v4782
    %v6203 = vunpack.c.l.b16 %v4783
    %v6204 = vunpack.c.h.b16 %v4783
    %v6205 = vunpack.c.l.b16 %v4784
    %v6206 = vunpack.c.h.b16 %v4784
    %v6207 = vunpack.c.l.b16 %v4785
    %v6208 = vunpack.c.h.b16 %v4785
    %v6209 = vunpack.c.l.b16 %v4786
    %v6210 = vunpack.c.h.b16 %v4786
    %v6211 = vunpack.c.l.b16 %v4787
    %v6212 = vunpack.c.h.b16 %v4787
    %v6213 = vunpack.c.l.b16 %v4788
    %v6214 = vunpack.c.h.b16 %v4788
    %v6215 = vunpack.c.l.b16 %v4789
    %v6216 = vunpack.c.h.b16 %v4789
    %v6217 = vunpack.c.l.b16 %v4790
    %v6218 = vunpack.c.h.b16 %v4790
    %v6219 = vunpack.c.l.b16 %v4791
    %v6220 = vunpack.c.h.b16 %v4791
    %v6221 = vunpack.c.l.b16 %v4792
    %v6222 = vunpack.c.h.b16 %v4792
    %v6223 = vunpack.c.l.b16 %v4793
    %v6224 = vunpack.c.h.b16 %v4793
    %v6225 = vunpack.c.l.b16 %v4794
    %v6226 = vunpack.c.h.b16 %v4794
    %v6227 = vunpack.c.l.b16 %v4795
    %v6228 = vunpack.c.h.b16 %v4795
    %v6229 = vunpack.c.l.b16 %v4796
    %v6230 = vunpack.c.h.b16 %v4796
    %v6231 = vunpack.c.l.b16 %v4797
    %v6232 = vunpack.c.h.b16 %v4797
    %v6233 = vunpack.c.l.b16 %v4798
    %v6234 = vunpack.c.h.b16 %v4798
    %v6235 = vunpack.c.l.b16 %v4799
    %v6236 = vunpack.c.h.b16 %v4799
    %v6237 = vunpack.c.l.b16 %v4800
    %v6238 = vunpack.c.h.b16 %v4800
    %v6239 = vunpack.c.l.b16 %v4801
    %v6240 = vunpack.c.h.b16 %v4801
    %v6241 = vunpack.c.l.b16 %v4802
    %v6242 = vunpack.c.h.b16 %v4802
    %v6243 = vunpack.c.l.b16 %v4803
    %v6244 = vunpack.c.h.b16 %v4803
    %v6245 = vunpack.c.l.b16 %v4804
    %v6246 = vunpack.c.h.b16 %v4804
    %v6247 = vunpack.c.l.b16 %v4805
    %v6248 = vunpack.c.h.b16 %v4805
    %v6249 = vunpack.c.l.b16 %v4806
    %v6250 = vunpack.c.h.b16 %v4806
    %v6251 = vunpack.c.l.b16 %v4807
    %v6252 = vunpack.c.h.b16 %v4807
    %v6253 = vunpack.c.l.b16 %v4808
    %v6254 = vunpack.c.h.b16 %v4808
    %v6255 = vunpack.c.l.b16 %v4809
    %v6256 = vunpack.c.h.b16 %v4809
    %v6257 = vunpack.c.l.b16 %v4810
    %v6258 = vunpack.c.h.b16 %v4810
    %v6259 = vunpack.c.l.b16 %v4811
    %v6260 = vunpack.c.h.b16 %v4811
    %v6261 = vunpack.c.l.b16 %v4812
    %v6262 = vunpack.c.h.b16 %v4812
    %v6263 = vunpack.c.l.b16 %v4813
    %v6264 = vunpack.c.h.b16 %v4813
    %v6265 = vunpack.c.l.b16 %v4814
    %v6266 = vunpack.c.h.b16 %v4814
    %v6267 = vunpack.c.l.b16 %v4815
    %v6268 = vunpack.c.h.b16 %v4815
    %v6269 = vunpack.c.l.b16 %v4816
    %v6270 = vunpack.c.h.b16 %v4816
    %v6271 = vunpack.c.l.b16 %v4817
    %v6272 = vunpack.c.h.b16 %v4817
    %v6273 = vunpack.c.l.b16 %v4818
    %v6274 = vunpack.c.h.b16 %v4818
    %v6275 = vunpack.c.l.b16 %v4819
    %v6276 = vunpack.c.h.b16 %v4819
    %v6277 = vunpack.c.l.b16 %v4820
    %v6278 = vunpack.c.h.b16 %v4820
    %v6279 = vunpack.c.l.b16 %v4821
    %v6280 = vunpack.c.h.b16 %v4821
    %v6281 = vunpack.c.l.b16 %v4822
    %v6282 = vunpack.c.h.b16 %v4822
    %v6283 = vunpack.c.l.b16 %v4823
    %v6284 = vunpack.c.h.b16 %v4823
    %v6285 = vunpack.c.l.b16 %v4824
    %v6286 = vunpack.c.h.b16 %v4824
    %v6287 = vunpack.c.l.b16 %v4825
    %v6288 = vunpack.c.h.b16 %v4825
    %v6289 = vunpack.c.l.b16 %v4826
    %v6290 = vunpack.c.h.b16 %v4826
    %v6291 = vunpack.c.l.b16 %v4827
    %v6292 = vunpack.c.h.b16 %v4827
    %v6293 = vunpack.c.l.b16 %v4828
    %v6294 = vunpack.c.h.b16 %v4828
    %v6295 = vunpack.c.l.b16 %v4829
    %v6296 = vunpack.c.h.b16 %v4829
    %v6297 = vunpack.c.l.b16 %v4830
    %v6298 = vunpack.c.h.b16 %v4830
    %v6299 = vunpack.c.l.b16 %v4831
    %v6300 = vunpack.c.h.b16 %v4831
    %v6301 = vunpack.c.l.b16 %v4832
    %v6302 = vunpack.c.h.b16 %v4832
    %v6303 = vunpack.c.l.b16 %v4833
    %v6304 = vunpack.c.h.b16 %v4833
    %v6305 = vunpack.c.l.b16 %v4834
    %v6306 = vunpack.c.h.b16 %v4834
    %v6307 = vunpack.c.l.b16 %v4835
    %v6308 = vunpack.c.h.b16 %v4835
    %v6309 = vunpack.c.l.b16 %v4836
    %v6310 = vunpack.c.h.b16 %v4836
    %v6311 = vunpack.c.l.b16 %v4837
    %v6312 = vunpack.c.h.b16 %v4837
    %v6313 = vunpack.c.l.b16 %v4838
    %v6314 = vunpack.c.h.b16 %v4838
    %v6315 = vunpack.c.l.b16 %v4839
    %v6316 = vunpack.c.h.b16 %v4839
    %v6317 = vunpack.c.l.b16 %v4840
    %v6318 = vunpack.c.h.b16 %v4840
    %v6319 = vunpack.c.l.b16 %v4841
    %v6320 = vunpack.c.h.b16 %v4841
    %v6321 = vunpack.c.l.b16 %v4842
    %v6322 = vunpack.c.h.b16 %v4842
    %v6323 = vunpack.c.l.b16 %v4843
    %v6324 = vunpack.c.h.b16 %v4843
    %v6325 = vunpack.c.l.b16 %v4844
    %v6326 = vunpack.c.h.b16 %v4844
    %v6327 = vunpack.c.l.b16 %v4845
    %v6328 = vunpack.c.h.b16 %v4845
    %v6329 = vunpack.c.l.b16 %v4846
    %v6330 = vunpack.c.h.b16 %v4846
    %v6331 = vunpack.c.l.b16 %v4847
    %v6332 = vunpack.c.h.b16 %v4847
    %v6333 = vunpack.c.l.b16 %v4848
    %v6334 = vunpack.c.h.b16 %v4848
    %v6335 = vunpack.c.l.b16 %v4849
    %v6336 = vunpack.c.h.b16 %v4849
    %v6337 = vunpack.c.l.b16 %v4850
    %v6338 = vunpack.c.h.b16 %v4850
    %v6339 = vunpack.c.l.b16 %v4851
    %v6340 = vunpack.c.h.b16 %v4851
    %v6341 = vunpack.c.l.b16 %v4852
    %v6342 = vunpack.c.h.b16 %v4852
    %v6343 = vunpack.c.l.b16 %v4853
    %v6344 = vunpack.c.h.b16 %v4853
    %v6345 = vunpack.c.l.b16 %v4854
    %v6346 = vunpack.c.h.b16 %v4854
    %v6347 = vunpack.c.l.b16 %v4855
    %v6348 = vunpack.c.h.b16 %v4855
    %v6349 = vunpack.c.l.b16 %v4856
    %v6350 = vunpack.c.h.b16 %v4856
    %v6351 = vunpack.c.l.b16 %v4857
    %v6352 = vunpack.c.h.b16 %v4857
    %v6353 = vunpack.c.l.b16 %v4858
    %v6354 = vunpack.c.h.b16 %v4858
    %v6355 = vunpack.c.l.b16 %v4859
    %v6356 = vunpack.c.h.b16 %v4859
    %v6357 = vunpack.c.l.b16 %v4860
    %v6358 = vunpack.c.h.b16 %v4860
    %v6359 = vunpack.c.l.b16 %v4861
    %v6360 = vunpack.c.h.b16 %v4861
    %v6361 = vunpack.c.l.b16 %v4862
    %v6362 = vunpack.c.h.b16 %v4862
    %v6363 = vunpack.c.l.b16 %v4863
    %v6364 = vunpack.c.h.b16 %v4863
    %v6365 = vunpack.c.l.b16 %v4864
    %v6366 = vunpack.c.h.b16 %v4864
    %v6367 = vunpack.c.l.b16 %v4865
    %v6368 = vunpack.c.h.b16 %v4865
    %v6369 = vunpack.c.l.b16 %v4866
    %v6370 = vunpack.c.h.b16 %v4866
    %v6371 = vunpack.c.l.b16 %v4867
    %v6372 = vunpack.c.h.b16 %v4867
    %v6373 = vunpack.c.l.b16 %v4868
    %v6374 = vunpack.c.h.b16 %v4868
    %v6375 = vunpack.c.l.b16 %v4869
    %v6376 = vunpack.c.h.b16 %v4869
    %v6377 = vunpack.c.l.b16 %v4870
    %v6378 = vunpack.c.h.b16 %v4870
    %v6379 = vunpack.c.l.b16 %v4871
    %v6380 = vunpack.c.h.b16 %v4871
    %v6381 = vunpack.c.l.b16 %v4872
    %v6382 = vunpack.c.h.b16 %v4872
    %v6383 = vunpack.c.l.b16 %v4873
    %v6384 = vunpack.c.h.b16 %v4873
    %v6385 = vunpack.c.l.b16 %v4874
    %v6386 = vunpack.c.h.b16 %v4874
    %v6387 = vunpack.c.l.b16 %v4875
    %v6388 = vunpack.c.h.b16 %v4875
    %v6389 = vunpack.c.l.b16 %v4876
    %v6390 = vunpack.c.h.b16 %v4876
    %v6391 = vunpack.c.l.b16 %v4877
    %v6392 = vunpack.c.h.b16 %v4877
    %v6393 = vunpack.c.l.b16 %v4878
    %v6394 = vunpack.c.h.b16 %v4878
    %v6395 = vunpack.c.l.b16 %v4879
    %v6396 = vunpack.c.h.b16 %v4879
    %v6397 = vunpack.c.l.b16 %v4880
    %v6398 = vunpack.c.h.b16 %v4880
    %v6399 = vunpack.c.l.b16 %v4881
    %v6400 = vunpack.c.h.b16 %v4881
    %v6401 = vunpack.c.l.b16 %v4882
    %v6402 = vunpack.c.h.b16 %v4882
    %v6403 = vunpack.c.l.b16 %v4883
    %v6404 = vunpack.c.h.b16 %v4883
    %v6405 = vunpack.c.l.b16 %v4884
    %v6406 = vunpack.c.h.b16 %v4884
    %v6407 = vunpack.c.l.b16 %v4885
    %v6408 = vunpack.c.h.b16 %v4885
    %v6409 = vunpack.c.l.b16 %v4886
    %v6410 = vunpack.c.h.b16 %v4886
    %v6411 = vunpack.c.l.b16 %v4887
    %v6412 = vunpack.c.h.b16 %v4887
    %v6413 = vunpack.c.l.b16 %v4888
    %v6414 = vunpack.c.h.b16 %v4888
    %v6415 = vunpack.c.l.b16 %v4889
    %v6416 = vunpack.c.h.b16 %v4889
    %v6417 = vunpack.c.l.b16 %v4890
    %v6418 = vunpack.c.h.b16 %v4890
    %v6419 = vunpack.c.l.b16 %v4891
    %v6420 = vunpack.c.h.b16 %v4891
    %v6421 = vunpack.c.l.b16 %v4892
    %v6422 = vunpack.c.h.b16 %v4892
    %v6423 = vunpack.c.l.b16 %v4893
    %v6424 = vunpack.c.h.b16 %v4893
    %v6425 = vunpack.c.l.b16 %v4894
    %v6426 = vunpack.c.h.b16 %v4894
    %v6427 = vunpack.c.l.b16 %v4895
    %v6428 = vunpack.c.h.b16 %v4895
    %v6429 = vunpack.c.l.b16 %v4896
    %v6430 = vunpack.c.h.b16 %v4896
    %v6431 = vunpack.c.l.b16 %v4897
    %v6432 = vunpack.c.h.b16 %v4897
    %v6433 = vunpack.c.l.b16 %v4898
    %v6434 = vunpack.c.h.b16 %v4898
    %v6435 = vunpack.c.l.b16 %v4899
    %v6436 = vunpack.c.h.b16 %v4899
    %v6437 = vunpack.c.l.b16 %v4900
    %v6438 = vunpack.c.h.b16 %v4900
    %v6439 = vunpack.c.l.b16 %v4901
    %v6440 = vunpack.c.h.b16 %v4901
    %v6441 = vunpack.c.l.b16 %v4902
    %v6442 = vunpack.c.h.b16 %v4902
    %v6443 = vunpack.c.l.b16 %v4903
    %v6444 = vunpack.c.h.b16 %v4903
    %v6445 = vunpack.c.l.b16 %v4904
    %v6446 = vunpack.c.h.b16 %v4904
    %v6447 = vunpack.c.l.b16 %v4905
    %v6448 = vunpack.c.h.b16 %v4905
    %v6449 = vunpack.c.l.b16 %v4906
    %v6450 = vunpack.c.h.b16 %v4906
    %v6451 = vunpack.c.l.b16 %v4907
    %v6452 = vunpack.c.h.b16 %v4907
    %v6453 = vunpack.c.l.b16 %v4908
    %v6454 = vunpack.c.h.b16 %v4908
    %v6455 = vunpack.c.l.b16 %v4909
    %v6456 = vunpack.c.h.b16 %v4909
    %v6457 = vunpack.c.l.b16 %v4910
    %v6458 = vunpack.c.h.b16 %v4910
    %v6459 = vunpack.c.l.b16 %v4911
    %v6460 = vunpack.c.h.b16 %v4911
    %v6461 = vunpack.c.l.b16 %v4912
    %v6462 = vunpack.c.h.b16 %v4912
    %v6463 = vunpack.c.l.b16 %v4913
    %v6464 = vunpack.c.h.b16 %v4913
    %v6465 = vunpack.c.l.b16 %v4914
    %v6466 = vunpack.c.h.b16 %v4914
    %v6467 = vunpack.c.l.b16 %v4915
    %v6468 = vunpack.c.h.b16 %v4915
    %v6469 = vunpack.c.l.b16 %v4916
    %v6470 = vunpack.c.h.b16 %v4916
    %v6471 = vunpack.c.l.b16 %v4917
    %v6472 = vunpack.c.h.b16 %v4917
    %v6473 = vunpack.c.l.b16 %v4918
    %v6474 = vunpack.c.h.b16 %v4918
    %v6475 = vunpack.c.l.b16 %v4919
    %v6476 = vunpack.c.h.b16 %v4919
    %v6477 = vunpack.c.l.b16 %v4920
    %v6478 = vunpack.c.h.b16 %v4920
    %v6479 = vunpack.c.l.b16 %v4921
    %v6480 = vunpack.c.h.b16 %v4921
    %v6481 = vunpack.c.l.b16 %v4922
    %v6482 = vunpack.c.h.b16 %v4922
    %v6483 = vunpack.c.l.b16 %v4923
    %v6484 = vunpack.c.h.b16 %v4923
    %v6485 = vunpack.c.l.b16 %v4924
    %v6486 = vunpack.c.h.b16 %v4924
    %v6487 = vunpack.c.l.b16 %v4925
    %v6488 = vunpack.c.h.b16 %v4925
    %v6489 = vunpack.c.l.b16 %v4926
    %v6490 = vunpack.c.h.b16 %v4926
    %v6491 = vunpack.c.l.b16 %v4927
    %v6492 = vunpack.c.h.b16 %v4927
    %v6493 = vunpack.c.l.b16 %v4928
    %v6494 = vunpack.c.h.b16 %v4928
    %v6495 = vunpack.c.l.b16 %v4929
    %v6496 = vunpack.c.h.b16 %v4929
    %v6497 = vunpack.c.l.b16 %v4930
    %v6498 = vunpack.c.h.b16 %v4930
    %v6499 = vunpack.c.l.b16 %v4931
    %v6500 = vunpack.c.h.b16 %v4931
    %v6501 = vunpack.c.l.b16 %v4932
    %v6502 = vunpack.c.h.b16 %v4932
    %v6503 = vunpack.c.l.b16 %v4933
    %v6504 = vunpack.c.h.b16 %v4933
    %v6505 = vunpack.c.l.b16 %v4934
    %v6506 = vunpack.c.h.b16 %v4934
    %v6507 = vunpack.c.l.b16 %v4935
    %v6508 = vunpack.c.h.b16 %v4935
    %v6509 = vunpack.c.l.b16 %v4936
    %v6510 = vunpack.c.h.b16 %v4936
    %v6511 = vunpack.c.l.b16 %v4937
    %v6512 = vunpack.c.h.b16 %v4937
    %v6513 = vunpack.c.l.b16 %v4938
    %v6514 = vunpack.c.h.b16 %v4938
    %v6515 = vunpack.c.l.b16 %v4939
    %v6516 = vunpack.c.h.b16 %v4939
    %v6517 = vunpack.c.l.b16 %v4940
    %v6518 = vunpack.c.h.b16 %v4940
    %v6519 = vunpack.c.l.b16 %v4941
    %v6520 = vunpack.c.h.b16 %v4941
    %v6521 = vunpack.c.l.b16 %v4942
    %v6522 = vunpack.c.h.b16 %v4942
    %v6523 = vunpack.c.l.b16 %v4943
    %v6524 = vunpack.c.h.b16 %v4943
    %v6525 = vunpack.c.l.b16 %v4944
    %v6526 = vunpack.c.h.b16 %v4944
    %v6527 = vunpack.c.l.b16 %v4945
    %v6528 = vunpack.c.h.b16 %v4945
    %v6529 = vunpack.c.l.b16 %v4946
    %v6530 = vunpack.c.h.b16 %v4946
    %v6531 = vunpack.c.l.b16 %v4947
    %v6532 = vunpack.c.h.b16 %v4947
    %v6533 = vunpack.c.l.b16 %v4948
    %v6534 = vunpack.c.h.b16 %v4948
    %v6535 = vunpack.c.l.b16 %v4949
    %v6536 = vunpack.c.h.b16 %v4949
    %v6537 = vunpack.c.l.b16 %v4950
    %v6538 = vunpack.c.h.b16 %v4950
    %v6539 = vunpack.c.l.b16 %v4951
    %v6540 = vunpack.c.h.b16 %v4951
    %v6541 = vunpack.c.l.b16 %v4952
    %v6542 = vunpack.c.h.b16 %v4952
    %v6543 = vunpack.c.l.b16 %v4953
    %v6544 = vunpack.c.h.b16 %v4953
    %v6545 = vunpack.c.l.b16 %v4954
    %v6546 = vunpack.c.h.b16 %v4954
    %v6547 = vunpack.c.l.b16 %v4955
    %v6548 = vunpack.c.h.b16 %v4955
    %v6549 = vunpack.c.l.b16 %v4956
    %v6550 = vunpack.c.h.b16 %v4956
    %v6551 = vunpack.c.l.b16 %v4957
    %v6552 = vunpack.c.h.b16 %v4957
    %v6553 = vunpack.c.l.b16 %v4958
    %v6554 = vunpack.c.h.b16 %v4958
    %v6555 = vunpack.c.l.b16 %v4959
    %v6556 = vunpack.c.h.b16 %v4959
    %v6557 = vunpack.c.l.b16 %v4960
    %v6558 = vunpack.c.h.b16 %v4960
    %v6559 = vunpack.c.l.b16 %v4961
    %v6560 = vunpack.c.h.b16 %v4961
    %v6561 = vunpack.c.l.b16 %v4962
    %v6562 = vunpack.c.h.b16 %v4962
    %v6563 = vunpack.c.l.b16 %v4963
    %v6564 = vunpack.c.h.b16 %v4963
    %v6565 = vunpack.c.l.b16 %v4964
    %v6566 = vunpack.c.h.b16 %v4964
    %v6567 = vunpack.c.l.b16 %v4965
    %v6568 = vunpack.c.h.b16 %v4965
    %v6569 = vunpack.c.l.b16 %v4966
    %v6570 = vunpack.c.h.b16 %v4966
    %v6571 = vunpack.c.l.b16 %v4967
    %v6572 = vunpack.c.h.b16 %v4967
    %v6573 = vunpack.c.l.b16 %v4968
    %v6574 = vunpack.c.h.b16 %v4968
    %v6575 = vunpack.c.l.b16 %v4969
    %v6576 = vunpack.c.h.b16 %v4969
    %v6577 = vunpack.c.l.b16 %v4970
    %v6578 = vunpack.c.h.b16 %v4970
    %v6579 = vunpack.c.l.b16 %v4971
    %v6580 = vunpack.c.h.b16 %v4971
    %v6581 = vunpack.c.l.b16 %v4972
    %v6582 = vunpack.c.h.b16 %v4972
    %v6583 = vunpack.c.l.b16 %v4973
    %v6584 = vunpack.c.h.b16 %v4973
    %v6585 = vunpack.c.l.b16 %v4974
    %v6586 = vunpack.c.h.b16 %v4974
    %v6587 = vunpack.c.l.b16 %v4975
    %v6588 = vunpack.c.h.b16 %v4975
    %v6589 = vunpack.c.l.b16 %v4976
    %v6590 = vunpack.c.h.b16 %v4976
    %v6591 = vunpack.c.l.b16 %v4977
    %v6592 = vunpack.c.h.b16 %v4977
    %v6593 = vunpack.c.l.b16 %v4978
    %v6594 = vunpack.c.h.b16 %v4978
    %v6595 = vunpack.c.l.b16 %v4979
    %v6596 = vunpack.c.h.b16 %v4979
    %v6597 = vunpack.c.l.b16 %v4980
    %v6598 = vunpack.c.h.b16 %v4980
    %v6599 = vunpack.c.l.b16 %v4981
    %v6600 = vunpack.c.h.b16 %v4981
    %v6601 = vunpack.c.l.b16 %v4982
    %v6602 = vunpack.c.h.b16 %v4982
    %v6603 = vunpack.c.l.b16 %v4983
    %v6604 = vunpack.c.h.b16 %v4983
    %v6605 = vunpack.c.l.b16 %v4984
    %v6606 = vunpack.c.h.b16 %v4984
    %v6607 = vunpack.c.l.b16 %v4985
    %v6608 = vunpack.c.h.b16 %v4985
    %v6609 = vunpack.c.l.b16 %v4986
    %v6610 = vunpack.c.h.b16 %v4986
    %v6611 = vunpack.c.l.b16 %v4987
    %v6612 = vunpack.c.h.b16 %v4987
    %v6613 = vunpack.c.l.b16 %v4988
    %v6614 = vunpack.c.h.b16 %v4988
    %v6615 = vunpack.c.l.b16 %v4989
    %v6616 = vunpack.c.h.b16 %v4989
    %v6617 = vunpack.c.l.b16 %v4990
    %v6618 = vunpack.c.h.b16 %v4990
    %v6619 = vunpack.c.l.b16 %v4991
    %v6620 = vunpack.c.h.b16 %v4991
    %v6621 = vunpack.c.l.b16 %v4992
    %v6622 = vunpack.c.h.b16 %v4992
    %v6623 = vunpack.c.l.b16 %v4993
    %v6624 = vunpack.c.h.b16 %v4993
    %v6625 = vunpack.c.l.b16 %v4994
    %v6626 = vunpack.c.h.b16 %v4994
    %v6627 = vunpack.c.l.b16 %v4995
    %v6628 = vunpack.c.h.b16 %v4995
    %v6629 = vunpack.c.l.b16 %v4996
    %v6630 = vunpack.c.h.b16 %v4996
    %v6631 = vunpack.c.l.b16 %v4997
    %v6632 = vunpack.c.h.b16 %v4997
    %v6633 = vunpack.c.l.b16 %v4998
    %v6634 = vunpack.c.h.b16 %v4998
    %v6635 = vunpack.c.l.b16 %v4999
    %v6636 = vunpack.c.h.b16 %v4999
    %v6637 = vunpack.c.l.b16 %v5000
    %v6638 = vunpack.c.h.b16 %v5000
    %v6639 = vunpack.c.l.b16 %v5001
    %v6640 = vunpack.c.h.b16 %v5001
    %v6641 = vunpack.c.l.b16 %v5002
    %v6642 = vunpack.c.h.b16 %v5002
    %v6643 = vunpack.c.l.b16 %v5003
    %v6644 = vunpack.c.h.b16 %v5003
    %v6645 = vunpack.c.l.b16 %v5004
    %v6646 = vunpack.c.h.b16 %v5004
    %v6647 = vunpack.c.l.b16 %v5005
    %v6648 = vunpack.c.h.b16 %v5005
    %v6649 = vunpack.c.l.b16 %v5006
    %v6650 = vunpack.c.h.b16 %v5006
    %v6651 = vunpack.c.l.b16 %v5007
    %v6652 = vunpack.c.h.b16 %v5007
    %v6653 = vunpack.c.l.b16 %v5008
    %v6654 = vunpack.c.h.b16 %v5008
    %v6655 = vunpack.c.l.b16 %v5009
    %v6656 = vunpack.c.h.b16 %v5009
    %v6657 = vunpack.c.l.b16 %v5010
    %v6658 = vunpack.c.h.b16 %v5010
    %v6659 = vunpack.c.l.b16 %v5011
    %v6660 = vunpack.c.h.b16 %v5011
    %v6661 = vunpack.c.l.b16 %v5012
    %v6662 = vunpack.c.h.b16 %v5012
    %v6663 = vunpack.c.l.b16 %v5013
    %v6664 = vunpack.c.h.b16 %v5013
    %v6665 = vunpack.c.l.b16 %v5014
    %v6666 = vunpack.c.h.b16 %v5014
    %v6667 = vunpack.c.l.b16 %v5015
    %v6668 = vunpack.c.h.b16 %v5015
    %v6669 = vunpack.c.l.b16 %v5016
    %v6670 = vunpack.c.h.b16 %v5016
    %v6671 = vunpack.c.l.b16 %v5017
    %v6672 = vunpack.c.h.b16 %v5017
    %v6673 = vunpack.c.l.b16 %v5018
    %v6674 = vunpack.c.h.b16 %v5018
    %v6675 = vunpack.c.l.b16 %v5019
    %v6676 = vunpack.c.h.b16 %v5019
    %v6677 = vunpack.c.l.b16 %v5020
    %v6678 = vunpack.c.h.b16 %v5020
    %v6679 = vunpack.c.l.b16 %v5021
    %v6680 = vunpack.c.h.b16 %v5021
    %v6681 = vunpack.c.l.b16 %v5022
    %v6682 = vunpack.c.h.b16 %v5022
    %v6683 = vunpack.c.l.b16 %v5023
    %v6684 = vunpack.c.h.b16 %v5023
    %v6685 = vunpack.c.l.b16 %v5024
    %v6686 = vunpack.c.h.b16 %v5024
    %v6687 = vunpack.c.l.b16 %v5025
    %v6688 = vunpack.c.h.b16 %v5025
    %v6689 = vunpack.c.l.b16 %v5026
    %v6690 = vunpack.c.h.b16 %v5026
    %v6691 = vunpack.c.l.b16 %v5027
    %v6692 = vunpack.c.h.b16 %v5027
    %v6693 = vunpack.c.l.b16 %v5028
    %v6694 = vunpack.c.h.b16 %v5028
    %v6695 = vunpack.c.l.b16 %v5029
    %v6696 = vunpack.c.h.b16 %v5029
    %v6697 = vunpack.c.l.b16 %v5030
    %v6698 = vunpack.c.h.b16 %v5030
    %v6699 = vunpack.c.l.b16 %v5031
    %v6700 = vunpack.c.h.b16 %v5031
    %v6701 = vunpack.c.l.b16 %v5032
    %v6702 = vunpack.c.h.b16 %v5032
    %v6703 = vunpack.c.l.b16 %v5033
    %v6704 = vunpack.c.h.b16 %v5033
    %v6705 = vunpack.c.l.b16 %v5034
    %v6706 = vunpack.c.h.b16 %v5034
    %v6707 = vunpack.c.l.b16 %v5035
    %v6708 = vunpack.c.h.b16 %v5035
    %v6709 = vunpack.c.l.b16 %v5036
    %v6710 = vunpack.c.h.b16 %v5036
    %v6711 = vunpack.c.l.b16 %v5037
    %v6712 = vunpack.c.h.b16 %v5037
    %v6713 = vunpack.c.l.b16 %v5038
    %v6714 = vunpack.c.h.b16 %v5038
    %v6715 = vunpack.c.l.b16 %v5039
    %v6716 = vunpack.c.h.b16 %v5039
    %v6717 = vunpack.c.l.b16 %v5040
    %v6718 = vunpack.c.h.b16 %v5040
    %v6719 = vunpack.c.l.b16 %v5041
    %v6720 = vunpack.c.h.b16 %v5041
    %v6721 = vunpack.c.l.b16 %v5042
    %v6722 = vunpack.c.h.b16 %v5042
    %v6723 = vunpack.c.l.b16 %v5043
    %v6724 = vunpack.c.h.b16 %v5043
    %v6725 = vunpack.c.l.b16 %v5044
    %v6726 = vunpack.c.h.b16 %v5044
    %v6727 = vunpack.c.l.b16 %v5045
    %v6728 = vunpack.c.h.b16 %v5045
    %v6729 = vunpack.c.l.b16 %v5046
    %v6730 = vunpack.c.h.b16 %v5046
    %v6731 = vunpack.c.l.b16 %v5047
    %v6732 = vunpack.c.h.b16 %v5047
    %v6733 = vunpack.c.l.b16 %v5048
    %v6734 = vunpack.c.h.b16 %v5048
    %v6735 = vunpack.c.l.b16 %v5049
    %v6736 = vunpack.c.h.b16 %v5049
    %v6737 = vunpack.c.l.b16 %v5050
    %v6738 = vunpack.c.h.b16 %v5050
    %v6739 = vunpack.c.l.b16 %v5051
    %v6740 = vunpack.c.h.b16 %v5051
    %v6741 = vunpack.c.l.b16 %v5052
    %v6742 = vunpack.c.h.b16 %v5052
    %v6743 = vunpack.c.l.b16 %v5053
    %v6744 = vunpack.c.h.b16 %v5053
    %v6745 = vunpack.c.l.b16 %v5054
    %v6746 = vunpack.c.h.b16 %v5054
    %v6747 = vunpack.c.l.b16 %v5055
    %v6748 = vunpack.c.h.b16 %v5055
    %v6749 = vunpack.c.l.b16 %v5056
    %v6750 = vunpack.c.h.b16 %v5056
    %v6751 = vunpack.c.l.b16 %v5057
    %v6752 = vunpack.c.h.b16 %v5057
    %v6753 = vunpack.c.l.b16 %v5058
    %v6754 = vunpack.c.h.b16 %v5058
    %v6755 = vunpack.c.l.b16 %v5059
    %v6756 = vunpack.c.h.b16 %v5059
    %v6757 = vunpack.c.l.b16 %v5060
    %v6758 = vunpack.c.h.b16 %v5060
    %v6759 = vunpack.c.l.b16 %v5061
    %v6760 = vunpack.c.h.b16 %v5061
    %v6761 = vunpack.c.l.b16 %v5062
    %v6762 = vunpack.c.h.b16 %v5062
    %v6763 = vunpack.c.l.b16 %v5063
    %v6764 = vunpack.c.h.b16 %v5063
    %v6765 = vunpack.c.l.b16 %v5064
    %v6766 = vunpack.c.h.b16 %v5064
    %v6767 = vunpack.c.l.b16 %v5065
    %v6768 = vunpack.c.h.b16 %v5065
    %v6769 = vunpack.c.l.b16 %v5066
    %v6770 = vunpack.c.h.b16 %v5066
    %v6771 = vunpack.c.l.b16 %v5067
    %v6772 = vunpack.c.h.b16 %v5067
    %v6773 = vunpack.c.l.b16 %v5068
    %v6774 = vunpack.c.h.b16 %v5068
    %v6775 = vunpack.c.l.b16 %v5069
    %v6776 = vunpack.c.h.b16 %v5069
    %v6777 = vunpack.c.l.b16 %v5070
    %v6778 = vunpack.c.h.b16 %v5070
    %v6779 = vunpack.c.l.b16 %v5071
    %v6780 = vunpack.c.h.b16 %v5071
    %v6781 = vunpack.c.l.b16 %v5072
    %v6782 = vunpack.c.h.b16 %v5072
    %v6783 = vunpack.c.l.b16 %v5073
    %v6784 = vunpack.c.h.b16 %v5073
    %v6785 = vunpack.c.l.b16 %v5074
    %v6786 = vunpack.c.h.b16 %v5074
    %v6787 = vunpack.c.l.b16 %v5075
    %v6788 = vunpack.c.h.b16 %v5075
    %v6789 = vunpack.c.l.b16 %v5076
    %v6790 = vunpack.c.h.b16 %v5076
    %v6791 = vunpack.c.l.b16 %v5077
    %v6792 = vunpack.c.h.b16 %v5077
    %v6793 = vunpack.c.l.b16 %v5078
    %v6794 = vunpack.c.h.b16 %v5078
    %v6795 = vunpack.c.l.b16 %v5079
    %v6796 = vunpack.c.h.b16 %v5079
    %v6797 = vunpack.c.l.b16 %v5080
    %v6798 = vunpack.c.h.b16 %v5080
    %v6799 = vunpack.c.l.b16 %v5081
    %v6800 = vunpack.c.h.b16 %v5081
    %v6801 = vunpack.c.l.b16 %v5082
    %v6802 = vunpack.c.h.b16 %v5082
    %v6803 = vunpack.c.l.b16 %v5083
    %v6804 = vunpack.c.h.b16 %v5083
    %v6805 = vunpack.c.l.b16 %v5084
    %v6806 = vunpack.c.h.b16 %v5084
    %v6807 = vunpack.c.l.b16 %v5085
    %v6808 = vunpack.c.h.b16 %v5085
    %v6809 = vunpack.c.l.b16 %v5086
    %v6810 = vunpack.c.h.b16 %v5086
    %v6811 = vunpack.c.l.b16 %v5087
    %v6812 = vunpack.c.h.b16 %v5087
    %v6813 = vunpack.c.l.b16 %v5088
    %v6814 = vunpack.c.h.b16 %v5088
    %v6815 = vunpack.c.l.b16 %v5089
    %v6816 = vunpack.c.h.b16 %v5089
    %v6817 = vunpack.c.l.b16 %v5090
    %v6818 = vunpack.c.h.b16 %v5090
    %v6819 = vunpack.c.l.b16 %v5091
    %v6820 = vunpack.c.h.b16 %v5091
    %v6821 = vunpack.c.l.b16 %v5092
    %v6822 = vunpack.c.h.b16 %v5092
    %v6823 = vunpack.c.l.b16 %v5093
    %v6824 = vunpack.c.h.b16 %v5093
    %v6825 = vunpack.c.l.b16 %v5094
    %v6826 = vunpack.c.h.b16 %v5094
    %v6827 = vunpack.c.l.b16 %v5095
    %v6828 = vunpack.c.h.b16 %v5095
    %v6829 = vunpack.c.l.b16 %v5096
    %v6830 = vunpack.c.h.b16 %v5096
    %v6831 = vpack.c.b16 %v5691, %v5679
    %v6832 = vpack.c.b16 %v5692, %v5680
    %v6833 = vpack.c.b16 %v5693, %v5681
    %v6834 = vpack.c.b16 %v5694, %v5682
    %v6835 = vpack.c.b16 %v5695, %v5683
    %v6836 = vpack.c.b16 %v5696, %v5684
    %v6837 = vpack.c.b16 %v5697, %v5685
    %v6838 = vpack.c.b16 %v5698, %v5686
    %v6839 = vpack.c.b16 %v5699, %v5687
    %v6840 = vpack.c.b16 %v5700, %v5688
    %v6841 = vpack.c.b16 %v5701, %v5689
    %v6842 = vpack.c.b16 %v5702, %v5690
    %v6843 = vpack.c.b16 %v5715, %v5703
    %v6844 = vpack.c.b16 %v5716, %v5704
    %v6845 = vpack.c.b16 %v5717, %v5705
    %v6846 = vpack.c.b16 %v5718, %v5706
    %v6847 = vpack.c.b16 %v5719, %v5707
    %v6848 = vpack.c.b16 %v5720, %v5708
    %v6849 = vpack.c.b16 %v5721, %v5709
    %v6850 = vpack.c.b16 %v5722, %v5710
    %v6851 = vpack.c.b16 %v5723, %v5711
    %v6852 = vpack.c.b16 %v5724, %v5712
    %v6853 = vpack.c.b16 %v5725, %v5713
    %v6854 = vpack.c.b16 %v5726, %v5714
    %v6855 = vpack.c.b16 %v5739, %v5727
    %v6856 = vpack.c.b16 %v5740, %v5728
    %v6857 = vpack.c.b16 %v5741, %v5729
    %v6858 = vpack.c.b16 %v5742, %v5730
    %v6859 = vpack.c.b16 %v5743, %v5731
    %v6860 = vpack.c.b16 %v5744, %v5732
    %v6861 = vpack.c.b16 %v5745, %v5733
    %v6862 = vpack.c.b16 %v5746, %v5734
    %v6863 = vpack.c.b16 %v5747, %v5735
    %v6864 = vpack.c.b16 %v5748, %v5736
    %v6865 = vpack.c.b16 %v5749, %v5737
    %v6866 = vpack.c.b16 %v5750, %v5738
    %v6867 = vpack.c.b16 %v5763, %v5751
    %v6868 = vpack.c.b16 %v5764, %v5752
    %v6869 = vpack.c.b16 %v5765, %v5753
    %v6870 = vpack.c.b16 %v5766, %v5754
    %v6871 = vpack.c.b16 %v5767, %v5755
    %v6872 = vpack.c.b16 %v5768, %v5756
    %v6873 = vpack.c.b16 %v5769, %v5757
    %v6874 = vpack.c.b16 %v5770, %v5758
    %v6875 = vpack.c.b16 %v5771, %v5759
    %v6876 = vpack.c.b16 %v5772, %v5760
    %v6877 = vpack.c.b16 %v5773, %v5761
    %v6878 = vpack.c.b16 %v5774, %v5762
    %v6879 = vpack.c.b16 %v5787, %v5775
    %v6880 = vpack.c.b16 %v5788, %v5776
    %v6881 = vpack.c.b16 %v5789, %v5777
    %v6882 = vpack.c.b16 %v5790, %v5778
    %v6883 = vpack.c.b16 %v5791, %v5779
    %v6884 = vpack.c.b16 %v5792, %v5780
    %v6885 = vpack.c.b16 %v5793, %v5781
    %v6886 = vpack.c.b16 %v5794, %v5782
    %v6887 = vpack.c.b16 %v5795, %v5783
    %v6888 = vpack.c.b16 %v5796, %v5784
    %v6889 = vpack.c.b16 %v5797, %v5785
    %v6890 = vpack.c.b16 %v5798, %v5786
    %v6891 = vpack.c.b16 %v5811, %v5799
    %v6892 = vpack.c.b16 %v5812, %v5800
    %v6893 = vpack.c.b16 %v5813, %v5801
    %v6894 = vpack.c.b16 %v5814, %v5802
    %v6895 = vpack.c.b16 %v5815, %v5803
    %v6896 = vpack.c.b16 %v5816, %v5804
    %v6897 = vpack.c.b16 %v5817, %v5805
    %v6898 = vpack.c.b16 %v5818, %v5806
    %v6899 = vpack.c.b16 %v5819, %v5807
    %v6900 = vpack.c.b16 %v5820, %v5808
    %v6901 = vpack.c.b16 %v5821, %v5809
    %v6902 = vpack.c.b16 %v5822, %v5810
    %v6903 = vpack.c.b16 %v5835, %v5823
    %v6904 = vpack.c.b16 %v5836, %v5824
    %v6905 = vpack.c.b16 %v5837, %v5825
    %v6906 = vpack.c.b16 %v5838, %v5826
    %v6907 = vpack.c.b16 %v5839, %v5827
    %v6908 = vpack.c.b16 %v5840, %v5828
    %v6909 = vpack.c.b16 %v5841, %v5829
    %v6910 = vpack.c.b16 %v5842, %v5830
    %v6911 = vpack.c.b16 %v5843, %v5831
    %v6912 = vpack.c.b16 %v5844, %v5832
    %v6913 = vpack.c.b16 %v5845, %v5833
    %v6914 = vpack.c.b16 %v5846, %v5834
    %v6915 = vpack.c.b16 %v5859, %v5847
    %v6916 = vpack.c.b16 %v5860, %v5848
    %v6917 = vpack.c.b16 %v5861, %v5849
    %v6918 = vpack.c.b16 %v5862, %v5850
    %v6919 = vpack.c.b16 %v5863, %v5851
    %v6920 = vpack.c.b16 %v5864, %v5852
    %v6921 = vpack.c.b16 %v5865, %v5853
    %v6922 = vpack.c.b16 %v5866, %v5854
    %v6923 = vpack.c.b16 %v5867, %v5855
    %v6924 = vpack.c.b16 %v5868, %v5856
    %v6925 = vpack.c.b16 %v5869, %v5857
    %v6926 = vpack.c.b16 %v5870, %v5858
    %v6927 = vpack.c.b16 %v5883, %v5871
    %v6928 = vpack.c.b16 %v5884, %v5872
    %v6929 = vpack.c.b16 %v5885, %v5873
    %v6930 = vpack.c.b16 %v5886, %v5874
    %v6931 = vpack.c.b16 %v5887, %v5875
    %v6932 = vpack.c.b16 %v5888, %v5876
    %v6933 = vpack.c.b16 %v5889, %v5877
    %v6934 = vpack.c.b16 %v5890, %v5878
    %v6935 = vpack.c.b16 %v5891, %v5879
    %v6936 = vpack.c.b16 %v5892, %v5880
    %v6937 = vpack.c.b16 %v5893, %v5881
    %v6938 = vpack.c.b16 %v5894, %v5882
    %v6939 = vpack.c.b16 %v5907, %v5895
    %v6940 = vpack.c.b16 %v5908, %v5896
    %v6941 = vpack.c.b16 %v5909, %v5897
    %v6942 = vpack.c.b16 %v5910, %v5898
    %v6943 = vpack.c.b16 %v5911, %v5899
    %v6944 = vpack.c.b16 %v5912, %v5900
    %v6945 = vpack.c.b16 %v5913, %v5901
    %v6946 = vpack.c.b16 %v5914, %v5902
    %v6947 = vpack.c.b16 %v5915, %v5903
    %v6948 = vpack.c.b16 %v5916, %v5904
    %v6949 = vpack.c.b16 %v5917, %v5905
    %v6950 = vpack.c.b16 %v5918, %v5906
    %v6951 = vpack.c.b16 %v5931, %v5919
    %v6952 = vpack.c.b16 %v5932, %v5920
    %v6953 = vpack.c.b16 %v5933, %v5921
    %v6954 = vpack.c.b16 %v5934, %v5922
    %v6955 = vpack.c.b16 %v5935, %v5923
    %v6956 = vpack.c.b16 %v5936, %v5924
    %v6957 = vpack.c.b16 %v5937, %v5925
    %v6958 = vpack.c.b16 %v5938, %v5926
    %v6959 = vpack.c.b16 %v5939, %v5927
    %v6960 = vpack.c.b16 %v5940, %v5928
    %v6961 = vpack.c.b16 %v5941, %v5929
    %v6962 = vpack.c.b16 %v5942, %v5930
    %v6963 = vpack.c.b16 %v5955, %v5943
    %v6964 = vpack.c.b16 %v5956, %v5944
    %v6965 = vpack.c.b16 %v5957, %v5945
    %v6966 = vpack.c.b16 %v5958, %v5946
    %v6967 = vpack.c.b16 %v5959, %v5947
    %v6968 = vpack.c.b16 %v5960, %v5948
    %v6969 = vpack.c.b16 %v5961, %v5949
    %v6970 = vpack.c.b16 %v5962, %v5950
    %v6971 = vpack.c.b16 %v5963, %v5951
    %v6972 = vpack.c.b16 %v5964, %v5952
    %v6973 = vpack.c.b16 %v5965, %v5953
    %v6974 = vpack.c.b16 %v5966, %v5954
    %v6975 = vpack.c.b16 %v5979, %v5967
    %v6976 = vpack.c.b16 %v5980, %v5968
    %v6977 = vpack.c.b16 %v5981, %v5969
    %v6978 = vpack.c.b16 %v5982, %v5970
    %v6979 = vpack.c.b16 %v5983, %v5971
    %v6980 = vpack.c.b16 %v5984, %v5972
    %v6981 = vpack.c.b16 %v5985, %v5973
    %v6982 = vpack.c.b16 %v5986, %v5974
    %v6983 = vpack.c.b16 %v5987, %v5975
    %v6984 = vpack.c.b16 %v5988, %v5976
    %v6985 = vpack.c.b16 %v5989, %v5977
    %v6986 = vpack.c.b16 %v5990, %v5978
    %v6987 = vpack.c.b16 %v6003, %v5991
    %v6988 = vpack.c.b16 %v6004, %v5992
    %v6989 = vpack.c.b16 %v6005, %v5993
    %v6990 = vpack.c.b16 %v6006, %v5994
    %v6991 = vpack.c.b16 %v6007, %v5995
    %v6992 = vpack.c.b16 %v6008, %v5996
    %v6993 = vpack.c.b16 %v6009, %v5997
    %v6994 = vpack.c.b16 %v6010, %v5998
    %v6995 = vpack.c.b16 %v6011, %v5999
    %v6996 = vpack.c.b16 %v6012, %v6000
    %v6997 = vpack.c.b16 %v6013, %v6001
    %v6998 = vpack.c.b16 %v6014, %v6002
    %v6999 = vpack.c.b16 %v6027, %v6015
    %v7000 = vpack.c.b16 %v6028, %v6016
    %v7001 = vpack.c.b16 %v6029, %v6017
    %v7002 = vpack.c.b16 %v6030, %v6018
    %v7003 = vpack.c.b16 %v6031, %v6019
    %v7004 = vpack.c.b16 %v6032, %v6020
    %v7005 = vpack.c.b16 %v6033, %v6021
    %v7006 = vpack.c.b16 %v6034, %v6022
    %v7007 = vpack.c.b16 %v6035, %v6023
    %v7008 = vpack.c.b16 %v6036, %v6024
    %v7009 = vpack.c.b16 %v6037, %v6025
    %v7010 = vpack.c.b16 %v6038, %v6026
    %v7011 = vpack.c.b16 %v6051, %v6039
    %v7012 = vpack.c.b16 %v6052, %v6040
    %v7013 = vpack.c.b16 %v6053, %v6041
    %v7014 = vpack.c.b16 %v6054, %v6042
    %v7015 = vpack.c.b16 %v6055, %v6043
    %v7016 = vpack.c.b16 %v6056, %v6044
    %v7017 = vpack.c.b16 %v6057, %v6045
    %v7018 = vpack.c.b16 %v6058, %v6046
    %v7019 = vpack.c.b16 %v6059, %v6047
    %v7020 = vpack.c.b16 %v6060, %v6048
    %v7021 = vpack.c.b16 %v6061, %v6049
    %v7022 = vpack.c.b16 %v6062, %v6050
    %v7023 = vpack.c.b16 %v6075, %v6063
    %v7024 = vpack.c.b16 %v6076, %v6064
    %v7025 = vpack.c.b16 %v6077, %v6065
    %v7026 = vpack.c.b16 %v6078, %v6066
    %v7027 = vpack.c.b16 %v6079, %v6067
    %v7028 = vpack.c.b16 %v6080, %v6068
    %v7029 = vpack.c.b16 %v6081, %v6069
    %v7030 = vpack.c.b16 %v6082, %v6070
    %v7031 = vpack.c.b16 %v6083, %v6071
    %v7032 = vpack.c.b16 %v6084, %v6072
    %v7033 = vpack.c.b16 %v6085, %v6073
    %v7034 = vpack.c.b16 %v6086, %v6074
    %v7035 = vpack.c.b16 %v6099, %v6087
    %v7036 = vpack.c.b16 %v6100, %v6088
    %v7037 = vpack.c.b16 %v6101, %v6089
    %v7038 = vpack.c.b16 %v6102, %v6090
    %v7039 = vpack.c.b16 %v6103, %v6091
    %v7040 = vpack.c.b16 %v6104, %v6092
    %v7041 = vpack.c.b16 %v6105, %v6093
    %v7042 = vpack.c.b16 %v6106, %v6094
    %v7043 = vpack.c.b16 %v6107, %v6095
    %v7044 = vpack.c.b16 %v6108, %v6096
    %v7045 = vpack.c.b16 %v6109, %v6097
    %v7046 = vpack.c.b16 %v6110, %v6098
    %v7047 = vpack.c.b16 %v6123, %v6111
    %v7048 = vpack.c.b16 %v6124, %v6112
    %v7049 = vpack.c.b16 %v6125, %v6113
    %v7050 = vpack.c.b16 %v6126, %v6114
    %v7051 = vpack.c.b16 %v6127, %v6115
    %v7052 = vpack.c.b16 %v6128, %v6116
    %v7053 = vpack.c.b16 %v6129, %v6117
    %v7054 = vpack.c.b16 %v6130, %v6118
    %v7055 = vpack.c.b16 %v6131, %v6119
    %v7056 = vpack.c.b16 %v6132, %v6120
    %v7057 = vpack.c.b16 %v6133, %v6121
    %v7058 = vpack.c.b16 %v6134, %v6122
    %v7059 = vpack.c.b16 %v6147, %v6135
    %v7060 = vpack.c.b16 %v6148, %v6136
    %v7061 = vpack.c.b16 %v6149, %v6137
    %v7062 = vpack.c.b16 %v6150, %v6138
    %v7063 = vpack.c.b16 %v6151, %v6139
    %v7064 = vpack.c.b16 %v6152, %v6140
    %v7065 = vpack.c.b16 %v6153, %v6141
    %v7066 = vpack.c.b16 %v6154, %v6142
    %v7067 = vpack.c.b16 %v6155, %v6143
    %v7068 = vpack.c.b16 %v6156, %v6144
    %v7069 = vpack.c.b16 %v6157, %v6145
    %v7070 = vpack.c.b16 %v6158, %v6146
    %v7071 = vpack.c.b16 %v6171, %v6159
    %v7072 = vpack.c.b16 %v6172, %v6160
    %v7073 = vpack.c.b16 %v6173, %v6161
    %v7074 = vpack.c.b16 %v6174, %v6162
    %v7075 = vpack.c.b16 %v6175, %v6163
    %v7076 = vpack.c.b16 %v6176, %v6164
    %v7077 = vpack.c.b16 %v6177, %v6165
    %v7078 = vpack.c.b16 %v6178, %v6166
    %v7079 = vpack.c.b16 %v6179, %v6167
    %v7080 = vpack.c.b16 %v6180, %v6168
    %v7081 = vpack.c.b16 %v6181, %v6169
    %v7082 = vpack.c.b16 %v6182, %v6170
    %v7083 = vpack.c.b16 %v6195, %v6183
    %v7084 = vpack.c.b16 %v6196, %v6184
    %v7085 = vpack.c.b16 %v6197, %v6185
    %v7086 = vpack.c.b16 %v6198, %v6186
    %v7087 = vpack.c.b16 %v6199, %v6187
    %v7088 = vpack.c.b16 %v6200, %v6188
    %v7089 = vpack.c.b16 %v6201, %v6189
    %v7090 = vpack.c.b16 %v6202, %v6190
    %v7091 = vpack.c.b16 %v6203, %v6191
    %v7092 = vpack.c.b16 %v6204, %v6192
    %v7093 = vpack.c.b16 %v6205, %v6193
    %v7094 = vpack.c.b16 %v6206, %v6194
    %v7095 = vpack.c.b16 %v6219, %v6207
    %v7096 = vpack.c.b16 %v6220, %v6208
    %v7097 = vpack.c.b16 %v6221, %v6209
    %v7098 = vpack.c.b16 %v6222, %v6210
    %v7099 = vpack.c.b16 %v6223, %v6211
    %v7100 = vpack.c.b16 %v6224, %v6212
    %v7101 = vpack.c.b16 %v6225, %v6213
    %v7102 = vpack.c.b16 %v6226, %v6214
    %v7103 = vpack.c.b16 %v6227, %v6215
    %v7104 = vpack.c.b16 %v6228, %v6216
    %v7105 = vpack.c.b16 %v6229, %v6217
    %v7106 = vpack.c.b16 %v6230, %v6218
    %v7107 = vpack.c.b16 %v6243, %v6231
    %v7108 = vpack.c.b16 %v6244, %v6232
    %v7109 = vpack.c.b16 %v6245, %v6233
    %v7110 = vpack.c.b16 %v6246, %v6234
    %v7111 = vpack.c.b16 %v6247, %v6235
    %v7112 = vpack.c.b16 %v6248, %v6236
    %v7113 = vpack.c.b16 %v6249, %v6237
    %v7114 = vpack.c.b16 %v6250, %v6238
    %v7115 = vpack.c.b16 %v6251, %v6239
    %v7116 = vpack.c.b16 %v6252, %v6240
    %v7117 = vpack.c.b16 %v6253, %v6241
    %v7118 = vpack.c.b16 %v6254, %v6242
    %v7119 = vpack.c.b16 %v6267, %v6255
    %v7120 = vpack.c.b16 %v6268, %v6256
    %v7121 = vpack.c.b16 %v6269, %v6257
    %v7122 = vpack.c.b16 %v6270, %v6258
    %v7123 = vpack.c.b16 %v6271, %v6259
    %v7124 = vpack.c.b16 %v6272, %v6260
    %v7125 = vpack.c.b16 %v6273, %v6261
    %v7126 = vpack.c.b16 %v6274, %v6262
    %v7127 = vpack.c.b16 %v6275, %v6263
    %v7128 = vpack.c.b16 %v6276, %v6264
    %v7129 = vpack.c.b16 %v6277, %v6265
    %v7130 = vpack.c.b16 %v6278, %v6266
    %v7131 = vpack.c.b16 %v6291, %v6279
    %v7132 = vpack.c.b16 %v6292, %v6280
    %v7133 = vpack.c.b16 %v6293, %v6281
    %v7134 = vpack.c.b16 %v6294, %v6282
    %v7135 = vpack.c.b16 %v6295, %v6283
    %v7136 = vpack.c.b16 %v6296, %v6284
    %v7137 = vpack.c.b16 %v6297, %v6285
    %v7138 = vpack.c.b16 %v6298, %v6286
    %v7139 = vpack.c.b16 %v6299, %v6287
    %v7140 = vpack.c.b16 %v6300, %v6288
    %v7141 = vpack.c.b16 %v6301, %v6289
    %v7142 = vpack.c.b16 %v6302, %v6290
    %v7143 = vpack.c.b16 %v6315, %v6303
    %v7144 = vpack.c.b16 %v6316, %v6304
    %v7145 = vpack.c.b16 %v6317, %v6305
    %v7146 = vpack.c.b16 %v6318, %v6306
    %v7147 = vpack.c.b16 %v6319, %v6307
    %v7148 = vpack.c.b16 %v6320, %v6308
    %v7149 = vpack.c.b16 %v6321, %v6309
    %v7150 = vpack.c.b16 %v6322, %v6310
    %v7151 = vpack.c.b16 %v6323, %v6311
    %v7152 = vpack.c.b16 %v6324, %v6312
    %v7153 = vpack.c.b16 %v6325, %v6313
    %v7154 = vpack.c.b16 %v6326, %v6314
    %v7155 = vpack.c.b16 %v6339, %v6327
    %v7156 = vpack.c.b16 %v6340, %v6328
    %v7157 = vpack.c.b16 %v6341, %v6329
    %v7158 = vpack.c.b16 %v6342, %v6330
    %v7159 = vpack.c.b16 %v6343, %v6331
    %v7160 = vpack.c.b16 %v6344, %v6332
    %v7161 = vpack.c.b16 %v6345, %v6333
    %v7162 = vpack.c.b16 %v6346, %v6334
    %v7163 = vpack.c.b16 %v6347, %v6335
    %v7164 = vpack.c.b16 %v6348, %v6336
    %v7165 = vpack.c.b16 %v6349, %v6337
    %v7166 = vpack.c.b16 %v6350, %v6338
    %v7167 = vpack.c.b16 %v6363, %v6351
    %v7168 = vpack.c.b16 %v6364, %v6352
    %v7169 = vpack.c.b16 %v6365, %v6353
    %v7170 = vpack.c.b16 %v6366, %v6354
    %v7171 = vpack.c.b16 %v6367, %v6355
    %v7172 = vpack.c.b16 %v6368, %v6356
    %v7173 = vpack.c.b16 %v6369, %v6357
    %v7174 = vpack.c.b16 %v6370, %v6358
    %v7175 = vpack.c.b16 %v6371, %v6359
    %v7176 = vpack.c.b16 %v6372, %v6360
    %v7177 = vpack.c.b16 %v6373, %v6361
    %v7178 = vpack.c.b16 %v6374, %v6362
    %v7179 = vpack.c.b16 %v6387, %v6375
    %v7180 = vpack.c.b16 %v6388, %v6376
    %v7181 = vpack.c.b16 %v6389, %v6377
    %v7182 = vpack.c.b16 %v6390, %v6378
    %v7183 = vpack.c.b16 %v6391, %v6379
    %v7184 = vpack.c.b16 %v6392, %v6380
    %v7185 = vpack.c.b16 %v6393, %v6381
    %v7186 = vpack.c.b16 %v6394, %v6382
    %v7187 = vpack.c.b16 %v6395, %v6383
    %v7188 = vpack.c.b16 %v6396, %v6384
    %v7189 = vpack.c.b16 %v6397, %v6385
    %v7190 = vpack.c.b16 %v6398, %v6386
    %v7191 = vpack.c.b16 %v6411, %v6399
    %v7192 = vpack.c.b16 %v6412, %v6400
    %v7193 = vpack.c.b16 %v6413, %v6401
    %v7194 = vpack.c.b16 %v6414, %v6402
    %v7195 = vpack.c.b16 %v6415, %v6403
    %v7196 = vpack.c.b16 %v6416, %v6404
    %v7197 = vpack.c.b16 %v6417, %v6405
    %v7198 = vpack.c.b16 %v6418, %v6406
    %v7199 = vpack.c.b16 %v6419, %v6407
    %v7200 = vpack.c.b16 %v6420, %v6408
    %v7201 = vpack.c.b16 %v6421, %v6409
    %v7202 = vpack.c.b16 %v6422, %v6410
    %v7203 = vpack.c.b16 %v6435, %v6423
    %v7204 = vpack.c.b16 %v6436, %v6424
    %v7205 = vpack.c.b16 %v6437, %v6425
    %v7206 = vpack.c.b16 %v6438, %v6426
    %v7207 = vpack.c.b16 %v6439, %v6427
    %v7208 = vpack.c.b16 %v6440, %v6428
    %v7209 = vpack.c.b16 %v6441, %v6429
    %v7210 = vpack.c.b16 %v6442, %v6430
    %v7211 = vpack.c.b16 %v6443, %v6431
    %v7212 = vpack.c.b16 %v6444, %v6432
    %v7213 = vpack.c.b16 %v6445, %v6433
    %v7214 = vpack.c.b16 %v6446, %v6434
    %v7215 = vpack.c.b16 %v6459, %v6447
    %v7216 = vpack.c.b16 %v6460, %v6448
    %v7217 = vpack.c.b16 %v6461, %v6449
    %v7218 = vpack.c.b16 %v6462, %v6450
    %v7219 = vpack.c.b16 %v6463, %v6451
    %v7220 = vpack.c.b16 %v6464, %v6452
    %v7221 = vpack.c.b16 %v6465, %v6453
    %v7222 = vpack.c.b16 %v6466, %v6454
    %v7223 = vpack.c.b16 %v6467, %v6455
    %v7224 = vpack.c.b16 %v6468, %v6456
    %v7225 = vpack.c.b16 %v6469, %v6457
    %v7226 = vpack.c.b16 %v6470, %v6458
    %v7227 = vpack.c.b16 %v6483, %v6471
    %v7228 = vpack.c.b16 %v6484, %v6472
    %v7229 = vpack.c.b16 %v6485, %v6473
    %v7230 = vpack.c.b16 %v6486, %v6474
    %v7231 = vpack.c.b16 %v6487, %v6475
    %v7232 = vpack.c.b16 %v6488, %v6476
    %v7233 = vpack.c.b16 %v6489, %v6477
    %v7234 = vpack.c.b16 %v6490, %v6478
    %v7235 = vpack.c.b16 %v6491, %v6479
    %v7236 = vpack.c.b16 %v6492, %v6480
    %v7237 = vpack.c.b16 %v6493, %v6481
    %v7238 = vpack.c.b16 %v6494, %v6482
    %v7239 = vpack.c.b16 %v6507, %v6495
    %v7240 = vpack.c.b16 %v6508, %v6496
    %v7241 = vpack.c.b16 %v6509, %v6497
    %v7242 = vpack.c.b16 %v6510, %v6498
    %v7243 = vpack.c.b16 %v6511, %v6499
    %v7244 = vpack.c.b16 %v6512, %v6500
    %v7245 = vpack.c.b16 %v6513, %v6501
    %v7246 = vpack.c.b16 %v6514, %v6502
    %v7247 = vpack.c.b16 %v6515, %v6503
    %v7248 = vpack.c.b16 %v6516, %v6504
    %v7249 = vpack.c.b16 %v6517, %v6505
    %v7250 = vpack.c.b16 %v6518, %v6506
    %v7251 = vpack.c.b16 %v6531, %v6519
    %v7252 = vpack.c.b16 %v6532, %v6520
    %v7253 = vpack.c.b16 %v6533, %v6521
    %v7254 = vpack.c.b16 %v6534, %v6522
    %v7255 = vpack.c.b16 %v6535, %v6523
    %v7256 = vpack.c.b16 %v6536, %v6524
    %v7257 = vpack.c.b16 %v6537, %v6525
    %v7258 = vpack.c.b16 %v6538, %v6526
    %v7259 = vpack.c.b16 %v6539, %v6527
    %v7260 = vpack.c.b16 %v6540, %v6528
    %v7261 = vpack.c.b16 %v6541, %v6529
    %v7262 = vpack.c.b16 %v6542, %v6530
    %v7263 = vpack.c.b16 %v6555, %v6543
    %v7264 = vpack.c.b16 %v6556, %v6544
    %v7265 = vpack.c.b16 %v6557, %v6545
    %v7266 = vpack.c.b16 %v6558, %v6546
    %v7267 = vpack.c.b16 %v6559, %v6547
    %v7268 = vpack.c.b16 %v6560, %v6548
    %v7269 = vpack.c.b16 %v6561, %v6549
    %v7270 = vpack.c.b16 %v6562, %v6550
    %v7271 = vpack.c.b16 %v6563, %v6551
    %v7272 = vpack.c.b16 %v6564, %v6552
    %v7273 = vpack.c.b16 %v6565, %v6553
    %v7274 = vpack.c.b16 %v6566, %v6554
    %v7275 = vpack.c.b16 %v6579, %v6567
    %v7276 = vpack.c.b16 %v6580, %v6568
    %v7277 = vpack.c.b16 %v6581, %v6569
    %v7278 = vpack.c.b16 %v6582, %v6570
    %v7279 = vpack.c.b16 %v6583, %v6571
    %v7280 = vpack.c.b16 %v6584, %v6572
    %v7281 = vpack.c.b16 %v6585, %v6573
    %v7282 = vpack.c.b16 %v6586, %v6574
    %v7283 = vpack.c.b16 %v6587, %v6575
    %v7284 = vpack.c.b16 %v6588, %v6576
    %v7285 = vpack.c.b16 %v6589, %v6577
    %v7286 = vpack.c.b16 %v6590, %v6578
    %v7287 = vpack.c.b16 %v6603, %v6591
    %v7288 = vpack.c.b16 %v6604, %v6592
    %v7289 = vpack.c.b16 %v6605, %v6593
    %v7290 = vpack.c.b16 %v6606, %v6594
    %v7291 = vpack.c.b16 %v6607, %v6595
    %v7292 = vpack.c.b16 %v6608, %v6596
    %v7293 = vpack.c.b16 %v6609, %v6597
    %v7294 = vpack.c.b16 %v6610, %v6598
    %v7295 = vpack.c.b16 %v6611, %v6599
    %v7296 = vpack.c.b16 %v6612, %v6600
    %v7297 = vpack.c.b16 %v6613, %v6601
    %v7298 = vpack.c.b16 %v6614, %v6602
    %v7299 = vpack.c.b16 %v6627, %v6615
    %v7300 = vpack.c.b16 %v6628, %v6616
    %v7301 = vpack.c.b16 %v6629, %v6617
    %v7302 = vpack.c.b16 %v6630, %v6618
    %v7303 = vpack.c.b16 %v6631, %v6619
    %v7304 = vpack.c.b16 %v6632, %v6620
    %v7305 = vpack.c.b16 %v6633, %v6621
    %v7306 = vpack.c.b16 %v6634, %v6622
    %v7307 = vpack.c.b16 %v6635, %v6623
    %v7308 = vpack.c.b16 %v6636, %v6624
    %v7309 = vpack.c.b16 %v6637, %v6625
    %v7310 = vpack.c.b16 %v6638, %v6626
    %v7311 = vpack.c.b16 %v6651, %v6639
    %v7312 = vpack.c.b16 %v6652, %v6640
    %v7313 = vpack.c.b16 %v6653, %v6641
    %v7314 = vpack.c.b16 %v6654, %v6642
    %v7315 = vpack.c.b16 %v6655, %v6643
    %v7316 = vpack.c.b16 %v6656, %v6644
    %v7317 = vpack.c.b16 %v6657, %v6645
    %v7318 = vpack.c.b16 %v6658, %v6646
    %v7319 = vpack.c.b16 %v6659, %v6647
    %v7320 = vpack.c.b16 %v6660, %v6648
    %v7321 = vpack.c.b16 %v6661, %v6649
    %v7322 = vpack.c.b16 %v6662, %v6650
    %v7323 = vpack.c.b16 %v6675, %v6663
    %v7324 = vpack.c.b16 %v6676, %v6664
    %v7325 = vpack.c.b16 %v6677, %v6665
    %v7326 = vpack.c.b16 %v6678, %v6666
    %v7327 = vpack.c.b16 %v6679, %v6667
    %v7328 = vpack.c.b16 %v6680, %v6668
    %v7329 = vpack.c.b16 %v6681, %v6669
    %v7330 = vpack.c.b16 %v6682, %v6670
    %v7331 = vpack.c.b16 %v6683, %v6671
    %v7332 = vpack.c.b16 %v6684, %v6672
    %v7333 = vpack.c.b16 %v6685, %v6673
    %v7334 = vpack.c.b16 %v6686, %v6674
    %v7335 = vpack.c.b16 %v6699, %v6687
    %v7336 = vpack.c.b16 %v6700, %v6688
    %v7337 = vpack.c.b16 %v6701, %v6689
    %v7338 = vpack.c.b16 %v6702, %v6690
    %v7339 = vpack.c.b16 %v6703, %v6691
    %v7340 = vpack.c.b16 %v6704, %v6692
    %v7341 = vpack.c.b16 %v6705, %v6693
    %v7342 = vpack.c.b16 %v6706, %v6694
    %v7343 = vpack.c.b16 %v6707, %v6695
    %v7344 = vpack.c.b16 %v6708, %v6696
    %v7345 = vpack.c.b16 %v6709, %v6697
    %v7346 = vpack.c.b16 %v6710, %v6698
    %v7347 = vpack.c.b16 %v6723, %v6711
    %v7348 = vpack.c.b16 %v6724, %v6712
    %v7349 = vpack.c.b16 %v6725, %v6713
    %v7350 = vpack.c.b16 %v6726, %v6714
    %v7351 = vpack.c.b16 %v6727, %v6715
    %v7352 = vpack.c.b16 %v6728, %v6716
    %v7353 = vpack.c.b16 %v6729, %v6717
    %v7354 = vpack.c.b16 %v6730, %v6718
    %v7355 = vpack.c.b16 %v6731, %v6719
    %v7356 = vpack.c.b16 %v6732, %v6720
    %v7357 = vpack.c.b16 %v6733, %v6721
    %v7358 = vpack.c.b16 %v6734, %v6722
    %v7359 = vpack.c.b16 %v6747, %v6735
    %v7360 = vpack.c.b16 %v6748, %v6736
    %v7361 = vpack.c.b16 %v6749, %v6737
    %v7362 = vpack.c.b16 %v6750, %v6738
    %v7363 = vpack.c.b16 %v6751, %v6739
    %v7364 = vpack.c.b16 %v6752, %v6740
    %v7365 = vpack.c.b16 %v6753, %v6741
    %v7366 = vpack.c.b16 %v6754, %v6742
    %v7367 = vpack.c.b16 %v6755, %v6743
    %v7368 = vpack.c.b16 %v6756, %v6744
    %v7369 = vpack.c.b16 %v6757, %v6745
    %v7370 = vpack.c.b16 %v6758, %v6746
    %v7371 = vpack.c.b16 %v6771, %v6759
    %v7372 = vpack.c.b16 %v6772, %v6760
    %v7373 = vpack.c.b16 %v6773, %v6761
    %v7374 = vpack.c.b16 %v6774, %v6762
    %v7375 = vpack.c.b16 %v6775, %v6763
    %v7376 = vpack.c.b16 %v6776, %v6764
    %v7377 = vpack.c.b16 %v6777, %v6765
    %v7378 = vpack.c.b16 %v6778, %v6766
    %v7379 = vpack.c.b16 %v6779, %v6767
    %v7380 = vpack.c.b16 %v6780, %v6768
    %v7381 = vpack.c.b16 %v6781, %v6769
    %v7382 = vpack.c.b16 %v6782, %v6770
    %v7383 = vpack.c.b16 %v6795, %v6783
    %v7384 = vpack.c.b16 %v6796, %v6784
    %v7385 = vpack.c.b16 %v6797, %v6785
    %v7386 = vpack.c.b16 %v6798, %v6786
    %v7387 = vpack.c.b16 %v6799, %v6787
    %v7388 = vpack.c.b16 %v6800, %v6788
    %v7389 = vpack.c.b16 %v6801, %v6789
    %v7390 = vpack.c.b16 %v6802, %v6790
    %v7391 = vpack.c.b16 %v6803, %v6791
    %v7392 = vpack.c.b16 %v6804, %v6792
    %v7393 = vpack.c.b16 %v6805, %v6793
    %v7394 = vpack.c.b16 %v6806, %v6794
    %v7395 = vpack.c.b16 %v6819, %v6807
    %v7396 = vpack.c.b16 %v6820, %v6808
    %v7397 = vpack.c.b16 %v6821, %v6809
    %v7398 = vpack.c.b16 %v6822, %v6810
    %v7399 = vpack.c.b16 %v6823, %v6811
    %v7400 = vpack.c.b16 %v6824, %v6812
    %v7401 = vpack.c.b16 %v6825, %v6813
    %v7402 = vpack.c.b16 %v6826, %v6814
    %v7403 = vpack.c.b16 %v6827, %v6815
    %v7404 = vpack.c.b16 %v6828, %v6816
    %v7405 = vpack.c.b16 %v6829, %v6817
    %v7406 = vpack.c.b16 %v6830, %v6818
    %7983 = vmatprep.subr.bf16.mxu0 %v6832
    %7984 = vmatpush1.bf16.msra.mxu0 %v6831
    %7985 = vmatprep.subr.bf16.mxu0 %v6844
    %7986 = vmatpush1.bf16.msra.mxu0 %v6843
    %7987 = vmatprep.subr.bf16.mxu0 %v6856
    %7988 = vmatpush1.bf16.msra.mxu0 %v6855
    %7989 = vmatprep.subr.bf16.mxu0 %v6868
    %7990 = vmatpush1.bf16.msra.mxu0 %v6867
    %7991 = vmatprep.subr.bf16.mxu0 %v6880
    %7992 = vmatpush1.bf16.msra.mxu0 %v6879
    %7993 = vmatprep.subr.bf16.mxu0 %v6892
    %7994 = vmatpush1.bf16.msra.mxu0 %v6891
    %7995 = vmatprep.subr.bf16.mxu0 %v6904
    %7996 = vmatpush1.bf16.msra.mxu0 %v6903
    %7997 = vmatprep.subr.bf16.mxu0 %v6916
    %7998 = vmatpush1.bf16.msra.mxu0 %v6915
    %7999 = vmatprep.subr.bf16.mxu0 %v6928
    %8000 = vmatpush1.bf16.msra.mxu0 %v6927
    %8001 = vmatprep.subr.bf16.mxu0 %v6940
    %8002 = vmatpush1.bf16.msra.mxu0 %v6939
    %8003 = vmatprep.subr.bf16.mxu0 %v6952
    %8004 = vmatpush1.bf16.msra.mxu0 %v6951
    %8005 = vmatprep.subr.bf16.mxu0 %v6964
    %8006 = vmatpush1.bf16.msra.mxu0 %v6963
    %8007 = vmatprep.subr.bf16.mxu0 %v6976
    %8008 = vmatpush1.bf16.msra.mxu0 %v6975
    %8009 = vmatprep.subr.bf16.mxu0 %v6988
    %8010 = vmatpush1.bf16.msra.mxu0 %v6987
    %8011 = vmatprep.subr.bf16.mxu0 %v7000
    %8012 = vmatpush1.bf16.msra.mxu0 %v6999
    %8013 = vmatprep.subr.bf16.mxu0 %v7012
    %8014 = vmatpush1.bf16.msra.mxu0 %v7011
    %8015 = vmatprep.mubr.bf16.mxu0 %v5098
    %8016 = vmatmul.mubr.bf16.gmra.mrb[0].mxu0 %v5097
    %v8017 = vpop.f32.mrb[0].mxu0
    %v8018 = vadd.f32 0.0, %v8017
    %v8019 = vpop.f32.mrb[0].mxu0
    %v8020 = vadd.f32 0.0, %v8019
    %v8021 = vpop.f32.mrb[0].mxu0
    %v8022 = vadd.f32 0.0, %v8021
    %v8023 = vpop.f32.mrb[0].mxu0
    %v8024 = vadd.f32 0.0, %v8023
    %8025 = vdwg.mxu0
    %8026 = vmatprep.subr.bf16.mxu0 %v7024
    %8027 = vmatpush1.bf16.msra.mxu0 %v7023
    %8028 = vmatprep.subr.bf16.mxu0 %v7036
    %8029 = vmatpush1.bf16.msra.mxu0 %v7035
    %8030 = vmatprep.subr.bf16.mxu0 %v7048
    %8031 = vmatpush1.bf16.msra.mxu0 %v7047
    %8032 = vmatprep.subr.bf16.mxu0 %v7060
    %8033 = vmatpush1.bf16.msra.mxu0 %v7059
    %8034 = vmatprep.subr.bf16.mxu0 %v7072
    %8035 = vmatpush1.bf16.msra.mxu0 %v7071
    %8036 = vmatprep.subr.bf16.mxu0 %v7084
    %8037 = vmatpush1.bf16.msra.mxu0 %v7083
    %8038 = vmatprep.subr.bf16.mxu0 %v7096
    %8039 = vmatpush1.bf16.msra.mxu0 %v7095
    %8040 = vmatprep.subr.bf16.mxu0 %v7108
    %8041 = vmatpush1.bf16.msra.mxu0 %v7107
    %8042 = vmatprep.subr.bf16.mxu0 %v7120
    %8043 = vmatpush1.bf16.msra.mxu0 %v7119
    %8044 = vmatprep.subr.bf16.mxu0 %v7132
    %8045 = vmatpush1.bf16.msra.mxu0 %v7131
    %8046 = vmatprep.subr.bf16.mxu0 %v7144
    %8047 = vmatpush1.bf16.msra.mxu0 %v7143
    %8048 = vmatprep.subr.bf16.mxu0 %v7156
    %8049 = vmatpush1.bf16.msra.mxu0 %v7155
    %8050 = vmatprep.subr.bf16.mxu0 %v7168
    %8051 = vmatpush1.bf16.msra.mxu0 %v7167
    %8052 = vmatprep.subr.bf16.mxu0 %v7180
    %8053 = vmatpush1.bf16.msra.mxu0 %v7179
    %8054 = vmatprep.subr.bf16.mxu0 %v7192
    %8055 = vmatpush1.bf16.msra.mxu0 %v7191
    %8056 = vmatprep.subr.bf16.mxu0 %v7204
    %8057 = vmatpush1.bf16.msra.mxu0 %v7203
    %8058 = vmatprep.mubr.bf16.mxu0 %v5100
    %8059 = vmatmul.mubr.bf16.gmra.mrb[0].mxu0 %v5099
    %v8060 = vpop.f32.mrb[0].mxu0
    %v8061 = vadd.f32 %v8018, %v8060
    %v8062 = vpop.f32.mrb[0].mxu0
    %v8063 = vadd.f32 %v8020, %v8062
    %v8064 = vpop.f32.mrb[0].mxu0
    %v8065 = vadd.f32 %v8022, %v8064
    %v8066 = vpop.f32.mrb[0].mxu0
    %v8067 = vadd.f32 %v8024, %v8066
    %8068 = vdwg.mxu0
    %8069 = vmatprep.subr.bf16.mxu0 %v7216
    %8070 = vmatpush1.bf16.msra.mxu0 %v7215
    %8071 = vmatprep.subr.bf16.mxu0 %v7228
    %8072 = vmatpush1.bf16.msra.mxu0 %v7227
    %8073 = vmatprep.subr.bf16.mxu0 %v7240
    %8074 = vmatpush1.bf16.msra.mxu0 %v7239
    %8075 = vmatprep.subr.bf16.mxu0 %v7252
    %8076 = vmatpush1.bf16.msra.mxu0 %v7251
    %8077 = vmatprep.subr.bf16.mxu0 %v7264
    %8078 = vmatpush1.bf16.msra.mxu0 %v7263
    %8079 = vmatprep.subr.bf16.mxu0 %v7276
    %8080 = vmatpush1.bf16.msra.mxu0 %v7275
    %8081 = vmatprep.subr.bf16.mxu0 %v7288
    %8082 = vmatpush1.bf16.msra.mxu0 %v7287
    %8083 = vmatprep.subr.bf16.mxu0 %v7300
    %8084 = vmatpush1.bf16.msra.mxu0 %v7299
    %8085 = vmatprep.subr.bf16.mxu0 %v7312
    %8086 = vmatpush1.bf16.msra.mxu0 %v7311
    %8087 = vmatprep.subr.bf16.mxu0 %v7324
    %8088 = vmatpush1.bf16.msra.mxu0 %v7323
    %8089 = vmatprep.subr.bf16.mxu0 %v7336
    %8090 = vmatpush1.bf16.msra.mxu0 %v7335
    %8091 = vmatprep.subr.bf16.mxu0 %v7348
    %8092 = vmatpush1.bf16.msra.mxu0 %v7347
    %8093 = vmatprep.subr.bf16.mxu0 %v7360
    %8094 = vmatpush1.bf16.msra.mxu0 %v7359
    %8095 = vmatprep.subr.bf16.mxu0 %v7372
    %8096 = vmatpush1.bf16.msra.mxu0 %v7371
    %8097 = vmatprep.subr.bf16.mxu0 %v7384
    %8098 = vmatpush1.bf16.msra.mxu0 %v7383
    %8099 = vmatprep.subr.bf16.mxu0 %v7396
    %8100 = vmatpush1.bf16.msra.mxu0 %v7395
    %8101 = vmatprep.mubr.bf16.mxu0 %v5102
    %8102 = vmatmul.mubr.bf16.gmra.mrb[0].mxu0 %v5101
    %v8103 = vpop.f32.mrb[0].mxu0
    %v8104 = vadd.f32 %v8061, %v8103
    %v8105 = vpop.f32.mrb[0].mxu0
    %v8106 = vadd.f32 %v8063, %v8105
    %v8107 = vpop.f32.mrb[0].mxu0
    %v8108 = vadd.f32 %v8065, %v8107
    %v8109 = vpop.f32.mrb[0].mxu0
    %v8110 = vadd.f32 %v8067, %v8109
    %8111 = vdwg.mxu0
    %8112 = vmatprep.subr.bf16.mxu0 %v6834
    %8113 = vmatpush1.bf16.msra.mxu0 %v6833
    %8114 = vmatprep.subr.bf16.mxu0 %v6846
    %8115 = vmatpush1.bf16.msra.mxu0 %v6845
    %8116 = vmatprep.subr.bf16.mxu0 %v6858
    %8117 = vmatpush1.bf16.msra.mxu0 %v6857
    %8118 = vmatprep.subr.bf16.mxu0 %v6870
    %8119 = vmatpush1.bf16.msra.mxu0 %v6869
    %8120 = vmatprep.subr.bf16.mxu0 %v6882
    %8121 = vmatpush1.bf16.msra.mxu0 %v6881
    %8122 = vmatprep.subr.bf16.mxu0 %v6894
    %8123 = vmatpush1.bf16.msra.mxu0 %v6893
    %8124 = vmatprep.subr.bf16.mxu0 %v6906
    %8125 = vmatpush1.bf16.msra.mxu0 %v6905
    %8126 = vmatprep.subr.bf16.mxu0 %v6918
    %8127 = vmatpush1.bf16.msra.mxu0 %v6917
    %8128 = vmatprep.subr.bf16.mxu0 %v6930
    %8129 = vmatpush1.bf16.msra.mxu0 %v6929
    %8130 = vmatprep.subr.bf16.mxu0 %v6942
    %8131 = vmatpush1.bf16.msra.mxu0 %v6941
    %8132 = vmatprep.subr.bf16.mxu0 %v6954
    %8133 = vmatpush1.bf16.msra.mxu0 %v6953
    %8134 = vmatprep.subr.bf16.mxu0 %v6966
    %8135 = vmatpush1.bf16.msra.mxu0 %v6965
    %8136 = vmatprep.subr.bf16.mxu0 %v6978
    %8137 = vmatpush1.bf16.msra.mxu0 %v6977
    %8138 = vmatprep.subr.bf16.mxu0 %v6990
    %8139 = vmatpush1.bf16.msra.mxu0 %v6989
    %8140 = vmatprep.subr.bf16.mxu0 %v7002
    %8141 = vmatpush1.bf16.msra.mxu0 %v7001
    %8142 = vmatprep.subr.bf16.mxu0 %v7014
    %8143 = vmatpush1.bf16.msra.mxu0 %v7013
    %8144 = vmatprep.mubr.bf16.mxu0 %v5098
    %8145 = vmatmul.mubr.bf16.gmra.mrb[0].mxu0 %v5097
    %v8146 = vpop.f32.mrb[0].mxu0
    %v8147 = vadd.f32 0.0, %v8146
    %v8148 = vpop.f32.mrb[0].mxu0
    %v8149 = vadd.f32 0.0, %v8148
    %v8150 = vpop.f32.mrb[0].mxu0
    %v8151 = vadd.f32 0.0, %v8150
    %v8152 = vpop.f32.mrb[0].mxu0
    %v8153 = vadd.f32 0.0, %v8152
    %8154 = vdwg.mxu0
    %8155 = vmatprep.subr.bf16.mxu0 %v7026
    %8156 = vmatpush1.bf16.msra.mxu0 %v7025
    %8157 = vmatprep.subr.bf16.mxu0 %v7038
    %8158 = vmatpush1.bf16.msra.mxu0 %v7037
    %8159 = vmatprep.subr.bf16.mxu0 %v7050
    %8160 = vmatpush1.bf16.msra.mxu0 %v7049
    %8161 = vmatprep.subr.bf16.mxu0 %v7062
    %8162 = vmatpush1.bf16.msra.mxu0 %v7061
    %8163 = vmatprep.subr.bf16.mxu0 %v7074
    %8164 = vmatpush1.bf16.msra.mxu0 %v7073
    %8165 = vmatprep.subr.bf16.mxu0 %v7086
    %8166 = vmatpush1.bf16.msra.mxu0 %v7085
    %8167 = vmatprep.subr.bf16.mxu0 %v7098
    %8168 = vmatpush1.bf16.msra.mxu0 %v7097
    %8169 = vmatprep.subr.bf16.mxu0 %v7110
    %8170 = vmatpush1.bf16.msra.mxu0 %v7109
    %8171 = vmatprep.subr.bf16.mxu0 %v7122
    %8172 = vmatpush1.bf16.msra.mxu0 %v7121
    %8173 = vmatprep.subr.bf16.mxu0 %v7134
    %8174 = vmatpush1.bf16.msra.mxu0 %v7133
    %8175 = vmatprep.subr.bf16.mxu0 %v7146
    %8176 = vmatpush1.bf16.msra.mxu0 %v7145
    %8177 = vmatprep.subr.bf16.mxu0 %v7158
    %8178 = vmatpush1.bf16.msra.mxu0 %v7157
    %8179 = vmatprep.subr.bf16.mxu0 %v7170
    %8180 = vmatpush1.bf16.msra.mxu0 %v7169
    %8181 = vmatprep.subr.bf16.mxu0 %v7182
    %8182 = vmatpush1.bf16.msra.mxu0 %v7181
    %8183 = vmatprep.subr.bf16.mxu0 %v7194
    %8184 = vmatpush1.bf16.msra.mxu0 %v7193
    %8185 = vmatprep.subr.bf16.mxu0 %v7206
    %8186 = vmatpush1.bf16.msra.mxu0 %v7205
    %8187 = vmatprep.mubr.bf16.mxu0 %v5100
    %8188 = vmatmul.mubr.bf16.gmra.mrb[0].mxu0 %v5099
    %v8189 = vpop.f32.mrb[0].mxu0
    %v8190 = vadd.f32 %v8147, %v8189
    %v8191 = vpop.f32.mrb[0].mxu0
    %v8192 = vadd.f32 %v8149, %v8191
    %v8193 = vpop.f32.mrb[0].mxu0
    %v8194 = vadd.f32 %v8151, %v8193
    %v8195 = vpop.f32.mrb[0].mxu0
    %v8196 = vadd.f32 %v8153, %v8195
    %8197 = vdwg.mxu0
    %8198 = vmatprep.subr.bf16.mxu0 %v7218
    %8199 = vmatpush1.bf16.msra.mxu0 %v7217
    %8200 = vmatprep.subr.bf16.mxu0 %v7230
    %8201 = vmatpush1.bf16.msra.mxu0 %v7229
    %8202 = vmatprep.subr.bf16.mxu0 %v7242
    %8203 = vmatpush1.bf16.msra.mxu0 %v7241
    %8204 = vmatprep.subr.bf16.mxu0 %v7254
    %8205 = vmatpush1.bf16.msra.mxu0 %v7253
    %8206 = vmatprep.subr.bf16.mxu0 %v7266
    %8207 = vmatpush1.bf16.msra.mxu0 %v7265
    %8208 = vmatprep.subr.bf16.mxu0 %v7278
    %8209 = vmatpush1.bf16.msra.mxu0 %v7277
    %8210 = vmatprep.subr.bf16.mxu0 %v7290
    %8211 = vmatpush1.bf16.msra.mxu0 %v7289
    %8212 = vmatprep.subr.bf16.mxu0 %v7302
    %8213 = vmatpush1.bf16.msra.mxu0 %v7301
    %8214 = vmatprep.subr.bf16.mxu0 %v7314
    %8215 = vmatpush1.bf16.msra.mxu0 %v7313
    %8216 = vmatprep.subr.bf16.mxu0 %v7326
    %8217 = vmatpush1.bf16.msra.mxu0 %v7325
    %8218 = vmatprep.subr.bf16.mxu0 %v7338
    %8219 = vmatpush1.bf16.msra.mxu0 %v7337
    %8220 = vmatprep.subr.bf16.mxu0 %v7350
    %8221 = vmatpush1.bf16.msra.mxu0 %v7349
    %8222 = vmatprep.subr.bf16.mxu0 %v7362
    %8223 = vmatpush1.bf16.msra.mxu0 %v7361
    %8224 = vmatprep.subr.bf16.mxu0 %v7374
    %8225 = vmatpush1.bf16.msra.mxu0 %v7373
    %8226 = vmatprep.subr.bf16.mxu0 %v7386
    %8227 = vmatpush1.bf16.msra.mxu0 %v7385
    %8228 = vmatprep.subr.bf16.mxu0 %v7398
    %8229 = vmatpush1.bf16.msra.mxu0 %v7397
    %8230 = vmatprep.mubr.bf16.mxu0 %v5102
    %8231 = vmatmul.mubr.bf16.gmra.mrb[0].mxu0 %v5101
    %v8232 = vpop.f32.mrb[0].mxu0
    %v8233 = vadd.f32 %v8190, %v8232
    %v8234 = vpop.f32.mrb[0].mxu0
    %v8235 = vadd.f32 %v8192, %v8234
    %v8236 = vpop.f32.mrb[0].mxu0
    %v8237 = vadd.f32 %v8194, %v8236
    %v8238 = vpop.f32.mrb[0].mxu0
    %v8239 = vadd.f32 %v8196, %v8238
    %8240 = vdwg.mxu0
    %8241 = vmatprep.subr.bf16.mxu0 %v6836
    %8242 = vmatpush1.bf16.msra.mxu0 %v6835
    %8243 = vmatprep.subr.bf16.mxu0 %v6848
    %8244 = vmatpush1.bf16.msra.mxu0 %v6847
    %8245 = vmatprep.subr.bf16.mxu0 %v6860
    %8246 = vmatpush1.bf16.msra.mxu0 %v6859
    %8247 = vmatprep.subr.bf16.mxu0 %v6872
    %8248 = vmatpush1.bf16.msra.mxu0 %v6871
    %8249 = vmatprep.subr.bf16.mxu0 %v6884
    %8250 = vmatpush1.bf16.msra.mxu0 %v6883
    %8251 = vmatprep.subr.bf16.mxu0 %v6896
    %8252 = vmatpush1.bf16.msra.mxu0 %v6895
    %8253 = vmatprep.subr.bf16.mxu0 %v6908
    %8254 = vmatpush1.bf16.msra.mxu0 %v6907
    %8255 = vmatprep.subr.bf16.mxu0 %v6920
    %8256 = vmatpush1.bf16.msra.mxu0 %v6919
    %8257 = vmatprep.subr.bf16.mxu0 %v6932
    %8258 = vmatpush1.bf16.msra.mxu0 %v6931
    %8259 = vmatprep.subr.bf16.mxu0 %v6944
    %8260 = vmatpush1.bf16.msra.mxu0 %v6943
    %8261 = vmatprep.subr.bf16.mxu0 %v6956
    %8262 = vmatpush1.bf16.msra.mxu0 %v6955
    %8263 = vmatprep.subr.bf16.mxu0 %v6968
    %8264 = vmatpush1.bf16.msra.mxu0 %v6967
    %8265 = vmatprep.subr.bf16.mxu0 %v6980
    %8266 = vmatpush1.bf16.msra.mxu0 %v6979
    %8267 = vmatprep.subr.bf16.mxu0 %v6992
    %8268 = vmatpush1.bf16.msra.mxu0 %v6991
    %8269 = vmatprep.subr.bf16.mxu0 %v7004
    %8270 = vmatpush1.bf16.msra.mxu0 %v7003
    %8271 = vmatprep.subr.bf16.mxu0 %v7016
    %8272 = vmatpush1.bf16.msra.mxu0 %v7015
    %8273 = vmatprep.mubr.bf16.mxu0 %v5098
    %8274 = vmatmul.mubr.bf16.gmra.mrb[0].mxu0 %v5097
    %v8275 = vpop.f32.mrb[0].mxu0
    %v8276 = vadd.f32 0.0, %v8275
    %v8277 = vpop.f32.mrb[0].mxu0
    %v8278 = vadd.f32 0.0, %v8277
    %v8279 = vpop.f32.mrb[0].mxu0
    %v8280 = vadd.f32 0.0, %v8279
    %v8281 = vpop.f32.mrb[0].mxu0
    %v8282 = vadd.f32 0.0, %v8281
    %8283 = vdwg.mxu0
    %8284 = vmatprep.subr.bf16.mxu0 %v7028
    %8285 = vmatpush1.bf16.msra.mxu0 %v7027
    %8286 = vmatprep.subr.bf16.mxu0 %v7040
    %8287 = vmatpush1.bf16.msra.mxu0 %v7039
    %8288 = vmatprep.subr.bf16.mxu0 %v7052
    %8289 = vmatpush1.bf16.msra.mxu0 %v7051
    %8290 = vmatprep.subr.bf16.mxu0 %v7064
    %8291 = vmatpush1.bf16.msra.mxu0 %v7063
    %8292 = vmatprep.subr.bf16.mxu0 %v7076
    %8293 = vmatpush1.bf16.msra.mxu0 %v7075
    %8294 = vmatprep.subr.bf16.mxu0 %v7088
    %8295 = vmatpush1.bf16.msra.mxu0 %v7087
    %8296 = vmatprep.subr.bf16.mxu0 %v7100
    %8297 = vmatpush1.bf16.msra.mxu0 %v7099
    %8298 = vmatprep.subr.bf16.mxu0 %v7112
    %8299 = vmatpush1.bf16.msra.mxu0 %v7111
    %8300 = vmatprep.subr.bf16.mxu0 %v7124
    %8301 = vmatpush1.bf16.msra.mxu0 %v7123
    %8302 = vmatprep.subr.bf16.mxu0 %v7136
    %8303 = vmatpush1.bf16.msra.mxu0 %v7135
    %8304 = vmatprep.subr.bf16.mxu0 %v7148
    %8305 = vmatpush1.bf16.msra.mxu0 %v7147
    %8306 = vmatprep.subr.bf16.mxu0 %v7160
    %8307 = vmatpush1.bf16.msra.mxu0 %v7159
    %8308 = vmatprep.subr.bf16.mxu0 %v7172
    %8309 = vmatpush1.bf16.msra.mxu0 %v7171
    %8310 = vmatprep.subr.bf16.mxu0 %v7184
    %8311 = vmatpush1.bf16.msra.mxu0 %v7183
    %8312 = vmatprep.subr.bf16.mxu0 %v7196
    %8313 = vmatpush1.bf16.msra.mxu0 %v7195
    %8314 = vmatprep.subr.bf16.mxu0 %v7208
    %8315 = vmatpush1.bf16.msra.mxu0 %v7207
    %8316 = vmatprep.mubr.bf16.mxu0 %v5100
    %8317 = vmatmul.mubr.bf16.gmra.mrb[0].mxu0 %v5099
    %v8318 = vpop.f32.mrb[0].mxu0
    %v8319 = vadd.f32 %v8276, %v8318
    %v8320 = vpop.f32.mrb[0].mxu0
    %v8321 = vadd.f32 %v8278, %v8320
    %v8322 = vpop.f32.mrb[0].mxu0
    %v8323 = vadd.f32 %v8280, %v8322
    %v8324 = vpop.f32.mrb[0].mxu0
    %v8325 = vadd.f32 %v8282, %v8324
    %8326 = vdwg.mxu0
    %8327 = vmatprep.subr.bf16.mxu0 %v7220
    %8328 = vmatpush1.bf16.msra.mxu0 %v7219
    %8329 = vmatprep.subr.bf16.mxu0 %v7232
    %8330 = vmatpush1.bf16.msra.mxu0 %v7231
    %8331 = vmatprep.subr.bf16.mxu0 %v7244
    %8332 = vmatpush1.bf16.msra.mxu0 %v7243
    %8333 = vmatprep.subr.bf16.mxu0 %v7256
    %8334 = vmatpush1.bf16.msra.mxu0 %v7255
    %8335 = vmatprep.subr.bf16.mxu0 %v7268
    %8336 = vmatpush1.bf16.msra.mxu0 %v7267
    %8337 = vmatprep.subr.bf16.mxu0 %v7280
    %8338 = vmatpush1.bf16.msra.mxu0 %v7279
    %8339 = vmatprep.subr.bf16.mxu0 %v7292
    %8340 = vmatpush1.bf16.msra.mxu0 %v7291
    %8341 = vmatprep.subr.bf16.mxu0 %v7304
    %8342 = vmatpush1.bf16.msra.mxu0 %v7303
    %8343 = vmatprep.subr.bf16.mxu0 %v7316
    %8344 = vmatpush1.bf16.msra.mxu0 %v7315
    %8345 = vmatprep.subr.bf16.mxu0 %v7328
    %8346 = vmatpush1.bf16.msra.mxu0 %v7327
    %8347 = vmatprep.subr.bf16.mxu0 %v7340
    %8348 = vmatpush1.bf16.msra.mxu0 %v7339
    %8349 = vmatprep.subr.bf16.mxu0 %v7352
    %8350 = vmatpush1.bf16.msra.mxu0 %v7351
    %8351 = vmatprep.subr.bf16.mxu0 %v7364
    %8352 = vmatpush1.bf16.msra.mxu0 %v7363
    %8353 = vmatprep.subr.bf16.mxu0 %v7376
    %8354 = vmatpush1.bf16.msra.mxu0 %v7375
    %8355 = vmatprep.subr.bf16.mxu0 %v7388
    %8356 = vmatpush1.bf16.msra.mxu0 %v7387
    %8357 = vmatprep.subr.bf16.mxu0 %v7400
    %8358 = vmatpush1.bf16.msra.mxu0 %v7399
    %8359 = vmatprep.mubr.bf16.mxu0 %v5102
    %8360 = vmatmul.mubr.bf16.gmra.mrb[0].mxu0 %v5101
    %v8361 = vpop.f32.mrb[0].mxu0
    %v8362 = vadd.f32 %v8319, %v8361
    %v8363 = vpop.f32.mrb[0].mxu0
    %v8364 = vadd.f32 %v8321, %v8363
    %v8365 = vpop.f32.mrb[0].mxu0
    %v8366 = vadd.f32 %v8323, %v8365
    %v8367 = vpop.f32.mrb[0].mxu0
    %v8368 = vadd.f32 %v8325, %v8367
    %8369 = vdwg.mxu0
    %8370 = vmatprep.subr.bf16.mxu0 %v6838
    %8371 = vmatpush1.bf16.msra.mxu0 %v6837
    %8372 = vmatprep.subr.bf16.mxu0 %v6850
    %8373 = vmatpush1.bf16.msra.mxu0 %v6849
    %8374 = vmatprep.subr.bf16.mxu0 %v6862
    %8375 = vmatpush1.bf16.msra.mxu0 %v6861
    %8376 = vmatprep.subr.bf16.mxu0 %v6874
    %8377 = vmatpush1.bf16.msra.mxu0 %v6873
    %8378 = vmatprep.subr.bf16.mxu0 %v6886
    %8379 = vmatpush1.bf16.msra.mxu0 %v6885
    %8380 = vmatprep.subr.bf16.mxu0 %v6898
    %8381 = vmatpush1.bf16.msra.mxu0 %v6897
    %8382 = vmatprep.subr.bf16.mxu0 %v6910
    %8383 = vmatpush1.bf16.msra.mxu0 %v6909
    %8384 = vmatprep.subr.bf16.mxu0 %v6922
    %8385 = vmatpush1.bf16.msra.mxu0 %v6921
    %8386 = vmatprep.subr.bf16.mxu0 %v6934
    %8387 = vmatpush1.bf16.msra.mxu0 %v6933
    %8388 = vmatprep.subr.bf16.mxu0 %v6946
    %8389 = vmatpush1.bf16.msra.mxu0 %v6945
    %8390 = vmatprep.subr.bf16.mxu0 %v6958
    %8391 = vmatpush1.bf16.msra.mxu0 %v6957
    %8392 = vmatprep.subr.bf16.mxu0 %v6970
    %8393 = vmatpush1.bf16.msra.mxu0 %v6969
    %8394 = vmatprep.subr.bf16.mxu0 %v6982
    %8395 = vmatpush1.bf16.msra.mxu0 %v6981
    %8396 = vmatprep.subr.bf16.mxu0 %v6994
    %8397 = vmatpush1.bf16.msra.mxu0 %v6993
    %8398 = vmatprep.subr.bf16.mxu0 %v7006
    %8399 = vmatpush1.bf16.msra.mxu0 %v7005
    %8400 = vmatprep.subr.bf16.mxu0 %v7018
    %8401 = vmatpush1.bf16.msra.mxu0 %v7017
    %8402 = vmatprep.mubr.bf16.mxu0 %v5098
    %8403 = vmatmul.mubr.bf16.gmra.mrb[0].mxu0 %v5097
    %v8404 = vpop.f32.mrb[0].mxu0
    %v8405 = vadd.f32 0.0, %v8404
    %v8406 = vpop.f32.mrb[0].mxu0
    %v8407 = vadd.f32 0.0, %v8406
    %v8408 = vpop.f32.mrb[0].mxu0
    %v8409 = vadd.f32 0.0, %v8408
    %v8410 = vpop.f32.mrb[0].mxu0
    %v8411 = vadd.f32 0.0, %v8410
    %8412 = vdwg.mxu0
    %8413 = vmatprep.subr.bf16.mxu0 %v7030
    %8414 = vmatpush1.bf16.msra.mxu0 %v7029
    %8415 = vmatprep.subr.bf16.mxu0 %v7042
    %8416 = vmatpush1.bf16.msra.mxu0 %v7041
    %8417 = vmatprep.subr.bf16.mxu0 %v7054
    %8418 = vmatpush1.bf16.msra.mxu0 %v7053
    %8419 = vmatprep.subr.bf16.mxu0 %v7066
    %8420 = vmatpush1.bf16.msra.mxu0 %v7065
    %8421 = vmatprep.subr.bf16.mxu0 %v7078
    %8422 = vmatpush1.bf16.msra.mxu0 %v7077
    %8423 = vmatprep.subr.bf16.mxu0 %v7090
    %8424 = vmatpush1.bf16.msra.mxu0 %v7089
    %8425 = vmatprep.subr.bf16.mxu0 %v7102
    %8426 = vmatpush1.bf16.msra.mxu0 %v7101
    %8427 = vmatprep.subr.bf16.mxu0 %v7114
    %8428 = vmatpush1.bf16.msra.mxu0 %v7113
    %8429 = vmatprep.subr.bf16.mxu0 %v7126
    %8430 = vmatpush1.bf16.msra.mxu0 %v7125
    %8431 = vmatprep.subr.bf16.mxu0 %v7138
    %8432 = vmatpush1.bf16.msra.mxu0 %v7137
    %8433 = vmatprep.subr.bf16.mxu0 %v7150
    %8434 = vmatpush1.bf16.msra.mxu0 %v7149
    %8435 = vmatprep.subr.bf16.mxu0 %v7162
    %8436 = vmatpush1.bf16.msra.mxu0 %v7161
    %8437 = vmatprep.subr.bf16.mxu0 %v7174
    %8438 = vmatpush1.bf16.msra.mxu0 %v7173
    %8439 = vmatprep.subr.bf16.mxu0 %v7186
    %8440 = vmatpush1.bf16.msra.mxu0 %v7185
    %8441 = vmatprep.subr.bf16.mxu0 %v7198
    %8442 = vmatpush1.bf16.msra.mxu0 %v7197
    %8443 = vmatprep.subr.bf16.mxu0 %v7210
    %8444 = vmatpush1.bf16.msra.mxu0 %v7209
    %8445 = vmatprep.mubr.bf16.mxu0 %v5100
    %8446 = vmatmul.mubr.bf16.gmra.mrb[0].mxu0 %v5099
    %v8447 = vpop.f32.mrb[0].mxu0
    %v8448 = vadd.f32 %v8405, %v8447
    %v8449 = vpop.f32.mrb[0].mxu0
    %v8450 = vadd.f32 %v8407, %v8449
    %v8451 = vpop.f32.mrb[0].mxu0
    %v8452 = vadd.f32 %v8409, %v8451
    %v8453 = vpop.f32.mrb[0].mxu0
    %v8454 = vadd.f32 %v8411, %v8453
    %8455 = vdwg.mxu0
    %8456 = vmatprep.subr.bf16.mxu0 %v7222
    %8457 = vmatpush1.bf16.msra.mxu0 %v7221
    %8458 = vmatprep.subr.bf16.mxu0 %v7234
    %8459 = vmatpush1.bf16.msra.mxu0 %v7233
    %8460 = vmatprep.subr.bf16.mxu0 %v7246
    %8461 = vmatpush1.bf16.msra.mxu0 %v7245
    %8462 = vmatprep.subr.bf16.mxu0 %v7258
    %8463 = vmatpush1.bf16.msra.mxu0 %v7257
    %8464 = vmatprep.subr.bf16.mxu0 %v7270
    %8465 = vmatpush1.bf16.msra.mxu0 %v7269
    %8466 = vmatprep.subr.bf16.mxu0 %v7282
    %8467 = vmatpush1.bf16.msra.mxu0 %v7281
    %8468 = vmatprep.subr.bf16.mxu0 %v7294
    %8469 = vmatpush1.bf16.msra.mxu0 %v7293
    %8470 = vmatprep.subr.bf16.mxu0 %v7306
    %8471 = vmatpush1.bf16.msra.mxu0 %v7305
    %8472 = vmatprep.subr.bf16.mxu0 %v7318
    %8473 = vmatpush1.bf16.msra.mxu0 %v7317
    %8474 = vmatprep.subr.bf16.mxu0 %v7330
    %8475 = vmatpush1.bf16.msra.mxu0 %v7329
    %8476 = vmatprep.subr.bf16.mxu0 %v7342
    %8477 = vmatpush1.bf16.msra.mxu0 %v7341
    %8478 = vmatprep.subr.bf16.mxu0 %v7354
    %8479 = vmatpush1.bf16.msra.mxu0 %v7353
    %8480 = vmatprep.subr.bf16.mxu0 %v7366
    %8481 = vmatpush1.bf16.msra.mxu0 %v7365
    %8482 = vmatprep.subr.bf16.mxu0 %v7378
    %8483 = vmatpush1.bf16.msra.mxu0 %v7377
    %8484 = vmatprep.subr.bf16.mxu0 %v7390
    %8485 = vmatpush1.bf16.msra.mxu0 %v7389
    %8486 = vmatprep.subr.bf16.mxu0 %v7402
    %8487 = vmatpush1.bf16.msra.mxu0 %v7401
    %8488 = vmatprep.mubr.bf16.mxu0 %v5102
    %8489 = vmatmul.mubr.bf16.gmra.mrb[0].mxu0 %v5101
    %v8490 = vpop.f32.mrb[0].mxu0
    %v8491 = vadd.f32 %v8448, %v8490
    %v8492 = vpop.f32.mrb[0].mxu0
    %v8493 = vadd.f32 %v8450, %v8492
    %v8494 = vpop.f32.mrb[0].mxu0
    %v8495 = vadd.f32 %v8452, %v8494
    %v8496 = vpop.f32.mrb[0].mxu0
    %v8497 = vadd.f32 %v8454, %v8496
    %8498 = vdwg.mxu0
    %8499 = vmatprep.subr.bf16.mxu0 %v6840
    %8500 = vmatpush1.bf16.msra.mxu0 %v6839
    %8501 = vmatprep.subr.bf16.mxu0 %v6852
    %8502 = vmatpush1.bf16.msra.mxu0 %v6851
    %8503 = vmatprep.subr.bf16.mxu0 %v6864
    %8504 = vmatpush1.bf16.msra.mxu0 %v6863
    %8505 = vmatprep.subr.bf16.mxu0 %v6876
    %8506 = vmatpush1.bf16.msra.mxu0 %v6875
    %8507 = vmatprep.subr.bf16.mxu0 %v6888
    %8508 = vmatpush1.bf16.msra.mxu0 %v6887
    %8509 = vmatprep.subr.bf16.mxu0 %v6900
    %8510 = vmatpush1.bf16.msra.mxu0 %v6899
    %8511 = vmatprep.subr.bf16.mxu0 %v6912
    %8512 = vmatpush1.bf16.msra.mxu0 %v6911
    %8513 = vmatprep.subr.bf16.mxu0 %v6924
    %8514 = vmatpush1.bf16.msra.mxu0 %v6923
    %8515 = vmatprep.subr.bf16.mxu0 %v6936
    %8516 = vmatpush1.bf16.msra.mxu0 %v6935
    %8517 = vmatprep.subr.bf16.mxu0 %v6948
    %8518 = vmatpush1.bf16.msra.mxu0 %v6947
    %8519 = vmatprep.subr.bf16.mxu0 %v6960
    %8520 = vmatpush1.bf16.msra.mxu0 %v6959
    %8521 = vmatprep.subr.bf16.mxu0 %v6972
    %8522 = vmatpush1.bf16.msra.mxu0 %v6971
    %8523 = vmatprep.subr.bf16.mxu0 %v6984
    %8524 = vmatpush1.bf16.msra.mxu0 %v6983
    %8525 = vmatprep.subr.bf16.mxu0 %v6996
    %8526 = vmatpush1.bf16.msra.mxu0 %v6995
    %8527 = vmatprep.subr.bf16.mxu0 %v7008
    %8528 = vmatpush1.bf16.msra.mxu0 %v7007
    %8529 = vmatprep.subr.bf16.mxu0 %v7020
    %8530 = vmatpush1.bf16.msra.mxu0 %v7019
    %8531 = vmatprep.mubr.bf16.mxu0 %v5098
    %8532 = vmatmul.mubr.bf16.gmra.mrb[0].mxu0 %v5097
    %v8533 = vpop.f32.mrb[0].mxu0
    %v8534 = vadd.f32 0.0, %v8533
    %v8535 = vpop.f32.mrb[0].mxu0
    %v8536 = vadd.f32 0.0, %v8535
    %v8537 = vpop.f32.mrb[0].mxu0
    %v8538 = vadd.f32 0.0, %v8537
    %v8539 = vpop.f32.mrb[0].mxu0
    %v8540 = vadd.f32 0.0, %v8539
    %8541 = vdwg.mxu0
    %8542 = vmatprep.subr.bf16.mxu0 %v7032
    %8543 = vmatpush1.bf16.msra.mxu0 %v7031
    %8544 = vmatprep.subr.bf16.mxu0 %v7044
    %8545 = vmatpush1.bf16.msra.mxu0 %v7043
    %8546 = vmatprep.subr.bf16.mxu0 %v7056
    %8547 = vmatpush1.bf16.msra.mxu0 %v7055
    %8548 = vmatprep.subr.bf16.mxu0 %v7068
    %8549 = vmatpush1.bf16.msra.mxu0 %v7067
    %8550 = vmatprep.subr.bf16.mxu0 %v7080
    %8551 = vmatpush1.bf16.msra.mxu0 %v7079
    %8552 = vmatprep.subr.bf16.mxu0 %v7092
    %8553 = vmatpush1.bf16.msra.mxu0 %v7091
    %8554 = vmatprep.subr.bf16.mxu0 %v7104
    %8555 = vmatpush1.bf16.msra.mxu0 %v7103
    %8556 = vmatprep.subr.bf16.mxu0 %v7116
    %8557 = vmatpush1.bf16.msra.mxu0 %v7115
    %8558 = vmatprep.subr.bf16.mxu0 %v7128
    %8559 = vmatpush1.bf16.msra.mxu0 %v7127
    %8560 = vmatprep.subr.bf16.mxu0 %v7140
    %8561 = vmatpush1.bf16.msra.mxu0 %v7139
    %8562 = vmatprep.subr.bf16.mxu0 %v7152
    %8563 = vmatpush1.bf16.msra.mxu0 %v7151
    %8564 = vmatprep.subr.bf16.mxu0 %v7164
    %8565 = vmatpush1.bf16.msra.mxu0 %v7163
    %8566 = vmatprep.subr.bf16.mxu0 %v7176
    %8567 = vmatpush1.bf16.msra.mxu0 %v7175
    %8568 = vmatprep.subr.bf16.mxu0 %v7188
    %8569 = vmatpush1.bf16.msra.mxu0 %v7187
    %8570 = vmatprep.subr.bf16.mxu0 %v7200
    %8571 = vmatpush1.bf16.msra.mxu0 %v7199
    %8572 = vmatprep.subr.bf16.mxu0 %v7212
    %8573 = vmatpush1.bf16.msra.mxu0 %v7211
    %8574 = vmatprep.mubr.bf16.mxu0 %v5100
    %8575 = vmatmul.mubr.bf16.gmra.mrb[0].mxu0 %v5099
    %v8576 = vpop.f32.mrb[0].mxu0
    %v8577 = vadd.f32 %v8534, %v8576
    %v8578 = vpop.f32.mrb[0].mxu0
    %v8579 = vadd.f32 %v8536, %v8578
    %v8580 = vpop.f32.mrb[0].mxu0
    %v8581 = vadd.f32 %v8538, %v8580
    %v8582 = vpop.f32.mrb[0].mxu0
    %v8583 = vadd.f32 %v8540, %v8582
    %8584 = vdwg.mxu0
    %8585 = vmatprep.subr.bf16.mxu0 %v7224
    %8586 = vmatpush1.bf16.msra.mxu0 %v7223
    %8587 = vmatprep.subr.bf16.mxu0 %v7236
    %8588 = vmatpush1.bf16.msra.mxu0 %v7235
    %8589 = vmatprep.subr.bf16.mxu0 %v7248
    %8590 = vmatpush1.bf16.msra.mxu0 %v7247
    %8591 = vmatprep.subr.bf16.mxu0 %v7260
    %8592 = vmatpush1.bf16.msra.mxu0 %v7259
    %8593 = vmatprep.subr.bf16.mxu0 %v7272
    %8594 = vmatpush1.bf16.msra.mxu0 %v7271
    %8595 = vmatprep.subr.bf16.mxu0 %v7284
    %8596 = vmatpush1.bf16.msra.mxu0 %v7283
    %8597 = vmatprep.subr.bf16.mxu0 %v7296
    %8598 = vmatpush1.bf16.msra.mxu0 %v7295
    %8599 = vmatprep.subr.bf16.mxu0 %v7308
    %8600 = vmatpush1.bf16.msra.mxu0 %v7307
    %8601 = vmatprep.subr.bf16.mxu0 %v7320
    %8602 = vmatpush1.bf16.msra.mxu0 %v7319
    %8603 = vmatprep.subr.bf16.mxu0 %v7332
    %8604 = vmatpush1.bf16.msra.mxu0 %v7331
    %8605 = vmatprep.subr.bf16.mxu0 %v7344
    %8606 = vmatpush1.bf16.msra.mxu0 %v7343
    %8607 = vmatprep.subr.bf16.mxu0 %v7356
    %8608 = vmatpush1.bf16.msra.mxu0 %v7355
    %8609 = vmatprep.subr.bf16.mxu0 %v7368
    %8610 = vmatpush1.bf16.msra.mxu0 %v7367
    %8611 = vmatprep.subr.bf16.mxu0 %v7380
    %8612 = vmatpush1.bf16.msra.mxu0 %v7379
    %8613 = vmatprep.subr.bf16.mxu0 %v7392
    %8614 = vmatpush1.bf16.msra.mxu0 %v7391
    %8615 = vmatprep.subr.bf16.mxu0 %v7404
    %8616 = vmatpush1.bf16.msra.mxu0 %v7403
    %8617 = vmatprep.mubr.bf16.mxu0 %v5102
    %8618 = vmatmul.mubr.bf16.gmra.mrb[0].mxu0 %v5101
    %v8619 = vpop.f32.mrb[0].mxu0
    %v8620 = vadd.f32 %v8577, %v8619
    %v8621 = vpop.f32.mrb[0].mxu0
    %v8622 = vadd.f32 %v8579, %v8621
    %v8623 = vpop.f32.mrb[0].mxu0
    %v8624 = vadd.f32 %v8581, %v8623
    %v8625 = vpop.f32.mrb[0].mxu0
    %v8626 = vadd.f32 %v8583, %v8625
    %8627 = vdwg.mxu0
    %8628 = vmatprep.subr.bf16.mxu0 %v6842
    %8629 = vmatpush1.bf16.msra.mxu0 %v6841
    %8630 = vmatprep.subr.bf16.mxu0 %v6854
    %8631 = vmatpush1.bf16.msra.mxu0 %v6853
    %8632 = vmatprep.subr.bf16.mxu0 %v6866
    %8633 = vmatpush1.bf16.msra.mxu0 %v6865
    %8634 = vmatprep.subr.bf16.mxu0 %v6878
    %8635 = vmatpush1.bf16.msra.mxu0 %v6877
    %8636 = vmatprep.subr.bf16.mxu0 %v6890
    %8637 = vmatpush1.bf16.msra.mxu0 %v6889
    %8638 = vmatprep.subr.bf16.mxu0 %v6902
    %8639 = vmatpush1.bf16.msra.mxu0 %v6901
    %8640 = vmatprep.subr.bf16.mxu0 %v6914
    %8641 = vmatpush1.bf16.msra.mxu0 %v6913
    %8642 = vmatprep.subr.bf16.mxu0 %v6926
    %8643 = vmatpush1.bf16.msra.mxu0 %v6925
    %8644 = vmatprep.subr.bf16.mxu0 %v6938
    %8645 = vmatpush1.bf16.msra.mxu0 %v6937
    %8646 = vmatprep.subr.bf16.mxu0 %v6950
    %8647 = vmatpush1.bf16.msra.mxu0 %v6949
    %8648 = vmatprep.subr.bf16.mxu0 %v6962
    %8649 = vmatpush1.bf16.msra.mxu0 %v6961
    %8650 = vmatprep.subr.bf16.mxu0 %v6974
    %8651 = vmatpush1.bf16.msra.mxu0 %v6973
    %8652 = vmatprep.subr.bf16.mxu0 %v6986
    %8653 = vmatpush1.bf16.msra.mxu0 %v6985
    %8654 = vmatprep.subr.bf16.mxu0 %v6998
    %8655 = vmatpush1.bf16.msra.mxu0 %v6997
    %8656 = vmatprep.subr.bf16.mxu0 %v7010
    %8657 = vmatpush1.bf16.msra.mxu0 %v7009
    %8658 = vmatprep.subr.bf16.mxu0 %v7022
    %8659 = vmatpush1.bf16.msra.mxu0 %v7021
    %8660 = vmatprep.mubr.bf16.mxu0 %v5098
    %8661 = vmatmul.mubr.bf16.gmra.mrb[0].mxu0 %v5097
    %v8662 = vpop.f32.mrb[0].mxu0
    %v8663 = vadd.f32 0.0, %v8662
    %v8664 = vpop.f32.mrb[0].mxu0
    %v8665 = vadd.f32 0.0, %v8664
    %v8666 = vpop.f32.mrb[0].mxu0
    %v8667 = vadd.f32 0.0, %v8666
    %v8668 = vpop.f32.mrb[0].mxu0
    %v8669 = vadd.f32 0.0, %v8668
    %8670 = vdwg.mxu0
    %8671 = vmatprep.subr.bf16.mxu0 %v7034
    %8672 = vmatpush1.bf16.msra.mxu0 %v7033
    %8673 = vmatprep.subr.bf16.mxu0 %v7046
    %8674 = vmatpush1.bf16.msra.mxu0 %v7045
    %8675 = vmatprep.subr.bf16.mxu0 %v7058
    %8676 = vmatpush1.bf16.msra.mxu0 %v7057
    %8677 = vmatprep.subr.bf16.mxu0 %v7070
    %8678 = vmatpush1.bf16.msra.mxu0 %v7069
    %8679 = vmatprep.subr.bf16.mxu0 %v7082
    %8680 = vmatpush1.bf16.msra.mxu0 %v7081
    %8681 = vmatprep.subr.bf16.mxu0 %v7094
    %8682 = vmatpush1.bf16.msra.mxu0 %v7093
    %8683 = vmatprep.subr.bf16.mxu0 %v7106
    %8684 = vmatpush1.bf16.msra.mxu0 %v7105
    %8685 = vmatprep.subr.bf16.mxu0 %v7118
    %8686 = vmatpush1.bf16.msra.mxu0 %v7117
    %8687 = vmatprep.subr.bf16.mxu0 %v7130
    %8688 = vmatpush1.bf16.msra.mxu0 %v7129
    %8689 = vmatprep.subr.bf16.mxu0 %v7142
    %8690 = vmatpush1.bf16.msra.mxu0 %v7141
    %8691 = vmatprep.subr.bf16.mxu0 %v7154
    %8692 = vmatpush1.bf16.msra.mxu0 %v7153
    %8693 = vmatprep.subr.bf16.mxu0 %v7166
    %8694 = vmatpush1.bf16.msra.mxu0 %v7165
    %8695 = vmatprep.subr.bf16.mxu0 %v7178
    %8696 = vmatpush1.bf16.msra.mxu0 %v7177
    %8697 = vmatprep.subr.bf16.mxu0 %v7190
    %8698 = vmatpush1.bf16.msra.mxu0 %v7189
    %8699 = vmatprep.subr.bf16.mxu0 %v7202
    %8700 = vmatpush1.bf16.msra.mxu0 %v7201
    %8701 = vmatprep.subr.bf16.mxu0 %v7214
    %8702 = vmatpush1.bf16.msra.mxu0 %v7213
    %8703 = vmatprep.mubr.bf16.mxu0 %v5100
    %8704 = vmatmul.mubr.bf16.gmra.mrb[0].mxu0 %v5099
    %v8705 = vpop.f32.mrb[0].mxu0
    %v8706 = vadd.f32 %v8663, %v8705
    %v8707 = vpop.f32.mrb[0].mxu0
    %v8708 = vadd.f32 %v8665, %v8707
    %v8709 = vpop.f32.mrb[0].mxu0
    %v8710 = vadd.f32 %v8667, %v8709
    %v8711 = vpop.f32.mrb[0].mxu0
    %v8712 = vadd.f32 %v8669, %v8711
    %8713 = vdwg.mxu0
    %8714 = vmatprep.subr.bf16.mxu0 %v7226
    %8715 = vmatpush1.bf16.msra.mxu0 %v7225
    %8716 = vmatprep.subr.bf16.mxu0 %v7238
    %8717 = vmatpush1.bf16.msra.mxu0 %v7237
    %8718 = vmatprep.subr.bf16.mxu0 %v7250
    %8719 = vmatpush1.bf16.msra.mxu0 %v7249
    %8720 = vmatprep.subr.bf16.mxu0 %v7262
    %8721 = vmatpush1.bf16.msra.mxu0 %v7261
    %8722 = vmatprep.subr.bf16.mxu0 %v7274
    %8723 = vmatpush1.bf16.msra.mxu0 %v7273
    %8724 = vmatprep.subr.bf16.mxu0 %v7286
    %8725 = vmatpush1.bf16.msra.mxu0 %v7285
    %8726 = vmatprep.subr.bf16.mxu0 %v7298
    %8727 = vmatpush1.bf16.msra.mxu0 %v7297
    %8728 = vmatprep.subr.bf16.mxu0 %v7310
    %8729 = vmatpush1.bf16.msra.mxu0 %v7309
    %8730 = vmatprep.subr.bf16.mxu0 %v7322
    %8731 = vmatpush1.bf16.msra.mxu0 %v7321
    %8732 = vmatprep.subr.bf16.mxu0 %v7334
    %8733 = vmatpush1.bf16.msra.mxu0 %v7333
    %8734 = vmatprep.subr.bf16.mxu0 %v7346
    %8735 = vmatpush1.bf16.msra.mxu0 %v7345
    %8736 = vmatprep.subr.bf16.mxu0 %v7358
    %8737 = vmatpush1.bf16.msra.mxu0 %v7357
    %8738 = vmatprep.subr.bf16.mxu0 %v7370
    %8739 = vmatpush1.bf16.msra.mxu0 %v7369
    %8740 = vmatprep.subr.bf16.mxu0 %v7382
    %8741 = vmatpush1.bf16.msra.mxu0 %v7381
    %8742 = vmatprep.subr.bf16.mxu0 %v7394
    %8743 = vmatpush1.bf16.msra.mxu0 %v7393
    %8744 = vmatprep.subr.bf16.mxu0 %v7406
    %8745 = vmatpush1.bf16.msra.mxu0 %v7405
    %8746 = vmatprep.mubr.bf16.mxu0 %v5102
    %8747 = vmatmul.mubr.bf16.gmra.mrb[0].mxu0 %v5101
    %v8748 = vpop.f32.mrb[0].mxu0
    %v8749 = vadd.f32 %v8706, %v8748
    %v8750 = vpop.f32.mrb[0].mxu0
    %v8751 = vadd.f32 %v8708, %v8750
    %v8752 = vpop.f32.mrb[0].mxu0
    %v8753 = vadd.f32 %v8710, %v8752
    %v8754 = vpop.f32.mrb[0].mxu0
    %v8755 = vadd.f32 %v8712, %v8754
    %8756 = vdwg.mxu0
    %v8757 = vadd.f32 %v8104, %v8495
    %v8758 = vadd.f32 %v8106, %v8497
    %v8759 = vadd.f32 %v8233, %v8624
    %v8760 = vadd.f32 %v8235, %v8626
    %v8761 = vadd.f32 %v8362, %v8753
    %v8762 = vadd.f32 %v8364, %v8755
    %v8763 = vadd.f32 %v8108, %v8491
    %v8764 = vadd.f32 %v8110, %v8493
    %v8765 = vadd.f32 %v8237, %v8620
    %v8766 = vadd.f32 %v8239, %v8622
    %v8767 = vadd.f32 %v8366, %v8749
    %v8768 = vadd.f32 %v8368, %v8751
    %v8769 = vlaneseq
    %v8770 = vshrl.u32 %v8769, 7
    %v8771 = vsub.s32 1, %v8770
    %v8772 = vrot.slane %v164, %v8771
    %v8773 = vlaneseq
    %v8774 = vshrl.u32 %v8773, 7
    %v8775 = vsub.s32 3, %v8774
    %v8776 = vrot.slane %v164, %v8775
    %v8777 = vlaneseq
    %v8778 = vshrl.u32 %v8777, 7
    %v8779 = vsub.s32 5, %v8778
    %v8780 = vrot.slane %v164, %v8779
    %v8781 = vlaneseq
    %v8782 = vshrl.u32 %v8781, 7
    %v8783 = vsub.s32 7, %v8782
    %v8784 = vrot.slane %v164, %v8783
    %v8785 = vlaneseq
    %v8786 = vshrl.u32 %v8785, 7
    %v8787 = vsub.s32 1, %v8786
    %v8788 = vrot.slane %v165, %v8787
    %v8789 = vlaneseq
    %v8790 = vshrl.u32 %v8789, 7
    %v8791 = vsub.s32 3, %v8790
    %v8792 = vrot.slane %v165, %v8791
    %v8799 = vlaneseq
    %v8800 = vshrl.u32 %v8799, 7
    %v8801 = vsub.s32 1, %v8800
    %v8802 = vrot.slane %v8772, %v8801
    %v8803 = vlaneseq
    %v8804 = vshrl.u32 %v8803, 7
    %v8805 = vsub.s32 1, %v8804
    %v8806 = vrot.slane %v8776, %v8805
    %v8807 = vlaneseq
    %v8808 = vshrl.u32 %v8807, 7
    %v8809 = vsub.s32 1, %v8808
    %v8810 = vrot.slane %v8780, %v8809
    %v8811 = vlaneseq
    %v8812 = vshrl.u32 %v8811, 7
    %v8813 = vsub.s32 1, %v8812
    %v8814 = vrot.slane %v8784, %v8813
    %v8815 = vlaneseq
    %v8816 = vshrl.u32 %v8815, 7
    %v8817 = vsub.s32 1, %v8816
    %v8818 = vrot.slane %v8788, %v8817
    %v8819 = vlaneseq
    %v8820 = vshrl.u32 %v8819, 7
    %v8821 = vsub.s32 1, %v8820
    %v8822 = vrot.slane %v8792, %v8821
    %v8823 = vadd.f32 %v8757, %v8802
    %v8824 = vadd.f32 %v8758, %v8806
    %v8825 = vadd.f32 %v8759, %v8810
    %v8826 = vadd.f32 %v8760, %v8814
    %v8827 = vadd.f32 %v8761, %v8818
    %v8828 = vadd.f32 %v8762, %v8822
    %v8829 = vadd.f32 %v8763, %v8802
    %v8830 = vadd.f32 %v8764, %v8806
    %v8831 = vadd.f32 %v8765, %v8810
    %v8832 = vadd.f32 %v8766, %v8814
    %v8833 = vadd.f32 %v8767, %v8818
    %v8834 = vadd.f32 %v8768, %v8822
    %v8835 = vmax.f32 %v8823, 0.0
    %v8836 = vmax.f32 %v8824, 0.0
    %v8837 = vmax.f32 %v8825, 0.0
    %v8838 = vmax.f32 %v8826, 0.0
    %v8839 = vmax.f32 %v8827, 0.0
    %v8840 = vmax.f32 %v8828, 0.0
    %v8841 = vmax.f32 %v8829, 0.0
    %v8842 = vmax.f32 %v8830, 0.0
    %v8843 = vmax.f32 %v8831, 0.0
    %v8844 = vmax.f32 %v8832, 0.0
    %v8845 = vmax.f32 %v8833, 0.0
    %v8846 = vmax.f32 %v8834, 0.0
    %v8847 = vld [vmem:[#allocation7] sm:$0xff]
    %v8848 = vld [vmem:[#allocation7 + $0x10] sm:$0xff]
    %v8849 = vld [vmem:[#allocation7 + $0x20] sm:$0xff]
    %v8850 = vld [vmem:[#allocation7 + $0x30] sm:$0xff]
    %v8851 = vld [vmem:[#allocation7 + $0x40] sm:$0xff]
    %v8852 = vld [vmem:[#allocation7 + $0x50] sm:$0xff]
    %v8853 = vld [vmem:[#allocation7 + $0x60] sm:$0xff]
    %v8854 = vld [vmem:[#allocation7 + $0x70] sm:$0xff]
    %v8855 = vld [vmem:[#allocation7 + $0x80] sm:$0xff]
    %v8856 = vld [vmem:[#allocation7 + $0x90] sm:$0xff]
    %v8857 = vld [vmem:[#allocation7 + $0xa0] sm:$0xff]
    %v8858 = vld [vmem:[#allocation7 + $0xb0] sm:$0xff]
    %v8859 = vld [vmem:[#allocation7 + $0xc0] sm:$0xff]
    %v8860 = vld [vmem:[#allocation7 + $0xd0] sm:$0xff]
    %v8861 = vld [vmem:[#allocation7 + $0xe0] sm:$0xff]
    %v8862 = vld [vmem:[#allocation7 + $0xf0] sm:$0xff]
    %v8863 = vld [vmem:[#allocation7 + $0x100] sm:$0xff]
    %v8864 = vld [vmem:[#allocation7 + $0x110] sm:$0xff]
    %v8865 = vld [vmem:[#allocation7 + $0x120] sm:$0xff]
    %v8866 = vld [vmem:[#allocation7 + $0x130] sm:$0xff]
    %v8867 = vld [vmem:[#allocation7 + $0x140] sm:$0xff]
    %v8868 = vld [vmem:[#allocation7 + $0x150] sm:$0xff]
    %v8869 = vld [vmem:[#allocation7 + $0x160] sm:$0xff]
    %v8870 = vld [vmem:[#allocation7 + $0x170] sm:$0xff]
    %v8871 = vld [vmem:[#allocation7 + $0x180] sm:$0xff]
    %v8872 = vld [vmem:[#allocation7 + $0x190] sm:$0xff]
    %v8873 = vld [vmem:[#allocation7 + $0x1a0] sm:$0xff]
    %v8874 = vld [vmem:[#allocation7 + $0x1b0] sm:$0xff]
    %v8875 = vld [vmem:[#allocation7 + $0x1c0] sm:$0xff]
    %v8876 = vld [vmem:[#allocation7 + $0x1d0] sm:$0xff]
    %v8877 = vld [vmem:[#allocation7 + $0x1e0] sm:$0xff]
    %v8878 = vld [vmem:[#allocation7 + $0x1f0] sm:$0xff]
    %v8879 = vld [vmem:[#allocation7 + $0x200] sm:$0xff]
    %v8880 = vld [vmem:[#allocation7 + $0x210] sm:$0xff]
    %v8881 = vld [vmem:[#allocation7 + $0x220] sm:$0xff]
    %v8882 = vld [vmem:[#allocation7 + $0x230] sm:$0xff]
    %v8883 = vld [vmem:[#allocation7 + $0x240] sm:$0xff]
    %v8884 = vld [vmem:[#allocation7 + $0x250] sm:$0xff]
    %v8885 = vld [vmem:[#allocation7 + $0x260] sm:$0xff]
    %v8886 = vld [vmem:[#allocation7 + $0x270] sm:$0xff]
    %v8887 = vld [vmem:[#allocation7 + $0x280] sm:$0xff]
    %v8888 = vld [vmem:[#allocation7 + $0x290] sm:$0xff]
    %v8889 = vld [vmem:[#allocation7 + $0x2a0] sm:$0xff]
    %v8890 = vld [vmem:[#allocation7 + $0x2b0] sm:$0xff]
    %v8891 = vld [vmem:[#allocation7 + $0x2c0] sm:$0xff]
    %v8892 = vld [vmem:[#allocation7 + $0x2d0] sm:$0xff]
    %v8893 = vld [vmem:[#allocation7 + $0x2e0] sm:$0xff]
    %v8894 = vld [vmem:[#allocation7 + $0x2f0] sm:$0xff]
    %v8895 = vld [vmem:[#allocation7 + $0x300] sm:$0xff]
    %v8896 = vld [vmem:[#allocation7 + $0x310] sm:$0xff]
    %v8897 = vld [vmem:[#allocation7 + $0x320] sm:$0xff]
    %v8898 = vld [vmem:[#allocation7 + $0x330] sm:$0xff]
    %v8899 = vld [vmem:[#allocation7 + $0x340] sm:$0xff]
    %v8900 = vld [vmem:[#allocation7 + $0x350] sm:$0xff]
    %v8901 = vld [vmem:[#allocation7 + $0x360] sm:$0xff]
    %v8902 = vld [vmem:[#allocation7 + $0x370] sm:$0xff]
    %v8903 = vld [vmem:[#allocation7 + $0x380] sm:$0xff]
    %v8904 = vld [vmem:[#allocation7 + $0x390] sm:$0xff]
    %v8905 = vld [vmem:[#allocation7 + $0x3a0] sm:$0xff]
    %v8906 = vld [vmem:[#allocation7 + $0x3b0] sm:$0xff]
    %v8907 = vld [vmem:[#allocation7 + $0x3c0] sm:$0xff]
    %v8908 = vld [vmem:[#allocation7 + $0x3d0] sm:$0xff]
    %v8909 = vld [vmem:[#allocation7 + $0x3e0] sm:$0xff]
    %v8910 = vld [vmem:[#allocation7 + $0x3f0] sm:$0xff]
    %v8911 = vld [vmem:[#allocation7 + $0x400] sm:$0xff]
    %v8912 = vld [vmem:[#allocation7 + $0x410] sm:$0xff]
    %v8913 = vld [vmem:[#allocation7 + $0x420] sm:$0xff]
    %v8914 = vld [vmem:[#allocation7 + $0x430] sm:$0xff]
    %v8915 = vld [vmem:[#allocation7 + $0x440] sm:$0xff]
    %v8916 = vld [vmem:[#allocation7 + $0x450] sm:$0xff]
    %v8917 = vld [vmem:[#allocation7 + $0x460] sm:$0xff]
    %v8918 = vld [vmem:[#allocation7 + $0x470] sm:$0xff]
    %v8919 = vld [vmem:[#allocation7 + $0x480] sm:$0xff]
    %v8920 = vld [vmem:[#allocation7 + $0x490] sm:$0xff]
    %v8921 = vld [vmem:[#allocation7 + $0x4a0] sm:$0xff]
    %v8922 = vld [vmem:[#allocation7 + $0x4b0] sm:$0xff]
    %v8923 = vld [vmem:[#allocation7 + $0x4c0] sm:$0xff]
    %v8924 = vld [vmem:[#allocation7 + $0x4d0] sm:$0xff]
    %v8925 = vld [vmem:[#allocation7 + $0x4e0] sm:$0xff]
    %v8926 = vld [vmem:[#allocation7 + $0x4f0] sm:$0xff]
    %v8927 = vld [vmem:[#allocation7 + $0x500] sm:$0xff]
    %v8928 = vld [vmem:[#allocation7 + $0x510] sm:$0xff]
    %v8929 = vld [vmem:[#allocation7 + $0x520] sm:$0xff]
    %v8930 = vld [vmem:[#allocation7 + $0x530] sm:$0xff]
    %v8931 = vld [vmem:[#allocation7 + $0x540] sm:$0xff]
    %v8932 = vld [vmem:[#allocation7 + $0x550] sm:$0xff]
    %v8933 = vld [vmem:[#allocation7 + $0x560] sm:$0xff]
    %v8934 = vld [vmem:[#allocation7 + $0x570] sm:$0xff]
    %v8935 = vld [vmem:[#allocation7 + $0x580] sm:$0xff]
    %v8936 = vld [vmem:[#allocation7 + $0x590] sm:$0xff]
    %v8937 = vld [vmem:[#allocation7 + $0x5a0] sm:$0xff]
    %v8938 = vld [vmem:[#allocation7 + $0x5b0] sm:$0xff]
    %v8939 = vld [vmem:[#allocation7 + $0x5c0] sm:$0xff]
    %v8940 = vld [vmem:[#allocation7 + $0x5d0] sm:$0xff]
    %v8941 = vld [vmem:[#allocation7 + $0x5e0] sm:$0xff]
    %v8942 = vld [vmem:[#allocation7 + $0x5f0] sm:$0xff]
    %v8943 = vlaneseq
    %v8944 = vshrl.u32 %v8943, 7
    %v8945 = vsub.s32 0, %v8944
    %v8946 = vrot.slane %v166, %v8945
    %v8947 = vlaneseq
    %v8948 = vshrl.u32 %v8947, 7
    %v8949 = vsub.s32 0, %v8948
    %v8950 = vrot.slane %v167, %v8949
    %v8951 = vpack.c.b16 %v751, %v751
    %v8952 = vpack.c.b16 %v752, %v752
    %v8953 = vpack.c.b16 %v753, %v753
    %v8954 = vpack.c.b16 %v754, %v754
    %v8955 = vpack.c.b16 %v755, %v755
    %v8956 = vpack.c.b16 %v756, %v756
    %v9059 = vunpack.c.l.b16 %v8847
    %v9060 = vunpack.c.h.b16 %v8847
    %v9061 = vunpack.c.l.b16 %v8848
    %v9062 = vunpack.c.h.b16 %v8848
    %v9063 = vunpack.c.l.b16 %v8849
    %v9064 = vunpack.c.h.b16 %v8849
    %v9065 = vunpack.c.l.b16 %v8850
    %v9066 = vunpack.c.h.b16 %v8850
    %v9067 = vunpack.c.l.b16 %v8851
    %v9068 = vunpack.c.h.b16 %v8851
    %v9069 = vunpack.c.l.b16 %v8852
    %v9070 = vunpack.c.h.b16 %v8852
    %v9071 = vunpack.c.l.b16 %v8853
    %v9072 = vunpack.c.h.b16 %v8853
    %v9073 = vunpack.c.l.b16 %v8854
    %v9074 = vunpack.c.h.b16 %v8854
    %v9075 = vunpack.c.l.b16 %v8855
    %v9076 = vunpack.c.h.b16 %v8855
    %v9077 = vunpack.c.l.b16 %v8856
    %v9078 = vunpack.c.h.b16 %v8856
    %v9079 = vunpack.c.l.b16 %v8857
    %v9080 = vunpack.c.h.b16 %v8857
    %v9081 = vunpack.c.l.b16 %v8858
    %v9082 = vunpack.c.h.b16 %v8858
    %v9083 = vunpack.c.l.b16 %v8859
    %v9084 = vunpack.c.h.b16 %v8859
    %v9085 = vunpack.c.l.b16 %v8860
    %v9086 = vunpack.c.h.b16 %v8860
    %v9087 = vunpack.c.l.b16 %v8861
    %v9088 = vunpack.c.h.b16 %v8861
    %v9089 = vunpack.c.l.b16 %v8862
    %v9090 = vunpack.c.h.b16 %v8862
    %v9091 = vunpack.c.l.b16 %v8863
    %v9092 = vunpack.c.h.b16 %v8863
    %v9093 = vunpack.c.l.b16 %v8864
    %v9094 = vunpack.c.h.b16 %v8864
    %v9095 = vunpack.c.l.b16 %v8865
    %v9096 = vunpack.c.h.b16 %v8865
    %v9097 = vunpack.c.l.b16 %v8866
    %v9098 = vunpack.c.h.b16 %v8866
    %v9099 = vunpack.c.l.b16 %v8867
    %v9100 = vunpack.c.h.b16 %v8867
    %v9101 = vunpack.c.l.b16 %v8868
    %v9102 = vunpack.c.h.b16 %v8868
    %v9103 = vunpack.c.l.b16 %v8869
    %v9104 = vunpack.c.h.b16 %v8869
    %v9105 = vunpack.c.l.b16 %v8870
    %v9106 = vunpack.c.h.b16 %v8870
    %v9107 = vunpack.c.l.b16 %v8871
    %v9108 = vunpack.c.h.b16 %v8871
    %v9109 = vunpack.c.l.b16 %v8872
    %v9110 = vunpack.c.h.b16 %v8872
    %v9111 = vunpack.c.l.b16 %v8873
    %v9112 = vunpack.c.h.b16 %v8873
    %v9113 = vunpack.c.l.b16 %v8874
    %v9114 = vunpack.c.h.b16 %v8874
    %v9115 = vunpack.c.l.b16 %v8875
    %v9116 = vunpack.c.h.b16 %v8875
    %v9117 = vunpack.c.l.b16 %v8876
    %v9118 = vunpack.c.h.b16 %v8876
    %v9119 = vunpack.c.l.b16 %v8877
    %v9120 = vunpack.c.h.b16 %v8877
    %v9121 = vunpack.c.l.b16 %v8878
    %v9122 = vunpack.c.h.b16 %v8878
    %v9123 = vunpack.c.l.b16 %v8879
    %v9124 = vunpack.c.h.b16 %v8879
    %v9125 = vunpack.c.l.b16 %v8880
    %v9126 = vunpack.c.h.b16 %v8880
    %v9127 = vunpack.c.l.b16 %v8881
    %v9128 = vunpack.c.h.b16 %v8881
    %v9129 = vunpack.c.l.b16 %v8882
    %v9130 = vunpack.c.h.b16 %v8882
    %v9131 = vunpack.c.l.b16 %v8883
    %v9132 = vunpack.c.h.b16 %v8883
    %v9133 = vunpack.c.l.b16 %v8884
    %v9134 = vunpack.c.h.b16 %v8884
    %v9135 = vunpack.c.l.b16 %v8885
    %v9136 = vunpack.c.h.b16 %v8885
    %v9137 = vunpack.c.l.b16 %v8886
    %v9138 = vunpack.c.h.b16 %v8886
    %v9139 = vunpack.c.l.b16 %v8887
    %v9140 = vunpack.c.h.b16 %v8887
    %v9141 = vunpack.c.l.b16 %v8888
    %v9142 = vunpack.c.h.b16 %v8888
    %v9143 = vunpack.c.l.b16 %v8889
    %v9144 = vunpack.c.h.b16 %v8889
    %v9145 = vunpack.c.l.b16 %v8890
    %v9146 = vunpack.c.h.b16 %v8890
    %v9147 = vunpack.c.l.b16 %v8891
    %v9148 = vunpack.c.h.b16 %v8891
    %v9149 = vunpack.c.l.b16 %v8892
    %v9150 = vunpack.c.h.b16 %v8892
    %v9151 = vunpack.c.l.b16 %v8893
    %v9152 = vunpack.c.h.b16 %v8893
    %v9153 = vunpack.c.l.b16 %v8894
    %v9154 = vunpack.c.h.b16 %v8894
    %v9155 = vunpack.c.l.b16 %v8895
    %v9156 = vunpack.c.h.b16 %v8895
    %v9157 = vunpack.c.l.b16 %v8896
    %v9158 = vunpack.c.h.b16 %v8896
    %v9159 = vunpack.c.l.b16 %v8897
    %v9160 = vunpack.c.h.b16 %v8897
    %v9161 = vunpack.c.l.b16 %v8898
    %v9162 = vunpack.c.h.b16 %v8898
    %v9163 = vunpack.c.l.b16 %v8899
    %v9164 = vunpack.c.h.b16 %v8899
    %v9165 = vunpack.c.l.b16 %v8900
    %v9166 = vunpack.c.h.b16 %v8900
    %v9167 = vunpack.c.l.b16 %v8901
    %v9168 = vunpack.c.h.b16 %v8901
    %v9169 = vunpack.c.l.b16 %v8902
    %v9170 = vunpack.c.h.b16 %v8902
    %v9171 = vunpack.c.l.b16 %v8903
    %v9172 = vunpack.c.h.b16 %v8903
    %v9173 = vunpack.c.l.b16 %v8904
    %v9174 = vunpack.c.h.b16 %v8904
    %v9175 = vunpack.c.l.b16 %v8905
    %v9176 = vunpack.c.h.b16 %v8905
    %v9177 = vunpack.c.l.b16 %v8906
    %v9178 = vunpack.c.h.b16 %v8906
    %v9179 = vunpack.c.l.b16 %v8907
    %v9180 = vunpack.c.h.b16 %v8907
    %v9181 = vunpack.c.l.b16 %v8908
    %v9182 = vunpack.c.h.b16 %v8908
    %v9183 = vunpack.c.l.b16 %v8909
    %v9184 = vunpack.c.h.b16 %v8909
    %v9185 = vunpack.c.l.b16 %v8910
    %v9186 = vunpack.c.h.b16 %v8910
    %v9187 = vunpack.c.l.b16 %v8911
    %v9188 = vunpack.c.h.b16 %v8911
    %v9189 = vunpack.c.l.b16 %v8912
    %v9190 = vunpack.c.h.b16 %v8912
    %v9191 = vunpack.c.l.b16 %v8913
    %v9192 = vunpack.c.h.b16 %v8913
    %v9193 = vunpack.c.l.b16 %v8914
    %v9194 = vunpack.c.h.b16 %v8914
    %v9195 = vunpack.c.l.b16 %v8915
    %v9196 = vunpack.c.h.b16 %v8915
    %v9197 = vunpack.c.l.b16 %v8916
    %v9198 = vunpack.c.h.b16 %v8916
    %v9199 = vunpack.c.l.b16 %v8917
    %v9200 = vunpack.c.h.b16 %v8917
    %v9201 = vunpack.c.l.b16 %v8918
    %v9202 = vunpack.c.h.b16 %v8918
    %v9203 = vunpack.c.l.b16 %v8919
    %v9204 = vunpack.c.h.b16 %v8919
    %v9205 = vunpack.c.l.b16 %v8920
    %v9206 = vunpack.c.h.b16 %v8920
    %v9207 = vunpack.c.l.b16 %v8921
    %v9208 = vunpack.c.h.b16 %v8921
    %v9209 = vunpack.c.l.b16 %v8922
    %v9210 = vunpack.c.h.b16 %v8922
    %v9211 = vunpack.c.l.b16 %v8923
    %v9212 = vunpack.c.h.b16 %v8923
    %v9213 = vunpack.c.l.b16 %v8924
    %v9214 = vunpack.c.h.b16 %v8924
    %v9215 = vunpack.c.l.b16 %v8925
    %v9216 = vunpack.c.h.b16 %v8925
    %v9217 = vunpack.c.l.b16 %v8926
    %v9218 = vunpack.c.h.b16 %v8926
    %v9219 = vunpack.c.l.b16 %v8927
    %v9220 = vunpack.c.h.b16 %v8927
    %v9221 = vunpack.c.l.b16 %v8928
    %v9222 = vunpack.c.h.b16 %v8928
    %v9223 = vunpack.c.l.b16 %v8929
    %v9224 = vunpack.c.h.b16 %v8929
    %v9225 = vunpack.c.l.b16 %v8930
    %v9226 = vunpack.c.h.b16 %v8930
    %v9227 = vunpack.c.l.b16 %v8931
    %v9228 = vunpack.c.h.b16 %v8931
    %v9229 = vunpack.c.l.b16 %v8932
    %v9230 = vunpack.c.h.b16 %v8932
    %v9231 = vunpack.c.l.b16 %v8933
    %v9232 = vunpack.c.h.b16 %v8933
    %v9233 = vunpack.c.l.b16 %v8934
    %v9234 = vunpack.c.h.b16 %v8934
    %v9235 = vunpack.c.l.b16 %v8935
    %v9236 = vunpack.c.h.b16 %v8935
    %v9237 = vunpack.c.l.b16 %v8936
    %v9238 = vunpack.c.h.b16 %v8936
    %v9239 = vunpack.c.l.b16 %v8937
    %v9240 = vunpack.c.h.b16 %v8937
    %v9241 = vunpack.c.l.b16 %v8938
    %v9242 = vunpack.c.h.b16 %v8938
    %v9243 = vunpack.c.l.b16 %v8939
    %v9244 = vunpack.c.h.b16 %v8939
    %v9245 = vunpack.c.l.b16 %v8940
    %v9246 = vunpack.c.h.b16 %v8940
    %v9247 = vunpack.c.l.b16 %v8941
    %v9248 = vunpack.c.h.b16 %v8941
    %v9249 = vunpack.c.l.b16 %v8942
    %v9250 = vunpack.c.h.b16 %v8942
    %v9251 = vpack.c.b16 %v9061, %v9059
    %v9252 = vpack.c.b16 %v9062, %v9060
    %v9253 = vpack.c.b16 %v9065, %v9063
    %v9254 = vpack.c.b16 %v9066, %v9064
    %v9255 = vpack.c.b16 %v9069, %v9067
    %v9256 = vpack.c.b16 %v9070, %v9068
    %v9257 = vpack.c.b16 %v9073, %v9071
    %v9258 = vpack.c.b16 %v9074, %v9072
    %v9259 = vpack.c.b16 %v9077, %v9075
    %v9260 = vpack.c.b16 %v9078, %v9076
    %v9261 = vpack.c.b16 %v9081, %v9079
    %v9262 = vpack.c.b16 %v9082, %v9080
    %v9263 = vpack.c.b16 %v9085, %v9083
    %v9264 = vpack.c.b16 %v9086, %v9084
    %v9265 = vpack.c.b16 %v9089, %v9087
    %v9266 = vpack.c.b16 %v9090, %v9088
    %v9267 = vpack.c.b16 %v9093, %v9091
    %v9268 = vpack.c.b16 %v9094, %v9092
    %v9269 = vpack.c.b16 %v9097, %v9095
    %v9270 = vpack.c.b16 %v9098, %v9096
    %v9271 = vpack.c.b16 %v9101, %v9099
    %v9272 = vpack.c.b16 %v9102, %v9100
    %v9273 = vpack.c.b16 %v9105, %v9103
    %v9274 = vpack.c.b16 %v9106, %v9104
    %v9275 = vpack.c.b16 %v9109, %v9107
    %v9276 = vpack.c.b16 %v9110, %v9108
    %v9277 = vpack.c.b16 %v9113, %v9111
    %v9278 = vpack.c.b16 %v9114, %v9112
    %v9279 = vpack.c.b16 %v9117, %v9115
    %v9280 = vpack.c.b16 %v9118, %v9116
    %v9281 = vpack.c.b16 %v9121, %v9119
    %v9282 = vpack.c.b16 %v9122, %v9120
    %v9283 = vpack.c.b16 %v9125, %v9123
    %v9284 = vpack.c.b16 %v9126, %v9124
    %v9285 = vpack.c.b16 %v9129, %v9127
    %v9286 = vpack.c.b16 %v9130, %v9128
    %v9287 = vpack.c.b16 %v9133, %v9131
    %v9288 = vpack.c.b16 %v9134, %v9132
    %v9289 = vpack.c.b16 %v9137, %v9135
    %v9290 = vpack.c.b16 %v9138, %v9136
    %v9291 = vpack.c.b16 %v9141, %v9139
    %v9292 = vpack.c.b16 %v9142, %v9140
    %v9293 = vpack.c.b16 %v9145, %v9143
    %v9294 = vpack.c.b16 %v9146, %v9144
    %v9295 = vpack.c.b16 %v9149, %v9147
    %v9296 = vpack.c.b16 %v9150, %v9148
    %v9297 = vpack.c.b16 %v9153, %v9151
    %v9298 = vpack.c.b16 %v9154, %v9152
    %v9299 = vpack.c.b16 %v9157, %v9155
    %v9300 = vpack.c.b16 %v9158, %v9156
    %v9301 = vpack.c.b16 %v9161, %v9159
    %v9302 = vpack.c.b16 %v9162, %v9160
    %v9303 = vpack.c.b16 %v9165, %v9163
    %v9304 = vpack.c.b16 %v9166, %v9164
    %v9305 = vpack.c.b16 %v9169, %v9167
    %v9306 = vpack.c.b16 %v9170, %v9168
    %v9307 = vpack.c.b16 %v9173, %v9171
    %v9308 = vpack.c.b16 %v9174, %v9172
    %v9309 = vpack.c.b16 %v9177, %v9175
    %v9310 = vpack.c.b16 %v9178, %v9176
    %v9311 = vpack.c.b16 %v9181, %v9179
    %v9312 = vpack.c.b16 %v9182, %v9180
    %v9313 = vpack.c.b16 %v9185, %v9183
    %v9314 = vpack.c.b16 %v9186, %v9184
    %v9315 = vpack.c.b16 %v9189, %v9187
    %v9316 = vpack.c.b16 %v9190, %v9188
    %v9317 = vpack.c.b16 %v9193, %v9191
    %v9318 = vpack.c.b16 %v9194, %v9192
    %v9319 = vpack.c.b16 %v9197, %v9195
    %v9320 = vpack.c.b16 %v9198, %v9196
    %v9321 = vpack.c.b16 %v9201, %v9199
    %v9322 = vpack.c.b16 %v9202, %v9200
    %v9323 = vpack.c.b16 %v9205, %v9203
    %v9324 = vpack.c.b16 %v9206, %v9204
    %v9325 = vpack.c.b16 %v9209, %v9207
    %v9326 = vpack.c.b16 %v9210, %v9208
    %v9327 = vpack.c.b16 %v9213, %v9211
    %v9328 = vpack.c.b16 %v9214, %v9212
    %v9329 = vpack.c.b16 %v9217, %v9215
    %v9330 = vpack.c.b16 %v9218, %v9216
    %v9331 = vpack.c.b16 %v9221, %v9219
    %v9332 = vpack.c.b16 %v9222, %v9220
    %v9333 = vpack.c.b16 %v9225, %v9223
    %v9334 = vpack.c.b16 %v9226, %v9224
    %v9335 = vpack.c.b16 %v9229, %v9227
    %v9336 = vpack.c.b16 %v9230, %v9228
    %v9337 = vpack.c.b16 %v9233, %v9231
    %v9338 = vpack.c.b16 %v9234, %v9232
    %v9339 = vpack.c.b16 %v9237, %v9235
    %v9340 = vpack.c.b16 %v9238, %v9236
    %v9341 = vpack.c.b16 %v9241, %v9239
    %v9342 = vpack.c.b16 %v9242, %v9240
    %v9343 = vpack.c.b16 %v9245, %v9243
    %v9344 = vpack.c.b16 %v9246, %v9244
    %v9345 = vpack.c.b16 %v9249, %v9247
    %v9346 = vpack.c.b16 %v9250, %v9248
    %9443 = vmatprep.subr.bf16.mxu0 %v9252
    %9444 = vmatpush1.bf16.msra.mxu0 %v9251
    %9445 = vmatprep.subr.bf16.mxu0 %v9254
    %9446 = vmatpush1.bf16.msra.mxu0 %v9253
    %9447 = vmatprep.subr.bf16.mxu0 %v9256
    %9448 = vmatpush1.bf16.msra.mxu0 %v9255
    %9449 = vmatprep.subr.bf16.mxu0 %v9258
    %9450 = vmatpush1.bf16.msra.mxu0 %v9257
    %9451 = vmatprep.subr.bf16.mxu0 %v9260
    %9452 = vmatpush1.bf16.msra.mxu0 %v9259
    %9453 = vmatprep.subr.bf16.mxu0 %v9262
    %9454 = vmatpush1.bf16.msra.mxu0 %v9261
    %9455 = vmatprep.subr.bf16.mxu0 %v9264
    %9456 = vmatpush1.bf16.msra.mxu0 %v9263
    %9457 = vmatprep.subr.bf16.mxu0 %v9266
    %9458 = vmatpush1.bf16.msra.mxu0 %v9265
    %9459 = vmatprep.subr.bf16.mxu0 %v9268
    %9460 = vmatpush1.bf16.msra.mxu0 %v9267
    %9461 = vmatprep.subr.bf16.mxu0 %v9270
    %9462 = vmatpush1.bf16.msra.mxu0 %v9269
    %9463 = vmatprep.subr.bf16.mxu0 %v9272
    %9464 = vmatpush1.bf16.msra.mxu0 %v9271
    %9465 = vmatprep.subr.bf16.mxu0 %v9274
    %9466 = vmatpush1.bf16.msra.mxu0 %v9273
    %9467 = vmatprep.subr.bf16.mxu0 %v9276
    %9468 = vmatpush1.bf16.msra.mxu0 %v9275
    %9469 = vmatprep.subr.bf16.mxu0 %v9278
    %9470 = vmatpush1.bf16.msra.mxu0 %v9277
    %9471 = vmatprep.subr.bf16.mxu0 %v9280
    %9472 = vmatpush1.bf16.msra.mxu0 %v9279
    %9473 = vmatprep.subr.bf16.mxu0 %v9282
    %9474 = vmatpush1.bf16.msra.mxu0 %v9281
    %9475 = vmatprep.mubr.bf16.mxu0 %v8952
    %9476 = vmatmul.mubr.bf16.gmra.mrb[0].mxu0 %v8951
    %v9477 = vpop.f32.mrb[0].mxu0
    %v9478 = vadd.f32 %v8946, %v9477
    %v9479 = vpop.f32.mrb[0].mxu0
    %v9480 = vadd.f32 %v8950, %v9479
    %v9481 = vpop.f32.mrb[0].mxu0
    %v9482 = vpop.f32.mrb[0].mxu0
    %9483 = vdwg.mxu0
    %9484 = vmatprep.subr.bf16.mxu0 %v9284
    %9485 = vmatpush1.bf16.msra.mxu0 %v9283
    %9486 = vmatprep.subr.bf16.mxu0 %v9286
    %9487 = vmatpush1.bf16.msra.mxu0 %v9285
    %9488 = vmatprep.subr.bf16.mxu0 %v9288
    %9489 = vmatpush1.bf16.msra.mxu0 %v9287
    %9490 = vmatprep.subr.bf16.mxu0 %v9290
    %9491 = vmatpush1.bf16.msra.mxu0 %v9289
    %9492 = vmatprep.subr.bf16.mxu0 %v9292
    %9493 = vmatpush1.bf16.msra.mxu0 %v9291
    %9494 = vmatprep.subr.bf16.mxu0 %v9294
    %9495 = vmatpush1.bf16.msra.mxu0 %v9293
    %9496 = vmatprep.subr.bf16.mxu0 %v9296
    %9497 = vmatpush1.bf16.msra.mxu0 %v9295
    %9498 = vmatprep.subr.bf16.mxu0 %v9298
    %9499 = vmatpush1.bf16.msra.mxu0 %v9297
    %9500 = vmatprep.subr.bf16.mxu0 %v9300
    %9501 = vmatpush1.bf16.msra.mxu0 %v9299
    %9502 = vmatprep.subr.bf16.mxu0 %v9302
    %9503 = vmatpush1.bf16.msra.mxu0 %v9301
    %9504 = vmatprep.subr.bf16.mxu0 %v9304
    %9505 = vmatpush1.bf16.msra.mxu0 %v9303
    %9506 = vmatprep.subr.bf16.mxu0 %v9306
    %9507 = vmatpush1.bf16.msra.mxu0 %v9305
    %9508 = vmatprep.subr.bf16.mxu0 %v9308
    %9509 = vmatpush1.bf16.msra.mxu0 %v9307
    %9510 = vmatprep.subr.bf16.mxu0 %v9310
    %9511 = vmatpush1.bf16.msra.mxu0 %v9309
    %9512 = vmatprep.subr.bf16.mxu0 %v9312
    %9513 = vmatpush1.bf16.msra.mxu0 %v9311
    %9514 = vmatprep.subr.bf16.mxu0 %v9314
    %9515 = vmatpush1.bf16.msra.mxu0 %v9313
    %9516 = vmatprep.mubr.bf16.mxu0 %v8954
    %9517 = vmatmul.mubr.bf16.gmra.mrb[0].mxu0 %v8953
    %v9518 = vpop.f32.mrb[0].mxu0
    %v9519 = vadd.f32 %v9478, %v9518
    %v9520 = vpop.f32.mrb[0].mxu0
    %v9521 = vadd.f32 %v9480, %v9520
    %v9522 = vpop.f32.mrb[0].mxu0
    %v9523 = vpop.f32.mrb[0].mxu0
    %9524 = vdwg.mxu0
    %9525 = vmatprep.subr.bf16.mxu0 %v9316
    %9526 = vmatpush1.bf16.msra.mxu0 %v9315
    %9527 = vmatprep.subr.bf16.mxu0 %v9318
    %9528 = vmatpush1.bf16.msra.mxu0 %v9317
    %9529 = vmatprep.subr.bf16.mxu0 %v9320
    %9530 = vmatpush1.bf16.msra.mxu0 %v9319
    %9531 = vmatprep.subr.bf16.mxu0 %v9322
    %9532 = vmatpush1.bf16.msra.mxu0 %v9321
    %9533 = vmatprep.subr.bf16.mxu0 %v9324
    %9534 = vmatpush1.bf16.msra.mxu0 %v9323
    %9535 = vmatprep.subr.bf16.mxu0 %v9326
    %9536 = vmatpush1.bf16.msra.mxu0 %v9325
    %9537 = vmatprep.subr.bf16.mxu0 %v9328
    %9538 = vmatpush1.bf16.msra.mxu0 %v9327
    %9539 = vmatprep.subr.bf16.mxu0 %v9330
    %9540 = vmatpush1.bf16.msra.mxu0 %v9329
    %9541 = vmatprep.subr.bf16.mxu0 %v9332
    %9542 = vmatpush1.bf16.msra.mxu0 %v9331
    %9543 = vmatprep.subr.bf16.mxu0 %v9334
    %9544 = vmatpush1.bf16.msra.mxu0 %v9333
    %9545 = vmatprep.subr.bf16.mxu0 %v9336
    %9546 = vmatpush1.bf16.msra.mxu0 %v9335
    %9547 = vmatprep.subr.bf16.mxu0 %v9338
    %9548 = vmatpush1.bf16.msra.mxu0 %v9337
    %9549 = vmatprep.subr.bf16.mxu0 %v9340
    %9550 = vmatpush1.bf16.msra.mxu0 %v9339
    %9551 = vmatprep.subr.bf16.mxu0 %v9342
    %9552 = vmatpush1.bf16.msra.mxu0 %v9341
    %9553 = vmatprep.subr.bf16.mxu0 %v9344
    %9554 = vmatpush1.bf16.msra.mxu0 %v9343
    %9555 = vmatprep.subr.bf16.mxu0 %v9346
    %9556 = vmatpush1.bf16.msra.mxu0 %v9345
    %9557 = vmatprep.mubr.bf16.mxu0 %v8956
    %9558 = vmatmul.mubr.bf16.gmra.mrb[0].mxu0 %v8955
    %v9559 = vpop.f32.mrb[0].mxu0
    %v9560 = vadd.f32 %v9519, %v9559
    %v9561 = vpop.f32.mrb[0].mxu0
    %v9562 = vadd.f32 %v9521, %v9561
    %v9563 = vpop.f32.mrb[0].mxu0
    %v9564 = vpop.f32.mrb[0].mxu0
    %9565 = vdwg.mxu0
    %v9566 = vmax.f32 %v9560, 0.0
    %v9567 = vmax.f32 %v9562, 0.0
    %v9568 = vld [vmem:[#allocation7 + $0x8] sm:$0xff]
    %v9569 = vld [vmem:[#allocation7 + $0x18] sm:$0xff]
    %v9570 = vld [vmem:[#allocation7 + $0x28] sm:$0xff]
    %v9571 = vld [vmem:[#allocation7 + $0x38] sm:$0xff]
    %v9572 = vld [vmem:[#allocation7 + $0x48] sm:$0xff]
    %v9573 = vld [vmem:[#allocation7 + $0x58] sm:$0xff]
    %v9574 = vld [vmem:[#allocation7 + $0x68] sm:$0xff]
    %v9575 = vld [vmem:[#allocation7 + $0x78] sm:$0xff]
    %v9576 = vld [vmem:[#allocation7 + $0x88] sm:$0xff]
    %v9577 = vld [vmem:[#allocation7 + $0x98] sm:$0xff]
    %v9578 = vld [vmem:[#allocation7 + $0xa8] sm:$0xff]
    %v9579 = vld [vmem:[#allocation7 + $0xb8] sm:$0xff]
    %v9580 = vld [vmem:[#allocation7 + $0xc8] sm:$0xff]
    %v9581 = vld [vmem:[#allocation7 + $0xd8] sm:$0xff]
    %v9582 = vld [vmem:[#allocation7 + $0xe8] sm:$0xff]
    %v9583 = vld [vmem:[#allocation7 + $0xf8] sm:$0xff]
    %v9584 = vld [vmem:[#allocation7 + $0x108] sm:$0xff]
    %v9585 = vld [vmem:[#allocation7 + $0x118] sm:$0xff]
    %v9586 = vld [vmem:[#allocation7 + $0x128] sm:$0xff]
    %v9587 = vld [vmem:[#allocation7 + $0x138] sm:$0xff]
    %v9588 = vld [vmem:[#allocation7 + $0x148] sm:$0xff]
    %v9589 = vld [vmem:[#allocation7 + $0x158] sm:$0xff]
    %v9590 = vld [vmem:[#allocation7 + $0x168] sm:$0xff]
    %v9591 = vld [vmem:[#allocation7 + $0x178] sm:$0xff]
    %v9592 = vld [vmem:[#allocation7 + $0x188] sm:$0xff]
    %v9593 = vld [vmem:[#allocation7 + $0x198] sm:$0xff]
    %v9594 = vld [vmem:[#allocation7 + $0x1a8] sm:$0xff]
    %v9595 = vld [vmem:[#allocation7 + $0x1b8] sm:$0xff]
    %v9596 = vld [vmem:[#allocation7 + $0x1c8] sm:$0xff]
    %v9597 = vld [vmem:[#allocation7 + $0x1d8] sm:$0xff]
    %v9598 = vld [vmem:[#allocation7 + $0x1e8] sm:$0xff]
    %v9599 = vld [vmem:[#allocation7 + $0x1f8] sm:$0xff]
    %v9600 = vld [vmem:[#allocation7 + $0x208] sm:$0xff]
    %v9601 = vld [vmem:[#allocation7 + $0x218] sm:$0xff]
    %v9602 = vld [vmem:[#allocation7 + $0x228] sm:$0xff]
    %v9603 = vld [vmem:[#allocation7 + $0x238] sm:$0xff]
    %v9604 = vld [vmem:[#allocation7 + $0x248] sm:$0xff]
    %v9605 = vld [vmem:[#allocation7 + $0x258] sm:$0xff]
    %v9606 = vld [vmem:[#allocation7 + $0x268] sm:$0xff]
    %v9607 = vld [vmem:[#allocation7 + $0x278] sm:$0xff]
    %v9608 = vld [vmem:[#allocation7 + $0x288] sm:$0xff]
    %v9609 = vld [vmem:[#allocation7 + $0x298] sm:$0xff]
    %v9610 = vld [vmem:[#allocation7 + $0x2a8] sm:$0xff]
    %v9611 = vld [vmem:[#allocation7 + $0x2b8] sm:$0xff]
    %v9612 = vld [vmem:[#allocation7 + $0x2c8] sm:$0xff]
    %v9613 = vld [vmem:[#allocation7 + $0x2d8] sm:$0xff]
    %v9614 = vld [vmem:[#allocation7 + $0x2e8] sm:$0xff]
    %v9615 = vld [vmem:[#allocation7 + $0x2f8] sm:$0xff]
    %v9616 = vld [vmem:[#allocation7 + $0x308] sm:$0xff]
    %v9617 = vld [vmem:[#allocation7 + $0x318] sm:$0xff]
    %v9618 = vld [vmem:[#allocation7 + $0x328] sm:$0xff]
    %v9619 = vld [vmem:[#allocation7 + $0x338] sm:$0xff]
    %v9620 = vld [vmem:[#allocation7 + $0x348] sm:$0xff]
    %v9621 = vld [vmem:[#allocation7 + $0x358] sm:$0xff]
    %v9622 = vld [vmem:[#allocation7 + $0x368] sm:$0xff]
    %v9623 = vld [vmem:[#allocation7 + $0x378] sm:$0xff]
    %v9624 = vld [vmem:[#allocation7 + $0x388] sm:$0xff]
    %v9625 = vld [vmem:[#allocation7 + $0x398] sm:$0xff]
    %v9626 = vld [vmem:[#allocation7 + $0x3a8] sm:$0xff]
    %v9627 = vld [vmem:[#allocation7 + $0x3b8] sm:$0xff]
    %v9628 = vld [vmem:[#allocation7 + $0x3c8] sm:$0xff]
    %v9629 = vld [vmem:[#allocation7 + $0x3d8] sm:$0xff]
    %v9630 = vld [vmem:[#allocation7 + $0x3e8] sm:$0xff]
    %v9631 = vld [vmem:[#allocation7 + $0x3f8] sm:$0xff]
    %v9632 = vld [vmem:[#allocation7 + $0x408] sm:$0xff]
    %v9633 = vld [vmem:[#allocation7 + $0x418] sm:$0xff]
    %v9634 = vld [vmem:[#allocation7 + $0x428] sm:$0xff]
    %v9635 = vld [vmem:[#allocation7 + $0x438] sm:$0xff]
    %v9636 = vld [vmem:[#allocation7 + $0x448] sm:$0xff]
    %v9637 = vld [vmem:[#allocation7 + $0x458] sm:$0xff]
    %v9638 = vld [vmem:[#allocation7 + $0x468] sm:$0xff]
    %v9639 = vld [vmem:[#allocation7 + $0x478] sm:$0xff]
    %v9640 = vld [vmem:[#allocation7 + $0x488] sm:$0xff]
    %v9641 = vld [vmem:[#allocation7 + $0x498] sm:$0xff]
    %v9642 = vld [vmem:[#allocation7 + $0x4a8] sm:$0xff]
    %v9643 = vld [vmem:[#allocation7 + $0x4b8] sm:$0xff]
    %v9644 = vld [vmem:[#allocation7 + $0x4c8] sm:$0xff]
    %v9645 = vld [vmem:[#allocation7 + $0x4d8] sm:$0xff]
    %v9646 = vld [vmem:[#allocation7 + $0x4e8] sm:$0xff]
    %v9647 = vld [vmem:[#allocation7 + $0x4f8] sm:$0xff]
    %v9648 = vld [vmem:[#allocation7 + $0x508] sm:$0xff]
    %v9649 = vld [vmem:[#allocation7 + $0x518] sm:$0xff]
    %v9650 = vld [vmem:[#allocation7 + $0x528] sm:$0xff]
    %v9651 = vld [vmem:[#allocation7 + $0x538] sm:$0xff]
    %v9652 = vld [vmem:[#allocation7 + $0x548] sm:$0xff]
    %v9653 = vld [vmem:[#allocation7 + $0x558] sm:$0xff]
    %v9654 = vld [vmem:[#allocation7 + $0x568] sm:$0xff]
    %v9655 = vld [vmem:[#allocation7 + $0x578] sm:$0xff]
    %v9656 = vld [vmem:[#allocation7 + $0x588] sm:$0xff]
    %v9657 = vld [vmem:[#allocation7 + $0x598] sm:$0xff]
    %v9658 = vld [vmem:[#allocation7 + $0x5a8] sm:$0xff]
    %v9659 = vld [vmem:[#allocation7 + $0x5b8] sm:$0xff]
    %v9660 = vld [vmem:[#allocation7 + $0x5c8] sm:$0xff]
    %v9661 = vld [vmem:[#allocation7 + $0x5d8] sm:$0xff]
    %v9662 = vld [vmem:[#allocation7 + $0x5e8] sm:$0xff]
    %v9663 = vld [vmem:[#allocation7 + $0x5f8] sm:$0xff]
    %v9664 = vlaneseq
    %v9665 = vshrl.u32 %v9664, 7
    %v9666 = vsub.s32 4, %v9665
    %v9667 = vrot.slane %v166, %v9666
    %v9668 = vlaneseq
    %v9669 = vshrl.u32 %v9668, 7
    %v9670 = vsub.s32 4, %v9669
    %v9671 = vrot.slane %v167, %v9670
    %v9672 = vpack.c.b16 %v757, %v757
    %v9673 = vpack.c.b16 %v758, %v758
    %v9674 = vpack.c.b16 %v759, %v759
    %v9675 = vpack.c.b16 %v760, %v760
    %v9676 = vpack.c.b16 %v761, %v761
    %v9677 = vpack.c.b16 %v762, %v762
    %v9780 = vunpack.c.l.b16 %v9568
    %v9781 = vunpack.c.h.b16 %v9568
    %v9782 = vunpack.c.l.b16 %v9569
    %v9783 = vunpack.c.h.b16 %v9569
    %v9784 = vunpack.c.l.b16 %v9570
    %v9785 = vunpack.c.h.b16 %v9570
    %v9786 = vunpack.c.l.b16 %v9571
    %v9787 = vunpack.c.h.b16 %v9571
    %v9788 = vunpack.c.l.b16 %v9572
    %v9789 = vunpack.c.h.b16 %v9572
    %v9790 = vunpack.c.l.b16 %v9573
    %v9791 = vunpack.c.h.b16 %v9573
    %v9792 = vunpack.c.l.b16 %v9574
    %v9793 = vunpack.c.h.b16 %v9574
    %v9794 = vunpack.c.l.b16 %v9575
    %v9795 = vunpack.c.h.b16 %v9575
    %v9796 = vunpack.c.l.b16 %v9576
    %v9797 = vunpack.c.h.b16 %v9576
    %v9798 = vunpack.c.l.b16 %v9577
    %v9799 = vunpack.c.h.b16 %v9577
    %v9800 = vunpack.c.l.b16 %v9578
    %v9801 = vunpack.c.h.b16 %v9578
    %v9802 = vunpack.c.l.b16 %v9579
    %v9803 = vunpack.c.h.b16 %v9579
    %v9804 = vunpack.c.l.b16 %v9580
    %v9805 = vunpack.c.h.b16 %v9580
    %v9806 = vunpack.c.l.b16 %v9581
    %v9807 = vunpack.c.h.b16 %v9581
    %v9808 = vunpack.c.l.b16 %v9582
    %v9809 = vunpack.c.h.b16 %v9582
    %v9810 = vunpack.c.l.b16 %v9583
    %v9811 = vunpack.c.h.b16 %v9583
    %v9812 = vunpack.c.l.b16 %v9584
    %v9813 = vunpack.c.h.b16 %v9584
    %v9814 = vunpack.c.l.b16 %v9585
    %v9815 = vunpack.c.h.b16 %v9585
    %v9816 = vunpack.c.l.b16 %v9586
    %v9817 = vunpack.c.h.b16 %v9586
    %v9818 = vunpack.c.l.b16 %v9587
    %v9819 = vunpack.c.h.b16 %v9587
    %v9820 = vunpack.c.l.b16 %v9588
    %v9821 = vunpack.c.h.b16 %v9588
    %v9822 = vunpack.c.l.b16 %v9589
    %v9823 = vunpack.c.h.b16 %v9589
    %v9824 = vunpack.c.l.b16 %v9590
    %v9825 = vunpack.c.h.b16 %v9590
    %v9826 = vunpack.c.l.b16 %v9591
    %v9827 = vunpack.c.h.b16 %v9591
    %v9828 = vunpack.c.l.b16 %v9592
    %v9829 = vunpack.c.h.b16 %v9592
    %v9830 = vunpack.c.l.b16 %v9593
    %v9831 = vunpack.c.h.b16 %v9593
    %v9832 = vunpack.c.l.b16 %v9594
    %v9833 = vunpack.c.h.b16 %v9594
    %v9834 = vunpack.c.l.b16 %v9595
    %v9835 = vunpack.c.h.b16 %v9595
    %v9836 = vunpack.c.l.b16 %v9596
    %v9837 = vunpack.c.h.b16 %v9596
    %v9838 = vunpack.c.l.b16 %v9597
    %v9839 = vunpack.c.h.b16 %v9597
    %v9840 = vunpack.c.l.b16 %v9598
    %v9841 = vunpack.c.h.b16 %v9598
    %v9842 = vunpack.c.l.b16 %v9599
    %v9843 = vunpack.c.h.b16 %v9599
    %v9844 = vunpack.c.l.b16 %v9600
    %v9845 = vunpack.c.h.b16 %v9600
    %v9846 = vunpack.c.l.b16 %v9601
    %v9847 = vunpack.c.h.b16 %v9601
    %v9848 = vunpack.c.l.b16 %v9602
    %v9849 = vunpack.c.h.b16 %v9602
    %v9850 = vunpack.c.l.b16 %v9603
    %v9851 = vunpack.c.h.b16 %v9603
    %v9852 = vunpack.c.l.b16 %v9604
    %v9853 = vunpack.c.h.b16 %v9604
    %v9854 = vunpack.c.l.b16 %v9605
    %v9855 = vunpack.c.h.b16 %v9605
    %v9856 = vunpack.c.l.b16 %v9606
    %v9857 = vunpack.c.h.b16 %v9606
    %v9858 = vunpack.c.l.b16 %v9607
    %v9859 = vunpack.c.h.b16 %v9607
    %v9860 = vunpack.c.l.b16 %v9608
    %v9861 = vunpack.c.h.b16 %v9608
    %v9862 = vunpack.c.l.b16 %v9609
    %v9863 = vunpack.c.h.b16 %v9609
    %v9864 = vunpack.c.l.b16 %v9610
    %v9865 = vunpack.c.h.b16 %v9610
    %v9866 = vunpack.c.l.b16 %v9611
    %v9867 = vunpack.c.h.b16 %v9611
    %v9868 = vunpack.c.l.b16 %v9612
    %v9869 = vunpack.c.h.b16 %v9612
    %v9870 = vunpack.c.l.b16 %v9613
    %v9871 = vunpack.c.h.b16 %v9613
    %v9872 = vunpack.c.l.b16 %v9614
    %v9873 = vunpack.c.h.b16 %v9614
    %v9874 = vunpack.c.l.b16 %v9615
    %v9875 = vunpack.c.h.b16 %v9615
    %v9876 = vunpack.c.l.b16 %v9616
    %v9877 = vunpack.c.h.b16 %v9616
    %v9878 = vunpack.c.l.b16 %v9617
    %v9879 = vunpack.c.h.b16 %v9617
    %v9880 = vunpack.c.l.b16 %v9618
    %v9881 = vunpack.c.h.b16 %v9618
    %v9882 = vunpack.c.l.b16 %v9619
    %v9883 = vunpack.c.h.b16 %v9619
    %v9884 = vunpack.c.l.b16 %v9620
    %v9885 = vunpack.c.h.b16 %v9620
    %v9886 = vunpack.c.l.b16 %v9621
    %v9887 = vunpack.c.h.b16 %v9621
    %v9888 = vunpack.c.l.b16 %v9622
    %v9889 = vunpack.c.h.b16 %v9622
    %v9890 = vunpack.c.l.b16 %v9623
    %v9891 = vunpack.c.h.b16 %v9623
    %v9892 = vunpack.c.l.b16 %v9624
    %v9893 = vunpack.c.h.b16 %v9624
    %v9894 = vunpack.c.l.b16 %v9625
    %v9895 = vunpack.c.h.b16 %v9625
    %v9896 = vunpack.c.l.b16 %v9626
    %v9897 = vunpack.c.h.b16 %v9626
    %v9898 = vunpack.c.l.b16 %v9627
    %v9899 = vunpack.c.h.b16 %v9627
    %v9900 = vunpack.c.l.b16 %v9628
    %v9901 = vunpack.c.h.b16 %v9628
    %v9902 = vunpack.c.l.b16 %v9629
    %v9903 = vunpack.c.h.b16 %v9629
    %v9904 = vunpack.c.l.b16 %v9630
    %v9905 = vunpack.c.h.b16 %v9630
    %v9906 = vunpack.c.l.b16 %v9631
    %v9907 = vunpack.c.h.b16 %v9631
    %v9908 = vunpack.c.l.b16 %v9632
    %v9909 = vunpack.c.h.b16 %v9632
    %v9910 = vunpack.c.l.b16 %v9633
    %v9911 = vunpack.c.h.b16 %v9633
    %v9912 = vunpack.c.l.b16 %v9634
    %v9913 = vunpack.c.h.b16 %v9634
    %v9914 = vunpack.c.l.b16 %v9635
    %v9915 = vunpack.c.h.b16 %v9635
    %v9916 = vunpack.c.l.b16 %v9636
    %v9917 = vunpack.c.h.b16 %v9636
    %v9918 = vunpack.c.l.b16 %v9637
    %v9919 = vunpack.c.h.b16 %v9637
    %v9920 = vunpack.c.l.b16 %v9638
    %v9921 = vunpack.c.h.b16 %v9638
    %v9922 = vunpack.c.l.b16 %v9639
    %v9923 = vunpack.c.h.b16 %v9639
    %v9924 = vunpack.c.l.b16 %v9640
    %v9925 = vunpack.c.h.b16 %v9640
    %v9926 = vunpack.c.l.b16 %v9641
    %v9927 = vunpack.c.h.b16 %v9641
    %v9928 = vunpack.c.l.b16 %v9642
    %v9929 = vunpack.c.h.b16 %v9642
    %v9930 = vunpack.c.l.b16 %v9643
    %v9931 = vunpack.c.h.b16 %v9643
    %v9932 = vunpack.c.l.b16 %v9644
    %v9933 = vunpack.c.h.b16 %v9644
    %v9934 = vunpack.c.l.b16 %v9645
    %v9935 = vunpack.c.h.b16 %v9645
    %v9936 = vunpack.c.l.b16 %v9646
    %v9937 = vunpack.c.h.b16 %v9646
    %v9938 = vunpack.c.l.b16 %v9647
    %v9939 = vunpack.c.h.b16 %v9647
    %v9940 = vunpack.c.l.b16 %v9648
    %v9941 = vunpack.c.h.b16 %v9648
    %v9942 = vunpack.c.l.b16 %v9649
    %v9943 = vunpack.c.h.b16 %v9649
    %v9944 = vunpack.c.l.b16 %v9650
    %v9945 = vunpack.c.h.b16 %v9650
    %v9946 = vunpack.c.l.b16 %v9651
    %v9947 = vunpack.c.h.b16 %v9651
    %v9948 = vunpack.c.l.b16 %v9652
    %v9949 = vunpack.c.h.b16 %v9652
    %v9950 = vunpack.c.l.b16 %v9653
    %v9951 = vunpack.c.h.b16 %v9653
    %v9952 = vunpack.c.l.b16 %v9654
    %v9953 = vunpack.c.h.b16 %v9654
    %v9954 = vunpack.c.l.b16 %v9655
    %v9955 = vunpack.c.h.b16 %v9655
    %v9956 = vunpack.c.l.b16 %v9656
    %v9957 = vunpack.c.h.b16 %v9656
    %v9958 = vunpack.c.l.b16 %v9657
    %v9959 = vunpack.c.h.b16 %v9657
    %v9960 = vunpack.c.l.b16 %v9658
    %v9961 = vunpack.c.h.b16 %v9658
    %v9962 = vunpack.c.l.b16 %v9659
    %v9963 = vunpack.c.h.b16 %v9659
    %v9964 = vunpack.c.l.b16 %v9660
    %v9965 = vunpack.c.h.b16 %v9660
    %v9966 = vunpack.c.l.b16 %v9661
    %v9967 = vunpack.c.h.b16 %v9661
    %v9968 = vunpack.c.l.b16 %v9662
    %v9969 = vunpack.c.h.b16 %v9662
    %v9970 = vunpack.c.l.b16 %v9663
    %v9971 = vunpack.c.h.b16 %v9663
    %v9972 = vpack.c.b16 %v9782, %v9780
    %v9973 = vpack.c.b16 %v9783, %v9781
    %v9974 = vpack.c.b16 %v9786, %v9784
    %v9975 = vpack.c.b16 %v9787, %v9785
    %v9976 = vpack.c.b16 %v9790, %v9788
    %v9977 = vpack.c.b16 %v9791, %v9789
    %v9978 = vpack.c.b16 %v9794, %v9792
    %v9979 = vpack.c.b16 %v9795, %v9793
    %v9980 = vpack.c.b16 %v9798, %v9796
    %v9981 = vpack.c.b16 %v9799, %v9797
    %v9982 = vpack.c.b16 %v9802, %v9800
    %v9983 = vpack.c.b16 %v9803, %v9801
    %v9984 = vpack.c.b16 %v9806, %v9804
    %v9985 = vpack.c.b16 %v9807, %v9805
    %v9986 = vpack.c.b16 %v9810, %v9808
    %v9987 = vpack.c.b16 %v9811, %v9809
    %v9988 = vpack.c.b16 %v9814, %v9812
    %v9989 = vpack.c.b16 %v9815, %v9813
    %v9990 = vpack.c.b16 %v9818, %v9816
    %v9991 = vpack.c.b16 %v9819, %v9817
    %v9992 = vpack.c.b16 %v9822, %v9820
    %v9993 = vpack.c.b16 %v9823, %v9821
    %v9994 = vpack.c.b16 %v9826, %v9824
    %v9995 = vpack.c.b16 %v9827, %v9825
    %v9996 = vpack.c.b16 %v9830, %v9828
    %v9997 = vpack.c.b16 %v9831, %v9829
    %v9998 = vpack.c.b16 %v9834, %v9832
    %v9999 = vpack.c.b16 %v9835, %v9833
    %v10000 = vpack.c.b16 %v9838, %v9836
    %v10001 = vpack.c.b16 %v9839, %v9837
    %v10002 = vpack.c.b16 %v9842, %v9840
    %v10003 = vpack.c.b16 %v9843, %v9841
    %v10004 = vpack.c.b16 %v9846, %v9844
    %v10005 = vpack.c.b16 %v9847, %v9845
    %v10006 = vpack.c.b16 %v9850, %v9848
    %v10007 = vpack.c.b16 %v9851, %v9849
    %v10008 = vpack.c.b16 %v9854, %v9852
    %v10009 = vpack.c.b16 %v9855, %v9853
    %v10010 = vpack.c.b16 %v9858, %v9856
    %v10011 = vpack.c.b16 %v9859, %v9857
    %v10012 = vpack.c.b16 %v9862, %v9860
    %v10013 = vpack.c.b16 %v9863, %v9861
    %v10014 = vpack.c.b16 %v9866, %v9864
    %v10015 = vpack.c.b16 %v9867, %v9865
    %v10016 = vpack.c.b16 %v9870, %v9868
    %v10017 = vpack.c.b16 %v9871, %v9869
    %v10018 = vpack.c.b16 %v9874, %v9872
    %v10019 = vpack.c.b16 %v9875, %v9873
    %v10020 = vpack.c.b16 %v9878, %v9876
    %v10021 = vpack.c.b16 %v9879, %v9877
    %v10022 = vpack.c.b16 %v9882, %v9880
    %v10023 = vpack.c.b16 %v9883, %v9881
    %v10024 = vpack.c.b16 %v9886, %v9884
    %v10025 = vpack.c.b16 %v9887, %v9885
    %v10026 = vpack.c.b16 %v9890, %v9888
    %v10027 = vpack.c.b16 %v9891, %v9889
    %v10028 = vpack.c.b16 %v9894, %v9892
    %v10029 = vpack.c.b16 %v9895, %v9893
    %v10030 = vpack.c.b16 %v9898, %v9896
    %v10031 = vpack.c.b16 %v9899, %v9897
    %v10032 = vpack.c.b16 %v9902, %v9900
    %v10033 = vpack.c.b16 %v9903, %v9901
    %v10034 = vpack.c.b16 %v9906, %v9904
    %v10035 = vpack.c.b16 %v9907, %v9905
    %v10036 = vpack.c.b16 %v9910, %v9908
    %v10037 = vpack.c.b16 %v9911, %v9909
    %v10038 = vpack.c.b16 %v9914, %v9912
    %v10039 = vpack.c.b16 %v9915, %v9913
    %v10040 = vpack.c.b16 %v9918, %v9916
    %v10041 = vpack.c.b16 %v9919, %v9917
    %v10042 = vpack.c.b16 %v9922, %v9920
    %v10043 = vpack.c.b16 %v9923, %v9921
    %v10044 = vpack.c.b16 %v9926, %v9924
    %v10045 = vpack.c.b16 %v9927, %v9925
    %v10046 = vpack.c.b16 %v9930, %v9928
    %v10047 = vpack.c.b16 %v9931, %v9929
    %v10048 = vpack.c.b16 %v9934, %v9932
    %v10049 = vpack.c.b16 %v9935, %v9933
    %v10050 = vpack.c.b16 %v9938, %v9936
    %v10051 = vpack.c.b16 %v9939, %v9937
    %v10052 = vpack.c.b16 %v9942, %v9940
    %v10053 = vpack.c.b16 %v9943, %v9941
    %v10054 = vpack.c.b16 %v9946, %v9944
    %v10055 = vpack.c.b16 %v9947, %v9945
    %v10056 = vpack.c.b16 %v9950, %v9948
    %v10057 = vpack.c.b16 %v9951, %v9949
    %v10058 = vpack.c.b16 %v9954, %v9952
    %v10059 = vpack.c.b16 %v9955, %v9953
    %v10060 = vpack.c.b16 %v9958, %v9956
    %v10061 = vpack.c.b16 %v9959, %v9957
    %v10062 = vpack.c.b16 %v9962, %v9960
    %v10063 = vpack.c.b16 %v9963, %v9961
    %v10064 = vpack.c.b16 %v9966, %v9964
    %v10065 = vpack.c.b16 %v9967, %v9965
    %v10066 = vpack.c.b16 %v9970, %v9968
    %v10067 = vpack.c.b16 %v9971, %v9969
    %10164 = vmatprep.subr.bf16.mxu0 %v9973
    %10165 = vmatpush1.bf16.msra.mxu0 %v9972
    %10166 = vmatprep.subr.bf16.mxu0 %v9975
    %10167 = vmatpush1.bf16.msra.mxu0 %v9974
    %10168 = vmatprep.subr.bf16.mxu0 %v9977
    %10169 = vmatpush1.bf16.msra.mxu0 %v9976
    %10170 = vmatprep.subr.bf16.mxu0 %v9979
    %10171 = vmatpush1.bf16.msra.mxu0 %v9978
    %10172 = vmatprep.subr.bf16.mxu0 %v9981
    %10173 = vmatpush1.bf16.msra.mxu0 %v9980
    %10174 = vmatprep.subr.bf16.mxu0 %v9983
    %10175 = vmatpush1.bf16.msra.mxu0 %v9982
    %10176 = vmatprep.subr.bf16.mxu0 %v9985
    %10177 = vmatpush1.bf16.msra.mxu0 %v9984
    %10178 = vmatprep.subr.bf16.mxu0 %v9987
    %10179 = vmatpush1.bf16.msra.mxu0 %v9986
    %10180 = vmatprep.subr.bf16.mxu0 %v9989
    %10181 = vmatpush1.bf16.msra.mxu0 %v9988
    %10182 = vmatprep.subr.bf16.mxu0 %v9991
    %10183 = vmatpush1.bf16.msra.mxu0 %v9990
    %10184 = vmatprep.subr.bf16.mxu0 %v9993
    %10185 = vmatpush1.bf16.msra.mxu0 %v9992
    %10186 = vmatprep.subr.bf16.mxu0 %v9995
    %10187 = vmatpush1.bf16.msra.mxu0 %v9994
    %10188 = vmatprep.subr.bf16.mxu0 %v9997
    %10189 = vmatpush1.bf16.msra.mxu0 %v9996
    %10190 = vmatprep.subr.bf16.mxu0 %v9999
    %10191 = vmatpush1.bf16.msra.mxu0 %v9998
    %10192 = vmatprep.subr.bf16.mxu0 %v10001
    %10193 = vmatpush1.bf16.msra.mxu0 %v10000
    %10194 = vmatprep.subr.bf16.mxu0 %v10003
    %10195 = vmatpush1.bf16.msra.mxu0 %v10002
    %10196 = vmatprep.mubr.bf16.mxu0 %v9673
    %10197 = vmatmul.mubr.bf16.gmra.mrb[0].mxu0 %v9672
    %v10198 = vpop.f32.mrb[0].mxu0
    %v10199 = vadd.f32 %v9667, %v10198
    %v10200 = vpop.f32.mrb[0].mxu0
    %v10201 = vadd.f32 %v9671, %v10200
    %v10202 = vpop.f32.mrb[0].mxu0
    %v10203 = vpop.f32.mrb[0].mxu0
    %10204 = vdwg.mxu0
    %10205 = vmatprep.subr.bf16.mxu0 %v10005
    %10206 = vmatpush1.bf16.msra.mxu0 %v10004
    %10207 = vmatprep.subr.bf16.mxu0 %v10007
    %10208 = vmatpush1.bf16.msra.mxu0 %v10006
    %10209 = vmatprep.subr.bf16.mxu0 %v10009
    %10210 = vmatpush1.bf16.msra.mxu0 %v10008
    %10211 = vmatprep.subr.bf16.mxu0 %v10011
    %10212 = vmatpush1.bf16.msra.mxu0 %v10010
    %10213 = vmatprep.subr.bf16.mxu0 %v10013
    %10214 = vmatpush1.bf16.msra.mxu0 %v10012
    %10215 = vmatprep.subr.bf16.mxu0 %v10015
    %10216 = vmatpush1.bf16.msra.mxu0 %v10014
    %10217 = vmatprep.subr.bf16.mxu0 %v10017
    %10218 = vmatpush1.bf16.msra.mxu0 %v10016
    %10219 = vmatprep.subr.bf16.mxu0 %v10019
    %10220 = vmatpush1.bf16.msra.mxu0 %v10018
    %10221 = vmatprep.subr.bf16.mxu0 %v10021
    %10222 = vmatpush1.bf16.msra.mxu0 %v10020
    %10223 = vmatprep.subr.bf16.mxu0 %v10023
    %10224 = vmatpush1.bf16.msra.mxu0 %v10022
    %10225 = vmatprep.subr.bf16.mxu0 %v10025
    %10226 = vmatpush1.bf16.msra.mxu0 %v10024
    %10227 = vmatprep.subr.bf16.mxu0 %v10027
    %10228 = vmatpush1.bf16.msra.mxu0 %v10026
    %10229 = vmatprep.subr.bf16.mxu0 %v10029
    %10230 = vmatpush1.bf16.msra.mxu0 %v10028
    %10231 = vmatprep.subr.bf16.mxu0 %v10031
    %10232 = vmatpush1.bf16.msra.mxu0 %v10030
    %10233 = vmatprep.subr.bf16.mxu0 %v10033
    %10234 = vmatpush1.bf16.msra.mxu0 %v10032
    %10235 = vmatprep.subr.bf16.mxu0 %v10035
    %10236 = vmatpush1.bf16.msra.mxu0 %v10034
    %10237 = vmatprep.mubr.bf16.mxu0 %v9675
    %10238 = vmatmul.mubr.bf16.gmra.mrb[0].mxu0 %v9674
    %v10239 = vpop.f32.mrb[0].mxu0
    %v10240 = vadd.f32 %v10199, %v10239
    %v10241 = vpop.f32.mrb[0].mxu0
    %v10242 = vadd.f32 %v10201, %v10241
    %v10243 = vpop.f32.mrb[0].mxu0
    %v10244 = vpop.f32.mrb[0].mxu0
    %10245 = vdwg.mxu0
    %10246 = vmatprep.subr.bf16.mxu0 %v10037
    %10247 = vmatpush1.bf16.msra.mxu0 %v10036
    %10248 = vmatprep.subr.bf16.mxu0 %v10039
    %10249 = vmatpush1.bf16.msra.mxu0 %v10038
    %10250 = vmatprep.subr.bf16.mxu0 %v10041
    %10251 = vmatpush1.bf16.msra.mxu0 %v10040
    %10252 = vmatprep.subr.bf16.mxu0 %v10043
    %10253 = vmatpush1.bf16.msra.mxu0 %v10042
    %10254 = vmatprep.subr.bf16.mxu0 %v10045
    %10255 = vmatpush1.bf16.msra.mxu0 %v10044
    %10256 = vmatprep.subr.bf16.mxu0 %v10047
    %10257 = vmatpush1.bf16.msra.mxu0 %v10046
    %10258 = vmatprep.subr.bf16.mxu0 %v10049
    %10259 = vmatpush1.bf16.msra.mxu0 %v10048
    %10260 = vmatprep.subr.bf16.mxu0 %v10051
    %10261 = vmatpush1.bf16.msra.mxu0 %v10050
    %10262 = vmatprep.subr.bf16.mxu0 %v10053
    %10263 = vmatpush1.bf16.msra.mxu0 %v10052
    %10264 = vmatprep.subr.bf16.mxu0 %v10055
    %10265 = vmatpush1.bf16.msra.mxu0 %v10054
    %10266 = vmatprep.subr.bf16.mxu0 %v10057
    %10267 = vmatpush1.bf16.msra.mxu0 %v10056
    %10268 = vmatprep.subr.bf16.mxu0 %v10059
    %10269 = vmatpush1.bf16.msra.mxu0 %v10058
    %10270 = vmatprep.subr.bf16.mxu0 %v10061
    %10271 = vmatpush1.bf16.msra.mxu0 %v10060
    %10272 = vmatprep.subr.bf16.mxu0 %v10063
    %10273 = vmatpush1.bf16.msra.mxu0 %v10062
    %10274 = vmatprep.subr.bf16.mxu0 %v10065
    %10275 = vmatpush1.bf16.msra.mxu0 %v10064
    %10276 = vmatprep.subr.bf16.mxu0 %v10067
    %10277 = vmatpush1.bf16.msra.mxu0 %v10066
    %10278 = vmatprep.mubr.bf16.mxu0 %v9677
    %10279 = vmatmul.mubr.bf16.gmra.mrb[0].mxu0 %v9676
    %v10280 = vpop.f32.mrb[0].mxu0
    %v10281 = vadd.f32 %v10240, %v10280
    %v10282 = vpop.f32.mrb[0].mxu0
    %v10283 = vadd.f32 %v10242, %v10282
    %v10284 = vpop.f32.mrb[0].mxu0
    %v10285 = vpop.f32.mrb[0].mxu0
    %10286 = vdwg.mxu0
    %v10287 = vmax.f32 %v10281, 0.0
    %v10288 = vmax.f32 %v10283, 0.0
    %v10289 = vld [vmem:[#allocation9] sm:$0xf]
    %v10290 = vld [vmem:[#allocation9 + $0x8] sm:$0xf]
    %v10291 = vld [vmem:[#allocation9 + $0x10] sm:$0xf]
    %v10292 = vld [vmem:[#allocation9 + $0x18] sm:$0xf]
    %v10293 = vld [vmem:[#allocation9 + $0x20] sm:$0xf]
    %v10294 = vld [vmem:[#allocation9 + $0x28] sm:$0xf]
    %v10295 = vld [vmem:[#allocation9 + $0x30] sm:$0xf]
    %v10296 = vld [vmem:[#allocation9 + $0x38] sm:$0xf]
    %v10297 = vld [vmem:[#allocation9 + $0x40] sm:$0xf]
    %v10298 = vld [vmem:[#allocation9 + $0x48] sm:$0xf]
    %v10299 = vld [vmem:[#allocation9 + $0x50] sm:$0xf]
    %v10300 = vld [vmem:[#allocation9 + $0x58] sm:$0xf]
    %v10301 = vld [vmem:[#allocation9 + $0x60] sm:$0xf]
    %v10302 = vld [vmem:[#allocation9 + $0x68] sm:$0xf]
    %v10303 = vld [vmem:[#allocation9 + $0x70] sm:$0xf]
    %v10304 = vld [vmem:[#allocation9 + $0x78] sm:$0xf]
    %v10305 = vld [vmem:[#allocation9 + $0x80] sm:$0xf]
    %v10306 = vld [vmem:[#allocation9 + $0x88] sm:$0xf]
    %v10307 = vld [vmem:[#allocation9 + $0x90] sm:$0xf]
    %v10308 = vld [vmem:[#allocation9 + $0x98] sm:$0xf]
    %v10309 = vld [vmem:[#allocation9 + $0xa0] sm:$0xf]
    %v10310 = vld [vmem:[#allocation9 + $0xa8] sm:$0xf]
    %v10311 = vld [vmem:[#allocation9 + $0xb0] sm:$0xf]
    %v10312 = vld [vmem:[#allocation9 + $0xb8] sm:$0xf]
    %v10313 = vld [vmem:[#allocation9 + $0xc0] sm:$0xf]
    %v10314 = vld [vmem:[#allocation9 + $0xc8] sm:$0xf]
    %v10315 = vld [vmem:[#allocation9 + $0xd0] sm:$0xf]
    %v10316 = vld [vmem:[#allocation9 + $0xd8] sm:$0xf]
    %v10317 = vld [vmem:[#allocation9 + $0xe0] sm:$0xf]
    %v10318 = vld [vmem:[#allocation9 + $0xe8] sm:$0xf]
    %v10319 = vld [vmem:[#allocation9 + $0xf0] sm:$0xf]
    %v10320 = vld [vmem:[#allocation9 + $0xf8] sm:$0xf]
    %v10321 = vpack.c.bf16 %v9566, %v9566
    %v10322 = vpack.c.bf16 %v9567, %v9567
    %v10323 = vlaneseq
    %v10324 = vshrl.u32 %v10323, 7
    %v10325 = vsub.s32 1, %v10324
    %v10326 = vrot.slane %v166, %v10325
    %v10359 = vunpack.c.l.b16 %v10289
    %v10360 = vunpack.c.l.b16 %v10290
    %v10361 = vunpack.c.l.b16 %v10291
    %v10362 = vunpack.c.l.b16 %v10292
    %v10363 = vunpack.c.l.b16 %v10293
    %v10364 = vunpack.c.l.b16 %v10294
    %v10365 = vunpack.c.l.b16 %v10295
    %v10366 = vunpack.c.l.b16 %v10296
    %v10367 = vunpack.c.l.b16 %v10297
    %v10368 = vunpack.c.l.b16 %v10298
    %v10369 = vunpack.c.l.b16 %v10299
    %v10370 = vunpack.c.l.b16 %v10300
    %v10371 = vunpack.c.l.b16 %v10301
    %v10372 = vunpack.c.l.b16 %v10302
    %v10373 = vunpack.c.l.b16 %v10303
    %v10374 = vunpack.c.l.b16 %v10304
    %v10375 = vunpack.c.l.b16 %v10305
    %v10376 = vunpack.c.l.b16 %v10306
    %v10377 = vunpack.c.l.b16 %v10307
    %v10378 = vunpack.c.l.b16 %v10308
    %v10379 = vunpack.c.l.b16 %v10309
    %v10380 = vunpack.c.l.b16 %v10310
    %v10381 = vunpack.c.l.b16 %v10311
    %v10382 = vunpack.c.l.b16 %v10312
    %v10383 = vunpack.c.l.b16 %v10313
    %v10384 = vunpack.c.l.b16 %v10314
    %v10385 = vunpack.c.l.b16 %v10315
    %v10386 = vunpack.c.l.b16 %v10316
    %v10387 = vunpack.c.l.b16 %v10317
    %v10388 = vunpack.c.l.b16 %v10318
    %v10389 = vunpack.c.l.b16 %v10319
    %v10390 = vunpack.c.l.b16 %v10320
    %v10391 = vpack.c.b16 %v10360, %v10359
    %v10392 = vpack.c.b16 %v10362, %v10361
    %v10393 = vpack.c.b16 %v10364, %v10363
    %v10394 = vpack.c.b16 %v10366, %v10365
    %v10395 = vpack.c.b16 %v10368, %v10367
    %v10396 = vpack.c.b16 %v10370, %v10369
    %v10397 = vpack.c.b16 %v10372, %v10371
    %v10398 = vpack.c.b16 %v10374, %v10373
    %v10399 = vpack.c.b16 %v10376, %v10375
    %v10400 = vpack.c.b16 %v10378, %v10377
    %v10401 = vpack.c.b16 %v10380, %v10379
    %v10402 = vpack.c.b16 %v10382, %v10381
    %v10403 = vpack.c.b16 %v10384, %v10383
    %v10404 = vpack.c.b16 %v10386, %v10385
    %v10405 = vpack.c.b16 %v10388, %v10387
    %v10406 = vpack.c.b16 %v10390, %v10389
    %10423 = vmatprep.subr.bf16.mxu0 0
    %10424 = vmatpush1.bf16.msra.mxu0 %v10391
    %10425 = vmatprep.subr.bf16.mxu0 0
    %10426 = vmatpush1.bf16.msra.mxu0 %v10392
    %10427 = vmatprep.subr.bf16.mxu0 0
    %10428 = vmatpush1.bf16.msra.mxu0 %v10393
    %10429 = vmatprep.subr.bf16.mxu0 0
    %10430 = vmatpush1.bf16.msra.mxu0 %v10394
    %10431 = vmatprep.subr.bf16.mxu0 0
    %10432 = vmatpush1.bf16.msra.mxu0 %v10395
    %10433 = vmatprep.subr.bf16.mxu0 0
    %10434 = vmatpush1.bf16.msra.mxu0 %v10396
    %10435 = vmatprep.subr.bf16.mxu0 0
    %10436 = vmatpush1.bf16.msra.mxu0 %v10397
    %10437 = vmatprep.subr.bf16.mxu0 0
    %10438 = vmatpush1.bf16.msra.mxu0 %v10398
    %10439 = vmatprep.subr.bf16.mxu0 0
    %10440 = vmatpush1.bf16.msra.mxu0 %v10399
    %10441 = vmatprep.subr.bf16.mxu0 0
    %10442 = vmatpush1.bf16.msra.mxu0 %v10400
    %10443 = vmatprep.subr.bf16.mxu0 0
    %10444 = vmatpush1.bf16.msra.mxu0 %v10401
    %10445 = vmatprep.subr.bf16.mxu0 0
    %10446 = vmatpush1.bf16.msra.mxu0 %v10402
    %10447 = vmatprep.subr.bf16.mxu0 0
    %10448 = vmatpush1.bf16.msra.mxu0 %v10403
    %10449 = vmatprep.subr.bf16.mxu0 0
    %10450 = vmatpush1.bf16.msra.mxu0 %v10404
    %10451 = vmatprep.subr.bf16.mxu0 0
    %10452 = vmatpush1.bf16.msra.mxu0 %v10405
    %10453 = vmatprep.subr.bf16.mxu0 0
    %10454 = vmatpush1.bf16.msra.mxu0 %v10406
    %10455 = vmatprep.mubr.bf16.mxu0 %v10322
    %10456 = vmatmul.mubr.bf16.gmra.mrb[0].mxu0 %v10321
    %v10457 = vpop.f32.mrb[0].mxu0
    %v10458 = vadd.f32 %v10326, %v10457
    %v10459 = vpop.f32.mrb[0].mxu0
    %v10460 = vpop.f32.mrb[0].mxu0
    %v10461 = vpop.f32.mrb[0].mxu0
    %10462 = vdwg.mxu0
    %v10463 = vmax.f32 %v10458, 0.0
    %v10464 = vld [vmem:[#allocation9 + $0x4] sm:$0xf]
    %v10465 = vld [vmem:[#allocation9 + $0xc] sm:$0xf]
    %v10466 = vld [vmem:[#allocation9 + $0x14] sm:$0xf]
    %v10467 = vld [vmem:[#allocation9 + $0x1c] sm:$0xf]
    %v10468 = vld [vmem:[#allocation9 + $0x24] sm:$0xf]
    %v10469 = vld [vmem:[#allocation9 + $0x2c] sm:$0xf]
    %v10470 = vld [vmem:[#allocation9 + $0x34] sm:$0xf]
    %v10471 = vld [vmem:[#allocation9 + $0x3c] sm:$0xf]
    %v10472 = vld [vmem:[#allocation9 + $0x44] sm:$0xf]
    %v10473 = vld [vmem:[#allocation9 + $0x4c] sm:$0xf]
    %v10474 = vld [vmem:[#allocation9 + $0x54] sm:$0xf]
    %v10475 = vld [vmem:[#allocation9 + $0x5c] sm:$0xf]
    %v10476 = vld [vmem:[#allocation9 + $0x64] sm:$0xf]
    %v10477 = vld [vmem:[#allocation9 + $0x6c] sm:$0xf]
    %v10478 = vld [vmem:[#allocation9 + $0x74] sm:$0xf]
    %v10479 = vld [vmem:[#allocation9 + $0x7c] sm:$0xf]
    %v10480 = vld [vmem:[#allocation9 + $0x84] sm:$0xf]
    %v10481 = vld [vmem:[#allocation9 + $0x8c] sm:$0xf]
    %v10482 = vld [vmem:[#allocation9 + $0x94] sm:$0xf]
    %v10483 = vld [vmem:[#allocation9 + $0x9c] sm:$0xf]
    %v10484 = vld [vmem:[#allocation9 + $0xa4] sm:$0xf]
    %v10485 = vld [vmem:[#allocation9 + $0xac] sm:$0xf]
    %v10486 = vld [vmem:[#allocation9 + $0xb4] sm:$0xf]
    %v10487 = vld [vmem:[#allocation9 + $0xbc] sm:$0xf]
    %v10488 = vld [vmem:[#allocation9 + $0xc4] sm:$0xf]
    %v10489 = vld [vmem:[#allocation9 + $0xcc] sm:$0xf]
    %v10490 = vld [vmem:[#allocation9 + $0xd4] sm:$0xf]
    %v10491 = vld [vmem:[#allocation9 + $0xdc] sm:$0xf]
    %v10492 = vld [vmem:[#allocation9 + $0xe4] sm:$0xf]
    %v10493 = vld [vmem:[#allocation9 + $0xec] sm:$0xf]
    %v10494 = vld [vmem:[#allocation9 + $0xf4] sm:$0xf]
    %v10495 = vld [vmem:[#allocation9 + $0xfc] sm:$0xf]
    %v10496 = vpack.c.bf16 %v10287, %v10287
    %v10497 = vpack.c.bf16 %v10288, %v10288
    %v10498 = vlaneseq
    %v10499 = vshrl.u32 %v10498, 7
    %v10500 = vsub.s32 5, %v10499
    %v10501 = vrot.slane %v166, %v10500
    %v10534 = vunpack.c.l.b16 %v10464
    %v10535 = vunpack.c.l.b16 %v10465
    %v10536 = vunpack.c.l.b16 %v10466
    %v10537 = vunpack.c.l.b16 %v10467
    %v10538 = vunpack.c.l.b16 %v10468
    %v10539 = vunpack.c.l.b16 %v10469
    %v10540 = vunpack.c.l.b16 %v10470
    %v10541 = vunpack.c.l.b16 %v10471
    %v10542 = vunpack.c.l.b16 %v10472
    %v10543 = vunpack.c.l.b16 %v10473
    %v10544 = vunpack.c.l.b16 %v10474
    %v10545 = vunpack.c.l.b16 %v10475
    %v10546 = vunpack.c.l.b16 %v10476
    %v10547 = vunpack.c.l.b16 %v10477
    %v10548 = vunpack.c.l.b16 %v10478
    %v10549 = vunpack.c.l.b16 %v10479
    %v10550 = vunpack.c.l.b16 %v10480
    %v10551 = vunpack.c.l.b16 %v10481
    %v10552 = vunpack.c.l.b16 %v10482
    %v10553 = vunpack.c.l.b16 %v10483
    %v10554 = vunpack.c.l.b16 %v10484
    %v10555 = vunpack.c.l.b16 %v10485
    %v10556 = vunpack.c.l.b16 %v10486
    %v10557 = vunpack.c.l.b16 %v10487
    %v10558 = vunpack.c.l.b16 %v10488
    %v10559 = vunpack.c.l.b16 %v10489
    %v10560 = vunpack.c.l.b16 %v10490
    %v10561 = vunpack.c.l.b16 %v10491
    %v10562 = vunpack.c.l.b16 %v10492
    %v10563 = vunpack.c.l.b16 %v10493
    %v10564 = vunpack.c.l.b16 %v10494
    %v10565 = vunpack.c.l.b16 %v10495
    %v10566 = vpack.c.b16 %v10535, %v10534
    %v10567 = vpack.c.b16 %v10537, %v10536
    %v10568 = vpack.c.b16 %v10539, %v10538
    %v10569 = vpack.c.b16 %v10541, %v10540
    %v10570 = vpack.c.b16 %v10543, %v10542
    %v10571 = vpack.c.b16 %v10545, %v10544
    %v10572 = vpack.c.b16 %v10547, %v10546
    %v10573 = vpack.c.b16 %v10549, %v10548
    %v10574 = vpack.c.b16 %v10551, %v10550
    %v10575 = vpack.c.b16 %v10553, %v10552
    %v10576 = vpack.c.b16 %v10555, %v10554
    %v10577 = vpack.c.b16 %v10557, %v10556
    %v10578 = vpack.c.b16 %v10559, %v10558
    %v10579 = vpack.c.b16 %v10561, %v10560
    %v10580 = vpack.c.b16 %v10563, %v10562
    %v10581 = vpack.c.b16 %v10565, %v10564
    %10598 = vmatprep.subr.bf16.mxu0 0
    %10599 = vmatpush1.bf16.msra.mxu0 %v10566
    %10600 = vmatprep.subr.bf16.mxu0 0
    %10601 = vmatpush1.bf16.msra.mxu0 %v10567
    %10602 = vmatprep.subr.bf16.mxu0 0
    %10603 = vmatpush1.bf16.msra.mxu0 %v10568
    %10604 = vmatprep.subr.bf16.mxu0 0
    %10605 = vmatpush1.bf16.msra.mxu0 %v10569
    %10606 = vmatprep.subr.bf16.mxu0 0
    %10607 = vmatpush1.bf16.msra.mxu0 %v10570
    %10608 = vmatprep.subr.bf16.mxu0 0
    %10609 = vmatpush1.bf16.msra.mxu0 %v10571
    %10610 = vmatprep.subr.bf16.mxu0 0
    %10611 = vmatpush1.bf16.msra.mxu0 %v10572
    %10612 = vmatprep.subr.bf16.mxu0 0
    %10613 = vmatpush1.bf16.msra.mxu0 %v10573
    %10614 = vmatprep.subr.bf16.mxu0 0
    %10615 = vmatpush1.bf16.msra.mxu0 %v10574
    %10616 = vmatprep.subr.bf16.mxu0 0
    %10617 = vmatpush1.bf16.msra.mxu0 %v10575
    %10618 = vmatprep.subr.bf16.mxu0 0
    %10619 = vmatpush1.bf16.msra.mxu0 %v10576
    %10620 = vmatprep.subr.bf16.mxu0 0
    %10621 = vmatpush1.bf16.msra.mxu0 %v10577
    %10622 = vmatprep.subr.bf16.mxu0 0
    %10623 = vmatpush1.bf16.msra.mxu0 %v10578
    %10624 = vmatprep.subr.bf16.mxu0 0
    %10625 = vmatpush1.bf16.msra.mxu0 %v10579
    %10626 = vmatprep.subr.bf16.mxu0 0
    %10627 = vmatpush1.bf16.msra.mxu0 %v10580
    %10628 = vmatprep.subr.bf16.mxu0 0
    %10629 = vmatpush1.bf16.msra.mxu0 %v10581
    %10630 = vmatprep.mubr.bf16.mxu0 %v10497
    %10631 = vmatmul.mubr.bf16.gmra.mrb[0].mxu0 %v10496
    %v10632 = vpop.f32.mrb[0].mxu0
    %v10633 = vadd.f32 %v10501, %v10632
    %v10634 = vpop.f32.mrb[0].mxu0
    %v10635 = vpop.f32.mrb[0].mxu0
    %v10636 = vpop.f32.mrb[0].mxu0
    %10637 = vdwg.mxu0
    %v10638 = vmax.f32 %v10633, 0.0
    %v10639 = vld [vmem:[%s5] sm:$0xf]
    %v10640 = vld [vmem:[%s5 + $0x4] sm:$0xf]
    %v10641 = vld [vmem:[%s5 + $0x8] sm:$0xf]
    %v10642 = vld [vmem:[%s5 + $0xc] sm:$0xf]
    %v10643 = vld [vmem:[%s5 + $0x10] sm:$0xf]
    %v10644 = vld [vmem:[%s5 + $0x14] sm:$0xf]
    %v10645 = vld [vmem:[%s5 + $0x18] sm:$0xf]
    %v10646 = vld [vmem:[%s5 + $0x1c] sm:$0xf]
    %v10647 = vld [vmem:[%s5 + $0x20] sm:$0xf]
    %v10648 = vld [vmem:[%s5 + $0x24] sm:$0xf]
    %v10649 = vld [vmem:[%s5 + $0x28] sm:$0xf]
    %v10650 = vld [vmem:[%s5 + $0x2c] sm:$0xf]
    %v10651 = vld [vmem:[%s5 + $0x30] sm:$0xf]
    %v10652 = vld [vmem:[%s5 + $0x34] sm:$0xf]
    %v10653 = vld [vmem:[%s5 + $0x38] sm:$0xf]
    %v10654 = vld [vmem:[%s5 + $0x3c] sm:$0xf]
    %v10655 = vpack.c.bf16 %v10463, %v10463
    %v10656 = vlaneseq
    %v10657 = vshrl.u32 %v10656, 7
    %v10658 = vsub.s32 2, %v10657
    %v10659 = vrot.slane %v166, %v10658
    %v10676 = vunpack.c.l.b16 %v10639
    %v10677 = vunpack.c.l.b16 %v10640
    %v10678 = vunpack.c.l.b16 %v10641
    %v10679 = vunpack.c.l.b16 %v10642
    %v10680 = vunpack.c.l.b16 %v10643
    %v10681 = vunpack.c.l.b16 %v10644
    %v10682 = vunpack.c.l.b16 %v10645
    %v10683 = vunpack.c.l.b16 %v10646
    %v10684 = vunpack.c.l.b16 %v10647
    %v10685 = vunpack.c.l.b16 %v10648
    %v10686 = vunpack.c.l.b16 %v10649
    %v10687 = vunpack.c.l.b16 %v10650
    %v10688 = vunpack.c.l.b16 %v10651
    %v10689 = vunpack.c.l.b16 %v10652
    %v10690 = vunpack.c.l.b16 %v10653
    %v10691 = vunpack.c.l.b16 %v10654
    %v10692 = vpack.c.b16 %v10677, %v10676
    %v10693 = vpack.c.b16 %v10679, %v10678
    %v10694 = vpack.c.b16 %v10681, %v10680
    %v10695 = vpack.c.b16 %v10683, %v10682
    %v10696 = vpack.c.b16 %v10685, %v10684
    %v10697 = vpack.c.b16 %v10687, %v10686
    %v10698 = vpack.c.b16 %v10689, %v10688
    %v10699 = vpack.c.b16 %v10691, %v10690
    %10708 = vmatprep.subr.bf16.mxu0 0
    %10709 = vmatpush1.bf16.msra.mxu0 %v10692
    %10710 = vmatprep.subr.bf16.mxu0 0
    %10711 = vmatpush1.bf16.msra.mxu0 %v10693
    %10712 = vmatprep.subr.bf16.mxu0 0
    %10713 = vmatpush1.bf16.msra.mxu0 %v10694
    %10714 = vmatprep.subr.bf16.mxu0 0
    %10715 = vmatpush1.bf16.msra.mxu0 %v10695
    %10716 = vmatprep.subr.bf16.mxu0 0
    %10717 = vmatpush1.bf16.msra.mxu0 %v10696
    %10718 = vmatprep.subr.bf16.mxu0 0
    %10719 = vmatpush1.bf16.msra.mxu0 %v10697
    %10720 = vmatprep.subr.bf16.mxu0 0
    %10721 = vmatpush1.bf16.msra.mxu0 %v10698
    %10722 = vmatprep.subr.bf16.mxu0 0
    %10723 = vmatpush1.bf16.msra.mxu0 %v10699
    %10724 = vmatprep.subr.bf16.mxu0 0
    %10725 = vmatpush1.bf16.msra.mxu0 0
    %10726 = vmatprep.subr.bf16.mxu0 0
    %10727 = vmatpush1.bf16.msra.mxu0 0
    %10728 = vmatprep.subr.bf16.mxu0 0
    %10729 = vmatpush1.bf16.msra.mxu0 0
    %10730 = vmatprep.subr.bf16.mxu0 0
    %10731 = vmatpush1.bf16.msra.mxu0 0
    %10732 = vmatprep.subr.bf16.mxu0 0
    %10733 = vmatpush1.bf16.msra.mxu0 0
    %10734 = vmatprep.subr.bf16.mxu0 0
    %10735 = vmatpush1.bf16.msra.mxu0 0
    %10736 = vmatprep.subr.bf16.mxu0 0
    %10737 = vmatpush1.bf16.msra.mxu0 0
    %10738 = vmatprep.subr.bf16.mxu0 0
    %10739 = vmatpush1.bf16.msra.mxu0 0
    %10740 = vmatprep.mubr.bf16.mxu0 0
    %10741 = vmatmul.mubr.bf16.gmra.mrb[0].mxu0 %v10655
    %v10742 = vpop.f32.mrb[0].mxu0
    %v10743 = vadd.f32 %v10659, %v10742
    %v10744 = vpop.f32.mrb[0].mxu0
    %v10745 = vpop.f32.mrb[0].mxu0
    %v10746 = vpop.f32.mrb[0].mxu0
    %10747 = vdwg.mxu0
    %v10748 = vmax.f32 %v10743, 0.0
    %v10749 = vld [vmem:[%s5 + $0x40] sm:$0xf]
    %v10750 = vld [vmem:[%s5 + $0x44] sm:$0xf]
    %v10751 = vld [vmem:[%s5 + $0x48] sm:$0xf]
    %v10752 = vld [vmem:[%s5 + $0x4c] sm:$0xf]
    %v10753 = vld [vmem:[%s5 + $0x50] sm:$0xf]
    %v10754 = vld [vmem:[%s5 + $0x54] sm:$0xf]
    %v10755 = vld [vmem:[%s5 + $0x58] sm:$0xf]
    %v10756 = vld [vmem:[%s5 + $0x5c] sm:$0xf]
    %v10757 = vld [vmem:[%s5 + $0x60] sm:$0xf]
    %v10758 = vld [vmem:[%s5 + $0x64] sm:$0xf]
    %v10759 = vld [vmem:[%s5 + $0x68] sm:$0xf]
    %v10760 = vld [vmem:[%s5 + $0x6c] sm:$0xf]
    %v10761 = vld [vmem:[%s5 + $0x70] sm:$0xf]
    %v10762 = vld [vmem:[%s5 + $0x74] sm:$0xf]
    %v10763 = vld [vmem:[%s5 + $0x78] sm:$0xf]
    %v10764 = vld [vmem:[%s5 + $0x7c] sm:$0xf]
    %v10765 = vpack.c.bf16 %v10638, %v10638
    %v10766 = vlaneseq
    %v10767 = vshrl.u32 %v10766, 7
    %v10768 = vsub.s32 6, %v10767
    %v10769 = vrot.slane %v166, %v10768
    %v10786 = vunpack.c.l.b16 %v10749
    %v10787 = vunpack.c.l.b16 %v10750
    %v10788 = vunpack.c.l.b16 %v10751
    %v10789 = vunpack.c.l.b16 %v10752
    %v10790 = vunpack.c.l.b16 %v10753
    %v10791 = vunpack.c.l.b16 %v10754
    %v10792 = vunpack.c.l.b16 %v10755
    %v10793 = vunpack.c.l.b16 %v10756
    %v10794 = vunpack.c.l.b16 %v10757
    %v10795 = vunpack.c.l.b16 %v10758
    %v10796 = vunpack.c.l.b16 %v10759
    %v10797 = vunpack.c.l.b16 %v10760
    %v10798 = vunpack.c.l.b16 %v10761
    %v10799 = vunpack.c.l.b16 %v10762
    %v10800 = vunpack.c.l.b16 %v10763
    %v10801 = vunpack.c.l.b16 %v10764
    %v10802 = vpack.c.b16 %v10787, %v10786
    %v10803 = vpack.c.b16 %v10789, %v10788
    %v10804 = vpack.c.b16 %v10791, %v10790
    %v10805 = vpack.c.b16 %v10793, %v10792
    %v10806 = vpack.c.b16 %v10795, %v10794
    %v10807 = vpack.c.b16 %v10797, %v10796
    %v10808 = vpack.c.b16 %v10799, %v10798
    %v10809 = vpack.c.b16 %v10801, %v10800
    %10818 = vmatprep.subr.bf16.mxu0 0
    %10819 = vmatpush1.bf16.msra.mxu0 %v10802
    %10820 = vmatprep.subr.bf16.mxu0 0
    %10821 = vmatpush1.bf16.msra.mxu0 %v10803
    %10822 = vmatprep.subr.bf16.mxu0 0
    %10823 = vmatpush1.bf16.msra.mxu0 %v10804
    %10824 = vmatprep.subr.bf16.mxu0 0
    %10825 = vmatpush1.bf16.msra.mxu0 %v10805
    %10826 = vmatprep.subr.bf16.mxu0 0
    %10827 = vmatpush1.bf16.msra.mxu0 %v10806
    %10828 = vmatprep.subr.bf16.mxu0 0
    %10829 = vmatpush1.bf16.msra.mxu0 %v10807
    %10830 = vmatprep.subr.bf16.mxu0 0
    %10831 = vmatpush1.bf16.msra.mxu0 %v10808
    %10832 = vmatprep.subr.bf16.mxu0 0
    %10833 = vmatpush1.bf16.msra.mxu0 %v10809
    %10834 = vmatprep.subr.bf16.mxu0 0
    %10835 = vmatpush1.bf16.msra.mxu0 0
    %10836 = vmatprep.subr.bf16.mxu0 0
    %10837 = vmatpush1.bf16.msra.mxu0 0
    %10838 = vmatprep.subr.bf16.mxu0 0
    %10839 = vmatpush1.bf16.msra.mxu0 0
    %10840 = vmatprep.subr.bf16.mxu0 0
    %10841 = vmatpush1.bf16.msra.mxu0 0
    %10842 = vmatprep.subr.bf16.mxu0 0
    %10843 = vmatpush1.bf16.msra.mxu0 0
    %10844 = vmatprep.subr.bf16.mxu0 0
    %10845 = vmatpush1.bf16.msra.mxu0 0
    %10846 = vmatprep.subr.bf16.mxu0 0
    %10847 = vmatpush1.bf16.msra.mxu0 0
    %10848 = vmatprep.subr.bf16.mxu0 0
    %10849 = vmatpush1.bf16.msra.mxu0 0
    %10850 = vmatprep.mubr.bf16.mxu0 0
    %10851 = vmatmul.mubr.bf16.gmra.mrb[0].mxu0 %v10765
    %v10852 = vpop.f32.mrb[0].mxu0
    %v10853 = vadd.f32 %v10769, %v10852
    %v10854 = vpop.f32.mrb[0].mxu0
    %v10855 = vpop.f32.mrb[0].mxu0
    %v10856 = vpop.f32.mrb[0].mxu0
    %10857 = vdwg.mxu0
    %v10858 = vmax.f32 %v10853, 0.0
    %v10859 = vld [vmem:[%s5 + $0x80] sm:$0xf]
    %v10860 = vld [vmem:[%s5 + $0x84] sm:$0xf]
    %v10861 = vld [vmem:[%s5 + $0x88] sm:$0xf]
    %v10862 = vld [vmem:[%s5 + $0x8c] sm:$0xf]
    %v10863 = vld [vmem:[%s5 + $0x90] sm:$0xf]
    %v10864 = vld [vmem:[%s5 + $0x94] sm:$0xf]
    %v10865 = vld [vmem:[%s5 + $0x98] sm:$0xf]
    %v10866 = vld [vmem:[%s5 + $0x9c] sm:$0xf]
    %v10867 = vpack.c.bf16 %v10748, %v10748
    %v10868 = vlaneseq
    %v10869 = vshrl.u32 %v10868, 7
    %v10870 = vsub.s32 3, %v10869
    %v10871 = vrot.slane %v166, %v10870
    %v10880 = vunpack.c.l.b16 %v10859
    %v10881 = vunpack.c.l.b16 %v10860
    %v10882 = vunpack.c.l.b16 %v10861
    %v10883 = vunpack.c.l.b16 %v10862
    %v10884 = vunpack.c.l.b16 %v10863
    %v10885 = vunpack.c.l.b16 %v10864
    %v10886 = vunpack.c.l.b16 %v10865
    %v10887 = vunpack.c.l.b16 %v10866
    %v10888 = vpack.c.b16 %v10881, %v10880
    %v10889 = vpack.c.b16 %v10883, %v10882
    %v10890 = vpack.c.b16 %v10885, %v10884
    %v10891 = vpack.c.b16 %v10887, %v10886
    %vm10896 = vcmask 523264
    %v10898 = vsel %vm10896, %v10867, 0
    %10900 = vmatprep.subr.bf16.mxu0 0
    %10901 = vmatpush1.bf16.msra.mxu0 %v10888
    %10902 = vmatprep.subr.bf16.mxu0 0
    %10903 = vmatpush1.bf16.msra.mxu0 %v10889
    %10904 = vmatprep.subr.bf16.mxu0 0
    %10905 = vmatpush1.bf16.msra.mxu0 %v10890
    %10906 = vmatprep.subr.bf16.mxu0 0
    %10907 = vmatpush1.bf16.msra.mxu0 %v10891
    %10908 = vmatprep.subr.bf16.mxu0 0
    %10909 = vmatpush1.bf16.msra.mxu0 0
    %10910 = vmatprep.subr.bf16.mxu0 0
    %10911 = vmatpush1.bf16.msra.mxu0 0
    %10912 = vmatprep.subr.bf16.mxu0 0
    %10913 = vmatpush1.bf16.msra.mxu0 0
    %10914 = vmatprep.subr.bf16.mxu0 0
    %10915 = vmatpush1.bf16.msra.mxu0 0
    %10916 = vmatprep.subr.bf16.mxu0 0
    %10917 = vmatpush1.bf16.msra.mxu0 0
    %10918 = vmatprep.subr.bf16.mxu0 0
    %10919 = vmatpush1.bf16.msra.mxu0 0
    %10920 = vmatprep.subr.bf16.mxu0 0
    %10921 = vmatpush1.bf16.msra.mxu0 0
    %10922 = vmatprep.subr.bf16.mxu0 0
    %10923 = vmatpush1.bf16.msra.mxu0 0
    %10924 = vmatprep.subr.bf16.mxu0 0
    %10925 = vmatpush1.bf16.msra.mxu0 0
    %10926 = vmatprep.subr.bf16.mxu0 0
    %10927 = vmatpush1.bf16.msra.mxu0 0
    %10928 = vmatprep.subr.bf16.mxu0 0
    %10929 = vmatpush1.bf16.msra.mxu0 0
    %10930 = vmatprep.subr.bf16.mxu0 0
    %10931 = vmatpush1.bf16.msra.mxu0 0
    %10932 = vmatprep.mubr.bf16.mxu0 0
    %10933 = vmatmul.mubr.bf16.gmra.mrb[0].mxu0 %v10898
    %v10934 = vpop.f32.mrb[0].mxu0
    %v10935 = vadd.f32 %v10871, %v10934
    %v10936 = vpop.f32.mrb[0].mxu0
    %v10937 = vpop.f32.mrb[0].mxu0
    %v10938 = vpop.f32.mrb[0].mxu0
    %10939 = vdwg.mxu0
    %v10940 = vmax.f32 %v10935, 0.0
    %v10941 = vld [vmem:[%s5 + $0xa0] sm:$0xf]
    %v10942 = vld [vmem:[%s5 + $0xa4] sm:$0xf]
    %v10943 = vld [vmem:[%s5 + $0xa8] sm:$0xf]
    %v10944 = vld [vmem:[%s5 + $0xac] sm:$0xf]
    %v10945 = vld [vmem:[%s5 + $0xb0] sm:$0xf]
    %v10946 = vld [vmem:[%s5 + $0xb4] sm:$0xf]
    %v10947 = vld [vmem:[%s5 + $0xb8] sm:$0xf]
    %v10948 = vld [vmem:[%s5 + $0xbc] sm:$0xf]
    %v10949 = vpack.c.bf16 %v10858, %v10858
    %v10950 = vlaneseq
    %v10951 = vshrl.u32 %v10950, 7
    %v10952 = vsub.s32 7, %v10951
    %v10953 = vrot.slane %v166, %v10952
    %v10962 = vunpack.c.l.b16 %v10941
    %v10963 = vunpack.c.l.b16 %v10942
    %v10964 = vunpack.c.l.b16 %v10943
    %v10965 = vunpack.c.l.b16 %v10944
    %v10966 = vunpack.c.l.b16 %v10945
    %v10967 = vunpack.c.l.b16 %v10946
    %v10968 = vunpack.c.l.b16 %v10947
    %v10969 = vunpack.c.l.b16 %v10948
    %v10970 = vpack.c.b16 %v10963, %v10962
    %v10971 = vpack.c.b16 %v10965, %v10964
    %v10972 = vpack.c.b16 %v10967, %v10966
    %v10973 = vpack.c.b16 %v10969, %v10968
    %v10979 = vsel %vm10896, %v10949, 0
    %10981 = vmatprep.subr.bf16.mxu0 0
    %10982 = vmatpush1.bf16.msra.mxu0 %v10970
    %10983 = vmatprep.subr.bf16.mxu0 0
    %10984 = vmatpush1.bf16.msra.mxu0 %v10971
    %10985 = vmatprep.subr.bf16.mxu0 0
    %10986 = vmatpush1.bf16.msra.mxu0 %v10972
    %10987 = vmatprep.subr.bf16.mxu0 0
    %10988 = vmatpush1.bf16.msra.mxu0 %v10973
    %10989 = vmatprep.subr.bf16.mxu0 0
    %10990 = vmatpush1.bf16.msra.mxu0 0
    %10991 = vmatprep.subr.bf16.mxu0 0
    %10992 = vmatpush1.bf16.msra.mxu0 0
    %10993 = vmatprep.subr.bf16.mxu0 0
    %10994 = vmatpush1.bf16.msra.mxu0 0
    %10995 = vmatprep.subr.bf16.mxu0 0
    %10996 = vmatpush1.bf16.msra.mxu0 0
    %10997 = vmatprep.subr.bf16.mxu0 0
    %10998 = vmatpush1.bf16.msra.mxu0 0
    %10999 = vmatprep.subr.bf16.mxu0 0
    %11000 = vmatpush1.bf16.msra.mxu0 0
    %11001 = vmatprep.subr.bf16.mxu0 0
    %11002 = vmatpush1.bf16.msra.mxu0 0
    %11003 = vmatprep.subr.bf16.mxu0 0
    %11004 = vmatpush1.bf16.msra.mxu0 0
    %11005 = vmatprep.subr.bf16.mxu0 0
    %11006 = vmatpush1.bf16.msra.mxu0 0
    %11007 = vmatprep.subr.bf16.mxu0 0
    %11008 = vmatpush1.bf16.msra.mxu0 0
    %11009 = vmatprep.subr.bf16.mxu0 0
    %11010 = vmatpush1.bf16.msra.mxu0 0
    %11011 = vmatprep.subr.bf16.mxu0 0
    %11012 = vmatpush1.bf16.msra.mxu0 0
    %11013 = vmatprep.mubr.bf16.mxu0 0
    %11014 = vmatmul.mubr.bf16.gmra.mrb[0].mxu0 %v10979
    %v11015 = vpop.f32.mrb[0].mxu0
    %v11016 = vadd.f32 %v10953, %v11015
    %v11017 = vpop.f32.mrb[0].mxu0
    %v11018 = vpop.f32.mrb[0].mxu0
    %v11019 = vpop.f32.mrb[0].mxu0
    %11020 = vdwg.mxu0
    %v11021 = vmax.f32 %v11016, 0.0
    %v11022 = vld [vmem:[#allocation12] sm:$0xff]
    %v11023 = vld [vmem:[#allocation12 + $0x8] sm:$0xff]
    %v11024 = vld [vmem:[#allocation12 + $0x10] sm:$0xff]
    %v11025 = vld [vmem:[#allocation12 + $0x18] sm:$0xff]
    %v11026 = vld [vmem:[#allocation12 + $0x20] sm:$0xff]
    %v11027 = vld [vmem:[#allocation12 + $0x28] sm:$0xff]
    %v11028 = vld [vmem:[#allocation12 + $0x30] sm:$0xff]
    %v11029 = vld [vmem:[#allocation12 + $0x38] sm:$0xff]
    %v11030 = vld [vmem:[#allocation12 + $0x40] sm:$0xff]
    %v11031 = vld [vmem:[#allocation12 + $0x48] sm:$0xff]
    %v11032 = vld [vmem:[#allocation12 + $0x50] sm:$0xff]
    %v11033 = vld [vmem:[#allocation12 + $0x58] sm:$0xff]
    %v11034 = vld [vmem:[#allocation12 + $0x60] sm:$0xff]
    %v11035 = vld [vmem:[#allocation12 + $0x68] sm:$0xff]
    %v11036 = vld [vmem:[#allocation12 + $0x70] sm:$0xff]
    %v11037 = vld [vmem:[#allocation12 + $0x78] sm:$0xff]
    %v11038 = vld [vmem:[#allocation12 + $0x80] sm:$0xff]
    %v11039 = vld [vmem:[#allocation12 + $0x88] sm:$0xff]
    %v11040 = vld [vmem:[#allocation12 + $0x90] sm:$0xff]
    %v11041 = vld [vmem:[#allocation12 + $0x98] sm:$0xff]
    %v11042 = vld [vmem:[#allocation12 + $0xa0] sm:$0xff]
    %v11043 = vld [vmem:[#allocation12 + $0xa8] sm:$0xff]
    %v11044 = vld [vmem:[#allocation12 + $0xb0] sm:$0xff]
    %v11045 = vld [vmem:[#allocation12 + $0xb8] sm:$0xff]
    %v11046 = vld [vmem:[#allocation12 + $0xc0] sm:$0xff]
    %v11047 = vld [vmem:[#allocation12 + $0xc8] sm:$0xff]
    %v11048 = vld [vmem:[#allocation12 + $0xd0] sm:$0xff]
    %v11049 = vld [vmem:[#allocation12 + $0xd8] sm:$0xff]
    %v11050 = vld [vmem:[#allocation12 + $0xe0] sm:$0xff]
    %v11051 = vld [vmem:[#allocation12 + $0xe8] sm:$0xff]
    %v11052 = vld [vmem:[#allocation12 + $0xf0] sm:$0xff]
    %v11053 = vld [vmem:[#allocation12 + $0xf8] sm:$0xff]
    %v11054 = vld [vmem:[#allocation12 + $0x100] sm:$0xff]
    %v11055 = vld [vmem:[#allocation12 + $0x108] sm:$0xff]
    %v11056 = vld [vmem:[#allocation12 + $0x110] sm:$0xff]
    %v11057 = vld [vmem:[#allocation12 + $0x118] sm:$0xff]
    %v11058 = vld [vmem:[#allocation12 + $0x120] sm:$0xff]
    %v11059 = vld [vmem:[#allocation12 + $0x128] sm:$0xff]
    %v11060 = vld [vmem:[#allocation12 + $0x130] sm:$0xff]
    %v11061 = vld [vmem:[#allocation12 + $0x138] sm:$0xff]
    %v11062 = vld [vmem:[#allocation12 + $0x140] sm:$0xff]
    %v11063 = vld [vmem:[#allocation12 + $0x148] sm:$0xff]
    %v11064 = vld [vmem:[#allocation12 + $0x150] sm:$0xff]
    %v11065 = vld [vmem:[#allocation12 + $0x158] sm:$0xff]
    %v11066 = vld [vmem:[#allocation12 + $0x160] sm:$0xff]
    %v11067 = vld [vmem:[#allocation12 + $0x168] sm:$0xff]
    %v11068 = vld [vmem:[#allocation12 + $0x170] sm:$0xff]
    %v11069 = vld [vmem:[#allocation12 + $0x178] sm:$0xff]
    %v11070 = vld [vmem:[#allocation12 + $0x180] sm:$0xff]
    %v11071 = vld [vmem:[#allocation12 + $0x188] sm:$0xff]
    %v11072 = vld [vmem:[#allocation12 + $0x190] sm:$0xff]
    %v11073 = vld [vmem:[#allocation12 + $0x198] sm:$0xff]
    %v11074 = vld [vmem:[#allocation12 + $0x1a0] sm:$0xff]
    %v11075 = vld [vmem:[#allocation12 + $0x1a8] sm:$0xff]
    %v11076 = vld [vmem:[#allocation12 + $0x1b0] sm:$0xff]
    %v11077 = vld [vmem:[#allocation12 + $0x1b8] sm:$0xff]
    %v11078 = vld [vmem:[#allocation12 + $0x1c0] sm:$0xff]
    %v11079 = vld [vmem:[#allocation12 + $0x1c8] sm:$0xff]
    %v11080 = vld [vmem:[#allocation12 + $0x1d0] sm:$0xff]
    %v11081 = vld [vmem:[#allocation12 + $0x1d8] sm:$0xff]
    %v11082 = vld [vmem:[#allocation12 + $0x1e0] sm:$0xff]
    %v11083 = vld [vmem:[#allocation12 + $0x1e8] sm:$0xff]
    %v11084 = vld [vmem:[#allocation12 + $0x1f0] sm:$0xff]
    %v11085 = vld [vmem:[#allocation12 + $0x1f8] sm:$0xff]
    %v11086 = vld [vmem:[#allocation12 + $0x200] sm:$0xff]
    %v11087 = vld [vmem:[#allocation12 + $0x208] sm:$0xff]
    %v11088 = vld [vmem:[#allocation12 + $0x210] sm:$0xff]
    %v11089 = vld [vmem:[#allocation12 + $0x218] sm:$0xff]
    %v11090 = vld [vmem:[#allocation12 + $0x220] sm:$0xff]
    %v11091 = vld [vmem:[#allocation12 + $0x228] sm:$0xff]
    %v11092 = vld [vmem:[#allocation12 + $0x230] sm:$0xff]
    %v11093 = vld [vmem:[#allocation12 + $0x238] sm:$0xff]
    %v11094 = vld [vmem:[#allocation12 + $0x240] sm:$0xff]
    %v11095 = vld [vmem:[#allocation12 + $0x248] sm:$0xff]
    %v11096 = vld [vmem:[#allocation12 + $0x250] sm:$0xff]
    %v11097 = vld [vmem:[#allocation12 + $0x258] sm:$0xff]
    %v11098 = vld [vmem:[#allocation12 + $0x260] sm:$0xff]
    %v11099 = vld [vmem:[#allocation12 + $0x268] sm:$0xff]
    %v11100 = vld [vmem:[#allocation12 + $0x270] sm:$0xff]
    %v11101 = vld [vmem:[#allocation12 + $0x278] sm:$0xff]
    %v11102 = vld [vmem:[#allocation12 + $0x280] sm:$0xff]
    %v11103 = vld [vmem:[#allocation12 + $0x288] sm:$0xff]
    %v11104 = vld [vmem:[#allocation12 + $0x290] sm:$0xff]
    %v11105 = vld [vmem:[#allocation12 + $0x298] sm:$0xff]
    %v11106 = vld [vmem:[#allocation12 + $0x2a0] sm:$0xff]
    %v11107 = vld [vmem:[#allocation12 + $0x2a8] sm:$0xff]
    %v11108 = vld [vmem:[#allocation12 + $0x2b0] sm:$0xff]
    %v11109 = vld [vmem:[#allocation12 + $0x2b8] sm:$0xff]
    %v11110 = vld [vmem:[#allocation12 + $0x2c0] sm:$0xff]
    %v11111 = vld [vmem:[#allocation12 + $0x2c8] sm:$0xff]
    %v11112 = vld [vmem:[#allocation12 + $0x2d0] sm:$0xff]
    %v11113 = vld [vmem:[#allocation12 + $0x2d8] sm:$0xff]
    %v11114 = vld [vmem:[#allocation12 + $0x2e0] sm:$0xff]
    %v11115 = vld [vmem:[#allocation12 + $0x2e8] sm:$0xff]
    %v11116 = vld [vmem:[#allocation12 + $0x2f0] sm:$0xff]
    %v11117 = vld [vmem:[#allocation12 + $0x2f8] sm:$0xff]
    %v11118 = vpack.c.bf16 %v8835, %v8835
    %v11119 = vpack.c.bf16 %v8836, %v8836
    %v11120 = vpack.c.bf16 %v8837, %v8837
    %v11121 = vpack.c.bf16 %v8838, %v8838
    %v11122 = vpack.c.bf16 %v8839, %v8839
    %v11123 = vpack.c.bf16 %v8840, %v8840
    %v11124 = vld [vmem:[#allocation12 + $0x300] sm:$0xff]
    %v11125 = vld [vmem:[#allocation12 + $0x308] sm:$0xff]
    %v11126 = vld [vmem:[#allocation12 + $0x310] sm:$0xff]
    %v11127 = vld [vmem:[#allocation12 + $0x318] sm:$0xff]
    %v11128 = vld [vmem:[#allocation12 + $0x320] sm:$0xff]
    %v11129 = vld [vmem:[#allocation12 + $0x328] sm:$0xff]
    %v11130 = vld [vmem:[#allocation12 + $0x330] sm:$0xff]
    %v11131 = vld [vmem:[#allocation12 + $0x338] sm:$0xff]
    %v11132 = vld [vmem:[#allocation12 + $0x340] sm:$0xff]
    %v11133 = vld [vmem:[#allocation12 + $0x348] sm:$0xff]
    %v11134 = vld [vmem:[#allocation12 + $0x350] sm:$0xff]
    %v11135 = vld [vmem:[#allocation12 + $0x358] sm:$0xff]
    %v11136 = vld [vmem:[#allocation12 + $0x360] sm:$0xff]
    %v11137 = vld [vmem:[#allocation12 + $0x368] sm:$0xff]
    %v11138 = vld [vmem:[#allocation12 + $0x370] sm:$0xff]
    %v11139 = vld [vmem:[#allocation12 + $0x378] sm:$0xff]
    %v11140 = vld [vmem:[#allocation12 + $0x380] sm:$0xff]
    %v11141 = vld [vmem:[#allocation12 + $0x388] sm:$0xff]
    %v11142 = vld [vmem:[#allocation12 + $0x390] sm:$0xff]
    %v11143 = vld [vmem:[#allocation12 + $0x398] sm:$0xff]
    %v11144 = vld [vmem:[#allocation12 + $0x3a0] sm:$0xff]
    %v11145 = vld [vmem:[#allocation12 + $0x3a8] sm:$0xff]
    %v11146 = vld [vmem:[#allocation12 + $0x3b0] sm:$0xff]
    %v11147 = vld [vmem:[#allocation12 + $0x3b8] sm:$0xff]
    %v11148 = vld [vmem:[#allocation12 + $0x3c0] sm:$0xff]
    %v11149 = vld [vmem:[#allocation12 + $0x3c8] sm:$0xff]
    %v11150 = vld [vmem:[#allocation12 + $0x3d0] sm:$0xff]
    %v11151 = vld [vmem:[#allocation12 + $0x3d8] sm:$0xff]
    %v11152 = vld [vmem:[#allocation12 + $0x3e0] sm:$0xff]
    %v11153 = vld [vmem:[#allocation12 + $0x3e8] sm:$0xff]
    %v11154 = vld [vmem:[#allocation12 + $0x3f0] sm:$0xff]
    %v11155 = vld [vmem:[#allocation12 + $0x3f8] sm:$0xff]
    %v11156 = vld [vmem:[#allocation12 + $0x400] sm:$0xff]
    %v11157 = vld [vmem:[#allocation12 + $0x408] sm:$0xff]
    %v11158 = vld [vmem:[#allocation12 + $0x410] sm:$0xff]
    %v11159 = vld [vmem:[#allocation12 + $0x418] sm:$0xff]
    %v11160 = vld [vmem:[#allocation12 + $0x420] sm:$0xff]
    %v11161 = vld [vmem:[#allocation12 + $0x428] sm:$0xff]
    %v11162 = vld [vmem:[#allocation12 + $0x430] sm:$0xff]
    %v11163 = vld [vmem:[#allocation12 + $0x438] sm:$0xff]
    %v11164 = vld [vmem:[#allocation12 + $0x440] sm:$0xff]
    %v11165 = vld [vmem:[#allocation12 + $0x448] sm:$0xff]
    %v11166 = vld [vmem:[#allocation12 + $0x450] sm:$0xff]
    %v11167 = vld [vmem:[#allocation12 + $0x458] sm:$0xff]
    %v11168 = vld [vmem:[#allocation12 + $0x460] sm:$0xff]
    %v11169 = vld [vmem:[#allocation12 + $0x468] sm:$0xff]
    %v11170 = vld [vmem:[#allocation12 + $0x470] sm:$0xff]
    %v11171 = vld [vmem:[#allocation12 + $0x478] sm:$0xff]
    %v11172 = vld [vmem:[#allocation12 + $0x480] sm:$0xff]
    %v11173 = vld [vmem:[#allocation12 + $0x488] sm:$0xff]
    %v11174 = vld [vmem:[#allocation12 + $0x490] sm:$0xff]
    %v11175 = vld [vmem:[#allocation12 + $0x498] sm:$0xff]
    %v11176 = vld [vmem:[#allocation12 + $0x4a0] sm:$0xff]
    %v11177 = vld [vmem:[#allocation12 + $0x4a8] sm:$0xff]
    %v11178 = vld [vmem:[#allocation12 + $0x4b0] sm:$0xff]
    %v11179 = vld [vmem:[#allocation12 + $0x4b8] sm:$0xff]
    %v11180 = vld [vmem:[#allocation12 + $0x4c0] sm:$0xff]
    %v11181 = vld [vmem:[#allocation12 + $0x4c8] sm:$0xff]
    %v11182 = vld [vmem:[#allocation12 + $0x4d0] sm:$0xff]
    %v11183 = vld [vmem:[#allocation12 + $0x4d8] sm:$0xff]
    %v11184 = vld [vmem:[#allocation12 + $0x4e0] sm:$0xff]
    %v11185 = vld [vmem:[#allocation12 + $0x4e8] sm:$0xff]
    %v11186 = vld [vmem:[#allocation12 + $0x4f0] sm:$0xff]
    %v11187 = vld [vmem:[#allocation12 + $0x4f8] sm:$0xff]
    %v11188 = vld [vmem:[#allocation12 + $0x500] sm:$0xff]
    %v11189 = vld [vmem:[#allocation12 + $0x508] sm:$0xff]
    %v11190 = vld [vmem:[#allocation12 + $0x510] sm:$0xff]
    %v11191 = vld [vmem:[#allocation12 + $0x518] sm:$0xff]
    %v11192 = vld [vmem:[#allocation12 + $0x520] sm:$0xff]
    %v11193 = vld [vmem:[#allocation12 + $0x528] sm:$0xff]
    %v11194 = vld [vmem:[#allocation12 + $0x530] sm:$0xff]
    %v11195 = vld [vmem:[#allocation12 + $0x538] sm:$0xff]
    %v11196 = vld [vmem:[#allocation12 + $0x540] sm:$0xff]
    %v11197 = vld [vmem:[#allocation12 + $0x548] sm:$0xff]
    %v11198 = vld [vmem:[#allocation12 + $0x550] sm:$0xff]
    %v11199 = vld [vmem:[#allocation12 + $0x558] sm:$0xff]
    %v11200 = vld [vmem:[#allocation12 + $0x560] sm:$0xff]
    %v11201 = vld [vmem:[#allocation12 + $0x568] sm:$0xff]
    %v11202 = vld [vmem:[#allocation12 + $0x570] sm:$0xff]
    %v11203 = vld [vmem:[#allocation12 + $0x578] sm:$0xff]
    %v11204 = vld [vmem:[#allocation12 + $0x580] sm:$0xff]
    %v11205 = vld [vmem:[#allocation12 + $0x588] sm:$0xff]
    %v11206 = vld [vmem:[#allocation12 + $0x590] sm:$0xff]
    %v11207 = vld [vmem:[#allocation12 + $0x598] sm:$0xff]
    %v11208 = vld [vmem:[#allocation12 + $0x5a0] sm:$0xff]
    %v11209 = vld [vmem:[#allocation12 + $0x5a8] sm:$0xff]
    %v11210 = vld [vmem:[#allocation12 + $0x5b0] sm:$0xff]
    %v11211 = vld [vmem:[#allocation12 + $0x5b8] sm:$0xff]
    %v11212 = vld [vmem:[#allocation12 + $0x5c0] sm:$0xff]
    %v11213 = vld [vmem:[#allocation12 + $0x5c8] sm:$0xff]
    %v11214 = vld [vmem:[#allocation12 + $0x5d0] sm:$0xff]
    %v11215 = vld [vmem:[#allocation12 + $0x5d8] sm:$0xff]
    %v11216 = vld [vmem:[#allocation12 + $0x5e0] sm:$0xff]
    %v11217 = vld [vmem:[#allocation12 + $0x5e8] sm:$0xff]
    %v11218 = vld [vmem:[#allocation12 + $0x5f0] sm:$0xff]
    %v11219 = vld [vmem:[#allocation12 + $0x5f8] sm:$0xff]
    %v11220 = vpack.c.bf16 %v8841, %v8841
    %v11221 = vpack.c.bf16 %v8842, %v8842
    %v11222 = vpack.c.bf16 %v8843, %v8843
    %v11223 = vpack.c.bf16 %v8844, %v8844
    %v11224 = vpack.c.bf16 %v8845, %v8845
    %v11225 = vpack.c.bf16 %v8846, %v8846
    %v11322 = vunpack.c.l.b16 %v11124
    %v11323 = vunpack.c.h.b16 %v11124
    %v11324 = vunpack.c.l.b16 %v11125
    %v11325 = vunpack.c.h.b16 %v11125
    %v11326 = vunpack.c.l.b16 %v11126
    %v11327 = vunpack.c.h.b16 %v11126
    %v11328 = vunpack.c.l.b16 %v11127
    %v11329 = vunpack.c.h.b16 %v11127
    %v11330 = vunpack.c.l.b16 %v11128
    %v11331 = vunpack.c.h.b16 %v11128
    %v11332 = vunpack.c.l.b16 %v11129
    %v11333 = vunpack.c.h.b16 %v11129
    %v11334 = vunpack.c.l.b16 %v11130
    %v11335 = vunpack.c.h.b16 %v11130
    %v11336 = vunpack.c.l.b16 %v11131
    %v11337 = vunpack.c.h.b16 %v11131
    %v11338 = vunpack.c.l.b16 %v11132
    %v11339 = vunpack.c.h.b16 %v11132
    %v11340 = vunpack.c.l.b16 %v11133
    %v11341 = vunpack.c.h.b16 %v11133
    %v11342 = vunpack.c.l.b16 %v11134
    %v11343 = vunpack.c.h.b16 %v11134
    %v11344 = vunpack.c.l.b16 %v11135
    %v11345 = vunpack.c.h.b16 %v11135
    %v11346 = vunpack.c.l.b16 %v11136
    %v11347 = vunpack.c.h.b16 %v11136
    %v11348 = vunpack.c.l.b16 %v11137
    %v11349 = vunpack.c.h.b16 %v11137
    %v11350 = vunpack.c.l.b16 %v11138
    %v11351 = vunpack.c.h.b16 %v11138
    %v11352 = vunpack.c.l.b16 %v11139
    %v11353 = vunpack.c.h.b16 %v11139
    %v11354 = vunpack.c.l.b16 %v11140
    %v11355 = vunpack.c.h.b16 %v11140
    %v11356 = vunpack.c.l.b16 %v11141
    %v11357 = vunpack.c.h.b16 %v11141
    %v11358 = vunpack.c.l.b16 %v11142
    %v11359 = vunpack.c.h.b16 %v11142
    %v11360 = vunpack.c.l.b16 %v11143
    %v11361 = vunpack.c.h.b16 %v11143
    %v11362 = vunpack.c.l.b16 %v11144
    %v11363 = vunpack.c.h.b16 %v11144
    %v11364 = vunpack.c.l.b16 %v11145
    %v11365 = vunpack.c.h.b16 %v11145
    %v11366 = vunpack.c.l.b16 %v11146
    %v11367 = vunpack.c.h.b16 %v11146
    %v11368 = vunpack.c.l.b16 %v11147
    %v11369 = vunpack.c.h.b16 %v11147
    %v11370 = vunpack.c.l.b16 %v11148
    %v11371 = vunpack.c.h.b16 %v11148
    %v11372 = vunpack.c.l.b16 %v11149
    %v11373 = vunpack.c.h.b16 %v11149
    %v11374 = vunpack.c.l.b16 %v11150
    %v11375 = vunpack.c.h.b16 %v11150
    %v11376 = vunpack.c.l.b16 %v11151
    %v11377 = vunpack.c.h.b16 %v11151
    %v11378 = vunpack.c.l.b16 %v11152
    %v11379 = vunpack.c.h.b16 %v11152
    %v11380 = vunpack.c.l.b16 %v11153
    %v11381 = vunpack.c.h.b16 %v11153
    %v11382 = vunpack.c.l.b16 %v11154
    %v11383 = vunpack.c.h.b16 %v11154
    %v11384 = vunpack.c.l.b16 %v11155
    %v11385 = vunpack.c.h.b16 %v11155
    %v11386 = vunpack.c.l.b16 %v11156
    %v11387 = vunpack.c.h.b16 %v11156
    %v11388 = vunpack.c.l.b16 %v11157
    %v11389 = vunpack.c.h.b16 %v11157
    %v11390 = vunpack.c.l.b16 %v11158
    %v11391 = vunpack.c.h.b16 %v11158
    %v11392 = vunpack.c.l.b16 %v11159
    %v11393 = vunpack.c.h.b16 %v11159
    %v11394 = vunpack.c.l.b16 %v11160
    %v11395 = vunpack.c.h.b16 %v11160
    %v11396 = vunpack.c.l.b16 %v11161
    %v11397 = vunpack.c.h.b16 %v11161
    %v11398 = vunpack.c.l.b16 %v11162
    %v11399 = vunpack.c.h.b16 %v11162
    %v11400 = vunpack.c.l.b16 %v11163
    %v11401 = vunpack.c.h.b16 %v11163
    %v11402 = vunpack.c.l.b16 %v11164
    %v11403 = vunpack.c.h.b16 %v11164
    %v11404 = vunpack.c.l.b16 %v11165
    %v11405 = vunpack.c.h.b16 %v11165
    %v11406 = vunpack.c.l.b16 %v11166
    %v11407 = vunpack.c.h.b16 %v11166
    %v11408 = vunpack.c.l.b16 %v11167
    %v11409 = vunpack.c.h.b16 %v11167
    %v11410 = vunpack.c.l.b16 %v11168
    %v11411 = vunpack.c.h.b16 %v11168
    %v11412 = vunpack.c.l.b16 %v11169
    %v11413 = vunpack.c.h.b16 %v11169
    %v11414 = vunpack.c.l.b16 %v11170
    %v11415 = vunpack.c.h.b16 %v11170
    %v11416 = vunpack.c.l.b16 %v11171
    %v11417 = vunpack.c.h.b16 %v11171
    %v11418 = vunpack.c.l.b16 %v11172
    %v11419 = vunpack.c.h.b16 %v11172
    %v11420 = vunpack.c.l.b16 %v11173
    %v11421 = vunpack.c.h.b16 %v11173
    %v11422 = vunpack.c.l.b16 %v11174
    %v11423 = vunpack.c.h.b16 %v11174
    %v11424 = vunpack.c.l.b16 %v11175
    %v11425 = vunpack.c.h.b16 %v11175
    %v11426 = vunpack.c.l.b16 %v11176
    %v11427 = vunpack.c.h.b16 %v11176
    %v11428 = vunpack.c.l.b16 %v11177
    %v11429 = vunpack.c.h.b16 %v11177
    %v11430 = vunpack.c.l.b16 %v11178
    %v11431 = vunpack.c.h.b16 %v11178
    %v11432 = vunpack.c.l.b16 %v11179
    %v11433 = vunpack.c.h.b16 %v11179
    %v11434 = vunpack.c.l.b16 %v11180
    %v11435 = vunpack.c.h.b16 %v11180
    %v11436 = vunpack.c.l.b16 %v11181
    %v11437 = vunpack.c.h.b16 %v11181
    %v11438 = vunpack.c.l.b16 %v11182
    %v11439 = vunpack.c.h.b16 %v11182
    %v11440 = vunpack.c.l.b16 %v11183
    %v11441 = vunpack.c.h.b16 %v11183
    %v11442 = vunpack.c.l.b16 %v11184
    %v11443 = vunpack.c.h.b16 %v11184
    %v11444 = vunpack.c.l.b16 %v11185
    %v11445 = vunpack.c.h.b16 %v11185
    %v11446 = vunpack.c.l.b16 %v11186
    %v11447 = vunpack.c.h.b16 %v11186
    %v11448 = vunpack.c.l.b16 %v11187
    %v11449 = vunpack.c.h.b16 %v11187
    %v11450 = vunpack.c.l.b16 %v11188
    %v11451 = vunpack.c.h.b16 %v11188
    %v11452 = vunpack.c.l.b16 %v11189
    %v11453 = vunpack.c.h.b16 %v11189
    %v11454 = vunpack.c.l.b16 %v11190
    %v11455 = vunpack.c.h.b16 %v11190
    %v11456 = vunpack.c.l.b16 %v11191
    %v11457 = vunpack.c.h.b16 %v11191
    %v11458 = vunpack.c.l.b16 %v11192
    %v11459 = vunpack.c.h.b16 %v11192
    %v11460 = vunpack.c.l.b16 %v11193
    %v11461 = vunpack.c.h.b16 %v11193
    %v11462 = vunpack.c.l.b16 %v11194
    %v11463 = vunpack.c.h.b16 %v11194
    %v11464 = vunpack.c.l.b16 %v11195
    %v11465 = vunpack.c.h.b16 %v11195
    %v11466 = vunpack.c.l.b16 %v11196
    %v11467 = vunpack.c.h.b16 %v11196
    %v11468 = vunpack.c.l.b16 %v11197
    %v11469 = vunpack.c.h.b16 %v11197
    %v11470 = vunpack.c.l.b16 %v11198
    %v11471 = vunpack.c.h.b16 %v11198
    %v11472 = vunpack.c.l.b16 %v11199
    %v11473 = vunpack.c.h.b16 %v11199
    %v11474 = vunpack.c.l.b16 %v11200
    %v11475 = vunpack.c.h.b16 %v11200
    %v11476 = vunpack.c.l.b16 %v11201
    %v11477 = vunpack.c.h.b16 %v11201
    %v11478 = vunpack.c.l.b16 %v11202
    %v11479 = vunpack.c.h.b16 %v11202
    %v11480 = vunpack.c.l.b16 %v11203
    %v11481 = vunpack.c.h.b16 %v11203
    %v11482 = vunpack.c.l.b16 %v11204
    %v11483 = vunpack.c.h.b16 %v11204
    %v11484 = vunpack.c.l.b16 %v11205
    %v11485 = vunpack.c.h.b16 %v11205
    %v11486 = vunpack.c.l.b16 %v11206
    %v11487 = vunpack.c.h.b16 %v11206
    %v11488 = vunpack.c.l.b16 %v11207
    %v11489 = vunpack.c.h.b16 %v11207
    %v11490 = vunpack.c.l.b16 %v11208
    %v11491 = vunpack.c.h.b16 %v11208
    %v11492 = vunpack.c.l.b16 %v11209
    %v11493 = vunpack.c.h.b16 %v11209
    %v11494 = vunpack.c.l.b16 %v11210
    %v11495 = vunpack.c.h.b16 %v11210
    %v11496 = vunpack.c.l.b16 %v11211
    %v11497 = vunpack.c.h.b16 %v11211
    %v11498 = vunpack.c.l.b16 %v11212
    %v11499 = vunpack.c.h.b16 %v11212
    %v11500 = vunpack.c.l.b16 %v11213
    %v11501 = vunpack.c.h.b16 %v11213
    %v11502 = vunpack.c.l.b16 %v11214
    %v11503 = vunpack.c.h.b16 %v11214
    %v11504 = vunpack.c.l.b16 %v11215
    %v11505 = vunpack.c.h.b16 %v11215
    %v11506 = vunpack.c.l.b16 %v11216
    %v11507 = vunpack.c.h.b16 %v11216
    %v11508 = vunpack.c.l.b16 %v11217
    %v11509 = vunpack.c.h.b16 %v11217
    %v11510 = vunpack.c.l.b16 %v11218
    %v11511 = vunpack.c.h.b16 %v11218
    %v11512 = vunpack.c.l.b16 %v11219
    %v11513 = vunpack.c.h.b16 %v11219
    %v11514 = vpack.c.b16 %v11324, %v11322
    %v11515 = vpack.c.b16 %v11325, %v11323
    %v11516 = vpack.c.b16 %v11328, %v11326
    %v11517 = vpack.c.b16 %v11329, %v11327
    %v11518 = vpack.c.b16 %v11332, %v11330
    %v11519 = vpack.c.b16 %v11333, %v11331
    %v11520 = vpack.c.b16 %v11336, %v11334
    %v11521 = vpack.c.b16 %v11337, %v11335
    %v11522 = vpack.c.b16 %v11340, %v11338
    %v11523 = vpack.c.b16 %v11341, %v11339
    %v11524 = vpack.c.b16 %v11344, %v11342
    %v11525 = vpack.c.b16 %v11345, %v11343
    %v11526 = vpack.c.b16 %v11348, %v11346
    %v11527 = vpack.c.b16 %v11349, %v11347
    %v11528 = vpack.c.b16 %v11352, %v11350
    %v11529 = vpack.c.b16 %v11353, %v11351
    %v11530 = vpack.c.b16 %v11356, %v11354
    %v11531 = vpack.c.b16 %v11357, %v11355
    %v11532 = vpack.c.b16 %v11360, %v11358
    %v11533 = vpack.c.b16 %v11361, %v11359
    %v11534 = vpack.c.b16 %v11364, %v11362
    %v11535 = vpack.c.b16 %v11365, %v11363
    %v11536 = vpack.c.b16 %v11368, %v11366
    %v11537 = vpack.c.b16 %v11369, %v11367
    %v11538 = vpack.c.b16 %v11372, %v11370
    %v11539 = vpack.c.b16 %v11373, %v11371
    %v11540 = vpack.c.b16 %v11376, %v11374
    %v11541 = vpack.c.b16 %v11377, %v11375
    %v11542 = vpack.c.b16 %v11380, %v11378
    %v11543 = vpack.c.b16 %v11381, %v11379
    %v11544 = vpack.c.b16 %v11384, %v11382
    %v11545 = vpack.c.b16 %v11385, %v11383
    %v11546 = vpack.c.b16 %v11388, %v11386
    %v11547 = vpack.c.b16 %v11389, %v11387
    %v11548 = vpack.c.b16 %v11392, %v11390
    %v11549 = vpack.c.b16 %v11393, %v11391
    %v11550 = vpack.c.b16 %v11396, %v11394
    %v11551 = vpack.c.b16 %v11397, %v11395
    %v11552 = vpack.c.b16 %v11400, %v11398
    %v11553 = vpack.c.b16 %v11401, %v11399
    %v11554 = vpack.c.b16 %v11404, %v11402
    %v11555 = vpack.c.b16 %v11405, %v11403
    %v11556 = vpack.c.b16 %v11408, %v11406
    %v11557 = vpack.c.b16 %v11409, %v11407
    %v11558 = vpack.c.b16 %v11412, %v11410
    %v11559 = vpack.c.b16 %v11413, %v11411
    %v11560 = vpack.c.b16 %v11416, %v11414
    %v11561 = vpack.c.b16 %v11417, %v11415
    %v11562 = vpack.c.b16 %v11420, %v11418
    %v11563 = vpack.c.b16 %v11421, %v11419
    %v11564 = vpack.c.b16 %v11424, %v11422
    %v11565 = vpack.c.b16 %v11425, %v11423
    %v11566 = vpack.c.b16 %v11428, %v11426
    %v11567 = vpack.c.b16 %v11429, %v11427
    %v11568 = vpack.c.b16 %v11432, %v11430
    %v11569 = vpack.c.b16 %v11433, %v11431
    %v11570 = vpack.c.b16 %v11436, %v11434
    %v11571 = vpack.c.b16 %v11437, %v11435
    %v11572 = vpack.c.b16 %v11440, %v11438
    %v11573 = vpack.c.b16 %v11441, %v11439
    %v11574 = vpack.c.b16 %v11444, %v11442
    %v11575 = vpack.c.b16 %v11445, %v11443
    %v11576 = vpack.c.b16 %v11448, %v11446
    %v11577 = vpack.c.b16 %v11449, %v11447
    %v11578 = vpack.c.b16 %v11452, %v11450
    %v11579 = vpack.c.b16 %v11453, %v11451
    %v11580 = vpack.c.b16 %v11456, %v11454
    %v11581 = vpack.c.b16 %v11457, %v11455
    %v11582 = vpack.c.b16 %v11460, %v11458
    %v11583 = vpack.c.b16 %v11461, %v11459
    %v11584 = vpack.c.b16 %v11464, %v11462
    %v11585 = vpack.c.b16 %v11465, %v11463
    %v11586 = vpack.c.b16 %v11468, %v11466
    %v11587 = vpack.c.b16 %v11469, %v11467
    %v11588 = vpack.c.b16 %v11472, %v11470
    %v11589 = vpack.c.b16 %v11473, %v11471
    %v11590 = vpack.c.b16 %v11476, %v11474
    %v11591 = vpack.c.b16 %v11477, %v11475
    %v11592 = vpack.c.b16 %v11480, %v11478
    %v11593 = vpack.c.b16 %v11481, %v11479
    %v11594 = vpack.c.b16 %v11484, %v11482
    %v11595 = vpack.c.b16 %v11485, %v11483
    %v11596 = vpack.c.b16 %v11488, %v11486
    %v11597 = vpack.c.b16 %v11489, %v11487
    %v11598 = vpack.c.b16 %v11492, %v11490
    %v11599 = vpack.c.b16 %v11493, %v11491
    %v11600 = vpack.c.b16 %v11496, %v11494
    %v11601 = vpack.c.b16 %v11497, %v11495
    %v11602 = vpack.c.b16 %v11500, %v11498
    %v11603 = vpack.c.b16 %v11501, %v11499
    %v11604 = vpack.c.b16 %v11504, %v11502
    %v11605 = vpack.c.b16 %v11505, %v11503
    %v11606 = vpack.c.b16 %v11508, %v11506
    %v11607 = vpack.c.b16 %v11509, %v11507
    %v11608 = vpack.c.b16 %v11512, %v11510
    %v11609 = vpack.c.b16 %v11513, %v11511
    %11706 = vmatprep.subr.bf16.mxu0 %v11515
    %11707 = vmatpush1.bf16.msra.mxu0 %v11514
    %11708 = vmatprep.subr.bf16.mxu0 %v11517
    %11709 = vmatpush1.bf16.msra.mxu0 %v11516
    %11710 = vmatprep.subr.bf16.mxu0 %v11519
    %11711 = vmatpush1.bf16.msra.mxu0 %v11518
    %11712 = vmatprep.subr.bf16.mxu0 %v11521
    %11713 = vmatpush1.bf16.msra.mxu0 %v11520
    %11714 = vmatprep.subr.bf16.mxu0 %v11523
    %11715 = vmatpush1.bf16.msra.mxu0 %v11522
    %11716 = vmatprep.subr.bf16.mxu0 %v11525
    %11717 = vmatpush1.bf16.msra.mxu0 %v11524
    %11718 = vmatprep.subr.bf16.mxu0 %v11527
    %11719 = vmatpush1.bf16.msra.mxu0 %v11526
    %11720 = vmatprep.subr.bf16.mxu0 %v11529
    %11721 = vmatpush1.bf16.msra.mxu0 %v11528
    %11722 = vmatprep.subr.bf16.mxu0 %v11531
    %11723 = vmatpush1.bf16.msra.mxu0 %v11530
    %11724 = vmatprep.subr.bf16.mxu0 %v11533
    %11725 = vmatpush1.bf16.msra.mxu0 %v11532
    %11726 = vmatprep.subr.bf16.mxu0 %v11535
    %11727 = vmatpush1.bf16.msra.mxu0 %v11534
    %11728 = vmatprep.subr.bf16.mxu0 %v11537
    %11729 = vmatpush1.bf16.msra.mxu0 %v11536
    %11730 = vmatprep.subr.bf16.mxu0 %v11539
    %11731 = vmatpush1.bf16.msra.mxu0 %v11538
    %11732 = vmatprep.subr.bf16.mxu0 %v11541
    %11733 = vmatpush1.bf16.msra.mxu0 %v11540
    %11734 = vmatprep.subr.bf16.mxu0 %v11543
    %11735 = vmatpush1.bf16.msra.mxu0 %v11542
    %11736 = vmatprep.subr.bf16.mxu0 %v11545
    %11737 = vmatpush1.bf16.msra.mxu0 %v11544
    %11738 = vmatprep.mubr.bf16.mxu0 %v11221
    %11739 = vmatmul.mubr.bf16.gmra.mrb[0].mxu0 %v11220
    %v11740 = vpop.f32.mrb[0].mxu0
    %v11741 = vadd.f32 0.0, %v11740
    %v11742 = vpop.f32.mrb[0].mxu0
    %v11743 = vadd.f32 0.0, %v11742
    %v11744 = vpop.f32.mrb[0].mxu0
    %v11745 = vpop.f32.mrb[0].mxu0
    %11746 = vdwg.mxu0
    %11747 = vmatprep.subr.bf16.mxu0 %v11547
    %11748 = vmatpush1.bf16.msra.mxu0 %v11546
    %11749 = vmatprep.subr.bf16.mxu0 %v11549
    %11750 = vmatpush1.bf16.msra.mxu0 %v11548
    %11751 = vmatprep.subr.bf16.mxu0 %v11551
    %11752 = vmatpush1.bf16.msra.mxu0 %v11550
    %11753 = vmatprep.subr.bf16.mxu0 %v11553
    %11754 = vmatpush1.bf16.msra.mxu0 %v11552
    %11755 = vmatprep.subr.bf16.mxu0 %v11555
    %11756 = vmatpush1.bf16.msra.mxu0 %v11554
    %11757 = vmatprep.subr.bf16.mxu0 %v11557
    %11758 = vmatpush1.bf16.msra.mxu0 %v11556
    %11759 = vmatprep.subr.bf16.mxu0 %v11559
    %11760 = vmatpush1.bf16.msra.mxu0 %v11558
    %11761 = vmatprep.subr.bf16.mxu0 %v11561
    %11762 = vmatpush1.bf16.msra.mxu0 %v11560
    %11763 = vmatprep.subr.bf16.mxu0 %v11563
    %11764 = vmatpush1.bf16.msra.mxu0 %v11562
    %11765 = vmatprep.subr.bf16.mxu0 %v11565
    %11766 = vmatpush1.bf16.msra.mxu0 %v11564
    %11767 = vmatprep.subr.bf16.mxu0 %v11567
    %11768 = vmatpush1.bf16.msra.mxu0 %v11566
    %11769 = vmatprep.subr.bf16.mxu0 %v11569
    %11770 = vmatpush1.bf16.msra.mxu0 %v11568
    %11771 = vmatprep.subr.bf16.mxu0 %v11571
    %11772 = vmatpush1.bf16.msra.mxu0 %v11570
    %11773 = vmatprep.subr.bf16.mxu0 %v11573
    %11774 = vmatpush1.bf16.msra.mxu0 %v11572
    %11775 = vmatprep.subr.bf16.mxu0 %v11575
    %11776 = vmatpush1.bf16.msra.mxu0 %v11574
    %11777 = vmatprep.subr.bf16.mxu0 %v11577
    %11778 = vmatpush1.bf16.msra.mxu0 %v11576
    %11779 = vmatprep.mubr.bf16.mxu0 %v11223
    %11780 = vmatmul.mubr.bf16.gmra.mrb[0].mxu0 %v11222
    %v11781 = vpop.f32.mrb[0].mxu0
    %v11782 = vadd.f32 %v11741, %v11781
    %v11783 = vpop.f32.mrb[0].mxu0
    %v11784 = vadd.f32 %v11743, %v11783
    %v11785 = vpop.f32.mrb[0].mxu0
    %v11786 = vpop.f32.mrb[0].mxu0
    %11787 = vdwg.mxu0
    %11788 = vmatprep.subr.bf16.mxu0 %v11579
    %11789 = vmatpush1.bf16.msra.mxu0 %v11578
    %11790 = vmatprep.subr.bf16.mxu0 %v11581
    %11791 = vmatpush1.bf16.msra.mxu0 %v11580
    %11792 = vmatprep.subr.bf16.mxu0 %v11583
    %11793 = vmatpush1.bf16.msra.mxu0 %v11582
    %11794 = vmatprep.subr.bf16.mxu0 %v11585
    %11795 = vmatpush1.bf16.msra.mxu0 %v11584
    %11796 = vmatprep.subr.bf16.mxu0 %v11587
    %11797 = vmatpush1.bf16.msra.mxu0 %v11586
    %11798 = vmatprep.subr.bf16.mxu0 %v11589
    %11799 = vmatpush1.bf16.msra.mxu0 %v11588
    %11800 = vmatprep.subr.bf16.mxu0 %v11591
    %11801 = vmatpush1.bf16.msra.mxu0 %v11590
    %11802 = vmatprep.subr.bf16.mxu0 %v11593
    %11803 = vmatpush1.bf16.msra.mxu0 %v11592
    %11804 = vmatprep.subr.bf16.mxu0 %v11595
    %11805 = vmatpush1.bf16.msra.mxu0 %v11594
    %11806 = vmatprep.subr.bf16.mxu0 %v11597
    %11807 = vmatpush1.bf16.msra.mxu0 %v11596
    %11808 = vmatprep.subr.bf16.mxu0 %v11599
    %11809 = vmatpush1.bf16.msra.mxu0 %v11598
    %11810 = vmatprep.subr.bf16.mxu0 %v11601
    %11811 = vmatpush1.bf16.msra.mxu0 %v11600
    %11812 = vmatprep.subr.bf16.mxu0 %v11603
    %11813 = vmatpush1.bf16.msra.mxu0 %v11602
    %11814 = vmatprep.subr.bf16.mxu0 %v11605
    %11815 = vmatpush1.bf16.msra.mxu0 %v11604
    %11816 = vmatprep.subr.bf16.mxu0 %v11607
    %11817 = vmatpush1.bf16.msra.mxu0 %v11606
    %11818 = vmatprep.subr.bf16.mxu0 %v11609
    %11819 = vmatpush1.bf16.msra.mxu0 %v11608
    %11820 = vmatprep.mubr.bf16.mxu0 %v11225
    %11821 = vmatmul.mubr.bf16.gmra.mrb[0].mxu0 %v11224
    %v11822 = vpop.f32.mrb[0].mxu0
    %v11823 = vadd.f32 %v11782, %v11822
    %v11824 = vpop.f32.mrb[0].mxu0
    %v11825 = vadd.f32 %v11784, %v11824
    %v11826 = vpop.f32.mrb[0].mxu0
    %v11827 = vpop.f32.mrb[0].mxu0
    %11828 = vdwg.mxu0
    %v11925 = vunpack.c.l.b16 %v11022
    %v11926 = vunpack.c.h.b16 %v11022
    %v11927 = vunpack.c.l.b16 %v11023
    %v11928 = vunpack.c.h.b16 %v11023
    %v11929 = vunpack.c.l.b16 %v11024
    %v11930 = vunpack.c.h.b16 %v11024
    %v11931 = vunpack.c.l.b16 %v11025
    %v11932 = vunpack.c.h.b16 %v11025
    %v11933 = vunpack.c.l.b16 %v11026
    %v11934 = vunpack.c.h.b16 %v11026
    %v11935 = vunpack.c.l.b16 %v11027
    %v11936 = vunpack.c.h.b16 %v11027
    %v11937 = vunpack.c.l.b16 %v11028
    %v11938 = vunpack.c.h.b16 %v11028
    %v11939 = vunpack.c.l.b16 %v11029
    %v11940 = vunpack.c.h.b16 %v11029
    %v11941 = vunpack.c.l.b16 %v11030
    %v11942 = vunpack.c.h.b16 %v11030
    %v11943 = vunpack.c.l.b16 %v11031
    %v11944 = vunpack.c.h.b16 %v11031
    %v11945 = vunpack.c.l.b16 %v11032
    %v11946 = vunpack.c.h.b16 %v11032
    %v11947 = vunpack.c.l.b16 %v11033
    %v11948 = vunpack.c.h.b16 %v11033
    %v11949 = vunpack.c.l.b16 %v11034
    %v11950 = vunpack.c.h.b16 %v11034
    %v11951 = vunpack.c.l.b16 %v11035
    %v11952 = vunpack.c.h.b16 %v11035
    %v11953 = vunpack.c.l.b16 %v11036
    %v11954 = vunpack.c.h.b16 %v11036
    %v11955 = vunpack.c.l.b16 %v11037
    %v11956 = vunpack.c.h.b16 %v11037
    %v11957 = vunpack.c.l.b16 %v11038
    %v11958 = vunpack.c.h.b16 %v11038
    %v11959 = vunpack.c.l.b16 %v11039
    %v11960 = vunpack.c.h.b16 %v11039
    %v11961 = vunpack.c.l.b16 %v11040
    %v11962 = vunpack.c.h.b16 %v11040
    %v11963 = vunpack.c.l.b16 %v11041
    %v11964 = vunpack.c.h.b16 %v11041
    %v11965 = vunpack.c.l.b16 %v11042
    %v11966 = vunpack.c.h.b16 %v11042
    %v11967 = vunpack.c.l.b16 %v11043
    %v11968 = vunpack.c.h.b16 %v11043
    %v11969 = vunpack.c.l.b16 %v11044
    %v11970 = vunpack.c.h.b16 %v11044
    %v11971 = vunpack.c.l.b16 %v11045
    %v11972 = vunpack.c.h.b16 %v11045
    %v11973 = vunpack.c.l.b16 %v11046
    %v11974 = vunpack.c.h.b16 %v11046
    %v11975 = vunpack.c.l.b16 %v11047
    %v11976 = vunpack.c.h.b16 %v11047
    %v11977 = vunpack.c.l.b16 %v11048
    %v11978 = vunpack.c.h.b16 %v11048
    %v11979 = vunpack.c.l.b16 %v11049
    %v11980 = vunpack.c.h.b16 %v11049
    %v11981 = vunpack.c.l.b16 %v11050
    %v11982 = vunpack.c.h.b16 %v11050
    %v11983 = vunpack.c.l.b16 %v11051
    %v11984 = vunpack.c.h.b16 %v11051
    %v11985 = vunpack.c.l.b16 %v11052
    %v11986 = vunpack.c.h.b16 %v11052
    %v11987 = vunpack.c.l.b16 %v11053
    %v11988 = vunpack.c.h.b16 %v11053
    %v11989 = vunpack.c.l.b16 %v11054
    %v11990 = vunpack.c.h.b16 %v11054
    %v11991 = vunpack.c.l.b16 %v11055
    %v11992 = vunpack.c.h.b16 %v11055
    %v11993 = vunpack.c.l.b16 %v11056
    %v11994 = vunpack.c.h.b16 %v11056
    %v11995 = vunpack.c.l.b16 %v11057
    %v11996 = vunpack.c.h.b16 %v11057
    %v11997 = vunpack.c.l.b16 %v11058
    %v11998 = vunpack.c.h.b16 %v11058
    %v11999 = vunpack.c.l.b16 %v11059
    %v12000 = vunpack.c.h.b16 %v11059
    %v12001 = vunpack.c.l.b16 %v11060
    %v12002 = vunpack.c.h.b16 %v11060
    %v12003 = vunpack.c.l.b16 %v11061
    %v12004 = vunpack.c.h.b16 %v11061
    %v12005 = vunpack.c.l.b16 %v11062
    %v12006 = vunpack.c.h.b16 %v11062
    %v12007 = vunpack.c.l.b16 %v11063
    %v12008 = vunpack.c.h.b16 %v11063
    %v12009 = vunpack.c.l.b16 %v11064
    %v12010 = vunpack.c.h.b16 %v11064
    %v12011 = vunpack.c.l.b16 %v11065
    %v12012 = vunpack.c.h.b16 %v11065
    %v12013 = vunpack.c.l.b16 %v11066
    %v12014 = vunpack.c.h.b16 %v11066
    %v12015 = vunpack.c.l.b16 %v11067
    %v12016 = vunpack.c.h.b16 %v11067
    %v12017 = vunpack.c.l.b16 %v11068
    %v12018 = vunpack.c.h.b16 %v11068
    %v12019 = vunpack.c.l.b16 %v11069
    %v12020 = vunpack.c.h.b16 %v11069
    %v12021 = vunpack.c.l.b16 %v11070
    %v12022 = vunpack.c.h.b16 %v11070
    %v12023 = vunpack.c.l.b16 %v11071
    %v12024 = vunpack.c.h.b16 %v11071
    %v12025 = vunpack.c.l.b16 %v11072
    %v12026 = vunpack.c.h.b16 %v11072
    %v12027 = vunpack.c.l.b16 %v11073
    %v12028 = vunpack.c.h.b16 %v11073
    %v12029 = vunpack.c.l.b16 %v11074
    %v12030 = vunpack.c.h.b16 %v11074
    %v12031 = vunpack.c.l.b16 %v11075
    %v12032 = vunpack.c.h.b16 %v11075
    %v12033 = vunpack.c.l.b16 %v11076
    %v12034 = vunpack.c.h.b16 %v11076
    %v12035 = vunpack.c.l.b16 %v11077
    %v12036 = vunpack.c.h.b16 %v11077
    %v12037 = vunpack.c.l.b16 %v11078
    %v12038 = vunpack.c.h.b16 %v11078
    %v12039 = vunpack.c.l.b16 %v11079
    %v12040 = vunpack.c.h.b16 %v11079
    %v12041 = vunpack.c.l.b16 %v11080
    %v12042 = vunpack.c.h.b16 %v11080
    %v12043 = vunpack.c.l.b16 %v11081
    %v12044 = vunpack.c.h.b16 %v11081
    %v12045 = vunpack.c.l.b16 %v11082
    %v12046 = vunpack.c.h.b16 %v11082
    %v12047 = vunpack.c.l.b16 %v11083
    %v12048 = vunpack.c.h.b16 %v11083
    %v12049 = vunpack.c.l.b16 %v11084
    %v12050 = vunpack.c.h.b16 %v11084
    %v12051 = vunpack.c.l.b16 %v11085
    %v12052 = vunpack.c.h.b16 %v11085
    %v12053 = vunpack.c.l.b16 %v11086
    %v12054 = vunpack.c.h.b16 %v11086
    %v12055 = vunpack.c.l.b16 %v11087
    %v12056 = vunpack.c.h.b16 %v11087
    %v12057 = vunpack.c.l.b16 %v11088
    %v12058 = vunpack.c.h.b16 %v11088
    %v12059 = vunpack.c.l.b16 %v11089
    %v12060 = vunpack.c.h.b16 %v11089
    %v12061 = vunpack.c.l.b16 %v11090
    %v12062 = vunpack.c.h.b16 %v11090
    %v12063 = vunpack.c.l.b16 %v11091
    %v12064 = vunpack.c.h.b16 %v11091
    %v12065 = vunpack.c.l.b16 %v11092
    %v12066 = vunpack.c.h.b16 %v11092
    %v12067 = vunpack.c.l.b16 %v11093
    %v12068 = vunpack.c.h.b16 %v11093
    %v12069 = vunpack.c.l.b16 %v11094
    %v12070 = vunpack.c.h.b16 %v11094
    %v12071 = vunpack.c.l.b16 %v11095
    %v12072 = vunpack.c.h.b16 %v11095
    %v12073 = vunpack.c.l.b16 %v11096
    %v12074 = vunpack.c.h.b16 %v11096
    %v12075 = vunpack.c.l.b16 %v11097
    %v12076 = vunpack.c.h.b16 %v11097
    %v12077 = vunpack.c.l.b16 %v11098
    %v12078 = vunpack.c.h.b16 %v11098
    %v12079 = vunpack.c.l.b16 %v11099
    %v12080 = vunpack.c.h.b16 %v11099
    %v12081 = vunpack.c.l.b16 %v11100
    %v12082 = vunpack.c.h.b16 %v11100
    %v12083 = vunpack.c.l.b16 %v11101
    %v12084 = vunpack.c.h.b16 %v11101
    %v12085 = vunpack.c.l.b16 %v11102
    %v12086 = vunpack.c.h.b16 %v11102
    %v12087 = vunpack.c.l.b16 %v11103
    %v12088 = vunpack.c.h.b16 %v11103
    %v12089 = vunpack.c.l.b16 %v11104
    %v12090 = vunpack.c.h.b16 %v11104
    %v12091 = vunpack.c.l.b16 %v11105
    %v12092 = vunpack.c.h.b16 %v11105
    %v12093 = vunpack.c.l.b16 %v11106
    %v12094 = vunpack.c.h.b16 %v11106
    %v12095 = vunpack.c.l.b16 %v11107
    %v12096 = vunpack.c.h.b16 %v11107
    %v12097 = vunpack.c.l.b16 %v11108
    %v12098 = vunpack.c.h.b16 %v11108
    %v12099 = vunpack.c.l.b16 %v11109
    %v12100 = vunpack.c.h.b16 %v11109
    %v12101 = vunpack.c.l.b16 %v11110
    %v12102 = vunpack.c.h.b16 %v11110
    %v12103 = vunpack.c.l.b16 %v11111
    %v12104 = vunpack.c.h.b16 %v11111
    %v12105 = vunpack.c.l.b16 %v11112
    %v12106 = vunpack.c.h.b16 %v11112
    %v12107 = vunpack.c.l.b16 %v11113
    %v12108 = vunpack.c.h.b16 %v11113
    %v12109 = vunpack.c.l.b16 %v11114
    %v12110 = vunpack.c.h.b16 %v11114
    %v12111 = vunpack.c.l.b16 %v11115
    %v12112 = vunpack.c.h.b16 %v11115
    %v12113 = vunpack.c.l.b16 %v11116
    %v12114 = vunpack.c.h.b16 %v11116
    %v12115 = vunpack.c.l.b16 %v11117
    %v12116 = vunpack.c.h.b16 %v11117
    %v12117 = vpack.c.b16 %v11927, %v11925
    %v12118 = vpack.c.b16 %v11928, %v11926
    %v12119 = vpack.c.b16 %v11931, %v11929
    %v12120 = vpack.c.b16 %v11932, %v11930
    %v12121 = vpack.c.b16 %v11935, %v11933
    %v12122 = vpack.c.b16 %v11936, %v11934
    %v12123 = vpack.c.b16 %v11939, %v11937
    %v12124 = vpack.c.b16 %v11940, %v11938
    %v12125 = vpack.c.b16 %v11943, %v11941
    %v12126 = vpack.c.b16 %v11944, %v11942
    %v12127 = vpack.c.b16 %v11947, %v11945
    %v12128 = vpack.c.b16 %v11948, %v11946
    %v12129 = vpack.c.b16 %v11951, %v11949
    %v12130 = vpack.c.b16 %v11952, %v11950
    %v12131 = vpack.c.b16 %v11955, %v11953
    %v12132 = vpack.c.b16 %v11956, %v11954
    %v12133 = vpack.c.b16 %v11959, %v11957
    %v12134 = vpack.c.b16 %v11960, %v11958
    %v12135 = vpack.c.b16 %v11963, %v11961
    %v12136 = vpack.c.b16 %v11964, %v11962
    %v12137 = vpack.c.b16 %v11967, %v11965
    %v12138 = vpack.c.b16 %v11968, %v11966
    %v12139 = vpack.c.b16 %v11971, %v11969
    %v12140 = vpack.c.b16 %v11972, %v11970
    %v12141 = vpack.c.b16 %v11975, %v11973
    %v12142 = vpack.c.b16 %v11976, %v11974
    %v12143 = vpack.c.b16 %v11979, %v11977
    %v12144 = vpack.c.b16 %v11980, %v11978
    %v12145 = vpack.c.b16 %v11983, %v11981
    %v12146 = vpack.c.b16 %v11984, %v11982
    %v12147 = vpack.c.b16 %v11987, %v11985
    %v12148 = vpack.c.b16 %v11988, %v11986
    %v12149 = vpack.c.b16 %v11991, %v11989
    %v12150 = vpack.c.b16 %v11992, %v11990
    %v12151 = vpack.c.b16 %v11995, %v11993
    %v12152 = vpack.c.b16 %v11996, %v11994
    %v12153 = vpack.c.b16 %v11999, %v11997
    %v12154 = vpack.c.b16 %v12000, %v11998
    %v12155 = vpack.c.b16 %v12003, %v12001
    %v12156 = vpack.c.b16 %v12004, %v12002
    %v12157 = vpack.c.b16 %v12007, %v12005
    %v12158 = vpack.c.b16 %v12008, %v12006
    %v12159 = vpack.c.b16 %v12011, %v12009
    %v12160 = vpack.c.b16 %v12012, %v12010
    %v12161 = vpack.c.b16 %v12015, %v12013
    %v12162 = vpack.c.b16 %v12016, %v12014
    %v12163 = vpack.c.b16 %v12019, %v12017
    %v12164 = vpack.c.b16 %v12020, %v12018
    %v12165 = vpack.c.b16 %v12023, %v12021
    %v12166 = vpack.c.b16 %v12024, %v12022
    %v12167 = vpack.c.b16 %v12027, %v12025
    %v12168 = vpack.c.b16 %v12028, %v12026
    %v12169 = vpack.c.b16 %v12031, %v12029
    %v12170 = vpack.c.b16 %v12032, %v12030
    %v12171 = vpack.c.b16 %v12035, %v12033
    %v12172 = vpack.c.b16 %v12036, %v12034
    %v12173 = vpack.c.b16 %v12039, %v12037
    %v12174 = vpack.c.b16 %v12040, %v12038
    %v12175 = vpack.c.b16 %v12043, %v12041
    %v12176 = vpack.c.b16 %v12044, %v12042
    %v12177 = vpack.c.b16 %v12047, %v12045
    %v12178 = vpack.c.b16 %v12048, %v12046
    %v12179 = vpack.c.b16 %v12051, %v12049
    %v12180 = vpack.c.b16 %v12052, %v12050
    %v12181 = vpack.c.b16 %v12055, %v12053
    %v12182 = vpack.c.b16 %v12056, %v12054
    %v12183 = vpack.c.b16 %v12059, %v12057
    %v12184 = vpack.c.b16 %v12060, %v12058
    %v12185 = vpack.c.b16 %v12063, %v12061
    %v12186 = vpack.c.b16 %v12064, %v12062
    %v12187 = vpack.c.b16 %v12067, %v12065
    %v12188 = vpack.c.b16 %v12068, %v12066
    %v12189 = vpack.c.b16 %v12071, %v12069
    %v12190 = vpack.c.b16 %v12072, %v12070
    %v12191 = vpack.c.b16 %v12075, %v12073
    %v12192 = vpack.c.b16 %v12076, %v12074
    %v12193 = vpack.c.b16 %v12079, %v12077
    %v12194 = vpack.c.b16 %v12080, %v12078
    %v12195 = vpack.c.b16 %v12083, %v12081
    %v12196 = vpack.c.b16 %v12084, %v12082
    %v12197 = vpack.c.b16 %v12087, %v12085
    %v12198 = vpack.c.b16 %v12088, %v12086
    %v12199 = vpack.c.b16 %v12091, %v12089
    %v12200 = vpack.c.b16 %v12092, %v12090
    %v12201 = vpack.c.b16 %v12095, %v12093
    %v12202 = vpack.c.b16 %v12096, %v12094
    %v12203 = vpack.c.b16 %v12099, %v12097
    %v12204 = vpack.c.b16 %v12100, %v12098
    %v12205 = vpack.c.b16 %v12103, %v12101
    %v12206 = vpack.c.b16 %v12104, %v12102
    %v12207 = vpack.c.b16 %v12107, %v12105
    %v12208 = vpack.c.b16 %v12108, %v12106
    %v12209 = vpack.c.b16 %v12111, %v12109
    %v12210 = vpack.c.b16 %v12112, %v12110
    %v12211 = vpack.c.b16 %v12115, %v12113
    %v12212 = vpack.c.b16 %v12116, %v12114
    %12309 = vmatprep.subr.bf16.mxu0 %v12118
    %12310 = vmatpush1.bf16.msra.mxu0 %v12117
    %12311 = vmatprep.subr.bf16.mxu0 %v12120
    %12312 = vmatpush1.bf16.msra.mxu0 %v12119
    %12313 = vmatprep.subr.bf16.mxu0 %v12122
    %12314 = vmatpush1.bf16.msra.mxu0 %v12121
    %12315 = vmatprep.subr.bf16.mxu0 %v12124
    %12316 = vmatpush1.bf16.msra.mxu0 %v12123
    %12317 = vmatprep.subr.bf16.mxu0 %v12126
    %12318 = vmatpush1.bf16.msra.mxu0 %v12125
    %12319 = vmatprep.subr.bf16.mxu0 %v12128
    %12320 = vmatpush1.bf16.msra.mxu0 %v12127
    %12321 = vmatprep.subr.bf16.mxu0 %v12130
    %12322 = vmatpush1.bf16.msra.mxu0 %v12129
    %12323 = vmatprep.subr.bf16.mxu0 %v12132
    %12324 = vmatpush1.bf16.msra.mxu0 %v12131
    %12325 = vmatprep.subr.bf16.mxu0 %v12134
    %12326 = vmatpush1.bf16.msra.mxu0 %v12133
    %12327 = vmatprep.subr.bf16.mxu0 %v12136
    %12328 = vmatpush1.bf16.msra.mxu0 %v12135
    %12329 = vmatprep.subr.bf16.mxu0 %v12138
    %12330 = vmatpush1.bf16.msra.mxu0 %v12137
    %12331 = vmatprep.subr.bf16.mxu0 %v12140
    %12332 = vmatpush1.bf16.msra.mxu0 %v12139
    %12333 = vmatprep.subr.bf16.mxu0 %v12142
    %12334 = vmatpush1.bf16.msra.mxu0 %v12141
    %12335 = vmatprep.subr.bf16.mxu0 %v12144
    %12336 = vmatpush1.bf16.msra.mxu0 %v12143
    %12337 = vmatprep.subr.bf16.mxu0 %v12146
    %12338 = vmatpush1.bf16.msra.mxu0 %v12145
    %12339 = vmatprep.subr.bf16.mxu0 %v12148
    %12340 = vmatpush1.bf16.msra.mxu0 %v12147
    %12341 = vmatprep.mubr.bf16.mxu0 %v11119
    %12342 = vmatmul.mubr.bf16.gmra.mrb[0].mxu0 %v11118
    %v12343 = vpop.f32.mrb[0].mxu0
    %v12344 = vadd.f32 %v11823, %v12343
    %v12345 = vpop.f32.mrb[0].mxu0
    %v12346 = vadd.f32 %v11825, %v12345
    %v12347 = vpop.f32.mrb[0].mxu0
    %v12348 = vpop.f32.mrb[0].mxu0
    %12349 = vdwg.mxu0
    %12350 = vmatprep.subr.bf16.mxu0 %v12150
    %12351 = vmatpush1.bf16.msra.mxu0 %v12149
    %12352 = vmatprep.subr.bf16.mxu0 %v12152
    %12353 = vmatpush1.bf16.msra.mxu0 %v12151
    %12354 = vmatprep.subr.bf16.mxu0 %v12154
    %12355 = vmatpush1.bf16.msra.mxu0 %v12153
    %12356 = vmatprep.subr.bf16.mxu0 %v12156
    %12357 = vmatpush1.bf16.msra.mxu0 %v12155
    %12358 = vmatprep.subr.bf16.mxu0 %v12158
    %12359 = vmatpush1.bf16.msra.mxu0 %v12157
    %12360 = vmatprep.subr.bf16.mxu0 %v12160
    %12361 = vmatpush1.bf16.msra.mxu0 %v12159
    %12362 = vmatprep.subr.bf16.mxu0 %v12162
    %12363 = vmatpush1.bf16.msra.mxu0 %v12161
    %12364 = vmatprep.subr.bf16.mxu0 %v12164
    %12365 = vmatpush1.bf16.msra.mxu0 %v12163
    %12366 = vmatprep.subr.bf16.mxu0 %v12166
    %12367 = vmatpush1.bf16.msra.mxu0 %v12165
    %12368 = vmatprep.subr.bf16.mxu0 %v12168
    %12369 = vmatpush1.bf16.msra.mxu0 %v12167
    %12370 = vmatprep.subr.bf16.mxu0 %v12170
    %12371 = vmatpush1.bf16.msra.mxu0 %v12169
    %12372 = vmatprep.subr.bf16.mxu0 %v12172
    %12373 = vmatpush1.bf16.msra.mxu0 %v12171
    %12374 = vmatprep.subr.bf16.mxu0 %v12174
    %12375 = vmatpush1.bf16.msra.mxu0 %v12173
    %12376 = vmatprep.subr.bf16.mxu0 %v12176
    %12377 = vmatpush1.bf16.msra.mxu0 %v12175
    %12378 = vmatprep.subr.bf16.mxu0 %v12178
    %12379 = vmatpush1.bf16.msra.mxu0 %v12177
    %12380 = vmatprep.subr.bf16.mxu0 %v12180
    %12381 = vmatpush1.bf16.msra.mxu0 %v12179
    %12382 = vmatprep.mubr.bf16.mxu0 %v11121
    %12383 = vmatmul.mubr.bf16.gmra.mrb[0].mxu0 %v11120
    %v12384 = vpop.f32.mrb[0].mxu0
    %v12385 = vadd.f32 %v12344, %v12384
    %v12386 = vpop.f32.mrb[0].mxu0
    %v12387 = vadd.f32 %v12346, %v12386
    %v12388 = vpop.f32.mrb[0].mxu0
    %v12389 = vpop.f32.mrb[0].mxu0
    %12390 = vdwg.mxu0
    %12391 = vmatprep.subr.bf16.mxu0 %v12182
    %12392 = vmatpush1.bf16.msra.mxu0 %v12181
    %12393 = vmatprep.subr.bf16.mxu0 %v12184
    %12394 = vmatpush1.bf16.msra.mxu0 %v12183
    %12395 = vmatprep.subr.bf16.mxu0 %v12186
    %12396 = vmatpush1.bf16.msra.mxu0 %v12185
    %12397 = vmatprep.subr.bf16.mxu0 %v12188
    %12398 = vmatpush1.bf16.msra.mxu0 %v12187
    %12399 = vmatprep.subr.bf16.mxu0 %v12190
    %12400 = vmatpush1.bf16.msra.mxu0 %v12189
    %12401 = vmatprep.subr.bf16.mxu0 %v12192
    %12402 = vmatpush1.bf16.msra.mxu0 %v12191
    %12403 = vmatprep.subr.bf16.mxu0 %v12194
    %12404 = vmatpush1.bf16.msra.mxu0 %v12193
    %12405 = vmatprep.subr.bf16.mxu0 %v12196
    %12406 = vmatpush1.bf16.msra.mxu0 %v12195
    %12407 = vmatprep.subr.bf16.mxu0 %v12198
    %12408 = vmatpush1.bf16.msra.mxu0 %v12197
    %12409 = vmatprep.subr.bf16.mxu0 %v12200
    %12410 = vmatpush1.bf16.msra.mxu0 %v12199
    %12411 = vmatprep.subr.bf16.mxu0 %v12202
    %12412 = vmatpush1.bf16.msra.mxu0 %v12201
    %12413 = vmatprep.subr.bf16.mxu0 %v12204
    %12414 = vmatpush1.bf16.msra.mxu0 %v12203
    %12415 = vmatprep.subr.bf16.mxu0 %v12206
    %12416 = vmatpush1.bf16.msra.mxu0 %v12205
    %12417 = vmatprep.subr.bf16.mxu0 %v12208
    %12418 = vmatpush1.bf16.msra.mxu0 %v12207
    %12419 = vmatprep.subr.bf16.mxu0 %v12210
    %12420 = vmatpush1.bf16.msra.mxu0 %v12209
    %12421 = vmatprep.subr.bf16.mxu0 %v12212
    %12422 = vmatpush1.bf16.msra.mxu0 %v12211
    %12423 = vmatprep.mubr.bf16.mxu0 %v11123
    %12424 = vmatmul.mubr.bf16.gmra.mrb[0].mxu0 %v11122
    %v12425 = vpop.f32.mrb[0].mxu0
    %v12426 = vadd.f32 %v12385, %v12425
    %v12427 = vpop.f32.mrb[0].mxu0
    %v12428 = vadd.f32 %v12387, %v12427
    %v12429 = vpop.f32.mrb[0].mxu0
    %v12430 = vpop.f32.mrb[0].mxu0
    %12431 = vdwg.mxu0
    %v12432 = vld [vmem:[#allocation13] sm:$0xff]
    %v12433 = vld [vmem:[#allocation13 + $0x8] sm:$0xff]
    %v12434 = vpack.c.bf16 %v10940, %v10940
    %v12437 = vunpack.c.l.b16 %v12432
    %v12438 = vunpack.c.h.b16 %v12432
    %v12439 = vunpack.c.l.b16 %v12433
    %v12440 = vunpack.c.h.b16 %v12433
    %v12441 = vpack.c.b16 %v12439, %v12437
    %v12442 = vpack.c.b16 %v12440, %v12438
    %vm12445 = vcmask 130048
    %v12447 = vsel %vm12445, %v12434, 0
    %12449 = vmatprep.subr.bf16.mxu0 %v12442
    %12450 = vmatpush1.bf16.msra.mxu0 %v12441
    %12451 = vmatprep.subr.bf16.mxu0 0
    %12452 = vmatpush1.bf16.msra.mxu0 0
    %12453 = vmatprep.subr.bf16.mxu0 0
    %12454 = vmatpush1.bf16.msra.mxu0 0
    %12455 = vmatprep.subr.bf16.mxu0 0
    %12456 = vmatpush1.bf16.msra.mxu0 0
    %12457 = vmatprep.subr.bf16.mxu0 0
    %12458 = vmatpush1.bf16.msra.mxu0 0
    %12459 = vmatprep.subr.bf16.mxu0 0
    %12460 = vmatpush1.bf16.msra.mxu0 0
    %12461 = vmatprep.subr.bf16.mxu0 0
    %12462 = vmatpush1.bf16.msra.mxu0 0
    %12463 = vmatprep.subr.bf16.mxu0 0
    %12464 = vmatpush1.bf16.msra.mxu0 0
    %12465 = vmatprep.subr.bf16.mxu0 0
    %12466 = vmatpush1.bf16.msra.mxu0 0
    %12467 = vmatprep.subr.bf16.mxu0 0
    %12468 = vmatpush1.bf16.msra.mxu0 0
    %12469 = vmatprep.subr.bf16.mxu0 0
    %12470 = vmatpush1.bf16.msra.mxu0 0
    %12471 = vmatprep.subr.bf16.mxu0 0
    %12472 = vmatpush1.bf16.msra.mxu0 0
    %12473 = vmatprep.subr.bf16.mxu0 0
    %12474 = vmatpush1.bf16.msra.mxu0 0
    %12475 = vmatprep.subr.bf16.mxu0 0
    %12476 = vmatpush1.bf16.msra.mxu0 0
    %12477 = vmatprep.subr.bf16.mxu0 0
    %12478 = vmatpush1.bf16.msra.mxu0 0
    %12479 = vmatprep.subr.bf16.mxu0 0
    %12480 = vmatpush1.bf16.msra.mxu0 0
    %12481 = vmatprep.mubr.bf16.mxu0 0
    %12482 = vmatmul.mubr.bf16.gmra.mrb[0].mxu0 %v12447
    %v12483 = vpop.f32.mrb[0].mxu0
    %v12484 = vadd.f32 0.0, %v12483
    %v12485 = vpop.f32.mrb[0].mxu0
    %v12486 = vadd.f32 0.0, %v12485
    %v12487 = vpop.f32.mrb[0].mxu0
    %v12488 = vpop.f32.mrb[0].mxu0
    %12489 = vdwg.mxu0
    %v12490 = vadd.f32 %v12426, %v12484
    %v12491 = vadd.f32 %v12428, %v12486
    %v12492 = vld [vmem:[#allocation13 + $0x10] sm:$0xff]
    %v12493 = vld [vmem:[#allocation13 + $0x18] sm:$0xff]
    %v12494 = vpack.c.bf16 %v11021, %v11021
    %v12497 = vunpack.c.l.b16 %v12492
    %v12498 = vunpack.c.h.b16 %v12492
    %v12499 = vunpack.c.l.b16 %v12493
    %v12500 = vunpack.c.h.b16 %v12493
    %v12501 = vpack.c.b16 %v12499, %v12497
    %v12502 = vpack.c.b16 %v12500, %v12498
    %v12506 = vsel %vm12445, %v12494, 0
    %12508 = vmatprep.subr.bf16.mxu0 %v12502
    %12509 = vmatpush1.bf16.msra.mxu0 %v12501
    %12510 = vmatprep.subr.bf16.mxu0 0
    %12511 = vmatpush1.bf16.msra.mxu0 0
    %12512 = vmatprep.subr.bf16.mxu0 0
    %12513 = vmatpush1.bf16.msra.mxu0 0
    %12514 = vmatprep.subr.bf16.mxu0 0
    %12515 = vmatpush1.bf16.msra.mxu0 0
    %12516 = vmatprep.subr.bf16.mxu0 0
    %12517 = vmatpush1.bf16.msra.mxu0 0
    %12518 = vmatprep.subr.bf16.mxu0 0
    %12519 = vmatpush1.bf16.msra.mxu0 0
    %12520 = vmatprep.subr.bf16.mxu0 0
    %12521 = vmatpush1.bf16.msra.mxu0 0
    %12522 = vmatprep.subr.bf16.mxu0 0
    %12523 = vmatpush1.bf16.msra.mxu0 0
    %12524 = vmatprep.subr.bf16.mxu0 0
    %12525 = vmatpush1.bf16.msra.mxu0 0
    %12526 = vmatprep.subr.bf16.mxu0 0
    %12527 = vmatpush1.bf16.msra.mxu0 0
    %12528 = vmatprep.subr.bf16.mxu0 0
    %12529 = vmatpush1.bf16.msra.mxu0 0
    %12530 = vmatprep.subr.bf16.mxu0 0
    %12531 = vmatpush1.bf16.msra.mxu0 0
    %12532 = vmatprep.subr.bf16.mxu0 0
    %12533 = vmatpush1.bf16.msra.mxu0 0
    %12534 = vmatprep.subr.bf16.mxu0 0
    %12535 = vmatpush1.bf16.msra.mxu0 0
    %12536 = vmatprep.subr.bf16.mxu0 0
    %12537 = vmatpush1.bf16.msra.mxu0 0
    %12538 = vmatprep.subr.bf16.mxu0 0
    %12539 = vmatpush1.bf16.msra.mxu0 0
    %12540 = vmatprep.mubr.bf16.mxu0 0
    %12541 = vmatmul.mubr.bf16.gmra.mrb[0].mxu0 %v12506
    %v12542 = vpop.f32.mrb[0].mxu0
    %v12543 = vadd.f32 0.0, %v12542
    %v12544 = vpop.f32.mrb[0].mxu0
    %v12545 = vadd.f32 0.0, %v12544
    %v12546 = vpop.f32.mrb[0].mxu0
    %v12547 = vpop.f32.mrb[0].mxu0
    %12548 = vdwg.mxu0
    %v12549 = vadd.f32 %v12490, %v12543
    %v12550 = vadd.f32 %v12491, %v12545
    %v12552 = vlaneseq
    %v12553 = vshrl.u32 %v12552, 7
    %v12554 = vsub.s32 0, %v12553
    %v12555 = vrot.slane %v168, %v12554
    %v12556 = vlaneseq
    %v12557 = vshrl.u32 %v12556, 7
    %v12558 = vsub.s32 4, %v12557
    %v12559 = vrot.slane %v168, %v12558
    %v12562 = vlaneseq
    %v12563 = vshrl.u32 %v12562, 7
    %v12564 = vsub.s32 0, %v12563
    %v12565 = vrot.slane %v12555, %v12564
    %v12566 = vlaneseq
    %v12567 = vshrl.u32 %v12566, 7
    %v12568 = vsub.s32 0, %v12567
    %v12569 = vrot.slane %v12559, %v12568
    %v12570 = vadd.f32 %v12549, %v12565
    %v12571 = vadd.f32 %v12550, %v12569
    %v12572 = vmax.f32 %v12570, 0.0
    %v12573 = vmax.f32 %v12571, 0.0
    %v12574 = vld [vmem:[%s9] sm:$0xf]
    %v12575 = vld [vmem:[%s9 + $0x4] sm:$0xf]
    %v12576 = vld [vmem:[%s9 + $0x8] sm:$0xf]
    %v12577 = vld [vmem:[%s9 + $0xc] sm:$0xf]
    %v12578 = vld [vmem:[%s9 + $0x10] sm:$0xf]
    %v12579 = vld [vmem:[%s9 + $0x14] sm:$0xf]
    %v12580 = vld [vmem:[%s9 + $0x18] sm:$0xf]
    %v12581 = vld [vmem:[%s9 + $0x1c] sm:$0xf]
    %v12582 = vld [vmem:[%s9 + $0x20] sm:$0xf]
    %v12583 = vld [vmem:[%s9 + $0x24] sm:$0xf]
    %v12584 = vld [vmem:[%s9 + $0x28] sm:$0xf]
    %v12585 = vld [vmem:[%s9 + $0x2c] sm:$0xf]
    %v12586 = vld [vmem:[%s9 + $0x30] sm:$0xf]
    %v12587 = vld [vmem:[%s9 + $0x34] sm:$0xf]
    %v12588 = vld [vmem:[%s9 + $0x38] sm:$0xf]
    %v12589 = vld [vmem:[%s9 + $0x3c] sm:$0xf]
    %v12590 = vld [vmem:[%s9 + $0x40] sm:$0xf]
    %v12591 = vld [vmem:[%s9 + $0x44] sm:$0xf]
    %v12592 = vld [vmem:[%s9 + $0x48] sm:$0xf]
    %v12593 = vld [vmem:[%s9 + $0x4c] sm:$0xf]
    %v12594 = vld [vmem:[%s9 + $0x50] sm:$0xf]
    %v12595 = vld [vmem:[%s9 + $0x54] sm:$0xf]
    %v12596 = vld [vmem:[%s9 + $0x58] sm:$0xf]
    %v12597 = vld [vmem:[%s9 + $0x5c] sm:$0xf]
    %v12598 = vld [vmem:[%s9 + $0x60] sm:$0xf]
    %v12599 = vld [vmem:[%s9 + $0x64] sm:$0xf]
    %v12600 = vld [vmem:[%s9 + $0x68] sm:$0xf]
    %v12601 = vld [vmem:[%s9 + $0x6c] sm:$0xf]
    %v12602 = vld [vmem:[%s9 + $0x70] sm:$0xf]
    %v12603 = vld [vmem:[%s9 + $0x74] sm:$0xf]
    %v12604 = vld [vmem:[%s9 + $0x78] sm:$0xf]
    %v12605 = vld [vmem:[%s9 + $0x7c] sm:$0xf]
    %v12606 = vpack.c.bf16 %v12572, %v12572
    %v12607 = vpack.c.bf16 %v12573, %v12573
    %v12608 = vlaneseq
    %v12609 = vshrl.u32 %v12608, 7
    %v12610 = vsub.s32 1, %v12609
    %v12611 = vrot.slane %v168, %v12610
    %v12644 = vunpack.c.l.b16 %v12574
    %v12645 = vunpack.c.l.b16 %v12575
    %v12646 = vunpack.c.l.b16 %v12576
    %v12647 = vunpack.c.l.b16 %v12577
    %v12648 = vunpack.c.l.b16 %v12578
    %v12649 = vunpack.c.l.b16 %v12579
    %v12650 = vunpack.c.l.b16 %v12580
    %v12651 = vunpack.c.l.b16 %v12581
    %v12652 = vunpack.c.l.b16 %v12582
    %v12653 = vunpack.c.l.b16 %v12583
    %v12654 = vunpack.c.l.b16 %v12584
    %v12655 = vunpack.c.l.b16 %v12585
    %v12656 = vunpack.c.l.b16 %v12586
    %v12657 = vunpack.c.l.b16 %v12587
    %v12658 = vunpack.c.l.b16 %v12588
    %v12659 = vunpack.c.l.b16 %v12589
    %v12660 = vunpack.c.l.b16 %v12590
    %v12661 = vunpack.c.l.b16 %v12591
    %v12662 = vunpack.c.l.b16 %v12592
    %v12663 = vunpack.c.l.b16 %v12593
    %v12664 = vunpack.c.l.b16 %v12594
    %v12665 = vunpack.c.l.b16 %v12595
    %v12666 = vunpack.c.l.b16 %v12596
    %v12667 = vunpack.c.l.b16 %v12597
    %v12668 = vunpack.c.l.b16 %v12598
    %v12669 = vunpack.c.l.b16 %v12599
    %v12670 = vunpack.c.l.b16 %v12600
    %v12671 = vunpack.c.l.b16 %v12601
    %v12672 = vunpack.c.l.b16 %v12602
    %v12673 = vunpack.c.l.b16 %v12603
    %v12674 = vunpack.c.l.b16 %v12604
    %v12675 = vunpack.c.l.b16 %v12605
    %v12676 = vpack.c.b16 %v12645, %v12644
    %v12677 = vpack.c.b16 %v12647, %v12646
    %v12678 = vpack.c.b16 %v12649, %v12648
    %v12679 = vpack.c.b16 %v12651, %v12650
    %v12680 = vpack.c.b16 %v12653, %v12652
    %v12681 = vpack.c.b16 %v12655, %v12654
    %v12682 = vpack.c.b16 %v12657, %v12656
    %v12683 = vpack.c.b16 %v12659, %v12658
    %v12684 = vpack.c.b16 %v12661, %v12660
    %v12685 = vpack.c.b16 %v12663, %v12662
    %v12686 = vpack.c.b16 %v12665, %v12664
    %v12687 = vpack.c.b16 %v12667, %v12666
    %v12688 = vpack.c.b16 %v12669, %v12668
    %v12689 = vpack.c.b16 %v12671, %v12670
    %v12690 = vpack.c.b16 %v12673, %v12672
    %v12691 = vpack.c.b16 %v12675, %v12674
    %12708 = vmatprep.subr.bf16.mxu0 0
    %12709 = vmatpush1.bf16.msra.mxu0 %v12676
    %12710 = vmatprep.subr.bf16.mxu0 0
    %12711 = vmatpush1.bf16.msra.mxu0 %v12677
    %12712 = vmatprep.subr.bf16.mxu0 0
    %12713 = vmatpush1.bf16.msra.mxu0 %v12678
    %12714 = vmatprep.subr.bf16.mxu0 0
    %12715 = vmatpush1.bf16.msra.mxu0 %v12679
    %12716 = vmatprep.subr.bf16.mxu0 0
    %12717 = vmatpush1.bf16.msra.mxu0 %v12680
    %12718 = vmatprep.subr.bf16.mxu0 0
    %12719 = vmatpush1.bf16.msra.mxu0 %v12681
    %12720 = vmatprep.subr.bf16.mxu0 0
    %12721 = vmatpush1.bf16.msra.mxu0 %v12682
    %12722 = vmatprep.subr.bf16.mxu0 0
    %12723 = vmatpush1.bf16.msra.mxu0 %v12683
    %12724 = vmatprep.subr.bf16.mxu0 0
    %12725 = vmatpush1.bf16.msra.mxu0 %v12684
    %12726 = vmatprep.subr.bf16.mxu0 0
    %12727 = vmatpush1.bf16.msra.mxu0 %v12685
    %12728 = vmatprep.subr.bf16.mxu0 0
    %12729 = vmatpush1.bf16.msra.mxu0 %v12686
    %12730 = vmatprep.subr.bf16.mxu0 0
    %12731 = vmatpush1.bf16.msra.mxu0 %v12687
    %12732 = vmatprep.subr.bf16.mxu0 0
    %12733 = vmatpush1.bf16.msra.mxu0 %v12688
    %12734 = vmatprep.subr.bf16.mxu0 0
    %12735 = vmatpush1.bf16.msra.mxu0 %v12689
    %12736 = vmatprep.subr.bf16.mxu0 0
    %12737 = vmatpush1.bf16.msra.mxu0 %v12690
    %12738 = vmatprep.subr.bf16.mxu0 0
    %12739 = vmatpush1.bf16.msra.mxu0 %v12691
    %12740 = vmatprep.mubr.bf16.mxu0 %v12607
    %12741 = vmatmul.mubr.bf16.gmra.mrb[0].mxu0 %v12606
    %v12742 = vpop.f32.mrb[0].mxu0
    %v12743 = vadd.f32 %v12611, %v12742
    %v12744 = vpop.f32.mrb[0].mxu0
    %v12745 = vpop.f32.mrb[0].mxu0
    %v12746 = vpop.f32.mrb[0].mxu0
    %12747 = vdwg.mxu0
    %v12748 = vmax.f32 %v12743, 0.0
    %v12749 = vld [vmem:[%s5 + $0xc0] sm:$0xf]
    %v12750 = vld [vmem:[%s5 + $0xc4] sm:$0xf]
    %v12751 = vld [vmem:[%s5 + $0xc8] sm:$0xf]
    %v12752 = vld [vmem:[%s5 + $0xcc] sm:$0xf]
    %v12753 = vld [vmem:[%s5 + $0xd0] sm:$0xf]
    %v12754 = vld [vmem:[%s5 + $0xd4] sm:$0xf]
    %v12755 = vld [vmem:[%s5 + $0xd8] sm:$0xf]
    %v12756 = vld [vmem:[%s5 + $0xdc] sm:$0xf]
    %v12757 = vpack.c.bf16 %v12748, %v12748
    %v12758 = vlaneseq
    %v12759 = vshrl.u32 %v12758, 7
    %v12760 = vsub.s32 2, %v12759
    %v12761 = vrot.slane %v168, %v12760
    %v12770 = vunpack.c.l.b16 %v12749
    %v12771 = vunpack.c.l.b16 %v12750
    %v12772 = vunpack.c.l.b16 %v12751
    %v12773 = vunpack.c.l.b16 %v12752
    %v12774 = vunpack.c.l.b16 %v12753
    %v12775 = vunpack.c.l.b16 %v12754
    %v12776 = vunpack.c.l.b16 %v12755
    %v12777 = vunpack.c.l.b16 %v12756
    %v12778 = vpack.c.b16 %v12771, %v12770
    %v12779 = vpack.c.b16 %v12773, %v12772
    %v12780 = vpack.c.b16 %v12775, %v12774
    %v12781 = vpack.c.b16 %v12777, %v12776
    %v12787 = vsel %vm10896, %v12757, 0
    %12789 = vmatprep.subr.bf16.mxu0 0
    %12790 = vmatpush1.bf16.msra.mxu0 %v12778
    %12791 = vmatprep.subr.bf16.mxu0 0
    %12792 = vmatpush1.bf16.msra.mxu0 %v12779
    %12793 = vmatprep.subr.bf16.mxu0 0
    %12794 = vmatpush1.bf16.msra.mxu0 %v12780
    %12795 = vmatprep.subr.bf16.mxu0 0
    %12796 = vmatpush1.bf16.msra.mxu0 %v12781
    %12797 = vmatprep.subr.bf16.mxu0 0
    %12798 = vmatpush1.bf16.msra.mxu0 0
    %12799 = vmatprep.subr.bf16.mxu0 0
    %12800 = vmatpush1.bf16.msra.mxu0 0
    %12801 = vmatprep.subr.bf16.mxu0 0
    %12802 = vmatpush1.bf16.msra.mxu0 0
    %12803 = vmatprep.subr.bf16.mxu0 0
    %12804 = vmatpush1.bf16.msra.mxu0 0
    %12805 = vmatprep.subr.bf16.mxu0 0
    %12806 = vmatpush1.bf16.msra.mxu0 0
    %12807 = vmatprep.subr.bf16.mxu0 0
    %12808 = vmatpush1.bf16.msra.mxu0 0
    %12809 = vmatprep.subr.bf16.mxu0 0
    %12810 = vmatpush1.bf16.msra.mxu0 0
    %12811 = vmatprep.subr.bf16.mxu0 0
    %12812 = vmatpush1.bf16.msra.mxu0 0
    %12813 = vmatprep.subr.bf16.mxu0 0
    %12814 = vmatpush1.bf16.msra.mxu0 0
    %12815 = vmatprep.subr.bf16.mxu0 0
    %12816 = vmatpush1.bf16.msra.mxu0 0
    %12817 = vmatprep.subr.bf16.mxu0 0
    %12818 = vmatpush1.bf16.msra.mxu0 0
    %12819 = vmatprep.subr.bf16.mxu0 0
    %12820 = vmatpush1.bf16.msra.mxu0 0
    %12821 = vmatprep.mubr.bf16.mxu0 0
    %12822 = vmatmul.mubr.bf16.gmra.mrb[0].mxu0 %v12787
    %v12823 = vpop.f32.mrb[0].mxu0
    %v12824 = vadd.f32 %v12761, %v12823
    %v12825 = vpop.f32.mrb[0].mxu0
    %v12826 = vpop.f32.mrb[0].mxu0
    %v12827 = vpop.f32.mrb[0].mxu0
    %12828 = vdwg.mxu0
    %v12829 = vxor.u32 %v12824, 2147483648
    %v12830 = vmul.f32 %v12829, 1.442695
    %v12831 = vpow.pop %v12830
    %v12832 = vadd.f32 %v12831, 1.0
    %v12833 = vrcp.pop %v12832
    %v12834 = vmul.f32 1.0, %v12833
    %v12835 = vld [vmem:[%s10] sm:$0xff]
    %v12836 = vld [vmem:[%s10 + $0x8] sm:$0xff]
    %v12837 = vlaneseq
    %v12838 = vshrl.u32 %v12837, 7
    %v12839 = vsub.s32 3, %v12838
    %v12840 = vrot.slane %v168, %v12839
    %v12842 = vsel %vm12445, %v12834, 0
    %12844 = vmatprep.subr.mxu0 0.0
    %12845 = vmatpush1.msra.mxu0 %v12835
    %12846 = vmatprep.subr.mxu0 0.0
    %12847 = vmatpush1.msra.mxu0 %v12836
    %12848 = vmatprep.subr.mxu0 0.0
    %12849 = vmatpush1.msra.mxu0 0.0
    %12850 = vmatprep.subr.mxu0 0.0
    %12851 = vmatpush1.msra.mxu0 0.0
    %12852 = vmatprep.subr.mxu0 0.0
    %12853 = vmatpush1.msra.mxu0 0.0
    %12854 = vmatprep.subr.mxu0 0.0
    %12855 = vmatpush1.msra.mxu0 0.0
    %12856 = vmatprep.subr.mxu0 0.0
    %12857 = vmatpush1.msra.mxu0 0.0
    %12858 = vmatprep.subr.mxu0 0.0
    %12859 = vmatpush1.msra.mxu0 0.0
    %12860 = vmatprep.subr.mxu0 0.0
    %12861 = vmatpush1.msra.mxu0 0.0
    %12862 = vmatprep.subr.mxu0 0.0
    %12863 = vmatpush1.msra.mxu0 0.0
    %12864 = vmatprep.subr.mxu0 0.0
    %12865 = vmatpush1.msra.mxu0 0.0
    %12866 = vmatprep.subr.mxu0 0.0
    %12867 = vmatpush1.msra.mxu0 0.0
    %12868 = vmatprep.subr.mxu0 0.0
    %12869 = vmatpush1.msra.mxu0 0.0
    %12870 = vmatprep.subr.mxu0 0.0
    %12871 = vmatpush1.msra.mxu0 0.0
    %12872 = vmatprep.subr.mxu0 0.0
    %12873 = vmatpush1.msra.mxu0 0.0
    %12874 = vmatprep.subr.mxu0 0.0
    %12875 = vmatpush1.msra.mxu0 0.0
    %12876 = vmatprep.subr.mxu0 0.0
    %12877 = vmatpush1.msra.mxu0 0.0
    %12878 = vmatprep.subr.mxu0 0.0
    %12879 = vmatpush1.msra.mxu0 0.0
    %12880 = vmatprep.subr.mxu0 0.0
    %12881 = vmatpush1.msra.mxu0 0.0
    %12882 = vmatprep.subr.mxu0 0.0
    %12883 = vmatpush1.msra.mxu0 0.0
    %12884 = vmatprep.subr.mxu0 0.0
    %12885 = vmatpush1.msra.mxu0 0.0
    %12886 = vmatprep.subr.mxu0 0.0
    %12887 = vmatpush1.msra.mxu0 0.0
    %12888 = vmatprep.subr.mxu0 0.0
    %12889 = vmatpush1.msra.mxu0 0.0
    %12890 = vmatprep.subr.mxu0 0.0
    %12891 = vmatpush1.msra.mxu0 0.0
    %12892 = vmatprep.subr.mxu0 0.0
    %12893 = vmatpush1.msra.mxu0 0.0
    %12894 = vmatprep.subr.mxu0 0.0
    %12895 = vmatpush1.msra.mxu0 0.0
    %12896 = vmatprep.subr.mxu0 0.0
    %12897 = vmatpush1.msra.mxu0 0.0
    %12898 = vmatprep.subr.mxu0 0.0
    %12899 = vmatpush1.msra.mxu0 0.0
    %12900 = vmatprep.subr.mxu0 0.0
    %12901 = vmatpush1.msra.mxu0 0.0
    %12902 = vmatprep.subr.mxu0 0.0
    %12903 = vmatpush1.msra.mxu0 0.0
    %12904 = vmatprep.subr.mxu0 0.0
    %12905 = vmatpush1.msra.mxu0 0.0
    %12906 = vmatprep.subr.mxu0 0.0
    %12907 = vmatpush1.msra.mxu0 0.0
    %12908 = vmatprep.mubr.f32.mxu0 0.0
    %12909 = vmatmul.mubr.f32.gmra.mrb[0].mxu0 %v12842
    %v12910 = vpop.f32.mrb[0].mxu0
    %v12911 = vadd.f32 %v12840, %v12910
    %v12912 = vpop.f32.mrb[0].mxu0
    %12913 = vdwg.mxu0
    %vm12914 = vcmask 31744
    %v12915 = vsel %vm12914, %v12911, -inf
    %12916 = vmax.xlane.f32.xlu0 %v12915
    %v12917 = vpop.xlane.xlu0 %12916
    %v12918 = vsub.f32 %v12911, %v12917
    %v12919 = vmul.f32 %v12918, 1.442695
    %v12920 = vpow.pop %v12919
    %v12921 = vsel %vm12914, %v12920, 0.0
    %12922 = vadd.xlane.f32.xlu0 %v12921
    %v12923 = vpop.xlane.xlu0 %12922
    %v12924 = vrcp.pop %v12923
    %v12925 = vmul.f32 %v12920, %v12924
    %12926 = vst.msk [vmem:[%s12] sm:$0xff] %vm12914, %v12925
    // Predicated region
    $region86: #{tpu_custom_call.1} parent=1 // pred_check
      _
    $region87: #{tpu_custom_call.1} parent=1 // pred_check_branch
      %12928 = sbr.rel (0) target = $region89
    $region88: #{tpu_custom_call.1} parent=1 // pred_region
      _
    $region89: #{tpu_custom_call.1} parent=1 // pred_fallthru
      _
    // Predicated region
    $region90: #{tpu_custom_call.1} parent=1 // pred_check
      _
    $region91: #{tpu_custom_call.1} parent=1 // pred_check_branch
      %12930 = sbr.rel (0) target = $region93
    $region92: #{tpu_custom_call.1} parent=1 // pred_region
      _
    $region93: #{tpu_custom_call.1} parent=1 // pred_fallthru
      _
    %12931 = vsyncpa [#allocation3], 1
    %12932 = vsyncpa [#allocation5], 1
    %12933 = vsyncpa [#allocation8], 1
    %12934 = vsyncpa [#allocation11], 1
    %12935 = vsyncpa [#allocation14], 1

</llo_original>
